<compile_context>
chip_gen: v7x
topology: tpu7x:2x2x1
jax: 0.10.0
libtpu: 0.0.40
codegen_flags: <defaults>
</compile_context>

<pallas_src>
import functools
import math

import jax
import jax.numpy as jnp
from jax import lax
from jax.experimental import pallas as pl
from jax.experimental.pallas import tpu as pltpu

_CHUNK = 2048          # lane-chunk width processed per in-kernel MXU matmul
_STATIC_UNROLL = 16    # unroll full chunks statically up to this count


def _round_up(x, m):
    return ((x + m - 1) // m) * m


def _default_vmem_limit():
    # v5e/v6e have 128 MiB physical VMEM -> use half; v7x (64 MiB) / unknown
    # -> keep the conservative 32 MiB that is known to work everywhere.
    try:
        phys = int(pltpu.get_tpu_info().vmem_capacity_bytes)
        return int(min(100 * 1024 * 1024, max(32 * 1024 * 1024, phys // 2)))
    except Exception:
        return 32 * 1024 * 1024


_VMEM_LIMIT = _default_vmem_limit()


# ----------------------------------------------------------------------------
# Packed activation layout
# ----------------------------------------------------------------------------

def _geom(H, W):
    """Packed-plane geometry: [G guard | R*Cw zero-padded grid | G guard].

    R = H+4 rows (2 pad/guard rows top+bottom), Cw = W+2 cols (1 pad col each
    side).  G >= 128 is chosen so that `base` (flat offset of grid row 1, the
    first row the conv window touches) is 128-aligned and the compute window
    may be rounded up to a multiple of 128 lanes without leaving the plane.
    """
    R = H + 4
    Cw = W + 2
    G = ((-Cw) % 128) + 128
    Ptot = R * Cw + 2 * G
    base = G + Cw                       # 128-aligned
    p_len = (R - 2) * Cw                # rows 1 .. R-2
    p_pad = _round_up(p_len, 128)       # <= p_len + G - 1 (stays in-plane)
    return R, Cw, G, Ptot, base, p_len, p_pad


def _pack_nchw(x, H, W):
    """(B, C, H, W) -> packed (B, round_up(C,8), Ptot) bf16 plane."""
    B, C = x.shape[0], x.shape[1]
    Cp = _round_up(C, 8)
    R, Cw, G, _, _, _, _ = _geom(H, W)
    buf = jnp.pad(x.astype(jnp.bfloat16),
                  ((0, 0), (0, Cp - C), (2, R - 2 - H), (1, Cw - 1 - W)))
    return jnp.pad(buf.reshape(B, Cp, R * Cw), ((0, 0), (0, 0), (G, G)))


def _unpack_nchw(xp, H, W):
    B, C = xp.shape[0], xp.shape[1]
    R, Cw, G, _, _, _, _ = _geom(H, W)
    return xp[:, :, G:G + R * Cw].reshape(B, C, R, Cw)[:, :, 2:2 + H, 1:1 + W]


def _valid_mask(H, W):
    R, Cw, G, _, _, _, _ = _geom(H, W)
    m = jnp.pad(jnp.ones((1, H, W), jnp.bfloat16), ((0, 0), (2, 2), (1, 1)))
    return jnp.pad(m.reshape(1, R * Cw), ((0, 0), (G, G)))


# ----------------------------------------------------------------------------
# Pallas kernels
# ----------------------------------------------------------------------------

def _conv_flat_kernel(*refs, taps, base, chunks, cin_p, has_soft, has_res, has_act):
    """Fused 3x3 (stride-1, pad-1) conv on a packed plane.

    [Softmax2d(x + deconv_bias) * f ->] per lane chunk: 9 shifted tap copies
    into one (9*cin_p, chunk) bf16 scratch, ONE MXU matmul with the
    (cout_p, 9*cin_p) weight, + bias [-> PReLU] [-> +f] [-> +residual],
    multiply by the valid-pixel mask, bf16 store.  Only the complement of the
    compute window is zero-filled.
    """
    i = 0
    x_ref = refs[i]; i += 1                     # (cin_p, Ptot) bf16
    if has_soft:
        f_ref = refs[i]; i += 1                 # (cin_p, Ptot) bf16
        bm_ref = refs[i]; i += 1                # (cin_p, 1) f32 (deconv bias)
    w_ref = refs[i]; i += 1                     # (cout_p, 9*cin_p) bf16
    b_ref = refs[i]; i += 1                     # (cout_p, 1) f32
    m_ref = refs[i]; i += 1                     # (1, Ptot) bf16 valid mask
    if has_act:
        a_ref = refs[i]; i += 1                 # (1,) f32 PReLU alpha (SMEM)
    if has_res:
        r_ref = refs[i]; i += 1                 # (cout_p, Ptot) bf16 residual
    o_ref = refs[i]; i += 1                     # (cout_p, Ptot) bf16 output
    tap_ref = refs[i]; i += 1                   # (9*cin_p, pc) bf16 scratch
    if has_soft:
        s_ref = refs[i]; i += 1                 # (cin_p, Ptot) bf16 scratch

    if has_soft:
        # res = Softmax2d(deconv_logits) * f; f is exactly zero on the pad
        # ring / guards, so res needs no extra masking.
        logits = x_ref[...].astype(jnp.float32) + bm_ref[...]
        logits = logits - jnp.max(logits, axis=0, keepdims=True)
        e = jnp.exp(logits)
        soft = e * pl.reciprocal(jnp.sum(e, axis=0, keepdims=True))
        s_ref[...] = (soft * f_ref[...].astype(jnp.float32)).astype(s_ref.dtype)
        src = s_ref
    else:
        src = x_ref

    w = w_ref[...]
    bias = b_ref[...]
    alpha = a_ref[0] if has_act else None

    def do_chunk(off, width):
        for t in range(9):                       # one shifted copy per tap
            tap_ref[t * cin_p:(t + 1) * cin_p, :width] = (
                src[:, pl.ds(off + taps[t], width)])
        y = jnp.dot(w, tap_ref[:, :width], preferred_element_type=jnp.float32)
        y = y + bias
        if has_act:
            y = jnp.where(y >= 0.0, y, alpha * y)          # PReLU
        if has_soft:                                       # JointAttention: res + x
            y = y + f_ref[:, pl.ds(off, width)].astype(jnp.float32)
        if has_res:                                        # skip connection
            y = y + r_ref[:, pl.ds(off, width)].astype(jnp.float32)
        y = y * m_ref[:, pl.ds(off, width)].astype(jnp.float32)  # re-zero pads
        o_ref[:, pl.ds(off, width)] = y.astype(o_ref.dtype)

    pc, n_full, rem = chunks
    if 1 <= n_full <= _STATIC_UNROLL:
        for c in range(n_full):
            do_chunk(base + c * pc, pc)
    elif n_full > _STATIC_UNROLL:
        def body(c, carry):
            do_chunk(pl.multiple_of(base + c * pc, 128), pc)
            return carry
        lax.fori_loop(0, n_full, body, 0)
    if rem:
        do_chunk(base + n_full * pc, rem)

    # Zero only the complement of the stored window (leading guard + row 0,
    # trailing tail); in-window pad pixels were already zeroed by the mask.
    cout_p = o_ref.shape[0]
    ptot = o_ref.shape[1]
    o_ref[:, :base] = jnp.zeros((cout_p, base), o_ref.dtype)
    end = base + n_full * pc + rem
    if end < ptot:
        o_ref[:, end:] = jnp.zeros((cout_p, ptot - end), o_ref.dtype)


def _matmul_kernel(*refs, has_bias, has_act):
    i = 0
    x_ref = refs[i]; i += 1
    w_ref = refs[i]; i += 1
    if has_bias:
        b_ref = refs[i]; i += 1
    if has_act:
        a_ref = refs[i]; i += 1
    o_ref = refs[i]
    acc = jnp.dot(x_ref[...], w_ref[...], preferred_element_type=jnp.float32)
    if has_bias:
        acc = acc + b_ref[...]
    if has_act:
        alpha = a_ref[0]
        acc = jnp.where(acc >= 0.0, acc, alpha * acc)
    o_ref[...] = acc.astype(o_ref.dtype)


# ----------------------------------------------------------------------------
# Wrappers
# ----------------------------------------------------------------------------

def conv3x3_flat(x_pk, w, b, alpha, *, H, W, residual_pk=None,
                 attention_f_pk=None, attention_bias=None):
    """Fused 3x3 / stride-1 / pad-1 conv (+bias [+PReLU] [+Softmax2d attention]
    [+residual]) on packed (B, C, Ptot) bf16 activations.

    w is PyTorch (Cout, Cin, 3, 3); returns packed (B, Cout_p, Ptot) bf16."""
    B, cin_p, Ptot = x_pk.shape
    cout, cin = w.shape[0], w.shape[1]
    cout_p = _round_up(cout, 8)
    R, Cw, G, Ptot2, base, p_len, p_pad = _geom(H, W)
    assert Ptot == Ptot2

    taps = tuple((di - 1) * Cw + (dj - 1) for di in range(3) for dj in range(3))

    # Lane-dense weight: (cout_p, 9*cin_p), tap-major / cin-minor.
    w4 = jnp.pad(w, ((0, cout_p - cout), (0, cin_p - cin), (0, 0), (0, 0)))
    w2d = jnp.transpose(w4, (0, 2, 3, 1)).reshape(cout_p, 9 * cin_p)
    w2d = w2d.astype(jnp.bfloat16)
    bb = jnp.pad(b.astype(jnp.float32), (0, cout_p - cout)).reshape(cout_p, 1)
    maskv = _valid_mask(H, W)

    has_soft = attention_f_pk is not None
    has_res = residual_pk is not None
    has_act = not (isinstance(alpha, (int, float)) and float(alpha) == 1.0)

    pc = min(_CHUNK, p_pad)
    n_full, rem = divmod(p_pad, pc)
    chunks = (pc, n_full, rem)

    inputs = [x_pk.astype(jnp.bfloat16)]
    in_specs = [pl.BlockSpec((None, cin_p, Ptot), lambda i: (i, 0, 0))]
    if has_soft:
        bm = jnp.pad(attention_bias.astype(jnp.float32),
                     (0, cin_p - attention_bias.shape[0]),
                     constant_values=-1e30).reshape(cin_p, 1)
        inputs += [attention_f_pk.astype(jnp.bfloat16), bm]
        in_specs += [pl.BlockSpec((None, cin_p, Ptot), lambda i: (i, 0, 0)),
                     pl.BlockSpec((cin_p, 1), lambda i: (0, 0))]
    inputs += [w2d, bb, maskv]
    in_specs += [pl.BlockSpec((cout_p, 9 * cin_p), lambda i: (0, 0)),
                 pl.BlockSpec((cout_p, 1), lambda i: (0, 0)),
                 pl.BlockSpec((1, Ptot), lambda i: (0, 0))]
    if has_act:
        inputs.append(jnp.reshape(jnp.asarray(alpha, jnp.float32), (1,)))
        in_specs.append(pl.BlockSpec(memory_space=pltpu.MemorySpace.SMEM))
    if has_res:
        inputs.append(residual_pk.astype(jnp.bfloat16))
        in_specs.append(pl.BlockSpec((None, cout_p, Ptot), lambda i: (i, 0, 0)))

    scratch = [pltpu.VMEM((9 * cin_p, pc), jnp.bfloat16)]
    if has_soft:
        scratch.append(pltpu.VMEM((cin_p, Ptot), jnp.bfloat16))

    kernel = functools.partial(_conv_flat_kernel, taps=taps, base=base,
                               chunks=chunks, cin_p=cin_p, has_soft=has_soft,
                               has_res=has_res, has_act=has_act)

    n_planes = cin_p * (2 if has_soft else 1) + cout_p * (2 if has_res else 1)
    cost = pl.CostEstimate(
        flops=2 * B * cout * cin * 9 * H * W,
        transcendentals=(B * cin_p * Ptot if has_soft else 0),
        bytes_accessed=2 * B * Ptot * n_planes)

    return pl.pallas_call(
        kernel,
        out_shape=jax.ShapeDtypeStruct((B, cout_p, Ptot), jnp.bfloat16),
        grid_spec=pltpu.PrefetchScalarGridSpec(
            num_scalar_prefetch=0,
            grid=(B,),
            in_specs=in_specs,
            out_specs=pl.BlockSpec((None, cout_p, Ptot), lambda i: (i, 0, 0)),
            scratch_shapes=scratch,
        ),
        compiler_params=pltpu.CompilerParams(
            dimension_semantics=("parallel",),
            vmem_limit_bytes=_VMEM_LIMIT),
        cost_estimate=cost,
    )(*inputs)


def _matmul_act(x, w, b=None, alpha=1.0):
    """[PReLU](x @ w [+ b]) with bf16 operands / f32 accumulation (LR-sized)."""
    M, K = x.shape
    N = w.shape[1]
    Mp = _round_up(max(M, 8), 8)
    tm = Mp if Mp <= 1024 else 512
    Mp = _round_up(Mp, tm)
    if Mp != M:
        x = jnp.pad(x, ((0, Mp - M), (0, 0)))
    x = x.astype(jnp.bfloat16)
    w = w.astype(jnp.bfloat16)
    has_bias = b is not None
    has_act = not (isinstance(alpha, (int, float)) and float(alpha) == 1.0)

    inputs = [x, w]
    in_specs = [pl.BlockSpec((tm, K), lambda i: (i, 0)),
                pl.BlockSpec((K, N), lambda i: (0, 0))]
    if has_bias:
        inputs.append(b.reshape(1, N).astype(jnp.float32))
        in_specs.append(pl.BlockSpec((1, N), lambda i: (0, 0)))
    if has_act:
        inputs.append(jnp.reshape(jnp.asarray(alpha, jnp.float32), (1,)))
        in_specs.append(pl.BlockSpec(memory_space=pltpu.MemorySpace.SMEM))

    kernel = functools.partial(_matmul_kernel, has_bias=has_bias, has_act=has_act)
    out = pl.pallas_call(
        kernel,
        out_shape=jax.ShapeDtypeStruct((Mp, N), jnp.float32),
        grid_spec=pltpu.PrefetchScalarGridSpec(
            num_scalar_prefetch=0,
            grid=(Mp // tm,),
            in_specs=in_specs,
            out_specs=pl.BlockSpec((tm, N), lambda i: (i, 0)),
        ),
        compiler_params=pltpu.CompilerParams(
            dimension_semantics=("parallel",),
            vmem_limit_bytes=_VMEM_LIMIT),
    )(*inputs)
    return out[:M]


def _joint_attention_mask(f_pk, blk, H, W):
    """mask_conv (stride-4 conv + PReLU) + sub-pixel ConvTranspose2d (stride-4)
    -> packed HR mask logits WITHOUT the deconv bias (the per-channel bias and
    the Softmax2d are fused into the downstream conv kernel)."""
    wc, bc, ac = blk['mask_conv']            # Conv2d(C, 16, 3, stride=4, pad=1)
    wd, bd = blk['mask_deconv']              # ConvTranspose2d(16, C, 3, stride=4, pad=1)
    C = wc.shape[1]
    cl = wc.shape[0]
    B = f_pk.shape[0]
    R, Cw, G, _, _, _, _ = _geom(H, W)
    HL = (H - 1) // 4 + 1
    WL = (W - 1) // 4 + 1

    # Strided im2col of the small stride-4 conv (LR-sized tensors, XLA glue).
    fv = f_pk[:, :C, G:G + R * Cw].reshape(B, C, R, Cw)
    taps = [fv[:, :, 1 + di:1 + di + 4 * HL:4, dj:dj + 4 * WL:4]
            for di in range(3) for dj in range(3)]
    patches = jnp.stack(taps, axis=1)                        # (B, 9, C, HL, WL)
    patches = jnp.transpose(patches, (0, 3, 4, 1, 2)).reshape(B * HL * WL, 9 * C)

    rhs_c = jnp.transpose(wc, (2, 3, 1, 0)).reshape(9 * C, cl)
    m_lr = _matmul_act(patches, rhs_c, bc, ac)               # (B*HL*WL, 16)

    # Sub-pixel lowering of the stride-4 ConvTranspose2d: each LR pixel emits a
    # disjoint 3x3 block; the 4th row/col of every 4x4 block and the
    # output_padding fringe are bias-only -> kept as zeros here (one
    # reshape/transpose, no 9 HR scatters); the bias is added in the kernel.
    rhs_d = jnp.transpose(wd, (0, 2, 3, 1)).reshape(cl, 9 * C)
    dec = _matmul_act(m_lr, rhs_d)                           # no bias, no act
    dec = dec.reshape(B, HL, WL, 3, 3, C)
    dec = jnp.pad(dec, ((0, 0), (0, 0), (0, 0), (0, 1), (0, 1), (0, 0)))
    hr = jnp.transpose(dec, (0, 5, 1, 3, 2, 4)).reshape(B, C, 4 * HL, 4 * WL)
    hr = jnp.pad(hr, ((0, 0), (0, 0), (0, 3), (0, 3)))       # output_padding fringe
    mask_hr = hr[:, :, 1:1 + H, 1:1 + W]                     # deconv padding=1 crop
    return _pack_nchw(mask_hr, H, W), bd


def _shuffle_repack(up_pk, H, W, n_feats):
    """unpack + PixelShuffle(2) + repack fused into one reshape/transpose/pad
    chain (no intermediate zero buffer / scatter)."""
    B = up_pk.shape[0]
    R, Cw, G, _, _, _, _ = _geom(H, W)
    x = up_pk[:, :4 * n_feats, G:G + R * Cw].reshape(B, 4 * n_feats, R, Cw)
    x = x[:, :, 2:2 + H, 1:1 + W]                            # (B, 4C, H, W)
    x = x.reshape(B, n_feats, 2, 2, H, W)
    x = jnp.transpose(x, (0, 1, 4, 2, 5, 3)).reshape(B, n_feats, 2 * H, 2 * W)
    return _pack_nchw(x, 2 * H, 2 * W)


# ----------------------------------------------------------------------------
# Parameters (deterministic init) and forward pass
# ----------------------------------------------------------------------------

def init_params(seed=0, n_colors=3, n_feats=16, n_resblocks=2, scale=2):
    keys = iter(jax.random.split(jax.random.PRNGKey(seed), 128))

    def conv_p(cout, cin, k):
        fan = cin * k * k
        w = jax.random.normal(next(keys), (cout, cin, k, k), jnp.float32) / math.sqrt(fan)
        b = jax.random.normal(next(keys), (cout,), jnp.float32) * 0.01
        return w, b

    p = {'head': conv_p(n_feats, n_colors, 3) + (0.25,)}      # conv + PReLU
    blocks = []
    for _ in range(n_resblocks):                              # JointAttention blocks
        blk = {'mask_conv': conv_p(16, n_feats, 3) + (0.25,)}
        wdt = jax.random.normal(next(keys), (16, n_feats, 3, 3), jnp.float32) / math.sqrt(16 * 9)
        bdt = jax.random.normal(next(keys), (n_feats,), jnp.float32) * 0.01
        blk['mask_deconv'] = (wdt, bdt)
        blk['conv_body'] = conv_p(n_feats, n_feats, 3) + (0.25,)
        blocks.append(blk)
    p['body_r'] = blocks
    p['body_conv'] = conv_p(n_feats, n_feats, 3)
    n_up = int(math.log(scale, 2))
    p['tail_up'] = [conv_p(4 * n_feats, n_feats, 3) + (0.25,) for _ in range(n_up)]
    p['tail_conv'] = conv_p(n_colors, n_feats, 3)
    return p


_RGB_MEAN = (0.4488, 0.4371, 0.404)
_RGB_RANGE = 1.0


def srresnet_forward(x_nchw, params):
    B, C, H, W = x_nchw.shape
    n_feats = params['head'][0].shape[0]
    mean = jnp.asarray(_RGB_MEAN, jnp.float32)[:C] * _RGB_RANGE

    # sub_mean (MeanShift, sign=-1, std=1) fused into the packing pass (exact).
    x = x_nchw.astype(jnp.float32) - mean[None, :, None, None]
    x_pk = _pack_nchw(x, H, W)

    w, b, a = params['head']
    f_pk = conv3x3_flat(x_pk, w, b, a, H=H, W=W)              # head conv + PReLU
    feat_pk = f_pk

    for blk in params['body_r']:                              # JointAttention blocks
        mask_pk, bd = _joint_attention_mask(f_pk, blk, H, W)
        w, b, a = blk['conv_body']
        # fused: Softmax2d(mask + bd) * f -> conv3x3 + bias -> PReLU -> (+ f)
        f_pk = conv3x3_flat(mask_pk, w, b, a, H=H, W=W,
                            attention_f_pk=f_pk, attention_bias=bd)

    w, b = params['body_conv']                                # body_conv + skip(head)
    y_pk = conv3x3_flat(f_pk, w, b, 1.0, H=H, W=W, residual_pk=feat_pk)

    Hc, Wc = H, W
    for (w, b, a) in params['tail_up']:                       # UpsampleBlock (x2 stages)
        up_pk = conv3x3_flat(y_pk, w, b, a, H=Hc, W=Wc)
        y_pk = _shuffle_repack(up_pk, Hc, Wc, n_feats)
        Hc, Wc = 2 * Hc, 2 * Wc

    w, b = params['tail_conv']
    b = b + mean                                              # add_mean folded (exact)
    out_pk = conv3x3_flat(y_pk, w, b, 1.0, H=Hc, W=Wc)
    out = _unpack_nchw(out_pk, Hc, Wc)[:, :w.shape[0]]        # drop channel padding
    return out.astype(jnp.float32)                            # NCHW, like PyTorch


if __name__ == "__main__":
    key = jax.random.PRNGKey(0)
    x = jax.random.normal(key, (2, 3, 16, 16), jnp.float32)   # NCHW, like PyTorch
    params = init_params(seed=0, n_colors=3, n_feats=16, n_resblocks=2, scale=2)

    fwd = jax.jit(srresnet_forward)
    y = fwd(x, params)
    jax.block_until_ready(y)
    assert y.shape == (2, 3, 32, 32), y.shape                 # x2 super-resolution
    print("KERNEL_OK")
</pallas_src>

<mosaic_0001>
module attributes {stable_mosaic.version = 11 : i64} {
  func.func @_conv_flat_kernel(%arg0: i32, %arg1: memref<1x8x836xbf16, #tpu.memory_space<vmem>>, %arg2: memref<16x72xbf16, #tpu.memory_space<vmem>>, %arg3: memref<16x1xf32, #tpu.memory_space<vmem>>, %arg4: memref<1x836xbf16, #tpu.memory_space<vmem>>, %arg5: memref<1xf32, #tpu.memory_space<smem>>, %arg6: memref<1x16x836xbf16, #tpu.memory_space<vmem>>, %arg7: memref<72x384xbf16, #tpu.memory_space<vmem>>) attributes {dimension_semantics = [#tpu.dimension_semantics<parallel>], iteration_bounds = array<i64: 2>, scalar_prefetch = 0 : i64, scratch_operands = 1 : i64, tpu.core_type = #tpu.core_type<tc>, window_params = [{transform_indices = @transform_0, window_bounds = array<i64: 1, 8, 836>}, {pipeline_mode = #tpu.pipeline_mode<synchronous>, transform_indices = @transform_1, window_bounds = array<i64: 16, 72>}, {pipeline_mode = #tpu.pipeline_mode<synchronous>, transform_indices = @transform_2, window_bounds = array<i64: 16, 1>}, {pipeline_mode = #tpu.pipeline_mode<synchronous>, transform_indices = @transform_3, window_bounds = array<i64: 1, 836>}, {transform_indices = @transform_4, window_bounds = array<i64: 1>}, {transform_indices = @transform_5, window_bounds = array<i64: 1, 16, 836>}]} {
    %c0 = arith.constant 0 : index
    %c0_0 = arith.constant 0 : index
    %0 = vector.load %arg2[%c0, %c0_0] : memref<16x72xbf16, #tpu.memory_space<vmem>>, vector<16x72xbf16>
    %c0_1 = arith.constant 0 : index
    %c0_2 = arith.constant 0 : index
    %1 = vector.load %arg3[%c0_1, %c0_2] : memref<16x1xf32, #tpu.memory_space<vmem>>, vector<16x1xf32>
    %c0_3 = arith.constant 0 : index
    %2 = memref.load %arg5[%c0_3] : memref<1xf32, #tpu.memory_space<smem>>
    %c0_4 = arith.constant 0 : index
    %c0_5 = arith.constant 0 : index
    %c237 = arith.constant 237 : index
    %3 = vector.load %arg1[%c0_4, %c0_5, %c237] : memref<1x8x836xbf16, #tpu.memory_space<vmem>>, vector<1x8x384xbf16>
    %4 = vector.shape_cast %3 : vector<1x8x384xbf16> to vector<8x384xbf16>
    %c0_6 = arith.constant 0 : index
    %c0_7 = arith.constant 0 : index
    %5 = vector.load %arg7[%c0_6, %c0_7] : memref<72x384xbf16, #tpu.memory_space<vmem>>, vector<8x384xbf16>
    tpu.vector_store %arg7[%c0_6, %c0_7], %4 {strides = array<i32>} : memref<72x384xbf16, #tpu.memory_space<vmem>>, vector<8x384xbf16>,
    %c0_8 = arith.constant 0 : index
    %c0_9 = arith.constant 0 : index
    %c238 = arith.constant 238 : index
    %6 = vector.load %arg1[%c0_8, %c0_9, %c238] : memref<1x8x836xbf16, #tpu.memory_space<vmem>>, vector<1x8x384xbf16>
    %7 = vector.shape_cast %6 : vector<1x8x384xbf16> to vector<8x384xbf16>
    %c8 = arith.constant 8 : index
    %c0_10 = arith.constant 0 : index
    %8 = vector.load %arg7[%c8, %c0_10] : memref<72x384xbf16, #tpu.memory_space<vmem>>, vector<8x384xbf16>
    tpu.vector_store %arg7[%c8, %c0_10], %7 {strides = array<i32>} : memref<72x384xbf16, #tpu.memory_space<vmem>>, vector<8x384xbf16>,
    %c0_11 = arith.constant 0 : index
    %c0_12 = arith.constant 0 : index
    %c239 = arith.constant 239 : index
    %9 = vector.load %arg1[%c0_11, %c0_12, %c239] : memref<1x8x836xbf16, #tpu.memory_space<vmem>>, vector<1x8x384xbf16>
    %10 = vector.shape_cast %9 : vector<1x8x384xbf16> to vector<8x384xbf16>
    %c16 = arith.constant 16 : index
    %c0_13 = arith.constant 0 : index
    %11 = vector.load %arg7[%c16, %c0_13] : memref<72x384xbf16, #tpu.memory_space<vmem>>, vector<8x384xbf16>
    tpu.vector_store %arg7[%c16, %c0_13], %10 {strides = array<i32>} : memref<72x384xbf16, #tpu.memory_space<vmem>>, vector<8x384xbf16>,
    %c0_14 = arith.constant 0 : index
    %c0_15 = arith.constant 0 : index
    %c255 = arith.constant 255 : index
    %12 = vector.load %arg1[%c0_14, %c0_15, %c255] : memref<1x8x836xbf16, #tpu.memory_space<vmem>>, vector<1x8x384xbf16>
    %13 = vector.shape_cast %12 : vector<1x8x384xbf16> to vector<8x384xbf16>
    %c24 = arith.constant 24 : index
    %c0_16 = arith.constant 0 : index
    %14 = vector.load %arg7[%c24, %c0_16] : memref<72x384xbf16, #tpu.memory_space<vmem>>, vector<8x384xbf16>
    tpu.vector_store %arg7[%c24, %c0_16], %13 {strides = array<i32>} : memref<72x384xbf16, #tpu.memory_space<vmem>>, vector<8x384xbf16>,
    %c0_17 = arith.constant 0 : index
    %c0_18 = arith.constant 0 : index
    %c256 = arith.constant 256 : index
    %15 = vector.load %arg1[%c0_17, %c0_18, %c256] : memref<1x8x836xbf16, #tpu.memory_space<vmem>>, vector<1x8x384xbf16>
    %16 = vector.shape_cast %15 : vector<1x8x384xbf16> to vector<8x384xbf16>
    %c32 = arith.constant 32 : index
    %c0_19 = arith.constant 0 : index
    %17 = vector.load %arg7[%c32, %c0_19] : memref<72x384xbf16, #tpu.memory_space<vmem>>, vector<8x384xbf16>
    tpu.vector_store %arg7[%c32, %c0_19], %16 {strides = array<i32>} : memref<72x384xbf16, #tpu.memory_space<vmem>>, vector<8x384xbf16>,
    %c0_20 = arith.constant 0 : index
    %c0_21 = arith.constant 0 : index
    %c257 = arith.constant 257 : index
    %18 = vector.load %arg1[%c0_20, %c0_21, %c257] : memref<1x8x836xbf16, #tpu.memory_space<vmem>>, vector<1x8x384xbf16>
    %19 = vector.shape_cast %18 : vector<1x8x384xbf16> to vector<8x384xbf16>
    %c40 = arith.constant 40 : index
    %c0_22 = arith.constant 0 : index
    %20 = vector.load %arg7[%c40, %c0_22] : memref<72x384xbf16, #tpu.memory_space<vmem>>, vector<8x384xbf16>
    tpu.vector_store %arg7[%c40, %c0_22], %19 {strides = array<i32>} : memref<72x384xbf16, #tpu.memory_space<vmem>>, vector<8x384xbf16>,
    %c0_23 = arith.constant 0 : index
    %c0_24 = arith.constant 0 : index
    %c273 = arith.constant 273 : index
    %21 = vector.load %arg1[%c0_23, %c0_24, %c273] : memref<1x8x836xbf16, #tpu.memory_space<vmem>>, vector<1x8x384xbf16>
    %22 = vector.shape_cast %21 : vector<1x8x384xbf16> to vector<8x384xbf16>
    %c48 = arith.constant 48 : index
    %c0_25 = arith.constant 0 : index
    %23 = vector.load %arg7[%c48, %c0_25] : memref<72x384xbf16, #tpu.memory_space<vmem>>, vector<8x384xbf16>
    tpu.vector_store %arg7[%c48, %c0_25], %22 {strides = array<i32>} : memref<72x384xbf16, #tpu.memory_space<vmem>>, vector<8x384xbf16>,
    %c0_26 = arith.constant 0 : index
    %c0_27 = arith.constant 0 : index
    %c274 = arith.constant 274 : index
    %24 = vector.load %arg1[%c0_26, %c0_27, %c274] : memref<1x8x836xbf16, #tpu.memory_space<vmem>>, vector<1x8x384xbf16>
    %25 = vector.shape_cast %24 : vector<1x8x384xbf16> to vector<8x384xbf16>
    %c56 = arith.constant 56 : index
    %c0_28 = arith.constant 0 : index
    %26 = vector.load %arg7[%c56, %c0_28] : memref<72x384xbf16, #tpu.memory_space<vmem>>, vector<8x384xbf16>
    tpu.vector_store %arg7[%c56, %c0_28], %25 {strides = array<i32>} : memref<72x384xbf16, #tpu.memory_space<vmem>>, vector<8x384xbf16>,
    %c0_29 = arith.constant 0 : index
    %c0_30 = arith.constant 0 : index
    %c275 = arith.constant 275 : index
    %27 = vector.load %arg1[%c0_29, %c0_30, %c275] : memref<1x8x836xbf16, #tpu.memory_space<vmem>>, vector<1x8x384xbf16>
    %28 = vector.shape_cast %27 : vector<1x8x384xbf16> to vector<8x384xbf16>
    %c64 = arith.constant 64 : index
    %c0_31 = arith.constant 0 : index
    %29 = vector.load %arg7[%c64, %c0_31] : memref<72x384xbf16, #tpu.memory_space<vmem>>, vector<8x384xbf16>
    tpu.vector_store %arg7[%c64, %c0_31], %28 {strides = array<i32>} : memref<72x384xbf16, #tpu.memory_space<vmem>>, vector<8x384xbf16>,
    %c0_32 = arith.constant 0 : index
    %c0_33 = arith.constant 0 : index
    %30 = vector.load %arg7[%c0_32, %c0_33] : memref<72x384xbf16, #tpu.memory_space<vmem>>, vector<72x384xbf16>
    %cst = arith.constant dense<0.000000e+00> : vector<16x384xf32>
    %31 = tpu.matmul %0, %30, %cst {dimension_numbers = #tpu.dot_dimension_numbers<[1], [0], [0], [1], [0, 0, 1, 1], [], []>} : vector<16x72xbf16>, vector<72x384xbf16>, vector<16x384xf32> -> vector<16x384xf32>
    %32 = vector.broadcast %1 : vector<16x1xf32> to vector<16x384xf32>
    %33 = arith.addf %31, %32 : vector<16x384xf32>
    %cst_34 = arith.constant 0.000000e+00 : f32
    %34 = vector.broadcast %cst_34 : f32 to vector<16x384xf32>
    %35 = arith.cmpf oge, %33, %34 : vector<16x384xf32>
    %36 = vector.broadcast %2 : f32 to vector<16x384xf32>
    %37 = arith.mulf %36, %33 : vector<16x384xf32>
    %38 = arith.select %35, %33, %37 : vector<16x384xi1>, vector<16x384xf32>
    %c0_35 = arith.constant 0 : index
    %c256_36 = arith.constant 256 : index
    %39 = vector.load %arg4[%c0_35, %c256_36] : memref<1x836xbf16, #tpu.memory_space<vmem>>, vector<1x384xbf16>
    %40 = arith.extf %39 : vector<1x384xbf16> to vector<1x384xf32>
    %41 = vector.broadcast %40 : vector<1x384xf32> to vector<16x384xf32>
    %42 = arith.mulf %38, %41 : vector<16x384xf32>
    %43 = arith.truncf %42 : vector<16x384xf32> to vector<16x384xbf16>
    %c0_37 = arith.constant 0 : index
    %c0_38 = arith.constant 0 : index
    %c256_39 = arith.constant 256 : index
    %44 = vector.load %arg6[%c0_37, %c0_38, %c256_39] : memref<1x16x836xbf16, #tpu.memory_space<vmem>>, vector<1x16x384xbf16>
    %45 = vector.shape_cast %44 : vector<1x16x384xbf16> to vector<16x384xbf16>
    %46 = vector.shape_cast %43 : vector<16x384xbf16> to vector<1x16x384xbf16>
    tpu.vector_store %arg6[%c0_37, %c0_38, %c256_39], %46 {strides = array<i32>} : memref<1x16x836xbf16, #tpu.memory_space<vmem>>, vector<1x16x384xbf16>,
    %cst_40 = arith.constant 0.000000e+00 : bf16
    %47 = vector.broadcast %cst_40 : bf16 to vector<16x256xbf16>
    %c0_41 = arith.constant 0 : index
    %c0_42 = arith.constant 0 : index
    %c0_43 = arith.constant 0 : index
    %48 = vector.load %arg6[%c0_41, %c0_42, %c0_43] : memref<1x16x836xbf16, #tpu.memory_space<vmem>>, vector<1x16x256xbf16>
    %49 = vector.shape_cast %48 : vector<1x16x256xbf16> to vector<16x256xbf16>
    %50 = vector.shape_cast %47 : vector<16x256xbf16> to vector<1x16x256xbf16>
    tpu.vector_store %arg6[%c0_41, %c0_42, %c0_43], %50 {strides = array<i32>} : memref<1x16x836xbf16, #tpu.memory_space<vmem>>, vector<1x16x256xbf16>,
    %cst_44 = arith.constant 0.000000e+00 : bf16
    %51 = vector.broadcast %cst_44 : bf16 to vector<16x196xbf16>
    %c0_45 = arith.constant 0 : index
    %c0_46 = arith.constant 0 : index
    %c640 = arith.constant 640 : index
    %52 = vector.load %arg6[%c0_45, %c0_46, %c640] : memref<1x16x836xbf16, #tpu.memory_space<vmem>>, vector<1x16x196xbf16>
    %53 = vector.shape_cast %52 : vector<1x16x196xbf16> to vector<16x196xbf16>
    %54 = vector.shape_cast %51 : vector<16x196xbf16> to vector<1x16x196xbf16>
    tpu.vector_store %arg6[%c0_45, %c0_46, %c640], %54 {strides = array<i32>} : memref<1x16x836xbf16, #tpu.memory_space<vmem>>, vector<1x16x196xbf16>,
    return
  }
  func.func @transform_0(%arg0: i32) -> (i32, i32, i32) {
    %c0_i32 = arith.constant 0 : i32
    %c0_i32_0 = arith.constant 0 : i32
    %c0_i32_1 = arith.constant 0 : i32
    return %arg0, %c0_i32, %c0_i32_0 : i32, i32, i32
  }
  func.func @transform_1(%arg0: i32) -> (i32, i32) {
    %c0_i32 = arith.constant 0 : i32
    %c0_i32_0 = arith.constant 0 : i32
    %c0_i32_1 = arith.constant 0 : i32
    return %c0_i32, %c0_i32_0 : i32, i32
  }
  func.func @transform_2(%arg0: i32) -> (i32, i32) {
    %c0_i32 = arith.constant 0 : i32
    %c0_i32_0 = arith.constant 0 : i32
    %c0_i32_1 = arith.constant 0 : i32
    return %c0_i32, %c0_i32_0 : i32, i32
  }
  func.func @transform_3(%arg0: i32) -> (i32, i32) {
    %c0_i32 = arith.constant 0 : i32
    %c0_i32_0 = arith.constant 0 : i32
    %c0_i32_1 = arith.constant 0 : i32
    return %c0_i32, %c0_i32_0 : i32, i32
  }
  func.func @transform_4(%arg0: i32) -> i32 {
    %c0_i32 = arith.constant 0 : i32
    %c0_i32_0 = arith.constant 0 : i32
    return %c0_i32 : i32
  }
  func.func @transform_5(%arg0: i32) -> (i32, i32, i32) {
    %c0_i32 = arith.constant 0 : i32
    %c0_i32_0 = arith.constant 0 : i32
    %c0_i32_1 = arith.constant 0 : i32
    return %arg0, %c0_i32, %c0_i32_0 : i32, i32, i32
  }
}

module attributes {stable_mosaic.version = 11 : i64} {
  func.func @_matmul_kernel(%arg0: i32, %arg1: memref<32x144xbf16, #tpu.memory_space<vmem>>, %arg2: memref<144x16xbf16, #tpu.memory_space<vmem>>, %arg3: memref<1x16xf32, #tpu.memory_space<vmem>>, %arg4: memref<1xf32, #tpu.memory_space<smem>>, %arg5: memref<32x16xf32, #tpu.memory_space<vmem>>) attributes {dimension_semantics = [#tpu.dimension_semantics<parallel>], iteration_bounds = array<i64: 1>, scalar_prefetch = 0 : i64, scratch_operands = 0 : i64, tpu.core_type = #tpu.core_type<tc>, window_params = [{transform_indices = @transform_0, window_bounds = array<i64: 32, 144>}, {pipeline_mode = #tpu.pipeline_mode<synchronous>, transform_indices = @transform_1, window_bounds = array<i64: 144, 16>}, {pipeline_mode = #tpu.pipeline_mode<synchronous>, transform_indices = @transform_2, window_bounds = array<i64: 1, 16>}, {transform_indices = @transform_3, window_bounds = array<i64: 1>}, {transform_indices = @transform_4, window_bounds = array<i64: 32, 16>}]} {
    %c0 = arith.constant 0 : index
    %c0_0 = arith.constant 0 : index
    %0 = vector.load %arg1[%c0, %c0_0] : memref<32x144xbf16, #tpu.memory_space<vmem>>, vector<32x144xbf16>
    %c0_1 = arith.constant 0 : index
    %c0_2 = arith.constant 0 : index
    %1 = vector.load %arg2[%c0_1, %c0_2] : memref<144x16xbf16, #tpu.memory_space<vmem>>, vector<144x16xbf16>
    %cst = arith.constant dense<0.000000e+00> : vector<32x16xf32>
    %2 = tpu.matmul %0, %1, %cst {dimension_numbers = #tpu.dot_dimension_numbers<[1], [0], [0], [1], [0, 0, 1, 1], [], []>} : vector<32x144xbf16>, vector<144x16xbf16>, vector<32x16xf32> -> vector<32x16xf32>
    %c0_3 = arith.constant 0 : index
    %c0_4 = arith.constant 0 : index
    %3 = vector.load %arg3[%c0_3, %c0_4] : memref<1x16xf32, #tpu.memory_space<vmem>>, vector<1x16xf32>
    %4 = vector.broadcast %3 : vector<1x16xf32> to vector<32x16xf32>
    %5 = arith.addf %2, %4 : vector<32x16xf32>
    %c0_5 = arith.constant 0 : index
    %6 = memref.load %arg4[%c0_5] : memref<1xf32, #tpu.memory_space<smem>>
    %cst_6 = arith.constant 0.000000e+00 : f32
    %7 = vector.broadcast %cst_6 : f32 to vector<32x16xf32>
    %8 = arith.cmpf oge, %5, %7 : vector<32x16xf32>
    %9 = vector.broadcast %6 : f32 to vector<32x16xf32>
    %10 = arith.mulf %9, %5 : vector<32x16xf32>
    %11 = arith.select %8, %5, %10 : vector<32x16xi1>, vector<32x16xf32>
    %c0_7 = arith.constant 0 : index
    %c0_8 = arith.constant 0 : index
    %12 = vector.load %arg5[%c0_7, %c0_8] : memref<32x16xf32, #tpu.memory_space<vmem>>, vector<32x16xf32>
    tpu.vector_store %arg5[%c0_7, %c0_8], %11 {strides = array<i32>} : memref<32x16xf32, #tpu.memory_space<vmem>>, vector<32x16xf32>,
    return
  }
  func.func @transform_0(%arg0: i32) -> (i32, i32) {
    %c0_i32 = arith.constant 0 : i32
    %c0_i32_0 = arith.constant 0 : i32
    return %arg0, %c0_i32 : i32, i32
  }
  func.func @transform_1(%arg0: i32) -> (i32, i32) {
    %c0_i32 = arith.constant 0 : i32
    %c0_i32_0 = arith.constant 0 : i32
    %c0_i32_1 = arith.constant 0 : i32
    return %c0_i32, %c0_i32_0 : i32, i32
  }
  func.func @transform_2(%arg0: i32) -> (i32, i32) {
    %c0_i32 = arith.constant 0 : i32
    %c0_i32_0 = arith.constant 0 : i32
    %c0_i32_1 = arith.constant 0 : i32
    return %c0_i32, %c0_i32_0 : i32, i32
  }
  func.func @transform_3(%arg0: i32) -> i32 {
    %c0_i32 = arith.constant 0 : i32
    %c0_i32_0 = arith.constant 0 : i32
    return %c0_i32 : i32
  }
  func.func @transform_4(%arg0: i32) -> (i32, i32) {
    %c0_i32 = arith.constant 0 : i32
    %c0_i32_0 = arith.constant 0 : i32
    return %arg0, %c0_i32 : i32, i32
  }
}

module attributes {stable_mosaic.version = 11 : i64} {
  func.func @_matmul_kernel(%arg0: i32, %arg1: memref<32x16xbf16, #tpu.memory_space<vmem>>, %arg2: memref<16x144xbf16, #tpu.memory_space<vmem>>, %arg3: memref<32x144xf32, #tpu.memory_space<vmem>>) attributes {dimension_semantics = [#tpu.dimension_semantics<parallel>], iteration_bounds = array<i64: 1>, scalar_prefetch = 0 : i64, scratch_operands = 0 : i64, tpu.core_type = #tpu.core_type<tc>, window_params = [{transform_indices = @transform_0, window_bounds = array<i64: 32, 16>}, {pipeline_mode = #tpu.pipeline_mode<synchronous>, transform_indices = @transform_1, window_bounds = array<i64: 16, 144>}, {transform_indices = @transform_2, window_bounds = array<i64: 32, 144>}]} {
    %c0 = arith.constant 0 : index
    %c0_0 = arith.constant 0 : index
    %0 = vector.load %arg1[%c0, %c0_0] : memref<32x16xbf16, #tpu.memory_space<vmem>>, vector<32x16xbf16>
    %c0_1 = arith.constant 0 : index
    %c0_2 = arith.constant 0 : index
    %1 = vector.load %arg2[%c0_1, %c0_2] : memref<16x144xbf16, #tpu.memory_space<vmem>>, vector<16x144xbf16>
    %cst = arith.constant dense<0.000000e+00> : vector<32x144xf32>
    %2 = tpu.matmul %0, %1, %cst {dimension_numbers = #tpu.dot_dimension_numbers<[1], [0], [0], [1], [0, 0, 1, 1], [], []>} : vector<32x16xbf16>, vector<16x144xbf16>, vector<32x144xf32> -> vector<32x144xf32>
    %c0_3 = arith.constant 0 : index
    %c0_4 = arith.constant 0 : index
    %3 = vector.load %arg3[%c0_3, %c0_4] : memref<32x144xf32, #tpu.memory_space<vmem>>, vector<32x144xf32>
    tpu.vector_store %arg3[%c0_3, %c0_4], %2 {strides = array<i32>} : memref<32x144xf32, #tpu.memory_space<vmem>>, vector<32x144xf32>,
    return
  }
  func.func @transform_0(%arg0: i32) -> (i32, i32) {
    %c0_i32 = arith.constant 0 : i32
    %c0_i32_0 = arith.constant 0 : i32
    return %arg0, %c0_i32 : i32, i32
  }
  func.func @transform_1(%arg0: i32) -> (i32, i32) {
    %c0_i32 = arith.constant 0 : i32
    %c0_i32_0 = arith.constant 0 : i32
    %c0_i32_1 = arith.constant 0 : i32
    return %c0_i32, %c0_i32_0 : i32, i32
  }
  func.func @transform_2(%arg0: i32) -> (i32, i32) {
    %c0_i32 = arith.constant 0 : i32
    %c0_i32_0 = arith.constant 0 : i32
    return %arg0, %c0_i32 : i32, i32
  }
}

module attributes {stable_mosaic.version = 11 : i64} {
  func.func @_conv_flat_kernel(%arg0: i32, %arg1: memref<1x16x836xbf16, #tpu.memory_space<vmem>>, %arg2: memref<1x16x836xbf16, #tpu.memory_space<vmem>>, %arg3: memref<16x1xf32, #tpu.memory_space<vmem>>, %arg4: memref<16x144xbf16, #tpu.memory_space<vmem>>, %arg5: memref<16x1xf32, #tpu.memory_space<vmem>>, %arg6: memref<1x836xbf16, #tpu.memory_space<vmem>>, %arg7: memref<1xf32, #tpu.memory_space<smem>>, %arg8: memref<1x16x836xbf16, #tpu.memory_space<vmem>>, %arg9: memref<144x384xbf16, #tpu.memory_space<vmem>>, %arg10: memref<16x836xbf16, #tpu.memory_space<vmem>>) attributes {dimension_semantics = [#tpu.dimension_semantics<parallel>], iteration_bounds = array<i64: 2>, scalar_prefetch = 0 : i64, scratch_operands = 2 : i64, tpu.core_type = #tpu.core_type<tc>, window_params = [{transform_indices = @transform_0, window_bounds = array<i64: 1, 16, 836>}, {transform_indices = @transform_1, window_bounds = array<i64: 1, 16, 836>}, {pipeline_mode = #tpu.pipeline_mode<synchronous>, transform_indices = @transform_2, window_bounds = array<i64: 16, 1>}, {pipeline_mode = #tpu.pipeline_mode<synchronous>, transform_indices = @transform_3, window_bounds = array<i64: 16, 144>}, {pipeline_mode = #tpu.pipeline_mode<synchronous>, transform_indices = @transform_4, window_bounds = array<i64: 16, 1>}, {pipeline_mode = #tpu.pipeline_mode<synchronous>, transform_indices = @transform_5, window_bounds = array<i64: 1, 836>}, {transform_indices = @transform_6, window_bounds = array<i64: 1>}, {transform_indices = @transform_7, window_bounds = array<i64: 1, 16, 836>}]} {
    %c0 = arith.constant 0 : index
    %c0_0 = arith.constant 0 : index
    %c0_1 = arith.constant 0 : index
    %0 = vector.load %arg1[%c0, %c0_0, %c0_1] : memref<1x16x836xbf16, #tpu.memory_space<vmem>>, vector<1x16x836xbf16>
    %1 = vector.shape_cast %0 : vector<1x16x836xbf16> to vector<16x836xbf16>
    %2 = arith.extf %1 : vector<16x836xbf16> to vector<16x836xf32>
    %c0_2 = arith.constant 0 : index
    %c0_3 = arith.constant 0 : index
    %3 = vector.load %arg3[%c0_2, %c0_3] : memref<16x1xf32, #tpu.memory_space<vmem>>, vector<16x1xf32>
    %4 = vector.broadcast %3 : vector<16x1xf32> to vector<16x836xf32>
    %5 = arith.addf %2, %4 : vector<16x836xf32>
    %cst = arith.constant dense<0xFF800000> : vector<836xf32>
    %6 = vector.multi_reduction <maximumf>, %5, %cst [0] : vector<16x836xf32> to vector<836xf32>
    %7 = vector.shape_cast %6 : vector<836xf32> to vector<1x836xf32>
    %8 = vector.broadcast %7 : vector<1x836xf32> to vector<16x836xf32>
    %9 = arith.subf %5, %8 : vector<16x836xf32>
    %10 = math.exp %9 : vector<16x836xf32>
    %cst_4 = arith.constant dense<0.000000e+00> : vector<836xf32>
    %11 = vector.multi_reduction <add>, %10, %cst_4 [0] : vector<16x836xf32> to vector<836xf32>
    %12 = vector.shape_cast %11 : vector<836xf32> to vector<1x836xf32>
    %13 = tpu.reciprocal %12 : vector<1x836xf32> -> vector<1x836xf32>
    %14 = vector.broadcast %13 : vector<1x836xf32> to vector<16x836xf32>
    %15 = arith.mulf %10, %14 : vector<16x836xf32>
    %c0_5 = arith.constant 0 : index
    %c0_6 = arith.constant 0 : index
    %c0_7 = arith.constant 0 : index
    %16 = vector.load %arg2[%c0_5, %c0_6, %c0_7] : memref<1x16x836xbf16, #tpu.memory_space<vmem>>, vector<1x16x836xbf16>
    %17 = vector.shape_cast %16 : vector<1x16x836xbf16> to vector<16x836xbf16>
    %18 = arith.extf %17 : vector<16x836xbf16> to vector<16x836xf32>
    %19 = arith.mulf %15, %18 : vector<16x836xf32>
    %20 = arith.truncf %19 : vector<16x836xf32> to vector<16x836xbf16>
    %c0_8 = arith.constant 0 : index
    %c0_9 = arith.constant 0 : index
    %21 = vector.load %arg10[%c0_8, %c0_9] : memref<16x836xbf16, #tpu.memory_space<vmem>>, vector<16x836xbf16>
    tpu.vector_store %arg10[%c0_8, %c0_9], %20 {strides = array<i32>} : memref<16x836xbf16, #tpu.memory_space<vmem>>, vector<16x836xbf16>,
    %c0_10 = arith.constant 0 : index
    %c0_11 = arith.constant 0 : index
    %22 = vector.load %arg4[%c0_10, %c0_11] : memref<16x144xbf16, #tpu.memory_space<vmem>>, vector<16x144xbf16>
    %c0_12 = arith.constant 0 : index
    %c0_13 = arith.constant 0 : index
    %23 = vector.load %arg5[%c0_12, %c0_13] : memref<16x1xf32, #tpu.memory_space<vmem>>, vector<16x1xf32>
    %c0_14 = arith.constant 0 : index
    %24 = memref.load %arg7[%c0_14] : memref<1xf32, #tpu.memory_space<smem>>
    %c0_15 = arith.constant 0 : index
    %c237 = arith.constant 237 : index
    %25 = vector.load %arg10[%c0_15, %c237] : memref<16x836xbf16, #tpu.memory_space<vmem>>, vector<16x384xbf16>
    %c0_16 = arith.constant 0 : index
    %c0_17 = arith.constant 0 : index
    %26 = vector.load %arg9[%c0_16, %c0_17] : memref<144x384xbf16, #tpu.memory_space<vmem>>, vector<16x384xbf16>
    tpu.vector_store %arg9[%c0_16, %c0_17], %25 {strides = array<i32>} : memref<144x384xbf16, #tpu.memory_space<vmem>>, vector<16x384xbf16>,
    %c0_18 = arith.constant 0 : index
    %c238 = arith.constant 238 : index
    %27 = vector.load %arg10[%c0_18, %c238] : memref<16x836xbf16, #tpu.memory_space<vmem>>, vector<16x384xbf16>
    %c16 = arith.constant 16 : index
    %c0_19 = arith.constant 0 : index
    %28 = vector.load %arg9[%c16, %c0_19] : memref<144x384xbf16, #tpu.memory_space<vmem>>, vector<16x384xbf16>
    tpu.vector_store %arg9[%c16, %c0_19], %27 {strides = array<i32>} : memref<144x384xbf16, #tpu.memory_space<vmem>>, vector<16x384xbf16>,
    %c0_20 = arith.constant 0 : index
    %c239 = arith.constant 239 : index
    %29 = vector.load %arg10[%c0_20, %c239] : memref<16x836xbf16, #tpu.memory_space<vmem>>, vector<16x384xbf16>
    %c32 = arith.constant 32 : index
    %c0_21 = arith.constant 0 : index
    %30 = vector.load %arg9[%c32, %c0_21] : memref<144x384xbf16, #tpu.memory_space<vmem>>, vector<16x384xbf16>
    tpu.vector_store %arg9[%c32, %c0_21], %29 {strides = array<i32>} : memref<144x384xbf16, #tpu.memory_space<vmem>>, vector<16x384xbf16>,
    %c0_22 = arith.constant 0 : index
    %c255 = arith.constant 255 : index
    %31 = vector.load %arg10[%c0_22, %c255] : memref<16x836xbf16, #tpu.memory_space<vmem>>, vector<16x384xbf16>
    %c48 = arith.constant 48 : index
    %c0_23 = arith.constant 0 : index
    %32 = vector.load %arg9[%c48, %c0_23] : memref<144x384xbf16, #tpu.memory_space<vmem>>, vector<16x384xbf16>
    tpu.vector_store %arg9[%c48, %c0_23], %31 {strides = array<i32>} : memref<144x384xbf16, #tpu.memory_space<vmem>>, vector<16x384xbf16>,
    %c0_24 = arith.constant 0 : index
    %c256 = arith.constant 256 : index
    %33 = vector.load %arg10[%c0_24, %c256] : memref<16x836xbf16, #tpu.memory_space<vmem>>, vector<16x384xbf16>
    %c64 = arith.constant 64 : index
    %c0_25 = arith.constant 0 : index
    %34 = vector.load %arg9[%c64, %c0_25] : memref<144x384xbf16, #tpu.memory_space<vmem>>, vector<16x384xbf16>
    tpu.vector_store %arg9[%c64, %c0_25], %33 {strides = array<i32>} : memref<144x384xbf16, #tpu.memory_space<vmem>>, vector<16x384xbf16>,
    %c0_26 = arith.constant 0 : index
    %c257 = arith.constant 257 : index
    %35 = vector.load %arg10[%c0_26, %c257] : memref<16x836xbf16, #tpu.memory_space<vmem>>, vector<16x384xbf16>
    %c80 = arith.constant 80 : index
    %c0_27 = arith.constant 0 : index
    %36 = vector.load %arg9[%c80, %c0_27] : memref<144x384xbf16, #tpu.memory_space<vmem>>, vector<16x384xbf16>
    tpu.vector_store %arg9[%c80, %c0_27], %35 {strides = array<i32>} : memref<144x384xbf16, #tpu.memory_space<vmem>>, vector<16x384xbf16>,
    %c0_28 = arith.constant 0 : index
    %c273 = arith.constant 273 : index
    %37 = vector.load %arg10[%c0_28, %c273] : memref<16x836xbf16, #tpu.memory_space<vmem>>, vector<16x384xbf16>
    %c96 = arith.constant 96 : index
    %c0_29 = arith.constant 0 : index
    %38 = vector.load %arg9[%c96, %c0_29] : memref<144x384xbf16, #tpu.memory_space<vmem>>, vector<16x384xbf16>
    tpu.vector_store %arg9[%c96, %c0_29], %37 {strides = array<i32>} : memref<144x384xbf16, #tpu.memory_space<vmem>>, vector<16x384xbf16>,
    %c0_30 = arith.constant 0 : index
    %c274 = arith.constant 274 : index
    %39 = vector.load %arg10[%c0_30, %c274] : memref<16x836xbf16, #tpu.memory_space<vmem>>, vector<16x384xbf16>
    %c112 = arith.constant 112 : index
    %c0_31 = arith.constant 0 : index
    %40 = vector.load %arg9[%c112, %c0_31] : memref<144x384xbf16, #tpu.memory_space<vmem>>, vector<16x384xbf16>
    tpu.vector_store %arg9[%c112, %c0_31], %39 {strides = array<i32>} : memref<144x384xbf16, #tpu.memory_space<vmem>>, vector<16x384xbf16>,
    %c0_32 = arith.constant 0 : index
    %c275 = arith.constant 275 : index
    %41 = vector.load %arg10[%c0_32, %c275] : memref<16x836xbf16, #tpu.memory_space<vmem>>, vector<16x384xbf16>
    %c128 = arith.constant 128 : index
    %c0_33 = arith.constant 0 : index
    %42 = vector.load %arg9[%c128, %c0_33] : memref<144x384xbf16, #tpu.memory_space<vmem>>, vector<16x384xbf16>
    tpu.vector_store %arg9[%c128, %c0_33], %41 {strides = array<i32>} : memref<144x384xbf16, #tpu.memory_space<vmem>>, vector<16x384xbf16>,
    %c0_34 = arith.constant 0 : index
    %c0_35 = arith.constant 0 : index
    %43 = vector.load %arg9[%c0_34, %c0_35] : memref<144x384xbf16, #tpu.memory_space<vmem>>, vector<144x384xbf16>
    %cst_36 = arith.constant dense<0.000000e+00> : vector<16x384xf32>
    %44 = tpu.matmul %22, %43, %cst_36 {dimension_numbers = #tpu.dot_dimension_numbers<[1], [0], [0], [1], [0, 0, 1, 1], [], []>} : vector<16x144xbf16>, vector<144x384xbf16>, vector<16x384xf32> -> vector<16x384xf32>
    %45 = vector.broadcast %23 : vector<16x1xf32> to vector<16x384xf32>
    %46 = arith.addf %44, %45 : vector<16x384xf32>
    %cst_37 = arith.constant 0.000000e+00 : f32
    %47 = vector.broadcast %cst_37 : f32 to vector<16x384xf32>
    %48 = arith.cmpf oge, %46, %47 : vector<16x384xf32>
    %49 = vector.broadcast %24 : f32 to vector<16x384xf32>
    %50 = arith.mulf %49, %46 : vector<16x384xf32>
    %51 = arith.select %48, %46, %50 : vector<16x384xi1>, vector<16x384xf32>
    %c0_38 = arith.constant 0 : index
    %c0_39 = arith.constant 0 : index
    %c256_40 = arith.constant 256 : index
    %52 = vector.load %arg2[%c0_38, %c0_39, %c256_40] : memref<1x16x836xbf16, #tpu.memory_space<vmem>>, vector<1x16x384xbf16>
    %53 = vector.shape_cast %52 : vector<1x16x384xbf16> to vector<16x384xbf16>
    %54 = arith.extf %53 : vector<16x384xbf16> to vector<16x384xf32>
    %55 = arith.addf %51, %54 : vector<16x384xf32>
    %c0_41 = arith.constant 0 : index
    %c256_42 = arith.constant 256 : index
    %56 = vector.load %arg6[%c0_41, %c256_42] : memref<1x836xbf16, #tpu.memory_space<vmem>>, vector<1x384xbf16>
    %57 = arith.extf %56 : vector<1x384xbf16> to vector<1x384xf32>
    %58 = vector.broadcast %57 : vector<1x384xf32> to vector<16x384xf32>
    %59 = arith.mulf %55, %58 : vector<16x384xf32>
    %60 = arith.truncf %59 : vector<16x384xf32> to vector<16x384xbf16>
    %c0_43 = arith.constant 0 : index
    %c0_44 = arith.constant 0 : index
    %c256_45 = arith.constant 256 : index
    %61 = vector.load %arg8[%c0_43, %c0_44, %c256_45] : memref<1x16x836xbf16, #tpu.memory_space<vmem>>, vector<1x16x384xbf16>
    %62 = vector.shape_cast %61 : vector<1x16x384xbf16> to vector<16x384xbf16>
    %63 = vector.shape_cast %60 : vector<16x384xbf16> to vector<1x16x384xbf16>
    tpu.vector_store %arg8[%c0_43, %c0_44, %c256_45], %63 {strides = array<i32>} : memref<1x16x836xbf16, #tpu.memory_space<vmem>>, vector<1x16x384xbf16>,
    %cst_46 = arith.constant 0.000000e+00 : bf16
    %64 = vector.broadcast %cst_46 : bf16 to vector<16x256xbf16>
    %c0_47 = arith.constant 0 : index
    %c0_48 = arith.constant 0 : index
    %c0_49 = arith.constant 0 : index
    %65 = vector.load %arg8[%c0_47, %c0_48, %c0_49] : memref<1x16x836xbf16, #tpu.memory_space<vmem>>, vector<1x16x256xbf16>
    %66 = vector.shape_cast %65 : vector<1x16x256xbf16> to vector<16x256xbf16>
    %67 = vector.shape_cast %64 : vector<16x256xbf16> to vector<1x16x256xbf16>
    tpu.vector_store %arg8[%c0_47, %c0_48, %c0_49], %67 {strides = array<i32>} : memref<1x16x836xbf16, #tpu.memory_space<vmem>>, vector<1x16x256xbf16>,
    %cst_50 = arith.constant 0.000000e+00 : bf16
    %68 = vector.broadcast %cst_50 : bf16 to vector<16x196xbf16>
    %c0_51 = arith.constant 0 : index
    %c0_52 = arith.constant 0 : index
    %c640 = arith.constant 640 : index
    %69 = vector.load %arg8[%c0_51, %c0_52, %c640] : memref<1x16x836xbf16, #tpu.memory_space<vmem>>, vector<1x16x196xbf16>
    %70 = vector.shape_cast %69 : vector<1x16x196xbf16> to vector<16x196xbf16>
    %71 = vector.shape_cast %68 : vector<16x196xbf16> to vector<1x16x196xbf16>
    tpu.vector_store %arg8[%c0_51, %c0_52, %c640], %71 {strides = array<i32>} : memref<1x16x836xbf16, #tpu.memory_space<vmem>>, vector<1x16x196xbf16>,
    return
  }
  func.func @transform_0(%arg0: i32) -> (i32, i32, i32) {
    %c0_i32 = arith.constant 0 : i32
    %c0_i32_0 = arith.constant 0 : i32
    %c0_i32_1 = arith.constant 0 : i32
    return %arg0, %c0_i32, %c0_i32_0 : i32, i32, i32
  }
  func.func @transform_1(%arg0: i32) -> (i32, i32, i32) {
    %c0_i32 = arith.constant 0 : i32
    %c0_i32_0 = arith.constant 0 : i32
    %c0_i32_1 = arith.constant 0 : i32
    return %arg0, %c0_i32, %c0_i32_0 : i32, i32, i32
  }
  func.func @transform_2(%arg0: i32) -> (i32, i32) {
    %c0_i32 = arith.constant 0 : i32
    %c0_i32_0 = arith.constant 0 : i32
    %c0_i32_1 = arith.constant 0 : i32
    return %c0_i32, %c0_i32_0 : i32, i32
  }
  func.func @transform_3(%arg0: i32) -> (i32, i32) {
    %c0_i32 = arith.constant 0 : i32
    %c0_i32_0 = arith.constant 0 : i32
    %c0_i32_1 = arith.constant 0 : i32
    return %c0_i32, %c0_i32_0 : i32, i32
  }
  func.func @transform_4(%arg0: i32) -> (i32, i32) {
    %c0_i32 = arith.constant 0 : i32
    %c0_i32_0 = arith.constant 0 : i32
    %c0_i32_1 = arith.constant 0 : i32
    return %c0_i32, %c0_i32_0 : i32, i32
  }
  func.func @transform_5(%arg0: i32) -> (i32, i32) {
    %c0_i32 = arith.constant 0 : i32
    %c0_i32_0 = arith.constant 0 : i32
    %c0_i32_1 = arith.constant 0 : i32
    return %c0_i32, %c0_i32_0 : i32, i32
  }
  func.func @transform_6(%arg0: i32) -> i32 {
    %c0_i32 = arith.constant 0 : i32
    %c0_i32_0 = arith.constant 0 : i32
    return %c0_i32 : i32
  }
  func.func @transform_7(%arg0: i32) -> (i32, i32, i32) {
    %c0_i32 = arith.constant 0 : i32
    %c0_i32_0 = arith.constant 0 : i32
    %c0_i32_1 = arith.constant 0 : i32
    return %arg0, %c0_i32, %c0_i32_0 : i32, i32, i32
  }
}

module attributes {stable_mosaic.version = 11 : i64} {
  func.func @_conv_flat_kernel(%arg0: i32, %arg1: memref<1x16x836xbf16, #tpu.memory_space<vmem>>, %arg2: memref<16x144xbf16, #tpu.memory_space<vmem>>, %arg3: memref<16x1xf32, #tpu.memory_space<vmem>>, %arg4: memref<1x836xbf16, #tpu.memory_space<vmem>>, %arg5: memref<1x16x836xbf16, #tpu.memory_space<vmem>>, %arg6: memref<1x16x836xbf16, #tpu.memory_space<vmem>>, %arg7: memref<144x384xbf16, #tpu.memory_space<vmem>>) attributes {dimension_semantics = [#tpu.dimension_semantics<parallel>], iteration_bounds = array<i64: 2>, scalar_prefetch = 0 : i64, scratch_operands = 1 : i64, tpu.core_type = #tpu.core_type<tc>, window_params = [{transform_indices = @transform_0, window_bounds = array<i64: 1, 16, 836>}, {pipeline_mode = #tpu.pipeline_mode<synchronous>, transform_indices = @transform_1, window_bounds = array<i64: 16, 144>}, {pipeline_mode = #tpu.pipeline_mode<synchronous>, transform_indices = @transform_2, window_bounds = array<i64: 16, 1>}, {pipeline_mode = #tpu.pipeline_mode<synchronous>, transform_indices = @transform_3, window_bounds = array<i64: 1, 836>}, {transform_indices = @transform_4, window_bounds = array<i64: 1, 16, 836>}, {transform_indices = @transform_5, window_bounds = array<i64: 1, 16, 836>}]} {
    %c0 = arith.constant 0 : index
    %c0_0 = arith.constant 0 : index
    %0 = vector.load %arg2[%c0, %c0_0] : memref<16x144xbf16, #tpu.memory_space<vmem>>, vector<16x144xbf16>
    %c0_1 = arith.constant 0 : index
    %c0_2 = arith.constant 0 : index
    %1 = vector.load %arg3[%c0_1, %c0_2] : memref<16x1xf32, #tpu.memory_space<vmem>>, vector<16x1xf32>
    %c0_3 = arith.constant 0 : index
    %c0_4 = arith.constant 0 : index
    %c237 = arith.constant 237 : index
    %2 = vector.load %arg1[%c0_3, %c0_4, %c237] : memref<1x16x836xbf16, #tpu.memory_space<vmem>>, vector<1x16x384xbf16>
    %3 = vector.shape_cast %2 : vector<1x16x384xbf16> to vector<16x384xbf16>
    %c0_5 = arith.constant 0 : index
    %c0_6 = arith.constant 0 : index
    %4 = vector.load %arg7[%c0_5, %c0_6] : memref<144x384xbf16, #tpu.memory_space<vmem>>, vector<16x384xbf16>
    tpu.vector_store %arg7[%c0_5, %c0_6], %3 {strides = array<i32>} : memref<144x384xbf16, #tpu.memory_space<vmem>>, vector<16x384xbf16>,
    %c0_7 = arith.constant 0 : index
    %c0_8 = arith.constant 0 : index
    %c238 = arith.constant 238 : index
    %5 = vector.load %arg1[%c0_7, %c0_8, %c238] : memref<1x16x836xbf16, #tpu.memory_space<vmem>>, vector<1x16x384xbf16>
    %6 = vector.shape_cast %5 : vector<1x16x384xbf16> to vector<16x384xbf16>
    %c16 = arith.constant 16 : index
    %c0_9 = arith.constant 0 : index
    %7 = vector.load %arg7[%c16, %c0_9] : memref<144x384xbf16, #tpu.memory_space<vmem>>, vector<16x384xbf16>
    tpu.vector_store %arg7[%c16, %c0_9], %6 {strides = array<i32>} : memref<144x384xbf16, #tpu.memory_space<vmem>>, vector<16x384xbf16>,
    %c0_10 = arith.constant 0 : index
    %c0_11 = arith.constant 0 : index
    %c239 = arith.constant 239 : index
    %8 = vector.load %arg1[%c0_10, %c0_11, %c239] : memref<1x16x836xbf16, #tpu.memory_space<vmem>>, vector<1x16x384xbf16>
    %9 = vector.shape_cast %8 : vector<1x16x384xbf16> to vector<16x384xbf16>
    %c32 = arith.constant 32 : index
    %c0_12 = arith.constant 0 : index
    %10 = vector.load %arg7[%c32, %c0_12] : memref<144x384xbf16, #tpu.memory_space<vmem>>, vector<16x384xbf16>
    tpu.vector_store %arg7[%c32, %c0_12], %9 {strides = array<i32>} : memref<144x384xbf16, #tpu.memory_space<vmem>>, vector<16x384xbf16>,
    %c0_13 = arith.constant 0 : index
    %c0_14 = arith.constant 0 : index
    %c255 = arith.constant 255 : index
    %11 = vector.load %arg1[%c0_13, %c0_14, %c255] : memref<1x16x836xbf16, #tpu.memory_space<vmem>>, vector<1x16x384xbf16>
    %12 = vector.shape_cast %11 : vector<1x16x384xbf16> to vector<16x384xbf16>
    %c48 = arith.constant 48 : index
    %c0_15 = arith.constant 0 : index
    %13 = vector.load %arg7[%c48, %c0_15] : memref<144x384xbf16, #tpu.memory_space<vmem>>, vector<16x384xbf16>
    tpu.vector_store %arg7[%c48, %c0_15], %12 {strides = array<i32>} : memref<144x384xbf16, #tpu.memory_space<vmem>>, vector<16x384xbf16>,
    %c0_16 = arith.constant 0 : index
    %c0_17 = arith.constant 0 : index
    %c256 = arith.constant 256 : index
    %14 = vector.load %arg1[%c0_16, %c0_17, %c256] : memref<1x16x836xbf16, #tpu.memory_space<vmem>>, vector<1x16x384xbf16>
    %15 = vector.shape_cast %14 : vector<1x16x384xbf16> to vector<16x384xbf16>
    %c64 = arith.constant 64 : index
    %c0_18 = arith.constant 0 : index
    %16 = vector.load %arg7[%c64, %c0_18] : memref<144x384xbf16, #tpu.memory_space<vmem>>, vector<16x384xbf16>
    tpu.vector_store %arg7[%c64, %c0_18], %15 {strides = array<i32>} : memref<144x384xbf16, #tpu.memory_space<vmem>>, vector<16x384xbf16>,
    %c0_19 = arith.constant 0 : index
    %c0_20 = arith.constant 0 : index
    %c257 = arith.constant 257 : index
    %17 = vector.load %arg1[%c0_19, %c0_20, %c257] : memref<1x16x836xbf16, #tpu.memory_space<vmem>>, vector<1x16x384xbf16>
    %18 = vector.shape_cast %17 : vector<1x16x384xbf16> to vector<16x384xbf16>
    %c80 = arith.constant 80 : index
    %c0_21 = arith.constant 0 : index
    %19 = vector.load %arg7[%c80, %c0_21] : memref<144x384xbf16, #tpu.memory_space<vmem>>, vector<16x384xbf16>
    tpu.vector_store %arg7[%c80, %c0_21], %18 {strides = array<i32>} : memref<144x384xbf16, #tpu.memory_space<vmem>>, vector<16x384xbf16>,
    %c0_22 = arith.constant 0 : index
    %c0_23 = arith.constant 0 : index
    %c273 = arith.constant 273 : index
    %20 = vector.load %arg1[%c0_22, %c0_23, %c273] : memref<1x16x836xbf16, #tpu.memory_space<vmem>>, vector<1x16x384xbf16>
    %21 = vector.shape_cast %20 : vector<1x16x384xbf16> to vector<16x384xbf16>
    %c96 = arith.constant 96 : index
    %c0_24 = arith.constant 0 : index
    %22 = vector.load %arg7[%c96, %c0_24] : memref<144x384xbf16, #tpu.memory_space<vmem>>, vector<16x384xbf16>
    tpu.vector_store %arg7[%c96, %c0_24], %21 {strides = array<i32>} : memref<144x384xbf16, #tpu.memory_space<vmem>>, vector<16x384xbf16>,
    %c0_25 = arith.constant 0 : index
    %c0_26 = arith.constant 0 : index
    %c274 = arith.constant 274 : index
    %23 = vector.load %arg1[%c0_25, %c0_26, %c274] : memref<1x16x836xbf16, #tpu.memory_space<vmem>>, vector<1x16x384xbf16>
    %24 = vector.shape_cast %23 : vector<1x16x384xbf16> to vector<16x384xbf16>
    %c112 = arith.constant 112 : index
    %c0_27 = arith.constant 0 : index
    %25 = vector.load %arg7[%c112, %c0_27] : memref<144x384xbf16, #tpu.memory_space<vmem>>, vector<16x384xbf16>
    tpu.vector_store %arg7[%c112, %c0_27], %24 {strides = array<i32>} : memref<144x384xbf16, #tpu.memory_space<vmem>>, vector<16x384xbf16>,
    %c0_28 = arith.constant 0 : index
    %c0_29 = arith.constant 0 : index
    %c275 = arith.constant 275 : index
    %26 = vector.load %arg1[%c0_28, %c0_29, %c275] : memref<1x16x836xbf16, #tpu.memory_space<vmem>>, vector<1x16x384xbf16>
    %27 = vector.shape_cast %26 : vector<1x16x384xbf16> to vector<16x384xbf16>
    %c128 = arith.constant 128 : index
    %c0_30 = arith.constant 0 : index
    %28 = vector.load %arg7[%c128, %c0_30] : memref<144x384xbf16, #tpu.memory_space<vmem>>, vector<16x384xbf16>
    tpu.vector_store %arg7[%c128, %c0_30], %27 {strides = array<i32>} : memref<144x384xbf16, #tpu.memory_space<vmem>>, vector<16x384xbf16>,
    %c0_31 = arith.constant 0 : index
    %c0_32 = arith.constant 0 : index
    %29 = vector.load %arg7[%c0_31, %c0_32] : memref<144x384xbf16, #tpu.memory_space<vmem>>, vector<144x384xbf16>
    %cst = arith.constant dense<0.000000e+00> : vector<16x384xf32>
    %30 = tpu.matmul %0, %29, %cst {dimension_numbers = #tpu.dot_dimension_numbers<[1], [0], [0], [1], [0, 0, 1, 1], [], []>} : vector<16x144xbf16>, vector<144x384xbf16>, vector<16x384xf32> -> vector<16x384xf32>
    %31 = vector.broadcast %1 : vector<16x1xf32> to vector<16x384xf32>
    %32 = arith.addf %30, %31 : vector<16x384xf32>
    %c0_33 = arith.constant 0 : index
    %c0_34 = arith.constant 0 : index
    %c256_35 = arith.constant 256 : index
    %33 = vector.load %arg5[%c0_33, %c0_34, %c256_35] : memref<1x16x836xbf16, #tpu.memory_space<vmem>>, vector<1x16x384xbf16>
    %34 = vector.shape_cast %33 : vector<1x16x384xbf16> to vector<16x384xbf16>
    %35 = arith.extf %34 : vector<16x384xbf16> to vector<16x384xf32>
    %36 = arith.addf %32, %35 : vector<16x384xf32>
    %c0_36 = arith.constant 0 : index
    %c256_37 = arith.constant 256 : index
    %37 = vector.load %arg4[%c0_36, %c256_37] : memref<1x836xbf16, #tpu.memory_space<vmem>>, vector<1x384xbf16>
    %38 = arith.extf %37 : vector<1x384xbf16> to vector<1x384xf32>
    %39 = vector.broadcast %38 : vector<1x384xf32> to vector<16x384xf32>
    %40 = arith.mulf %36, %39 : vector<16x384xf32>
    %41 = arith.truncf %40 : vector<16x384xf32> to vector<16x384xbf16>
    %c0_38 = arith.constant 0 : index
    %c0_39 = arith.constant 0 : index
    %c256_40 = arith.constant 256 : index
    %42 = vector.load %arg6[%c0_38, %c0_39, %c256_40] : memref<1x16x836xbf16, #tpu.memory_space<vmem>>, vector<1x16x384xbf16>
    %43 = vector.shape_cast %42 : vector<1x16x384xbf16> to vector<16x384xbf16>
    %44 = vector.shape_cast %41 : vector<16x384xbf16> to vector<1x16x384xbf16>
    tpu.vector_store %arg6[%c0_38, %c0_39, %c256_40], %44 {strides = array<i32>} : memref<1x16x836xbf16, #tpu.memory_space<vmem>>, vector<1x16x384xbf16>,
    %cst_41 = arith.constant 0.000000e+00 : bf16
    %45 = vector.broadcast %cst_41 : bf16 to vector<16x256xbf16>
    %c0_42 = arith.constant 0 : index
    %c0_43 = arith.constant 0 : index
    %c0_44 = arith.constant 0 : index
    %46 = vector.load %arg6[%c0_42, %c0_43, %c0_44] : memref<1x16x836xbf16, #tpu.memory_space<vmem>>, vector<1x16x256xbf16>
    %47 = vector.shape_cast %46 : vector<1x16x256xbf16> to vector<16x256xbf16>
    %48 = vector.shape_cast %45 : vector<16x256xbf16> to vector<1x16x256xbf16>
    tpu.vector_store %arg6[%c0_42, %c0_43, %c0_44], %48 {strides = array<i32>} : memref<1x16x836xbf16, #tpu.memory_space<vmem>>, vector<1x16x256xbf16>,
    %cst_45 = arith.constant 0.000000e+00 : bf16
    %49 = vector.broadcast %cst_45 : bf16 to vector<16x196xbf16>
    %c0_46 = arith.constant 0 : index
    %c0_47 = arith.constant 0 : index
    %c640 = arith.constant 640 : index
    %50 = vector.load %arg6[%c0_46, %c0_47, %c640] : memref<1x16x836xbf16, #tpu.memory_space<vmem>>, vector<1x16x196xbf16>
    %51 = vector.shape_cast %50 : vector<1x16x196xbf16> to vector<16x196xbf16>
    %52 = vector.shape_cast %49 : vector<16x196xbf16> to vector<1x16x196xbf16>
    tpu.vector_store %arg6[%c0_46, %c0_47, %c640], %52 {strides = array<i32>} : memref<1x16x836xbf16, #tpu.memory_space<vmem>>, vector<1x16x196xbf16>,
    return
  }
  func.func @transform_0(%arg0: i32) -> (i32, i32, i32) {
    %c0_i32 = arith.constant 0 : i32
    %c0_i32_0 = arith.constant 0 : i32
    %c0_i32_1 = arith.constant 0 : i32
    return %arg0, %c0_i32, %c0_i32_0 : i32, i32, i32
  }
  func.func @transform_1(%arg0: i32) -> (i32, i32) {
    %c0_i32 = arith.constant 0 : i32
    %c0_i32_0 = arith.constant 0 : i32
    %c0_i32_1 = arith.constant 0 : i32
    return %c0_i32, %c0_i32_0 : i32, i32
  }
  func.func @transform_2(%arg0: i32) -> (i32, i32) {
    %c0_i32 = arith.constant 0 : i32
    %c0_i32_0 = arith.constant 0 : i32
    %c0_i32_1 = arith.constant 0 : i32
    return %c0_i32, %c0_i32_0 : i32, i32
  }
  func.func @transform_3(%arg0: i32) -> (i32, i32) {
    %c0_i32 = arith.constant 0 : i32
    %c0_i32_0 = arith.constant 0 : i32
    %c0_i32_1 = arith.constant 0 : i32
    return %c0_i32, %c0_i32_0 : i32, i32
  }
  func.func @transform_4(%arg0: i32) -> (i32, i32, i32) {
    %c0_i32 = arith.constant 0 : i32
    %c0_i32_0 = arith.constant 0 : i32
    %c0_i32_1 = arith.constant 0 : i32
    return %arg0, %c0_i32, %c0_i32_0 : i32, i32, i32
  }
  func.func @transform_5(%arg0: i32) -> (i32, i32, i32) {
    %c0_i32 = arith.constant 0 : i32
    %c0_i32_0 = arith.constant 0 : i32
    %c0_i32_1 = arith.constant 0 : i32
    return %arg0, %c0_i32, %c0_i32_0 : i32, i32, i32
  }
}

module attributes {stable_mosaic.version = 11 : i64} {
  func.func @_conv_flat_kernel(%arg0: i32, %arg1: memref<1x16x836xbf16, #tpu.memory_space<vmem>>, %arg2: memref<64x144xbf16, #tpu.memory_space<vmem>>, %arg3: memref<64x1xf32, #tpu.memory_space<vmem>>, %arg4: memref<1x836xbf16, #tpu.memory_space<vmem>>, %arg5: memref<1xf32, #tpu.memory_space<smem>>, %arg6: memref<1x64x836xbf16, #tpu.memory_space<vmem>>, %arg7: memref<144x384xbf16, #tpu.memory_space<vmem>>) attributes {dimension_semantics = [#tpu.dimension_semantics<parallel>], iteration_bounds = array<i64: 2>, scalar_prefetch = 0 : i64, scratch_operands = 1 : i64, tpu.core_type = #tpu.core_type<tc>, window_params = [{transform_indices = @transform_0, window_bounds = array<i64: 1, 16, 836>}, {pipeline_mode = #tpu.pipeline_mode<synchronous>, transform_indices = @transform_1, window_bounds = array<i64: 64, 144>}, {pipeline_mode = #tpu.pipeline_mode<synchronous>, transform_indices = @transform_2, window_bounds = array<i64: 64, 1>}, {pipeline_mode = #tpu.pipeline_mode<synchronous>, transform_indices = @transform_3, window_bounds = array<i64: 1, 836>}, {transform_indices = @transform_4, window_bounds = array<i64: 1>}, {transform_indices = @transform_5, window_bounds = array<i64: 1, 64, 836>}]} {
    %c0 = arith.constant 0 : index
    %c0_0 = arith.constant 0 : index
    %0 = vector.load %arg2[%c0, %c0_0] : memref<64x144xbf16, #tpu.memory_space<vmem>>, vector<64x144xbf16>
    %c0_1 = arith.constant 0 : index
    %c0_2 = arith.constant 0 : index
    %1 = vector.load %arg3[%c0_1, %c0_2] : memref<64x1xf32, #tpu.memory_space<vmem>>, vector<64x1xf32>
    %c0_3 = arith.constant 0 : index
    %2 = memref.load %arg5[%c0_3] : memref<1xf32, #tpu.memory_space<smem>>
    %c0_4 = arith.constant 0 : index
    %c0_5 = arith.constant 0 : index
    %c237 = arith.constant 237 : index
    %3 = vector.load %arg1[%c0_4, %c0_5, %c237] : memref<1x16x836xbf16, #tpu.memory_space<vmem>>, vector<1x16x384xbf16>
    %4 = vector.shape_cast %3 : vector<1x16x384xbf16> to vector<16x384xbf16>
    %c0_6 = arith.constant 0 : index
    %c0_7 = arith.constant 0 : index
    %5 = vector.load %arg7[%c0_6, %c0_7] : memref<144x384xbf16, #tpu.memory_space<vmem>>, vector<16x384xbf16>
    tpu.vector_store %arg7[%c0_6, %c0_7], %4 {strides = array<i32>} : memref<144x384xbf16, #tpu.memory_space<vmem>>, vector<16x384xbf16>,
    %c0_8 = arith.constant 0 : index
    %c0_9 = arith.constant 0 : index
    %c238 = arith.constant 238 : index
    %6 = vector.load %arg1[%c0_8, %c0_9, %c238] : memref<1x16x836xbf16, #tpu.memory_space<vmem>>, vector<1x16x384xbf16>
    %7 = vector.shape_cast %6 : vector<1x16x384xbf16> to vector<16x384xbf16>
    %c16 = arith.constant 16 : index
    %c0_10 = arith.constant 0 : index
    %8 = vector.load %arg7[%c16, %c0_10] : memref<144x384xbf16, #tpu.memory_space<vmem>>, vector<16x384xbf16>
    tpu.vector_store %arg7[%c16, %c0_10], %7 {strides = array<i32>} : memref<144x384xbf16, #tpu.memory_space<vmem>>, vector<16x384xbf16>,
    %c0_11 = arith.constant 0 : index
    %c0_12 = arith.constant 0 : index
    %c239 = arith.constant 239 : index
    %9 = vector.load %arg1[%c0_11, %c0_12, %c239] : memref<1x16x836xbf16, #tpu.memory_space<vmem>>, vector<1x16x384xbf16>
    %10 = vector.shape_cast %9 : vector<1x16x384xbf16> to vector<16x384xbf16>
    %c32 = arith.constant 32 : index
    %c0_13 = arith.constant 0 : index
    %11 = vector.load %arg7[%c32, %c0_13] : memref<144x384xbf16, #tpu.memory_space<vmem>>, vector<16x384xbf16>
    tpu.vector_store %arg7[%c32, %c0_13], %10 {strides = array<i32>} : memref<144x384xbf16, #tpu.memory_space<vmem>>, vector<16x384xbf16>,
    %c0_14 = arith.constant 0 : index
    %c0_15 = arith.constant 0 : index
    %c255 = arith.constant 255 : index
    %12 = vector.load %arg1[%c0_14, %c0_15, %c255] : memref<1x16x836xbf16, #tpu.memory_space<vmem>>, vector<1x16x384xbf16>
    %13 = vector.shape_cast %12 : vector<1x16x384xbf16> to vector<16x384xbf16>
    %c48 = arith.constant 48 : index
    %c0_16 = arith.constant 0 : index
    %14 = vector.load %arg7[%c48, %c0_16] : memref<144x384xbf16, #tpu.memory_space<vmem>>, vector<16x384xbf16>
    tpu.vector_store %arg7[%c48, %c0_16], %13 {strides = array<i32>} : memref<144x384xbf16, #tpu.memory_space<vmem>>, vector<16x384xbf16>,
    %c0_17 = arith.constant 0 : index
    %c0_18 = arith.constant 0 : index
    %c256 = arith.constant 256 : index
    %15 = vector.load %arg1[%c0_17, %c0_18, %c256] : memref<1x16x836xbf16, #tpu.memory_space<vmem>>, vector<1x16x384xbf16>
    %16 = vector.shape_cast %15 : vector<1x16x384xbf16> to vector<16x384xbf16>
    %c64 = arith.constant 64 : index
    %c0_19 = arith.constant 0 : index
    %17 = vector.load %arg7[%c64, %c0_19] : memref<144x384xbf16, #tpu.memory_space<vmem>>, vector<16x384xbf16>
    tpu.vector_store %arg7[%c64, %c0_19], %16 {strides = array<i32>} : memref<144x384xbf16, #tpu.memory_space<vmem>>, vector<16x384xbf16>,
    %c0_20 = arith.constant 0 : index
    %c0_21 = arith.constant 0 : index
    %c257 = arith.constant 257 : index
    %18 = vector.load %arg1[%c0_20, %c0_21, %c257] : memref<1x16x836xbf16, #tpu.memory_space<vmem>>, vector<1x16x384xbf16>
    %19 = vector.shape_cast %18 : vector<1x16x384xbf16> to vector<16x384xbf16>
    %c80 = arith.constant 80 : index
    %c0_22 = arith.constant 0 : index
    %20 = vector.load %arg7[%c80, %c0_22] : memref<144x384xbf16, #tpu.memory_space<vmem>>, vector<16x384xbf16>
    tpu.vector_store %arg7[%c80, %c0_22], %19 {strides = array<i32>} : memref<144x384xbf16, #tpu.memory_space<vmem>>, vector<16x384xbf16>,
    %c0_23 = arith.constant 0 : index
    %c0_24 = arith.constant 0 : index
    %c273 = arith.constant 273 : index
    %21 = vector.load %arg1[%c0_23, %c0_24, %c273] : memref<1x16x836xbf16, #tpu.memory_space<vmem>>, vector<1x16x384xbf16>
    %22 = vector.shape_cast %21 : vector<1x16x384xbf16> to vector<16x384xbf16>
    %c96 = arith.constant 96 : index
    %c0_25 = arith.constant 0 : index
    %23 = vector.load %arg7[%c96, %c0_25] : memref<144x384xbf16, #tpu.memory_space<vmem>>, vector<16x384xbf16>
    tpu.vector_store %arg7[%c96, %c0_25], %22 {strides = array<i32>} : memref<144x384xbf16, #tpu.memory_space<vmem>>, vector<16x384xbf16>,
    %c0_26 = arith.constant 0 : index
    %c0_27 = arith.constant 0 : index
    %c274 = arith.constant 274 : index
    %24 = vector.load %arg1[%c0_26, %c0_27, %c274] : memref<1x16x836xbf16, #tpu.memory_space<vmem>>, vector<1x16x384xbf16>
    %25 = vector.shape_cast %24 : vector<1x16x384xbf16> to vector<16x384xbf16>
    %c112 = arith.constant 112 : index
    %c0_28 = arith.constant 0 : index
    %26 = vector.load %arg7[%c112, %c0_28] : memref<144x384xbf16, #tpu.memory_space<vmem>>, vector<16x384xbf16>
    tpu.vector_store %arg7[%c112, %c0_28], %25 {strides = array<i32>} : memref<144x384xbf16, #tpu.memory_space<vmem>>, vector<16x384xbf16>,
    %c0_29 = arith.constant 0 : index
    %c0_30 = arith.constant 0 : index
    %c275 = arith.constant 275 : index
    %27 = vector.load %arg1[%c0_29, %c0_30, %c275] : memref<1x16x836xbf16, #tpu.memory_space<vmem>>, vector<1x16x384xbf16>
    %28 = vector.shape_cast %27 : vector<1x16x384xbf16> to vector<16x384xbf16>
    %c128 = arith.constant 128 : index
    %c0_31 = arith.constant 0 : index
    %29 = vector.load %arg7[%c128, %c0_31] : memref<144x384xbf16, #tpu.memory_space<vmem>>, vector<16x384xbf16>
    tpu.vector_store %arg7[%c128, %c0_31], %28 {strides = array<i32>} : memref<144x384xbf16, #tpu.memory_space<vmem>>, vector<16x384xbf16>,
    %c0_32 = arith.constant 0 : index
    %c0_33 = arith.constant 0 : index
    %30 = vector.load %arg7[%c0_32, %c0_33] : memref<144x384xbf16, #tpu.memory_space<vmem>>, vector<144x384xbf16>
    %cst = arith.constant dense<0.000000e+00> : vector<64x384xf32>
    %31 = tpu.matmul %0, %30, %cst {dimension_numbers = #tpu.dot_dimension_numbers<[1], [0], [0], [1], [0, 0, 1, 1], [], []>} : vector<64x144xbf16>, vector<144x384xbf16>, vector<64x384xf32> -> vector<64x384xf32>
    %32 = vector.broadcast %1 : vector<64x1xf32> to vector<64x384xf32>
    %33 = arith.addf %31, %32 : vector<64x384xf32>
    %cst_34 = arith.constant 0.000000e+00 : f32
    %34 = vector.broadcast %cst_34 : f32 to vector<64x384xf32>
    %35 = arith.cmpf oge, %33, %34 : vector<64x384xf32>
    %36 = vector.broadcast %2 : f32 to vector<64x384xf32>
    %37 = arith.mulf %36, %33 : vector<64x384xf32>
    %38 = arith.select %35, %33, %37 : vector<64x384xi1>, vector<64x384xf32>
    %c0_35 = arith.constant 0 : index
    %c256_36 = arith.constant 256 : index
    %39 = vector.load %arg4[%c0_35, %c256_36] : memref<1x836xbf16, #tpu.memory_space<vmem>>, vector<1x384xbf16>
    %40 = arith.extf %39 : vector<1x384xbf16> to vector<1x384xf32>
    %41 = vector.broadcast %40 : vector<1x384xf32> to vector<64x384xf32>
    %42 = arith.mulf %38, %41 : vector<64x384xf32>
    %43 = arith.truncf %42 : vector<64x384xf32> to vector<64x384xbf16>
    %c0_37 = arith.constant 0 : index
    %c0_38 = arith.constant 0 : index
    %c256_39 = arith.constant 256 : index
    %44 = vector.load %arg6[%c0_37, %c0_38, %c256_39] : memref<1x64x836xbf16, #tpu.memory_space<vmem>>, vector<1x64x384xbf16>
    %45 = vector.shape_cast %44 : vector<1x64x384xbf16> to vector<64x384xbf16>
    %46 = vector.shape_cast %43 : vector<64x384xbf16> to vector<1x64x384xbf16>
    tpu.vector_store %arg6[%c0_37, %c0_38, %c256_39], %46 {strides = array<i32>} : memref<1x64x836xbf16, #tpu.memory_space<vmem>>, vector<1x64x384xbf16>,
    %cst_40 = arith.constant 0.000000e+00 : bf16
    %47 = vector.broadcast %cst_40 : bf16 to vector<64x256xbf16>
    %c0_41 = arith.constant 0 : index
    %c0_42 = arith.constant 0 : index
    %c0_43 = arith.constant 0 : index
    %48 = vector.load %arg6[%c0_41, %c0_42, %c0_43] : memref<1x64x836xbf16, #tpu.memory_space<vmem>>, vector<1x64x256xbf16>
    %49 = vector.shape_cast %48 : vector<1x64x256xbf16> to vector<64x256xbf16>
    %50 = vector.shape_cast %47 : vector<64x256xbf16> to vector<1x64x256xbf16>
    tpu.vector_store %arg6[%c0_41, %c0_42, %c0_43], %50 {strides = array<i32>} : memref<1x64x836xbf16, #tpu.memory_space<vmem>>, vector<1x64x256xbf16>,
    %cst_44 = arith.constant 0.000000e+00 : bf16
    %51 = vector.broadcast %cst_44 : bf16 to vector<64x196xbf16>
    %c0_45 = arith.constant 0 : index
    %c0_46 = arith.constant 0 : index
    %c640 = arith.constant 640 : index
    %52 = vector.load %arg6[%c0_45, %c0_46, %c640] : memref<1x64x836xbf16, #tpu.memory_space<vmem>>, vector<1x64x196xbf16>
    %53 = vector.shape_cast %52 : vector<1x64x196xbf16> to vector<64x196xbf16>
    %54 = vector.shape_cast %51 : vector<64x196xbf16> to vector<1x64x196xbf16>
    tpu.vector_store %arg6[%c0_45, %c0_46, %c640], %54 {strides = array<i32>} : memref<1x64x836xbf16, #tpu.memory_space<vmem>>, vector<1x64x196xbf16>,
    return
  }
  func.func @transform_0(%arg0: i32) -> (i32, i32, i32) {
    %c0_i32 = arith.constant 0 : i32
    %c0_i32_0 = arith.constant 0 : i32
    %c0_i32_1 = arith.constant 0 : i32
    return %arg0, %c0_i32, %c0_i32_0 : i32, i32, i32
  }
  func.func @transform_1(%arg0: i32) -> (i32, i32) {
    %c0_i32 = arith.constant 0 : i32
    %c0_i32_0 = arith.constant 0 : i32
    %c0_i32_1 = arith.constant 0 : i32
    return %c0_i32, %c0_i32_0 : i32, i32
  }
  func.func @transform_2(%arg0: i32) -> (i32, i32) {
    %c0_i32 = arith.constant 0 : i32
    %c0_i32_0 = arith.constant 0 : i32
    %c0_i32_1 = arith.constant 0 : i32
    return %c0_i32, %c0_i32_0 : i32, i32
  }
  func.func @transform_3(%arg0: i32) -> (i32, i32) {
    %c0_i32 = arith.constant 0 : i32
    %c0_i32_0 = arith.constant 0 : i32
    %c0_i32_1 = arith.constant 0 : i32
    return %c0_i32, %c0_i32_0 : i32, i32
  }
  func.func @transform_4(%arg0: i32) -> i32 {
    %c0_i32 = arith.constant 0 : i32
    %c0_i32_0 = arith.constant 0 : i32
    return %c0_i32 : i32
  }
  func.func @transform_5(%arg0: i32) -> (i32, i32, i32) {
    %c0_i32 = arith.constant 0 : i32
    %c0_i32_0 = arith.constant 0 : i32
    %c0_i32_1 = arith.constant 0 : i32
    return %arg0, %c0_i32, %c0_i32_0 : i32, i32, i32
  }
}

module attributes {stable_mosaic.version = 11 : i64} {
  func.func @_conv_flat_kernel(%arg0: i32, %arg1: memref<1x16x1668xbf16, #tpu.memory_space<vmem>>, %arg2: memref<8x144xbf16, #tpu.memory_space<vmem>>, %arg3: memref<8x1xf32, #tpu.memory_space<vmem>>, %arg4: memref<1x1668xbf16, #tpu.memory_space<vmem>>, %arg5: memref<1x8x1668xbf16, #tpu.memory_space<vmem>>, %arg6: memref<144x1280xbf16, #tpu.memory_space<vmem>>) attributes {dimension_semantics = [#tpu.dimension_semantics<parallel>], iteration_bounds = array<i64: 2>, scalar_prefetch = 0 : i64, scratch_operands = 1 : i64, tpu.core_type = #tpu.core_type<tc>, window_params = [{transform_indices = @transform_0, window_bounds = array<i64: 1, 16, 1668>}, {pipeline_mode = #tpu.pipeline_mode<synchronous>, transform_indices = @transform_1, window_bounds = array<i64: 8, 144>}, {pipeline_mode = #tpu.pipeline_mode<synchronous>, transform_indices = @transform_2, window_bounds = array<i64: 8, 1>}, {pipeline_mode = #tpu.pipeline_mode<synchronous>, transform_indices = @transform_3, window_bounds = array<i64: 1, 1668>}, {transform_indices = @transform_4, window_bounds = array<i64: 1, 8, 1668>}]} {
    %c0 = arith.constant 0 : index
    %c0_0 = arith.constant 0 : index
    %0 = vector.load %arg2[%c0, %c0_0] : memref<8x144xbf16, #tpu.memory_space<vmem>>, vector<8x144xbf16>
    %c0_1 = arith.constant 0 : index
    %c0_2 = arith.constant 0 : index
    %1 = vector.load %arg3[%c0_1, %c0_2] : memref<8x1xf32, #tpu.memory_space<vmem>>, vector<8x1xf32>
    %c0_3 = arith.constant 0 : index
    %c0_4 = arith.constant 0 : index
    %c221 = arith.constant 221 : index
    %2 = vector.load %arg1[%c0_3, %c0_4, %c221] : memref<1x16x1668xbf16, #tpu.memory_space<vmem>>, vector<1x16x1280xbf16>
    %3 = vector.shape_cast %2 : vector<1x16x1280xbf16> to vector<16x1280xbf16>
    %c0_5 = arith.constant 0 : index
    %c0_6 = arith.constant 0 : index
    %4 = vector.load %arg6[%c0_5, %c0_6] : memref<144x1280xbf16, #tpu.memory_space<vmem>>, vector<16x1280xbf16>
    tpu.vector_store %arg6[%c0_5, %c0_6], %3 {strides = array<i32>} : memref<144x1280xbf16, #tpu.memory_space<vmem>>, vector<16x1280xbf16>,
    %c0_7 = arith.constant 0 : index
    %c0_8 = arith.constant 0 : index
    %c222 = arith.constant 222 : index
    %5 = vector.load %arg1[%c0_7, %c0_8, %c222] : memref<1x16x1668xbf16, #tpu.memory_space<vmem>>, vector<1x16x1280xbf16>
    %6 = vector.shape_cast %5 : vector<1x16x1280xbf16> to vector<16x1280xbf16>
    %c16 = arith.constant 16 : index
    %c0_9 = arith.constant 0 : index
    %7 = vector.load %arg6[%c16, %c0_9] : memref<144x1280xbf16, #tpu.memory_space<vmem>>, vector<16x1280xbf16>
    tpu.vector_store %arg6[%c16, %c0_9], %6 {strides = array<i32>} : memref<144x1280xbf16, #tpu.memory_space<vmem>>, vector<16x1280xbf16>,
    %c0_10 = arith.constant 0 : index
    %c0_11 = arith.constant 0 : index
    %c223 = arith.constant 223 : index
    %8 = vector.load %arg1[%c0_10, %c0_11, %c223] : memref<1x16x1668xbf16, #tpu.memory_space<vmem>>, vector<1x16x1280xbf16>
    %9 = vector.shape_cast %8 : vector<1x16x1280xbf16> to vector<16x1280xbf16>
    %c32 = arith.constant 32 : index
    %c0_12 = arith.constant 0 : index
    %10 = vector.load %arg6[%c32, %c0_12] : memref<144x1280xbf16, #tpu.memory_space<vmem>>, vector<16x1280xbf16>
    tpu.vector_store %arg6[%c32, %c0_12], %9 {strides = array<i32>} : memref<144x1280xbf16, #tpu.memory_space<vmem>>, vector<16x1280xbf16>,
    %c0_13 = arith.constant 0 : index
    %c0_14 = arith.constant 0 : index
    %c255 = arith.constant 255 : index
    %11 = vector.load %arg1[%c0_13, %c0_14, %c255] : memref<1x16x1668xbf16, #tpu.memory_space<vmem>>, vector<1x16x1280xbf16>
    %12 = vector.shape_cast %11 : vector<1x16x1280xbf16> to vector<16x1280xbf16>
    %c48 = arith.constant 48 : index
    %c0_15 = arith.constant 0 : index
    %13 = vector.load %arg6[%c48, %c0_15] : memref<144x1280xbf16, #tpu.memory_space<vmem>>, vector<16x1280xbf16>
    tpu.vector_store %arg6[%c48, %c0_15], %12 {strides = array<i32>} : memref<144x1280xbf16, #tpu.memory_space<vmem>>, vector<16x1280xbf16>,
    %c0_16 = arith.constant 0 : index
    %c0_17 = arith.constant 0 : index
    %c256 = arith.constant 256 : index
    %14 = vector.load %arg1[%c0_16, %c0_17, %c256] : memref<1x16x1668xbf16, #tpu.memory_space<vmem>>, vector<1x16x1280xbf16>
    %15 = vector.shape_cast %14 : vector<1x16x1280xbf16> to vector<16x1280xbf16>
    %c64 = arith.constant 64 : index
    %c0_18 = arith.constant 0 : index
    %16 = vector.load %arg6[%c64, %c0_18] : memref<144x1280xbf16, #tpu.memory_space<vmem>>, vector<16x1280xbf16>
    tpu.vector_store %arg6[%c64, %c0_18], %15 {strides = array<i32>} : memref<144x1280xbf16, #tpu.memory_space<vmem>>, vector<16x1280xbf16>,
    %c0_19 = arith.constant 0 : index
    %c0_20 = arith.constant 0 : index
    %c257 = arith.constant 257 : index
    %17 = vector.load %arg1[%c0_19, %c0_20, %c257] : memref<1x16x1668xbf16, #tpu.memory_space<vmem>>, vector<1x16x1280xbf16>
    %18 = vector.shape_cast %17 : vector<1x16x1280xbf16> to vector<16x1280xbf16>
    %c80 = arith.constant 80 : index
    %c0_21 = arith.constant 0 : index
    %19 = vector.load %arg6[%c80, %c0_21] : memref<144x1280xbf16, #tpu.memory_space<vmem>>, vector<16x1280xbf16>
    tpu.vector_store %arg6[%c80, %c0_21], %18 {strides = array<i32>} : memref<144x1280xbf16, #tpu.memory_space<vmem>>, vector<16x1280xbf16>,
    %c0_22 = arith.constant 0 : index
    %c0_23 = arith.constant 0 : index
    %c289 = arith.constant 289 : index
    %20 = vector.load %arg1[%c0_22, %c0_23, %c289] : memref<1x16x1668xbf16, #tpu.memory_space<vmem>>, vector<1x16x1280xbf16>
    %21 = vector.shape_cast %20 : vector<1x16x1280xbf16> to vector<16x1280xbf16>
    %c96 = arith.constant 96 : index
    %c0_24 = arith.constant 0 : index
    %22 = vector.load %arg6[%c96, %c0_24] : memref<144x1280xbf16, #tpu.memory_space<vmem>>, vector<16x1280xbf16>
    tpu.vector_store %arg6[%c96, %c0_24], %21 {strides = array<i32>} : memref<144x1280xbf16, #tpu.memory_space<vmem>>, vector<16x1280xbf16>,
    %c0_25 = arith.constant 0 : index
    %c0_26 = arith.constant 0 : index
    %c290 = arith.constant 290 : index
    %23 = vector.load %arg1[%c0_25, %c0_26, %c290] : memref<1x16x1668xbf16, #tpu.memory_space<vmem>>, vector<1x16x1280xbf16>
    %24 = vector.shape_cast %23 : vector<1x16x1280xbf16> to vector<16x1280xbf16>
    %c112 = arith.constant 112 : index
    %c0_27 = arith.constant 0 : index
    %25 = vector.load %arg6[%c112, %c0_27] : memref<144x1280xbf16, #tpu.memory_space<vmem>>, vector<16x1280xbf16>
    tpu.vector_store %arg6[%c112, %c0_27], %24 {strides = array<i32>} : memref<144x1280xbf16, #tpu.memory_space<vmem>>, vector<16x1280xbf16>,
    %c0_28 = arith.constant 0 : index
    %c0_29 = arith.constant 0 : index
    %c291 = arith.constant 291 : index
    %26 = vector.load %arg1[%c0_28, %c0_29, %c291] : memref<1x16x1668xbf16, #tpu.memory_space<vmem>>, vector<1x16x1280xbf16>
    %27 = vector.shape_cast %26 : vector<1x16x1280xbf16> to vector<16x1280xbf16>
    %c128 = arith.constant 128 : index
    %c0_30 = arith.constant 0 : index
    %28 = vector.load %arg6[%c128, %c0_30] : memref<144x1280xbf16, #tpu.memory_space<vmem>>, vector<16x1280xbf16>
    tpu.vector_store %arg6[%c128, %c0_30], %27 {strides = array<i32>} : memref<144x1280xbf16, #tpu.memory_space<vmem>>, vector<16x1280xbf16>,
    %c0_31 = arith.constant 0 : index
    %c0_32 = arith.constant 0 : index
    %29 = vector.load %arg6[%c0_31, %c0_32] : memref<144x1280xbf16, #tpu.memory_space<vmem>>, vector<144x1280xbf16>
    %cst = arith.constant dense<0.000000e+00> : vector<8x1280xf32>
    %30 = tpu.matmul %0, %29, %cst {dimension_numbers = #tpu.dot_dimension_numbers<[1], [0], [0], [1], [0, 0, 1, 1], [], []>} : vector<8x144xbf16>, vector<144x1280xbf16>, vector<8x1280xf32> -> vector<8x1280xf32>
    %31 = vector.broadcast %1 : vector<8x1xf32> to vector<8x1280xf32>
    %32 = arith.addf %30, %31 : vector<8x1280xf32>
    %c0_33 = arith.constant 0 : index
    %c256_34 = arith.constant 256 : index
    %33 = vector.load %arg4[%c0_33, %c256_34] : memref<1x1668xbf16, #tpu.memory_space<vmem>>, vector<1x1280xbf16>
    %34 = arith.extf %33 : vector<1x1280xbf16> to vector<1x1280xf32>
    %35 = vector.broadcast %34 : vector<1x1280xf32> to vector<8x1280xf32>
    %36 = arith.mulf %32, %35 : vector<8x1280xf32>
    %37 = arith.truncf %36 : vector<8x1280xf32> to vector<8x1280xbf16>
    %c0_35 = arith.constant 0 : index
    %c0_36 = arith.constant 0 : index
    %c256_37 = arith.constant 256 : index
    %38 = vector.load %arg5[%c0_35, %c0_36, %c256_37] : memref<1x8x1668xbf16, #tpu.memory_space<vmem>>, vector<1x8x1280xbf16>
    %39 = vector.shape_cast %38 : vector<1x8x1280xbf16> to vector<8x1280xbf16>
    %40 = vector.shape_cast %37 : vector<8x1280xbf16> to vector<1x8x1280xbf16>
    tpu.vector_store %arg5[%c0_35, %c0_36, %c256_37], %40 {strides = array<i32>} : memref<1x8x1668xbf16, #tpu.memory_space<vmem>>, vector<1x8x1280xbf16>,
    %cst_38 = arith.constant 0.000000e+00 : bf16
    %41 = vector.broadcast %cst_38 : bf16 to vector<8x256xbf16>
    %c0_39 = arith.constant 0 : index
    %c0_40 = arith.constant 0 : index
    %c0_41 = arith.constant 0 : index
    %42 = vector.load %arg5[%c0_39, %c0_40, %c0_41] : memref<1x8x1668xbf16, #tpu.memory_space<vmem>>, vector<1x8x256xbf16>
    %43 = vector.shape_cast %42 : vector<1x8x256xbf16> to vector<8x256xbf16>
    %44 = vector.shape_cast %41 : vector<8x256xbf16> to vector<1x8x256xbf16>
    tpu.vector_store %arg5[%c0_39, %c0_40, %c0_41], %44 {strides = array<i32>} : memref<1x8x1668xbf16, #tpu.memory_space<vmem>>, vector<1x8x256xbf16>,
    %cst_42 = arith.constant 0.000000e+00 : bf16
    %45 = vector.broadcast %cst_42 : bf16 to vector<8x132xbf16>
    %c0_43 = arith.constant 0 : index
    %c0_44 = arith.constant 0 : index
    %c1536 = arith.constant 1536 : index
    %46 = vector.load %arg5[%c0_43, %c0_44, %c1536] : memref<1x8x1668xbf16, #tpu.memory_space<vmem>>, vector<1x8x132xbf16>
    %47 = vector.shape_cast %46 : vector<1x8x132xbf16> to vector<8x132xbf16>
    %48 = vector.shape_cast %45 : vector<8x132xbf16> to vector<1x8x132xbf16>
    tpu.vector_store %arg5[%c0_43, %c0_44, %c1536], %48 {strides = array<i32>} : memref<1x8x1668xbf16, #tpu.memory_space<vmem>>, vector<1x8x132xbf16>,
    return
  }
  func.func @transform_0(%arg0: i32) -> (i32, i32, i32) {
    %c0_i32 = arith.constant 0 : i32
    %c0_i32_0 = arith.constant 0 : i32
    %c0_i32_1 = arith.constant 0 : i32
    return %arg0, %c0_i32, %c0_i32_0 : i32, i32, i32
  }
  func.func @transform_1(%arg0: i32) -> (i32, i32) {
    %c0_i32 = arith.constant 0 : i32
    %c0_i32_0 = arith.constant 0 : i32
    %c0_i32_1 = arith.constant 0 : i32
    return %c0_i32, %c0_i32_0 : i32, i32
  }
  func.func @transform_2(%arg0: i32) -> (i32, i32) {
    %c0_i32 = arith.constant 0 : i32
    %c0_i32_0 = arith.constant 0 : i32
    %c0_i32_1 = arith.constant 0 : i32
    return %c0_i32, %c0_i32_0 : i32, i32
  }
  func.func @transform_3(%arg0: i32) -> (i32, i32) {
    %c0_i32 = arith.constant 0 : i32
    %c0_i32_0 = arith.constant 0 : i32
    %c0_i32_1 = arith.constant 0 : i32
    return %c0_i32, %c0_i32_0 : i32, i32
  }
  func.func @transform_4(%arg0: i32) -> (i32, i32, i32) {
    %c0_i32 = arith.constant 0 : i32
    %c0_i32_0 = arith.constant 0 : i32
    %c0_i32_1 = arith.constant 0 : i32
    return %arg0, %c0_i32, %c0_i32_0 : i32, i32, i32
  }
}

</mosaic_0001>

<llo_original>
// kernel: srresnet_forward.10
$region0: #{srresnet_forward.10}
  #allocation0 [shape = 'u32[]', space=smem, size = 0x4, offset = 0x4, fixed_abs, tag = 'smem constant byte address 0x4 - core index']
  #allocation1 [shape = 'u32[144,128]{1,0:T(1,128)}', space=vmem, size = 0x12000, scoped, tag = 'internal scratch']
  #allocation2 [shape = 'bf16[72,384]{1,0:T(8,128)(2,1)}', space=vmem, size = 0xd800, scoped, tag = 'scratch operand']
  #allocation3 [shape = 'f32[1]{0:T(128)S(6)}', space=smem, size = 0x200, scoped, tag = 'scoped memory for srresnet_forward.10']
  %s0 = inlined_call_operand.vmem [shape: bf16[2,8,836], index: 0, kind: input, shape index: {}]
  %s1 = inlined_call_operand.vmem [shape: bf16[16,72], index: 1, kind: input, shape index: {}]
  %s2 = inlined_call_operand.vmem [shape: f32[16,1], index: 2, kind: input, shape index: {}]
  %s3 = inlined_call_operand.vmem [shape: bf16[1,836], index: 3, kind: input, shape index: {}]
  %s4 = inlined_call_operand.<no memory space> [shape: f32[1], index: 4, kind: input, shape index: {}]
  %s5 = inlined_call_operand.vmem [shape: bf16[2,16,836], index: 5, kind: output, shape index: {}]
  %s6 = sld [smem:[#allocation0]]
  $region53: #{srresnet_forward.10} parent=0
    _
  %s8 = ssub.s32 1, %s6
  %s9 = scalar_select 0, %s8, %s6
  %10 = sst [smem:[#allocation3]] %s4
  loop: start=0, step=1, limit=4
  $region2: #{srresnet_forward.10} parent=0 // loop_pre_header
    _
  $region3: #{srresnet_forward.10} parent=0 // loop_header
    %s12 = sphi 0, %s16
    %p13 = scmp.ge.s32.totalorder %s12, 4
    %s22 = sphi 0, %s24
    %s25 = sphi 0, %s22
    %s26 = sphi 0, %s25
    %s42 = sphi 0, %s26
    %s46 = sphi 0, %s46
    %s48 = sphi 0, %s46
    %s49 = sphi 0, %s48
    %s63 = sphi 0, %s49
    %s67 = sphi 0, %s67
    %s69 = sphi 0, %s67
    %s70 = sphi 0, %s69
    %s84 = sphi 0, %s70
    %s88 = sphi 0, %s88
    %s90 = sphi 0, %s88
    %s91 = sphi 0, %s90
    %s105 = sphi 0, %s91
    %s109 = sphi 0, %s109
    %s111 = sphi 0, %s109
    %s112 = sphi 0, %s111
    %s126 = sphi 0, %s112
    %s132 = sphi 0, %s134
    %s135 = sphi 0, %s132
    %s136 = sphi 0, %s135
    %s152 = sphi 0, %s136
  $region4: #{srresnet_forward.10} parent=0 // loop_header_branch
    %15 = sbr.rel (%p13) target = $region8
  $region5: #{srresnet_forward.10} parent=0 // loop_body
    %s17 = ssub.s32 %s12, 1
    %s18 = ssub.s32 %s12, 2
    %s19 = sadd.s32 %s12, 1
    %s20 = ssub.s32 %s12, %s19
    %p21 = scmp.eq.s32.totalorder %s20, 0
    %s23 = sadd.s32 %s22, 1
    %s24 = scalar_select %p21, %s22, %s23
    %p27 = pneg %p21
    %p28 = scmp.eq.s32.totalorder %s12, 1
    %p29 = por %p27, %p28
    %p30 = scmp.ne.s32.totalorder %s22, %s25
    %p31 = scmp.eq.s32.totalorder %s12, 0
    %p32 = por %p30, %p31
    %p33 = scmp.ne.s32.totalorder %s22, %s25
    %p34 = scmp.eq.s32.totalorder %s17, 1
    %p35 = por %p33, %p34
    %p36 = scmp.ne.s32.totalorder %s25, %s26
    %p37 = scmp.eq.s32.totalorder %s17, 0
    %p38 = por %p36, %p37
    %p39 = scmp.ne.s32.totalorder %s25, %s26
    %p40 = scmp.eq.s32.totalorder %s18, 1
    %p41 = por %p39, %p40
    %p43 = scmp.ne.s32.totalorder %s26, %s42
    %p44 = scmp.eq.s32.totalorder %s18, 0
    %p45 = por %p43, %p44
    %s47 = sadd.s32 %s46, 1
    %p50 = scmp.eq.s32.totalorder %s12, 1
    %p51 = scmp.ne.s32.totalorder %s46, %s48
    %p52 = scmp.eq.s32.totalorder %s12, 0
    %p53 = por %p51, %p52
    %p54 = scmp.ne.s32.totalorder %s46, %s48
    %p55 = scmp.eq.s32.totalorder %s17, 1
    %p56 = por %p54, %p55
    %p57 = scmp.ne.s32.totalorder %s48, %s49
    %p58 = scmp.eq.s32.totalorder %s17, 0
    %p59 = por %p57, %p58
    %p60 = scmp.ne.s32.totalorder %s48, %s49
    %p61 = scmp.eq.s32.totalorder %s18, 1
    %p62 = por %p60, %p61
    %p64 = scmp.ne.s32.totalorder %s49, %s63
    %p65 = scmp.eq.s32.totalorder %s18, 0
    %p66 = por %p64, %p65
    %s68 = sadd.s32 %s67, 1
    %p71 = scmp.eq.s32.totalorder %s12, 1
    %p72 = scmp.ne.s32.totalorder %s67, %s69
    %p73 = scmp.eq.s32.totalorder %s12, 0
    %p74 = por %p72, %p73
    %p75 = scmp.ne.s32.totalorder %s67, %s69
    %p76 = scmp.eq.s32.totalorder %s17, 1
    %p77 = por %p75, %p76
    %p78 = scmp.ne.s32.totalorder %s69, %s70
    %p79 = scmp.eq.s32.totalorder %s17, 0
    %p80 = por %p78, %p79
    %p81 = scmp.ne.s32.totalorder %s69, %s70
    %p82 = scmp.eq.s32.totalorder %s18, 1
    %p83 = por %p81, %p82
    %p85 = scmp.ne.s32.totalorder %s70, %s84
    %p86 = scmp.eq.s32.totalorder %s18, 0
    %p87 = por %p85, %p86
    %s89 = sadd.s32 %s88, 1
    %p92 = scmp.eq.s32.totalorder %s12, 1
    %p93 = scmp.ne.s32.totalorder %s88, %s90
    %p94 = scmp.eq.s32.totalorder %s12, 0
    %p95 = por %p93, %p94
    %p96 = scmp.ne.s32.totalorder %s88, %s90
    %p97 = scmp.eq.s32.totalorder %s17, 1
    %p98 = por %p96, %p97
    %p99 = scmp.ne.s32.totalorder %s90, %s91
    %p100 = scmp.eq.s32.totalorder %s17, 0
    %p101 = por %p99, %p100
    %p102 = scmp.ne.s32.totalorder %s90, %s91
    %p103 = scmp.eq.s32.totalorder %s18, 1
    %p104 = por %p102, %p103
    %p106 = scmp.ne.s32.totalorder %s91, %s105
    %p107 = scmp.eq.s32.totalorder %s18, 0
    %p108 = por %p106, %p107
    %s110 = sadd.s32 %s109, 1
    %p113 = scmp.eq.s32.totalorder %s12, 1
    %p114 = scmp.ne.s32.totalorder %s109, %s111
    %p115 = scmp.eq.s32.totalorder %s12, 0
    %p116 = por %p114, %p115
    %p117 = scmp.ne.s32.totalorder %s109, %s111
    %p118 = scmp.eq.s32.totalorder %s17, 1
    %p119 = por %p117, %p118
    %p120 = scmp.ne.s32.totalorder %s111, %s112
    %p121 = scmp.eq.s32.totalorder %s17, 0
    %p122 = por %p120, %p121
    %p123 = scmp.ne.s32.totalorder %s111, %s112
    %p124 = scmp.eq.s32.totalorder %s18, 1
    %p125 = por %p123, %p124
    %p127 = scmp.ne.s32.totalorder %s112, %s126
    %p128 = scmp.eq.s32.totalorder %s18, 0
    %p129 = por %p127, %p128
    %s130 = ssub.s32 %s12, %s19
    %p131 = scmp.eq.s32.totalorder %s130, 0
    %s133 = sadd.s32 %s132, 1
    %s134 = scalar_select %p131, %s132, %s133
    %p137 = pneg %p131
    %p138 = scmp.eq.s32.totalorder %s12, 1
    %p139 = por %p137, %p138
    %p140 = scmp.ne.s32.totalorder %s132, %s135
    %p141 = scmp.eq.s32.totalorder %s12, 0
    %p142 = por %p140, %p141
    %p143 = scmp.ne.s32.totalorder %s132, %s135
    %p144 = scmp.eq.s32.totalorder %s17, 1
    %p145 = por %p143, %p144
    %p146 = scmp.ne.s32.totalorder %s135, %s136
    %p147 = scmp.eq.s32.totalorder %s17, 0
    %p148 = por %p146, %p147
    %p149 = scmp.ne.s32.totalorder %s135, %s136
    %p150 = scmp.eq.s32.totalorder %s18, 1
    %p151 = por %p149, %p150
    %p153 = scmp.ne.s32.totalorder %s136, %s152
    %p154 = scmp.eq.s32.totalorder %s18, 0
    %p155 = por %p153, %p154
    %p156 = scmp.le.s32.totalorder 1, %s12
    %p157 = scmp.lt.s32.totalorder %s12, 3
    %p158 = pnand %p156, %p157
    %p159 = pneg %p158
    // Predicated region
    $region9: #{srresnet_forward.10} parent=5 // pred_check
      _
    $region10: #{srresnet_forward.10} parent=5 // pred_check_branch
      %161 = sbr.rel (%p158) target = $region12
    $region11: #{srresnet_forward.10} parent=5 // pred_region
      %s162 = ssub.s32 %s12, 1
      // Predicated region
      $region13: #{srresnet_forward.10} parent=11 // pred_check
        %p163 = pneg %p59
      $region14: #{srresnet_forward.10} parent=11 // pred_check_branch
        %165 = sbr.rel (%p163) target = $region16
      $region15: #{srresnet_forward.10} parent=11 // pred_region
        _
      $region16: #{srresnet_forward.10} parent=11 // pred_fallthru
        _
      // Predicated region
      $region17: #{srresnet_forward.10} parent=11 // pred_check
        %p166 = pneg %p80
      $region18: #{srresnet_forward.10} parent=11 // pred_check_branch
        %168 = sbr.rel (%p166) target = $region20
      $region19: #{srresnet_forward.10} parent=11 // pred_region
        _
      $region20: #{srresnet_forward.10} parent=11 // pred_fallthru
        _
      // Predicated region
      $region21: #{srresnet_forward.10} parent=11 // pred_check
        %p169 = pneg %p101
      $region22: #{srresnet_forward.10} parent=11 // pred_check_branch
        %171 = sbr.rel (%p169) target = $region24
      $region23: #{srresnet_forward.10} parent=11 // pred_region
        _
      $region24: #{srresnet_forward.10} parent=11 // pred_fallthru
        _
      // Predicated region
      $region25: #{srresnet_forward.10} parent=11 // pred_check
        %p172 = pneg %p122
      $region26: #{srresnet_forward.10} parent=11 // pred_check_branch
        %174 = sbr.rel (%p172) target = $region28
      $region27: #{srresnet_forward.10} parent=11 // pred_region
        _
      $region28: #{srresnet_forward.10} parent=11 // pred_fallthru
        _
    $region12: #{srresnet_forward.10} parent=5 // pred_fallthru
      _
    %p175 = scmp.lt.s32.totalorder %s12, 2
    // Predicated region
    $region29: #{srresnet_forward.10} parent=5 // pred_check
      %p176 = pneg %p175
    $region30: #{srresnet_forward.10} parent=5 // pred_check_branch
      %178 = sbr.rel (%p176) target = $region32
    $region31: #{srresnet_forward.10} parent=5 // pred_region
      // Predicated region
      $region33: #{srresnet_forward.10} parent=31 // pred_check
        %p179 = pneg %p32
      $region34: #{srresnet_forward.10} parent=31 // pred_check_branch
        %181 = sbr.rel (%p179) target = $region36
      $region35: #{srresnet_forward.10} parent=31 // pred_region
        %p182 = scmp.lt.s32.totalorder %s12, 1
        %s183 = scalar_select %p182, %s12, 1
        %s184 = smul.addr %s183, 7
        %s185 = smul.addr %s184, 4
        %s186 = scalar_lea.vmem %s0, %s185
      $region36: #{srresnet_forward.10} parent=31 // pred_fallthru
        _
    $region32: #{srresnet_forward.10} parent=5 // pred_fallthru
      _
    %p187 = scmp.le.s32.totalorder 1, %s12
    %p188 = scmp.lt.s32.totalorder %s12, 3
    %p189 = pnand %p187, %p188
    %p190 = pneg %p189
    // Predicated region
    $region37: #{srresnet_forward.10} parent=5 // pred_check
      _
    $region38: #{srresnet_forward.10} parent=5 // pred_check_branch
      %192 = sbr.rel (%p189) target = $region40
    $region39: #{srresnet_forward.10} parent=5 // pred_region
      %s193 = ssub.s32 %s12, 1
      %p194 = scmp.lt.s32.totalorder %s17, 1
      %s195 = scalar_select %p194, %s17, 1
      %s196 = smul.addr %s195, 7
      %s197 = smul.addr %s196, 4
      %s198 = scalar_lea.vmem %s0, %s197
      %p199 = pneg %p38
      %p200 = pneg %p35
      %p201 = pneg %p59
      %p202 = pneg %p56
      %p203 = pneg %p80
      %p204 = pneg %p77
      %p205 = pneg %p101
      %p206 = pneg %p98
      %p207 = pneg %p122
      %p208 = pneg %p119
      %p209 = pneg %p148
      %p210 = pneg %p145
      %p211 = scmp.lt.s32.totalorder %s17, 1
      %s212 = scalar_select %p211, %s17, 1
      %s213 = smul.addr %s212, 14
      %s214 = smul.addr %s213, 4
      %s215 = scalar_lea.vmem %s5, %s214
      %p216 = scmp.lt.s32.totalorder %s17, 1
      %s217 = scalar_select %p216, %s17, 1
      %s218 = smul.addr %s217, 7
      %s219 = smul.addr %s218, 4
      %s220 = scalar_lea.vmem %s0, %s219
      %p221 = scmp.lt.s32.totalorder %s17, 1
      %s222 = scalar_select %p221, %s17, 1
      %s223 = smul.addr %s222, 14
      %s224 = smul.addr %s223, 4
      %s225 = scalar_lea.vmem %s5, %s224
      %v227 = vld [vmem:[%s1] sm:$0xf]
      %v228 = vld [vmem:[%s1 + $0x4] sm:$0xf]
      %v229 = vld [vmem:[%s2] sm:$0xff]
      %v230 = vld [vmem:[%s2 + $0x8] sm:$0xff]
      %s231 = sld [smem:[#allocation3]]
      %v232 = vld [vmem:[%s220 + $0x4] sm:$0xff]
      %v233 = vld [vmem:[%s220 + $0xc] sm:$0xff]
      %236 = vrot.lane.b32.xlu0 %v232, 19
      %v237 = vpop.permute.xlu0 %236
      %238 = vrot.lane.b32.xlu0 %v233, 19
      %v239 = vpop.permute.xlu0 %238
      %v240 = vrot.slane %v237, 4
      %v241 = vrot.slane %v239, 4
      %vm242 = vcmask 1043456
      %v243 = vsel %vm242, %v240, %v241
      %vm244 = vcmask 154624
      %v245 = vsel %vm244, %v237, %v243
      %v246 = vsel %vm244, %v239, %v241
      %249 = vst [vmem:[#allocation2] sm:$0xff] %v245
      %250 = vst [vmem:[#allocation2 + $0x8] sm:$0xf] %v246
      %v251 = vld [vmem:[%s220 + $0x4] sm:$0xff]
      %v252 = vld [vmem:[%s220 + $0xc] sm:$0xff]
      %255 = vrot.lane.b32.xlu0 %v251, 18
      %v256 = vpop.permute.xlu0 %255
      %257 = vrot.lane.b32.xlu0 %v252, 18
      %v258 = vpop.permute.xlu0 %257
      %v259 = vrot.slane %v256, 4
      %v260 = vrot.slane %v258, 4
      %v261 = vsel %vm242, %v259, %v260
      %vm262 = vcmask 146432
      %v263 = vsel %vm262, %v256, %v261
      %v264 = vsel %vm262, %v258, %v260
      %267 = vst [vmem:[#allocation2 + $0xc] sm:$0xff] %v263
      %268 = vst [vmem:[#allocation2 + $0x14] sm:$0xf] %v264
      %v269 = vld [vmem:[%s220 + $0x4] sm:$0xff]
      %v270 = vld [vmem:[%s220 + $0xc] sm:$0xff]
      %273 = vrot.lane.b32.xlu0 %v269, 17
      %v274 = vpop.permute.xlu0 %273
      %275 = vrot.lane.b32.xlu0 %v270, 17
      %v276 = vpop.permute.xlu0 %275
      %v277 = vrot.slane %v274, 4
      %v278 = vrot.slane %v276, 4
      %v279 = vsel %vm242, %v277, %v278
      %vm280 = vcmask 138240
      %v281 = vsel %vm280, %v274, %v279
      %v282 = vsel %vm280, %v276, %v278
      %285 = vst [vmem:[#allocation2 + $0x18] sm:$0xff] %v281
      %286 = vst [vmem:[#allocation2 + $0x20] sm:$0xf] %v282
      %v287 = vld [vmem:[%s220 + $0x4] sm:$0xff]
      %v288 = vld [vmem:[%s220 + $0xc] sm:$0xff]
      %291 = vrot.lane.b32.xlu0 %v287, 1
      %v292 = vpop.permute.xlu0 %291
      %293 = vrot.lane.b32.xlu0 %v288, 1
      %v294 = vpop.permute.xlu0 %293
      %v295 = vrot.slane %v292, 4
      %v296 = vrot.slane %v294, 4
      %v297 = vsel %vm242, %v295, %v296
      %vm298 = vcmask 7168
      %v299 = vsel %vm298, %v292, %v297
      %v300 = vsel %vm298, %v294, %v296
      %303 = vst [vmem:[#allocation2 + $0x24] sm:$0xff] %v299
      %304 = vst [vmem:[#allocation2 + $0x2c] sm:$0xf] %v300
      %v305 = vld [vmem:[%s220 + $0x8] sm:$0xff]
      %v306 = vld [vmem:[%s220 + $0x10] sm:$0xf]
      %307 = vst [vmem:[#allocation2 + $0x30] sm:$0xff] %v305
      %308 = vst [vmem:[#allocation2 + $0x38] sm:$0xf] %v306
      %v309 = vld [vmem:[%s220 + $0x8] sm:$0xff]
      %v310 = vld [vmem:[%s220 + $0x10] sm:$0xff]
      %313 = vrot.lane.b32.xlu0 %v309, 127
      %v314 = vpop.permute.xlu0 %313
      %315 = vrot.lane.b32.xlu0 %v310, 127
      %v316 = vpop.permute.xlu0 %315
      %v317 = vrot.slane %v314, 4
      %v318 = vrot.slane %v316, 4
      %v319 = vsel %vm242, %v317, %v318
      %vm320 = vcmask 1039360
      %v321 = vsel %vm320, %v314, %v319
      %v322 = vsel %vm320, %v316, %v318
      %325 = vst [vmem:[#allocation2 + $0x3c] sm:$0xff] %v321
      %326 = vst [vmem:[#allocation2 + $0x44] sm:$0xf] %v322
      %v327 = vld [vmem:[%s220 + $0x8] sm:$0xff]
      %v328 = vld [vmem:[%s220 + $0x10] sm:$0xff]
      %331 = vrot.lane.b32.xlu0 %v327, 111
      %v332 = vpop.permute.xlu0 %331
      %333 = vrot.lane.b32.xlu0 %v328, 111
      %v334 = vpop.permute.xlu0 %333
      %v335 = vrot.slane %v332, 4
      %v336 = vrot.slane %v334, 4
      %v337 = vsel %vm242, %v335, %v336
      %vm338 = vcmask 908288
      %v339 = vsel %vm338, %v332, %v337
      %v340 = vsel %vm338, %v334, %v336
      %343 = vst [vmem:[#allocation2 + $0x48] sm:$0xff] %v339
      %344 = vst [vmem:[#allocation2 + $0x50] sm:$0xf] %v340
      %v345 = vld [vmem:[%s220 + $0x8] sm:$0xff]
      %v346 = vld [vmem:[%s220 + $0x10] sm:$0xff]
      %349 = vrot.lane.b32.xlu0 %v345, 110
      %v350 = vpop.permute.xlu0 %349
      %351 = vrot.lane.b32.xlu0 %v346, 110
      %v352 = vpop.permute.xlu0 %351
      %v353 = vrot.slane %v350, 4
      %v354 = vrot.slane %v352, 4
      %v355 = vsel %vm242, %v353, %v354
      %vm356 = vcmask 900096
      %v357 = vsel %vm356, %v350, %v355
      %v358 = vsel %vm356, %v352, %v354
      %361 = vst [vmem:[#allocation2 + $0x54] sm:$0xff] %v357
      %362 = vst [vmem:[#allocation2 + $0x5c] sm:$0xf] %v358
      %v363 = vld [vmem:[%s220 + $0x8] sm:$0xff]
      %v364 = vld [vmem:[%s220 + $0x10] sm:$0xff]
      %367 = vrot.lane.b32.xlu0 %v363, 109
      %v368 = vpop.permute.xlu0 %367
      %369 = vrot.lane.b32.xlu0 %v364, 109
      %v370 = vpop.permute.xlu0 %369
      %v371 = vrot.slane %v368, 4
      %v372 = vrot.slane %v370, 4
      %v373 = vsel %vm242, %v371, %v372
      %vm374 = vcmask 891904
      %v375 = vsel %vm374, %v368, %v373
      %v376 = vsel %vm374, %v370, %v372
      %379 = vst [vmem:[#allocation2 + $0x60] sm:$0xff] %v375
      %380 = vst [vmem:[#allocation2 + $0x68] sm:$0xf] %v376
      %v381 = vld [vmem:[#allocation2] sm:$0xff]
      %v382 = vld [vmem:[#allocation2 + $0x8] sm:$0xf]
      %v383 = vld [vmem:[#allocation2 + $0xc] sm:$0xff]
      %v384 = vld [vmem:[#allocation2 + $0x14] sm:$0xf]
      %v385 = vld [vmem:[#allocation2 + $0x18] sm:$0xff]
      %v386 = vld [vmem:[#allocation2 + $0x20] sm:$0xf]
      %v387 = vld [vmem:[#allocation2 + $0x24] sm:$0xff]
      %v388 = vld [vmem:[#allocation2 + $0x2c] sm:$0xf]
      %v389 = vld [vmem:[#allocation2 + $0x30] sm:$0xff]
      %v390 = vld [vmem:[#allocation2 + $0x38] sm:$0xf]
      %v391 = vld [vmem:[#allocation2 + $0x3c] sm:$0xff]
      %v392 = vld [vmem:[#allocation2 + $0x44] sm:$0xf]
      %v393 = vld [vmem:[#allocation2 + $0x48] sm:$0xff]
      %v394 = vld [vmem:[#allocation2 + $0x50] sm:$0xf]
      %v395 = vld [vmem:[#allocation2 + $0x54] sm:$0xff]
      %v396 = vld [vmem:[#allocation2 + $0x5c] sm:$0xf]
      %v397 = vld [vmem:[#allocation2 + $0x60] sm:$0xff]
      %v398 = vld [vmem:[#allocation2 + $0x68] sm:$0xf]
      %400 = vset.pattern.permute.xlu0 0
      %401 = vperm.xlu0 %400, %v229
      %v402 = vpop.permute.xlu0 %401
      %405 = vset.pattern.permute.xlu0 0
      %406 = vperm.xlu0 %405, %v230
      %v407 = vpop.permute.xlu0 %406
      %v411 = vunpack.c.l.b16 %v227
      %v412 = vunpack.c.l.b16 %v228
      %v413 = vpack.c.b16 %v412, %v411
      %v432 = vunpack.c.l.b16 %v381
      %v433 = vunpack.c.h.b16 %v381
      %v434 = vunpack.c.l.b16 %v382
      %v435 = vunpack.c.l.b16 %v383
      %v436 = vunpack.c.h.b16 %v383
      %v437 = vunpack.c.l.b16 %v384
      %v438 = vunpack.c.l.b16 %v385
      %v439 = vunpack.c.h.b16 %v385
      %v440 = vunpack.c.l.b16 %v386
      %v441 = vunpack.c.l.b16 %v387
      %v442 = vunpack.c.h.b16 %v387
      %v443 = vunpack.c.l.b16 %v388
      %v444 = vunpack.c.l.b16 %v389
      %v445 = vunpack.c.h.b16 %v389
      %v446 = vunpack.c.l.b16 %v390
      %v447 = vunpack.c.l.b16 %v391
      %v448 = vunpack.c.h.b16 %v391
      %v449 = vunpack.c.l.b16 %v392
      %v450 = vunpack.c.l.b16 %v393
      %v451 = vunpack.c.h.b16 %v393
      %v452 = vunpack.c.l.b16 %v394
      %v453 = vunpack.c.l.b16 %v395
      %v454 = vunpack.c.h.b16 %v395
      %v455 = vunpack.c.l.b16 %v396
      %v456 = vunpack.c.l.b16 %v397
      %v457 = vunpack.c.h.b16 %v397
      %v458 = vunpack.c.l.b16 %v398
      %v459 = vpack.c.b16 %v435, %v432
      %v460 = vpack.c.b16 %v436, %v433
      %v461 = vpack.c.b16 %v437, %v434
      %v462 = vpack.c.b16 %v441, %v438
      %v463 = vpack.c.b16 %v442, %v439
      %v464 = vpack.c.b16 %v443, %v440
      %v465 = vpack.c.b16 %v447, %v444
      %v466 = vpack.c.b16 %v448, %v445
      %v467 = vpack.c.b16 %v449, %v446
      %v468 = vpack.c.b16 %v453, %v450
      %v469 = vpack.c.b16 %v454, %v451
      %v470 = vpack.c.b16 %v455, %v452
      %v471 = vpack.c.b16 %v456, %v456
      %v472 = vpack.c.b16 %v457, %v457
      %v473 = vpack.c.b16 %v458, %v458
      %vm486 = vcmask 588800
      %v488 = vsel %vm486, %v413, 0
      %vm490 = vcmask 1043456
      %v492 = vsel %vm490, %v471, 0
      %v495 = vsel %vm490, %v472, 0
      %v498 = vsel %vm490, %v473, 0
      %500 = vmatprep.subr.bf16.mxu0 %v460
      %501 = vmatpush1.bf16.msra.mxu0 %v459
      %502 = vmatprep.subr.bf16.mxu0 %v463
      %503 = vmatpush1.bf16.msra.mxu0 %v462
      %504 = vmatprep.subr.bf16.mxu0 %v466
      %505 = vmatpush1.bf16.msra.mxu0 %v465
      %506 = vmatprep.subr.bf16.mxu0 %v469
      %507 = vmatpush1.bf16.msra.mxu0 %v468
      %508 = vmatprep.subr.bf16.mxu0 %v495
      %509 = vmatpush1.bf16.msra.mxu0 %v492
      %510 = vmatprep.subr.bf16.mxu0 0
      %511 = vmatpush1.bf16.msra.mxu0 0
      %512 = vmatprep.subr.bf16.mxu0 0
      %513 = vmatpush1.bf16.msra.mxu0 0
      %514 = vmatprep.subr.bf16.mxu0 0
      %515 = vmatpush1.bf16.msra.mxu0 0
      %516 = vmatprep.subr.bf16.mxu0 0
      %517 = vmatpush1.bf16.msra.mxu0 0
      %518 = vmatprep.subr.bf16.mxu0 0
      %519 = vmatpush1.bf16.msra.mxu0 0
      %520 = vmatprep.subr.bf16.mxu0 0
      %521 = vmatpush1.bf16.msra.mxu0 0
      %522 = vmatprep.subr.bf16.mxu0 0
      %523 = vmatpush1.bf16.msra.mxu0 0
      %524 = vmatprep.subr.bf16.mxu0 0
      %525 = vmatpush1.bf16.msra.mxu0 0
      %526 = vmatprep.subr.bf16.mxu0 0
      %527 = vmatpush1.bf16.msra.mxu0 0
      %528 = vmatprep.subr.bf16.mxu0 0
      %529 = vmatpush1.bf16.msra.mxu0 0
      %530 = vmatprep.subr.bf16.mxu0 0
      %531 = vmatpush1.bf16.msra.mxu0 0
      %532 = vmatprep.mubr.bf16.mxu0 0
      %533 = vmatmul.mubr.bf16.gmra.mrb[0].mxu0 %v488
      %v534 = vpop.f32.mrb[0].mxu0
      %v535 = vadd.f32 %v402, %v534
      %v536 = vpop.f32.mrb[0].mxu0
      %v537 = vadd.f32 %v402, %v536
      %v538 = vpop.f32.mrb[0].mxu0
      %v539 = vadd.f32 %v407, %v538
      %v540 = vpop.f32.mrb[0].mxu0
      %v541 = vadd.f32 %v407, %v540
      %542 = vdwg.mxu0
      %543 = vmatprep.subr.bf16.mxu0 0
      %544 = vmatpush1.bf16.msra.mxu0 %v461
      %545 = vmatprep.subr.bf16.mxu0 0
      %546 = vmatpush1.bf16.msra.mxu0 %v464
      %547 = vmatprep.subr.bf16.mxu0 0
      %548 = vmatpush1.bf16.msra.mxu0 %v467
      %549 = vmatprep.subr.bf16.mxu0 0
      %550 = vmatpush1.bf16.msra.mxu0 %v470
      %551 = vmatprep.subr.bf16.mxu0 0
      %552 = vmatpush1.bf16.msra.mxu0 %v498
      %553 = vmatprep.subr.bf16.mxu0 0
      %554 = vmatpush1.bf16.msra.mxu0 0
      %555 = vmatprep.subr.bf16.mxu0 0
      %556 = vmatpush1.bf16.msra.mxu0 0
      %557 = vmatprep.subr.bf16.mxu0 0
      %558 = vmatpush1.bf16.msra.mxu0 0
      %559 = vmatprep.subr.bf16.mxu0 0
      %560 = vmatpush1.bf16.msra.mxu0 0
      %561 = vmatprep.subr.bf16.mxu0 0
      %562 = vmatpush1.bf16.msra.mxu0 0
      %563 = vmatprep.subr.bf16.mxu0 0
      %564 = vmatpush1.bf16.msra.mxu0 0
      %565 = vmatprep.subr.bf16.mxu0 0
      %566 = vmatpush1.bf16.msra.mxu0 0
      %567 = vmatprep.subr.bf16.mxu0 0
      %568 = vmatpush1.bf16.msra.mxu0 0
      %569 = vmatprep.subr.bf16.mxu0 0
      %570 = vmatpush1.bf16.msra.mxu0 0
      %571 = vmatprep.subr.bf16.mxu0 0
      %572 = vmatpush1.bf16.msra.mxu0 0
      %573 = vmatprep.subr.bf16.mxu0 0
      %574 = vmatpush1.bf16.msra.mxu0 0
      %575 = vmatprep.mubr.bf16.mxu0 0
      %576 = vmatmul.mubr.bf16.gmra.mrb[0].mxu0 %v488
      %v577 = vpop.f32.mrb[0].mxu0
      %v578 = vadd.f32 %v402, %v577
      %v579 = vpop.f32.mrb[0].mxu0
      %v580 = vpop.f32.mrb[0].mxu0
      %v581 = vadd.f32 %v407, %v580
      %v582 = vpop.f32.mrb[0].mxu0
      %583 = vdwg.mxu0
      %vm584 = vcmp.ge.f32.partialorder %v535, 0.0
      %vm585 = vcmp.ge.f32.partialorder %v537, 0.0
      %vm586 = vcmp.ge.f32.partialorder %v578, 0.0
      %vm587 = vcmp.ge.f32.partialorder %v539, 0.0
      %vm588 = vcmp.ge.f32.partialorder %v541, 0.0
      %vm589 = vcmp.ge.f32.partialorder %v581, 0.0
      %v590 = vstv %s231
      %v591 = vmul.f32 %v590, %v535
      %v592 = vmul.f32 %v590, %v537
      %v593 = vmul.f32 %v590, %v578
      %v594 = vmul.f32 %v590, %v539
      %v595 = vmul.f32 %v590, %v541
      %v596 = vmul.f32 %v590, %v581
      %v597 = vsel %vm584, %v535, %v591
      %v598 = vsel %vm585, %v537, %v592
      %v599 = vsel %vm586, %v578, %v593
      %v600 = vsel %vm587, %v539, %v594
      %v601 = vsel %vm588, %v541, %v595
      %v602 = vsel %vm589, %v581, %v596
      %v603 = vld [vmem:[%s3 + $0x2] sm:$0x7]
      %v604 = vunpack.c.l.bf16 %v603
      %v606 = vlaneseq
      %v607 = vshrl.u32 %v606, 7
      %v608 = vsub.s32 0, %v607
      %v609 = vrot.slane %v604, %v608
      %v610 = vlaneseq
      %v611 = vshrl.u32 %v610, 7
      %v612 = vsub.s32 2, %v611
      %v613 = vrot.slane %v604, %v612
      %v614 = vlaneseq
      %v615 = vshrl.u32 %v614, 7
      %v616 = vsub.s32 4, %v615
      %v617 = vrot.slane %v604, %v616
      %v621 = vlaneseq
      %v622 = vshrl.u32 %v621, 7
      %v623 = vsub.s32 0, %v622
      %v624 = vrot.slane %v609, %v623
      %v625 = vlaneseq
      %v626 = vshrl.u32 %v625, 7
      %v627 = vsub.s32 0, %v626
      %v628 = vrot.slane %v613, %v627
      %v629 = vlaneseq
      %v630 = vshrl.u32 %v629, 7
      %v631 = vsub.s32 0, %v630
      %v632 = vrot.slane %v617, %v631
      %v633 = vmul.f32 %v597, %v624
      %v634 = vmul.f32 %v598, %v628
      %v635 = vmul.f32 %v599, %v632
      %v636 = vmul.f32 %v600, %v624
      %v637 = vmul.f32 %v601, %v628
      %v638 = vmul.f32 %v602, %v632
      %v639 = vpack.c.bf16 %v636, %v633
      %v640 = vpack.c.bf16 %v637, %v634
      %v641 = vpack.c.bf16 %v638, %v635
      %v645 = vunpack.c.l.b16 %v639
      %v646 = vunpack.c.l.b16 %v640
      %v647 = vunpack.c.l.b16 %v641
      %v648 = vunpack.c.h.b16 %v639
      %v649 = vunpack.c.h.b16 %v640
      %v650 = vunpack.c.h.b16 %v641
      %v651 = vpack.c.b16 %v646, %v645
      %v652 = vpack.c.b16 %v647, %v647
      %v653 = vpack.c.b16 %v649, %v648
      %v654 = vpack.c.b16 %v650, %v650
      %659 = vst [vmem:[%s225 + $0x8] sm:$0xff] %v651
      %660 = vst [vmem:[%s225 + $0x10] sm:$0xf] %v652
      %661 = vst [vmem:[%s225 + $0x24] sm:$0xff] %v653
      %662 = vst [vmem:[%s225 + $0x2c] sm:$0xf] %v654
      %663 = vst [vmem:[%s225] sm:$0xff] 0
      %664 = vst [vmem:[%s225 + $0x1c] sm:$0xff] 0
      %vm665 = vcmask 556036
      %vm666 = vmor %vm665, %vm490
      %667 = vst.msk [vmem:[%s225 + $0x14] sm:$0xff] %vm666, 0
      %668 = vst.msk [vmem:[%s225 + $0x30] sm:$0xff] %vm666, 0
      %p669 = scmp.lt.s32.totalorder %s17, 1
      %s670 = scalar_select %p669, %s17, 1
      %s671 = smul.addr %s670, 14
      %s672 = smul.addr %s671, 4
      %s673 = scalar_lea.vmem %s5, %s672
      // Predicated region
      $region41: #{srresnet_forward.10} parent=39 // pred_check
        %p674 = pneg %p145
      $region42: #{srresnet_forward.10} parent=39 // pred_check_branch
        %676 = sbr.rel (%p674) target = $region44
      $region43: #{srresnet_forward.10} parent=39 // pred_region
        _
      $region44: #{srresnet_forward.10} parent=39 // pred_fallthru
        _
    $region40: #{srresnet_forward.10} parent=5 // pred_fallthru
      _
    %p677 = scmp.le.s32.totalorder 2, %s12
    // Predicated region
    $region45: #{srresnet_forward.10} parent=5 // pred_check
      %p678 = pneg %p677
    $region46: #{srresnet_forward.10} parent=5 // pred_check_branch
      %680 = sbr.rel (%p678) target = $region48
    $region47: #{srresnet_forward.10} parent=5 // pred_region
      %s681 = ssub.s32 %s12, 2
      // Predicated region
      $region49: #{srresnet_forward.10} parent=47 // pred_check
        %p682 = pneg %p151
      $region50: #{srresnet_forward.10} parent=47 // pred_check_branch
        %684 = sbr.rel (%p682) target = $region52
      $region51: #{srresnet_forward.10} parent=47 // pred_region
        %p685 = scmp.lt.s32.totalorder %s18, 1
        %s686 = scalar_select %p685, %s18, 1
        %s687 = smul.addr %s686, 14
        %s688 = smul.addr %s687, 4
        %s689 = scalar_lea.vmem %s5, %s688
      $region52: #{srresnet_forward.10} parent=47 // pred_fallthru
        _
    $region48: #{srresnet_forward.10} parent=5 // pred_fallthru
      _
  $region6: #{srresnet_forward.10} parent=0 // loop_footer
    %s16 = sadd.s32 1, %s12
  $region7: #{srresnet_forward.10} parent=0 // loop_footer_branch
    %11 = sbr.rel target = $region3
  $region8: #{srresnet_forward.10} parent=0 // loop_exit
    _

// kernel: srresnet_forward.11
$region0: #{srresnet_forward.11}
  #allocation0 [shape = 'u32[]', space=smem, size = 0x4, offset = 0x4, fixed_abs, tag = 'smem constant byte address 0x4 - core index']
  #allocation1 [shape = 'u32[144,128]{1,0:T(1,128)}', space=vmem, size = 0x12000, scoped, tag = 'internal scratch']
  #allocation2 [shape = 'f32[1]{0:T(128)S(6)}', space=smem, size = 0x200, scoped, tag = 'scoped memory for srresnet_forward.11']
  %s0 = inlined_call_operand.vmem [shape: bf16[32,144], index: 0, kind: input, shape index: {}]
  %s1 = inlined_call_operand.vmem [shape: bf16[144,16], index: 1, kind: input, shape index: {}]
  %s2 = inlined_call_operand.vmem [shape: f32[1,16], index: 2, kind: input, shape index: {}]
  %s3 = inlined_call_operand.<no memory space> [shape: f32[1], index: 3, kind: input, shape index: {}]
  %s4 = inlined_call_operand.vmem [shape: f32[32,16], index: 4, kind: output, shape index: {}]
  %s5 = sld [smem:[#allocation0]]
  $region26: #{srresnet_forward.11} parent=0
    _
  %s7 = ssub.s32 1, %s5
  %s8 = scalar_select 0, %s7, %s5
  %9 = sst [smem:[#allocation2]] %s3
  // Predicated region
  $region2: #{srresnet_forward.11} parent=0 // pred_check
    _
  $region3: #{srresnet_forward.11} parent=0 // pred_check_branch
    %11 = sbr.rel (0) target = $region5
  $region4: #{srresnet_forward.11} parent=0 // pred_region
    _
  $region5: #{srresnet_forward.11} parent=0 // pred_fallthru
    _
  // Predicated region
  $region6: #{srresnet_forward.11} parent=0 // pred_check
    _
  $region7: #{srresnet_forward.11} parent=0 // pred_check_branch
    %13 = sbr.rel (0) target = $region9
  $region8: #{srresnet_forward.11} parent=0 // pred_region
    _
  $region9: #{srresnet_forward.11} parent=0 // pred_fallthru
    _
  // Predicated region
  $region10: #{srresnet_forward.11} parent=0 // pred_check
    _
  $region11: #{srresnet_forward.11} parent=0 // pred_check_branch
    %15 = sbr.rel (0) target = $region13
  $region12: #{srresnet_forward.11} parent=0 // pred_region
    _
  $region13: #{srresnet_forward.11} parent=0 // pred_fallthru
    _
  // Predicated region
  $region14: #{srresnet_forward.11} parent=0 // pred_check
    _
  $region15: #{srresnet_forward.11} parent=0 // pred_check_branch
    %17 = sbr.rel (0) target = $region17
  $region16: #{srresnet_forward.11} parent=0 // pred_region
    _
  $region17: #{srresnet_forward.11} parent=0 // pred_fallthru
    _
  %v19 = vld [vmem:[%s0] sm:$0xff]
  %v20 = vld [vmem:[%s0 + $0x8] sm:$0xff]
  %v21 = vld [vmem:[%s0 + $0x10] sm:$0xff]
  %v22 = vld [vmem:[%s0 + $0x18] sm:$0xff]
  %v23 = vld [vmem:[%s1] sm:$0xf]
  %v24 = vld [vmem:[%s1 + $0x4] sm:$0xf]
  %v25 = vld [vmem:[%s1 + $0x8] sm:$0xf]
  %v26 = vld [vmem:[%s1 + $0xc] sm:$0xf]
  %v27 = vld [vmem:[%s1 + $0x10] sm:$0xf]
  %v28 = vld [vmem:[%s1 + $0x14] sm:$0xf]
  %v29 = vld [vmem:[%s1 + $0x18] sm:$0xf]
  %v30 = vld [vmem:[%s1 + $0x1c] sm:$0xf]
  %v31 = vld [vmem:[%s1 + $0x20] sm:$0xf]
  %v32 = vld [vmem:[%s1 + $0x24] sm:$0xf]
  %v33 = vld [vmem:[%s1 + $0x28] sm:$0xf]
  %v34 = vld [vmem:[%s1 + $0x2c] sm:$0xf]
  %v35 = vld [vmem:[%s1 + $0x30] sm:$0xf]
  %v36 = vld [vmem:[%s1 + $0x34] sm:$0xf]
  %v37 = vld [vmem:[%s1 + $0x38] sm:$0xf]
  %v38 = vld [vmem:[%s1 + $0x3c] sm:$0xf]
  %v39 = vld [vmem:[%s1 + $0x40] sm:$0xf]
  %v40 = vld [vmem:[%s1 + $0x44] sm:$0xf]
  %v41 = vld [vmem:[%s2] sm:$0x1]
  %v43 = vlaneseq
  %v44 = vshrl.u32 %v43, 7
  %v45 = vsub.s32 0, %v44
  %v46 = vrot.slane %v41, %v45
  %v52 = vunpack.c.l.b16 %v19
  %v53 = vunpack.c.h.b16 %v19
  %v54 = vunpack.c.l.b16 %v20
  %v55 = vunpack.c.h.b16 %v20
  %v56 = vunpack.c.l.b16 %v21
  %v57 = vunpack.c.h.b16 %v21
  %v58 = vunpack.c.l.b16 %v22
  %v59 = vunpack.c.h.b16 %v22
  %v60 = vpack.c.b16 %v54, %v52
  %v61 = vpack.c.b16 %v55, %v53
  %v62 = vpack.c.b16 %v58, %v56
  %v63 = vpack.c.b16 %v59, %v57
  %v84 = vunpack.c.l.b16 %v23
  %v85 = vunpack.c.l.b16 %v24
  %v86 = vunpack.c.l.b16 %v25
  %v87 = vunpack.c.l.b16 %v26
  %v88 = vunpack.c.l.b16 %v27
  %v89 = vunpack.c.l.b16 %v28
  %v90 = vunpack.c.l.b16 %v29
  %v91 = vunpack.c.l.b16 %v30
  %v92 = vunpack.c.l.b16 %v31
  %v93 = vunpack.c.l.b16 %v32
  %v94 = vunpack.c.l.b16 %v33
  %v95 = vunpack.c.l.b16 %v34
  %v96 = vunpack.c.l.b16 %v35
  %v97 = vunpack.c.l.b16 %v36
  %v98 = vunpack.c.l.b16 %v37
  %v99 = vunpack.c.l.b16 %v38
  %v100 = vunpack.c.l.b16 %v39
  %v101 = vunpack.c.l.b16 %v40
  %v102 = vpack.c.b16 %v85, %v84
  %v103 = vpack.c.b16 %v87, %v86
  %v104 = vpack.c.b16 %v89, %v88
  %v105 = vpack.c.b16 %v91, %v90
  %v106 = vpack.c.b16 %v93, %v92
  %v107 = vpack.c.b16 %v95, %v94
  %v108 = vpack.c.b16 %v97, %v96
  %v109 = vpack.c.b16 %v99, %v98
  %v110 = vpack.c.b16 %v101, %v100
  %vm120 = vcmask 130048
  %v122 = vsel %vm120, %v61, 0
  %v125 = vsel %vm120, %v63, 0
  %127 = vmatprep.subr.bf16.mxu0 0
  %128 = vmatpush1.bf16.msra.mxu0 %v102
  %129 = vmatprep.subr.bf16.mxu0 0
  %130 = vmatpush1.bf16.msra.mxu0 %v103
  %131 = vmatprep.subr.bf16.mxu0 0
  %132 = vmatpush1.bf16.msra.mxu0 %v104
  %133 = vmatprep.subr.bf16.mxu0 0
  %134 = vmatpush1.bf16.msra.mxu0 %v105
  %135 = vmatprep.subr.bf16.mxu0 0
  %136 = vmatpush1.bf16.msra.mxu0 %v106
  %137 = vmatprep.subr.bf16.mxu0 0
  %138 = vmatpush1.bf16.msra.mxu0 %v107
  %139 = vmatprep.subr.bf16.mxu0 0
  %140 = vmatpush1.bf16.msra.mxu0 %v108
  %141 = vmatprep.subr.bf16.mxu0 0
  %142 = vmatpush1.bf16.msra.mxu0 %v109
  %143 = vmatprep.subr.bf16.mxu0 0
  %144 = vmatpush1.bf16.msra.mxu0 %v110
  %145 = vmatprep.subr.bf16.mxu0 0
  %146 = vmatpush1.bf16.msra.mxu0 0
  %147 = vmatprep.subr.bf16.mxu0 0
  %148 = vmatpush1.bf16.msra.mxu0 0
  %149 = vmatprep.subr.bf16.mxu0 0
  %150 = vmatpush1.bf16.msra.mxu0 0
  %151 = vmatprep.subr.bf16.mxu0 0
  %152 = vmatpush1.bf16.msra.mxu0 0
  %153 = vmatprep.subr.bf16.mxu0 0
  %154 = vmatpush1.bf16.msra.mxu0 0
  %155 = vmatprep.subr.bf16.mxu0 0
  %156 = vmatpush1.bf16.msra.mxu0 0
  %157 = vmatprep.subr.bf16.mxu0 0
  %158 = vmatpush1.bf16.msra.mxu0 0
  %159 = vmatprep.mubr.bf16.mxu0 %v122
  %160 = vmatmul.mubr.bf16.gmra.mrb[0].mxu0 %v60
  %v161 = vpop.f32.mrb[0].mxu0
  %v162 = vadd.f32 %v46, %v161
  %v163 = vpop.f32.mrb[0].mxu0
  %v164 = vpop.f32.mrb[0].mxu0
  %v165 = vadd.f32 %v46, %v164
  %v166 = vpop.f32.mrb[0].mxu0
  %167 = vmatprep.mubr.bf16.mxu0 %v125
  %168 = vmatmul.mubr.bf16.gmra.mrb[0].mxu0 %v62
  %v169 = vpop.f32.mrb[0].mxu0
  %v170 = vadd.f32 %v46, %v169
  %v171 = vpop.f32.mrb[0].mxu0
  %v172 = vpop.f32.mrb[0].mxu0
  %v173 = vadd.f32 %v46, %v172
  %v174 = vpop.f32.mrb[0].mxu0
  %175 = vdwg.mxu0
  %s176 = sld [smem:[#allocation2]]
  %vm177 = vcmp.ge.f32.partialorder %v162, 0.0
  %vm178 = vcmp.ge.f32.partialorder %v165, 0.0
  %vm179 = vcmp.ge.f32.partialorder %v170, 0.0
  %vm180 = vcmp.ge.f32.partialorder %v173, 0.0
  %v181 = vstv %s176
  %v182 = vmul.f32 %v181, %v162
  %v183 = vmul.f32 %v181, %v165
  %v184 = vmul.f32 %v181, %v170
  %v185 = vmul.f32 %v181, %v173
  %v186 = vsel %vm177, %v162, %v182
  %v187 = vsel %vm178, %v165, %v183
  %v188 = vsel %vm179, %v170, %v184
  %v189 = vsel %vm180, %v173, %v185
  %190 = vst.msk [vmem:[%s4] sm:$0xff] %vm120, %v186
  %191 = vst.msk [vmem:[%s4 + $0x8] sm:$0xff] %vm120, %v187
  %192 = vst.msk [vmem:[%s4 + $0x10] sm:$0xff] %vm120, %v188
  %193 = vst.msk [vmem:[%s4 + $0x18] sm:$0xff] %vm120, %v189
  // Predicated region
  $region18: #{srresnet_forward.11} parent=0 // pred_check
    _
  $region19: #{srresnet_forward.11} parent=0 // pred_check_branch
    %195 = sbr.rel (0) target = $region21
  $region20: #{srresnet_forward.11} parent=0 // pred_region
    _
  $region21: #{srresnet_forward.11} parent=0 // pred_fallthru
    _
  // Predicated region
  $region22: #{srresnet_forward.11} parent=0 // pred_check
    _
  $region23: #{srresnet_forward.11} parent=0 // pred_check_branch
    %197 = sbr.rel (0) target = $region25
  $region24: #{srresnet_forward.11} parent=0 // pred_region
    _
  $region25: #{srresnet_forward.11} parent=0 // pred_fallthru
    _

// kernel: srresnet_forward.12
$region0: #{srresnet_forward.12}
  #allocation0 [shape = 'u32[]', space=smem, size = 0x4, offset = 0x4, fixed_abs, tag = 'smem constant byte address 0x4 - core index']
  #allocation1 [shape = 'u32[144,128]{1,0:T(1,128)}', space=vmem, size = 0x12000, scoped, tag = 'internal scratch']
  %s0 = inlined_call_operand.vmem [shape: bf16[32,16], index: 0, kind: input, shape index: {}]
  %s1 = inlined_call_operand.vmem [shape: bf16[16,144], index: 1, kind: input, shape index: {}]
  %s2 = inlined_call_operand.vmem [shape: f32[32,144], index: 2, kind: output, shape index: {}]
  %s3 = sld [smem:[#allocation0]]
  $region18: #{srresnet_forward.12} parent=0
    _
  %s5 = ssub.s32 1, %s3
  %s6 = scalar_select 0, %s5, %s3
  // Predicated region
  $region2: #{srresnet_forward.12} parent=0 // pred_check
    _
  $region3: #{srresnet_forward.12} parent=0 // pred_check_branch
    %8 = sbr.rel (0) target = $region5
  $region4: #{srresnet_forward.12} parent=0 // pred_region
    _
  $region5: #{srresnet_forward.12} parent=0 // pred_fallthru
    _
  // Predicated region
  $region6: #{srresnet_forward.12} parent=0 // pred_check
    _
  $region7: #{srresnet_forward.12} parent=0 // pred_check_branch
    %10 = sbr.rel (0) target = $region9
  $region8: #{srresnet_forward.12} parent=0 // pred_region
    _
  $region9: #{srresnet_forward.12} parent=0 // pred_fallthru
    _
  %v12 = vld [vmem:[%s0] sm:$0xf]
  %v13 = vld [vmem:[%s0 + $0x4] sm:$0xf]
  %v14 = vld [vmem:[%s0 + $0x8] sm:$0xf]
  %v15 = vld [vmem:[%s0 + $0xc] sm:$0xf]
  %v16 = vld [vmem:[%s1] sm:$0xff]
  %v17 = vld [vmem:[%s1 + $0x8] sm:$0xff]
  %v22 = vunpack.c.l.b16 %v12
  %v23 = vunpack.c.l.b16 %v13
  %v24 = vunpack.c.l.b16 %v14
  %v25 = vunpack.c.l.b16 %v15
  %v26 = vpack.c.b16 %v23, %v22
  %v27 = vpack.c.b16 %v25, %v24
  %v30 = vunpack.c.l.b16 %v16
  %v31 = vunpack.c.h.b16 %v16
  %v32 = vunpack.c.l.b16 %v17
  %v33 = vunpack.c.h.b16 %v17
  %v34 = vpack.c.b16 %v32, %v30
  %v35 = vpack.c.b16 %v33, %v31
  %vm38 = vcmask 130048
  %v40 = vsel %vm38, %v26, 0
  %v43 = vsel %vm38, %v27, 0
  %45 = vmatprep.subr.bf16.mxu0 %v35
  %46 = vmatpush1.bf16.msra.mxu0 %v34
  %47 = vmatprep.subr.bf16.mxu0 0
  %48 = vmatpush1.bf16.msra.mxu0 0
  %49 = vmatprep.subr.bf16.mxu0 0
  %50 = vmatpush1.bf16.msra.mxu0 0
  %51 = vmatprep.subr.bf16.mxu0 0
  %52 = vmatpush1.bf16.msra.mxu0 0
  %53 = vmatprep.subr.bf16.mxu0 0
  %54 = vmatpush1.bf16.msra.mxu0 0
  %55 = vmatprep.subr.bf16.mxu0 0
  %56 = vmatpush1.bf16.msra.mxu0 0
  %57 = vmatprep.subr.bf16.mxu0 0
  %58 = vmatpush1.bf16.msra.mxu0 0
  %59 = vmatprep.subr.bf16.mxu0 0
  %60 = vmatpush1.bf16.msra.mxu0 0
  %61 = vmatprep.subr.bf16.mxu0 0
  %62 = vmatpush1.bf16.msra.mxu0 0
  %63 = vmatprep.subr.bf16.mxu0 0
  %64 = vmatpush1.bf16.msra.mxu0 0
  %65 = vmatprep.subr.bf16.mxu0 0
  %66 = vmatpush1.bf16.msra.mxu0 0
  %67 = vmatprep.subr.bf16.mxu0 0
  %68 = vmatpush1.bf16.msra.mxu0 0
  %69 = vmatprep.subr.bf16.mxu0 0
  %70 = vmatpush1.bf16.msra.mxu0 0
  %71 = vmatprep.subr.bf16.mxu0 0
  %72 = vmatpush1.bf16.msra.mxu0 0
  %73 = vmatprep.subr.bf16.mxu0 0
  %74 = vmatpush1.bf16.msra.mxu0 0
  %75 = vmatprep.subr.bf16.mxu0 0
  %76 = vmatpush1.bf16.msra.mxu0 0
  %77 = vmatprep.mubr.bf16.mxu0 0
  %78 = vmatmul.mubr.bf16.gmra.mrb[0].mxu0 %v40
  %v79 = vpop.f32.mrb[0].mxu0
  %v80 = vadd.f32 0.0, %v79
  %v81 = vpop.f32.mrb[0].mxu0
  %v82 = vadd.f32 0.0, %v81
  %v83 = vpop.f32.mrb[0].mxu0
  %v84 = vadd.f32 0.0, %v83
  %v85 = vpop.f32.mrb[0].mxu0
  %v86 = vadd.f32 0.0, %v85
  %87 = vmatprep.mubr.bf16.mxu0 0
  %88 = vmatmul.mubr.bf16.gmra.mrb[0].mxu0 %v43
  %v89 = vpop.f32.mrb[0].mxu0
  %v90 = vadd.f32 0.0, %v89
  %v91 = vpop.f32.mrb[0].mxu0
  %v92 = vadd.f32 0.0, %v91
  %v93 = vpop.f32.mrb[0].mxu0
  %v94 = vadd.f32 0.0, %v93
  %v95 = vpop.f32.mrb[0].mxu0
  %v96 = vadd.f32 0.0, %v95
  %97 = vdwg.mxu0
  %98 = vst [vmem:[%s2] sm:$0xff] %v80
  %99 = vst.msk [vmem:[%s2 + $0x8] sm:$0xff] %vm38, %v82
  %100 = vst [vmem:[%s2 + $0x10] sm:$0xff] %v84
  %101 = vst.msk [vmem:[%s2 + $0x18] sm:$0xff] %vm38, %v86
  %102 = vst [vmem:[%s2 + $0x20] sm:$0xff] %v90
  %103 = vst.msk [vmem:[%s2 + $0x28] sm:$0xff] %vm38, %v92
  %104 = vst [vmem:[%s2 + $0x30] sm:$0xff] %v94
  %105 = vst.msk [vmem:[%s2 + $0x38] sm:$0xff] %vm38, %v96
  // Predicated region
  $region10: #{srresnet_forward.12} parent=0 // pred_check
    _
  $region11: #{srresnet_forward.12} parent=0 // pred_check_branch
    %107 = sbr.rel (0) target = $region13
  $region12: #{srresnet_forward.12} parent=0 // pred_region
    _
  $region13: #{srresnet_forward.12} parent=0 // pred_fallthru
    _
  // Predicated region
  $region14: #{srresnet_forward.12} parent=0 // pred_check
    _
  $region15: #{srresnet_forward.12} parent=0 // pred_check_branch
    %109 = sbr.rel (0) target = $region17
  $region16: #{srresnet_forward.12} parent=0 // pred_region
    _
  $region17: #{srresnet_forward.12} parent=0 // pred_fallthru
    _

// kernel: srresnet_forward.13
$region0: #{srresnet_forward.13}
  #allocation0 [shape = 'u32[]', space=smem, size = 0x4, offset = 0x4, fixed_abs, tag = 'smem constant byte address 0x4 - core index']
  #allocation1 [shape = 'u32[144,128]{1,0:T(1,128)}', space=vmem, size = 0x12000, scoped, tag = 'internal scratch']
  #allocation2 [shape = 'bf16[144,384]{1,0:T(16,128)(2,1)}', space=vmem, size = 0x1b000, scoped, tag = 'scratch operand']
  #allocation3 [shape = 'bf16[16,836]{1,0:T(16,128)(2,1)}', space=vmem, size = 0x7000, scoped, tag = 'scratch operand']
  #allocation4 [shape = 'f32[1]{0:T(128)S(6)}', space=smem, size = 0x200, scoped, tag = 'scoped memory for srresnet_forward.13']
  %s0 = inlined_call_operand.vmem [shape: bf16[2,16,836], index: 0, kind: input, shape index: {}]
  %s1 = inlined_call_operand.vmem [shape: bf16[2,16,836], index: 1, kind: input, shape index: {}]
  %s2 = inlined_call_operand.vmem [shape: f32[16,1], index: 2, kind: input, shape index: {}]
  %s3 = inlined_call_operand.vmem [shape: bf16[16,144], index: 3, kind: input, shape index: {}]
  %s4 = inlined_call_operand.vmem [shape: f32[16,1], index: 4, kind: input, shape index: {}]
  %s5 = inlined_call_operand.vmem [shape: bf16[1,836], index: 5, kind: input, shape index: {}]
  %s6 = inlined_call_operand.<no memory space> [shape: f32[1], index: 6, kind: input, shape index: {}]
  %s7 = inlined_call_operand.vmem [shape: bf16[2,16,836], index: 7, kind: output, shape index: {}]
  %s8 = sld [smem:[#allocation0]]
  $region61: #{srresnet_forward.13} parent=0
    _
  %s10 = ssub.s32 1, %s8
  %s11 = scalar_select 0, %s10, %s8
  %12 = sst [smem:[#allocation4]] %s6
  loop: start=0, step=1, limit=4
  $region2: #{srresnet_forward.13} parent=0 // loop_pre_header
    _
  $region3: #{srresnet_forward.13} parent=0 // loop_header
    %s14 = sphi 0, %s18
    %p15 = scmp.ge.s32.totalorder %s14, 4
    %s24 = sphi 0, %s26
    %s27 = sphi 0, %s24
    %s28 = sphi 0, %s27
    %s44 = sphi 0, %s28
    %s50 = sphi 0, %s52
    %s53 = sphi 0, %s50
    %s54 = sphi 0, %s53
    %s70 = sphi 0, %s54
    %s74 = sphi 0, %s74
    %s76 = sphi 0, %s74
    %s77 = sphi 0, %s76
    %s91 = sphi 0, %s77
    %s95 = sphi 0, %s95
    %s97 = sphi 0, %s95
    %s98 = sphi 0, %s97
    %s112 = sphi 0, %s98
    %s116 = sphi 0, %s116
    %s118 = sphi 0, %s116
    %s119 = sphi 0, %s118
    %s133 = sphi 0, %s119
    %s137 = sphi 0, %s137
    %s139 = sphi 0, %s137
    %s140 = sphi 0, %s139
    %s154 = sphi 0, %s140
    %s158 = sphi 0, %s158
    %s160 = sphi 0, %s158
    %s161 = sphi 0, %s160
    %s175 = sphi 0, %s161
    %s181 = sphi 0, %s183
    %s184 = sphi 0, %s181
    %s185 = sphi 0, %s184
    %s201 = sphi 0, %s185
  $region4: #{srresnet_forward.13} parent=0 // loop_header_branch
    %17 = sbr.rel (%p15) target = $region8
  $region5: #{srresnet_forward.13} parent=0 // loop_body
    %s19 = ssub.s32 %s14, 1
    %s20 = ssub.s32 %s14, 2
    %s21 = sadd.s32 %s14, 1
    %s22 = ssub.s32 %s14, %s21
    %p23 = scmp.eq.s32.totalorder %s22, 0
    %s25 = sadd.s32 %s24, 1
    %s26 = scalar_select %p23, %s24, %s25
    %p29 = pneg %p23
    %p30 = scmp.eq.s32.totalorder %s14, 1
    %p31 = por %p29, %p30
    %p32 = scmp.ne.s32.totalorder %s24, %s27
    %p33 = scmp.eq.s32.totalorder %s14, 0
    %p34 = por %p32, %p33
    %p35 = scmp.ne.s32.totalorder %s24, %s27
    %p36 = scmp.eq.s32.totalorder %s19, 1
    %p37 = por %p35, %p36
    %p38 = scmp.ne.s32.totalorder %s27, %s28
    %p39 = scmp.eq.s32.totalorder %s19, 0
    %p40 = por %p38, %p39
    %p41 = scmp.ne.s32.totalorder %s27, %s28
    %p42 = scmp.eq.s32.totalorder %s20, 1
    %p43 = por %p41, %p42
    %p45 = scmp.ne.s32.totalorder %s28, %s44
    %p46 = scmp.eq.s32.totalorder %s20, 0
    %p47 = por %p45, %p46
    %s48 = ssub.s32 %s14, %s21
    %p49 = scmp.eq.s32.totalorder %s48, 0
    %s51 = sadd.s32 %s50, 1
    %s52 = scalar_select %p49, %s50, %s51
    %p55 = pneg %p49
    %p56 = scmp.eq.s32.totalorder %s14, 1
    %p57 = por %p55, %p56
    %p58 = scmp.ne.s32.totalorder %s50, %s53
    %p59 = scmp.eq.s32.totalorder %s14, 0
    %p60 = por %p58, %p59
    %p61 = scmp.ne.s32.totalorder %s50, %s53
    %p62 = scmp.eq.s32.totalorder %s19, 1
    %p63 = por %p61, %p62
    %p64 = scmp.ne.s32.totalorder %s53, %s54
    %p65 = scmp.eq.s32.totalorder %s19, 0
    %p66 = por %p64, %p65
    %p67 = scmp.ne.s32.totalorder %s53, %s54
    %p68 = scmp.eq.s32.totalorder %s20, 1
    %p69 = por %p67, %p68
    %p71 = scmp.ne.s32.totalorder %s54, %s70
    %p72 = scmp.eq.s32.totalorder %s20, 0
    %p73 = por %p71, %p72
    %s75 = sadd.s32 %s74, 1
    %p78 = scmp.eq.s32.totalorder %s14, 1
    %p79 = scmp.ne.s32.totalorder %s74, %s76
    %p80 = scmp.eq.s32.totalorder %s14, 0
    %p81 = por %p79, %p80
    %p82 = scmp.ne.s32.totalorder %s74, %s76
    %p83 = scmp.eq.s32.totalorder %s19, 1
    %p84 = por %p82, %p83
    %p85 = scmp.ne.s32.totalorder %s76, %s77
    %p86 = scmp.eq.s32.totalorder %s19, 0
    %p87 = por %p85, %p86
    %p88 = scmp.ne.s32.totalorder %s76, %s77
    %p89 = scmp.eq.s32.totalorder %s20, 1
    %p90 = por %p88, %p89
    %p92 = scmp.ne.s32.totalorder %s77, %s91
    %p93 = scmp.eq.s32.totalorder %s20, 0
    %p94 = por %p92, %p93
    %s96 = sadd.s32 %s95, 1
    %p99 = scmp.eq.s32.totalorder %s14, 1
    %p100 = scmp.ne.s32.totalorder %s95, %s97
    %p101 = scmp.eq.s32.totalorder %s14, 0
    %p102 = por %p100, %p101
    %p103 = scmp.ne.s32.totalorder %s95, %s97
    %p104 = scmp.eq.s32.totalorder %s19, 1
    %p105 = por %p103, %p104
    %p106 = scmp.ne.s32.totalorder %s97, %s98
    %p107 = scmp.eq.s32.totalorder %s19, 0
    %p108 = por %p106, %p107
    %p109 = scmp.ne.s32.totalorder %s97, %s98
    %p110 = scmp.eq.s32.totalorder %s20, 1
    %p111 = por %p109, %p110
    %p113 = scmp.ne.s32.totalorder %s98, %s112
    %p114 = scmp.eq.s32.totalorder %s20, 0
    %p115 = por %p113, %p114
    %s117 = sadd.s32 %s116, 1
    %p120 = scmp.eq.s32.totalorder %s14, 1
    %p121 = scmp.ne.s32.totalorder %s116, %s118
    %p122 = scmp.eq.s32.totalorder %s14, 0
    %p123 = por %p121, %p122
    %p124 = scmp.ne.s32.totalorder %s116, %s118
    %p125 = scmp.eq.s32.totalorder %s19, 1
    %p126 = por %p124, %p125
    %p127 = scmp.ne.s32.totalorder %s118, %s119
    %p128 = scmp.eq.s32.totalorder %s19, 0
    %p129 = por %p127, %p128
    %p130 = scmp.ne.s32.totalorder %s118, %s119
    %p131 = scmp.eq.s32.totalorder %s20, 1
    %p132 = por %p130, %p131
    %p134 = scmp.ne.s32.totalorder %s119, %s133
    %p135 = scmp.eq.s32.totalorder %s20, 0
    %p136 = por %p134, %p135
    %s138 = sadd.s32 %s137, 1
    %p141 = scmp.eq.s32.totalorder %s14, 1
    %p142 = scmp.ne.s32.totalorder %s137, %s139
    %p143 = scmp.eq.s32.totalorder %s14, 0
    %p144 = por %p142, %p143
    %p145 = scmp.ne.s32.totalorder %s137, %s139
    %p146 = scmp.eq.s32.totalorder %s19, 1
    %p147 = por %p145, %p146
    %p148 = scmp.ne.s32.totalorder %s139, %s140
    %p149 = scmp.eq.s32.totalorder %s19, 0
    %p150 = por %p148, %p149
    %p151 = scmp.ne.s32.totalorder %s139, %s140
    %p152 = scmp.eq.s32.totalorder %s20, 1
    %p153 = por %p151, %p152
    %p155 = scmp.ne.s32.totalorder %s140, %s154
    %p156 = scmp.eq.s32.totalorder %s20, 0
    %p157 = por %p155, %p156
    %s159 = sadd.s32 %s158, 1
    %p162 = scmp.eq.s32.totalorder %s14, 1
    %p163 = scmp.ne.s32.totalorder %s158, %s160
    %p164 = scmp.eq.s32.totalorder %s14, 0
    %p165 = por %p163, %p164
    %p166 = scmp.ne.s32.totalorder %s158, %s160
    %p167 = scmp.eq.s32.totalorder %s19, 1
    %p168 = por %p166, %p167
    %p169 = scmp.ne.s32.totalorder %s160, %s161
    %p170 = scmp.eq.s32.totalorder %s19, 0
    %p171 = por %p169, %p170
    %p172 = scmp.ne.s32.totalorder %s160, %s161
    %p173 = scmp.eq.s32.totalorder %s20, 1
    %p174 = por %p172, %p173
    %p176 = scmp.ne.s32.totalorder %s161, %s175
    %p177 = scmp.eq.s32.totalorder %s20, 0
    %p178 = por %p176, %p177
    %s179 = ssub.s32 %s14, %s21
    %p180 = scmp.eq.s32.totalorder %s179, 0
    %s182 = sadd.s32 %s181, 1
    %s183 = scalar_select %p180, %s181, %s182
    %p186 = pneg %p180
    %p187 = scmp.eq.s32.totalorder %s14, 1
    %p188 = por %p186, %p187
    %p189 = scmp.ne.s32.totalorder %s181, %s184
    %p190 = scmp.eq.s32.totalorder %s14, 0
    %p191 = por %p189, %p190
    %p192 = scmp.ne.s32.totalorder %s181, %s184
    %p193 = scmp.eq.s32.totalorder %s19, 1
    %p194 = por %p192, %p193
    %p195 = scmp.ne.s32.totalorder %s184, %s185
    %p196 = scmp.eq.s32.totalorder %s19, 0
    %p197 = por %p195, %p196
    %p198 = scmp.ne.s32.totalorder %s184, %s185
    %p199 = scmp.eq.s32.totalorder %s20, 1
    %p200 = por %p198, %p199
    %p202 = scmp.ne.s32.totalorder %s185, %s201
    %p203 = scmp.eq.s32.totalorder %s20, 0
    %p204 = por %p202, %p203
    %p205 = scmp.le.s32.totalorder 1, %s14
    %p206 = scmp.lt.s32.totalorder %s14, 3
    %p207 = pnand %p205, %p206
    %p208 = pneg %p207
    // Predicated region
    $region9: #{srresnet_forward.13} parent=5 // pred_check
      _
    $region10: #{srresnet_forward.13} parent=5 // pred_check_branch
      %210 = sbr.rel (%p207) target = $region12
    $region11: #{srresnet_forward.13} parent=5 // pred_region
      %s211 = ssub.s32 %s14, 1
      // Predicated region
      $region13: #{srresnet_forward.13} parent=11 // pred_check
        %p212 = pneg %p87
      $region14: #{srresnet_forward.13} parent=11 // pred_check_branch
        %214 = sbr.rel (%p212) target = $region16
      $region15: #{srresnet_forward.13} parent=11 // pred_region
        _
      $region16: #{srresnet_forward.13} parent=11 // pred_fallthru
        _
      // Predicated region
      $region17: #{srresnet_forward.13} parent=11 // pred_check
        %p215 = pneg %p108
      $region18: #{srresnet_forward.13} parent=11 // pred_check_branch
        %217 = sbr.rel (%p215) target = $region20
      $region19: #{srresnet_forward.13} parent=11 // pred_region
        _
      $region20: #{srresnet_forward.13} parent=11 // pred_fallthru
        _
      // Predicated region
      $region21: #{srresnet_forward.13} parent=11 // pred_check
        %p218 = pneg %p129
      $region22: #{srresnet_forward.13} parent=11 // pred_check_branch
        %220 = sbr.rel (%p218) target = $region24
      $region23: #{srresnet_forward.13} parent=11 // pred_region
        _
      $region24: #{srresnet_forward.13} parent=11 // pred_fallthru
        _
      // Predicated region
      $region25: #{srresnet_forward.13} parent=11 // pred_check
        %p221 = pneg %p150
      $region26: #{srresnet_forward.13} parent=11 // pred_check_branch
        %223 = sbr.rel (%p221) target = $region28
      $region27: #{srresnet_forward.13} parent=11 // pred_region
        _
      $region28: #{srresnet_forward.13} parent=11 // pred_fallthru
        _
      // Predicated region
      $region29: #{srresnet_forward.13} parent=11 // pred_check
        %p224 = pneg %p171
      $region30: #{srresnet_forward.13} parent=11 // pred_check_branch
        %226 = sbr.rel (%p224) target = $region32
      $region31: #{srresnet_forward.13} parent=11 // pred_region
        _
      $region32: #{srresnet_forward.13} parent=11 // pred_fallthru
        _
    $region12: #{srresnet_forward.13} parent=5 // pred_fallthru
      _
    %p227 = scmp.lt.s32.totalorder %s14, 2
    // Predicated region
    $region33: #{srresnet_forward.13} parent=5 // pred_check
      %p228 = pneg %p227
    $region34: #{srresnet_forward.13} parent=5 // pred_check_branch
      %230 = sbr.rel (%p228) target = $region36
    $region35: #{srresnet_forward.13} parent=5 // pred_region
      // Predicated region
      $region37: #{srresnet_forward.13} parent=35 // pred_check
        %p231 = pneg %p34
      $region38: #{srresnet_forward.13} parent=35 // pred_check_branch
        %233 = sbr.rel (%p231) target = $region40
      $region39: #{srresnet_forward.13} parent=35 // pred_region
        %p234 = scmp.lt.s32.totalorder %s14, 1
        %s235 = scalar_select %p234, %s14, 1
        %s236 = smul.addr %s235, 14
        %s237 = smul.addr %s236, 4
        %s238 = scalar_lea.vmem %s0, %s237
      $region40: #{srresnet_forward.13} parent=35 // pred_fallthru
        _
      // Predicated region
      $region41: #{srresnet_forward.13} parent=35 // pred_check
        %p239 = pneg %p60
      $region42: #{srresnet_forward.13} parent=35 // pred_check_branch
        %241 = sbr.rel (%p239) target = $region44
      $region43: #{srresnet_forward.13} parent=35 // pred_region
        %p242 = scmp.lt.s32.totalorder %s14, 1
        %s243 = scalar_select %p242, %s14, 1
        %s244 = smul.addr %s243, 14
        %s245 = smul.addr %s244, 4
        %s246 = scalar_lea.vmem %s1, %s245
      $region44: #{srresnet_forward.13} parent=35 // pred_fallthru
        _
    $region36: #{srresnet_forward.13} parent=5 // pred_fallthru
      _
    %p247 = scmp.le.s32.totalorder 1, %s14
    %p248 = scmp.lt.s32.totalorder %s14, 3
    %p249 = pnand %p247, %p248
    %p250 = pneg %p249
    // Predicated region
    $region45: #{srresnet_forward.13} parent=5 // pred_check
      _
    $region46: #{srresnet_forward.13} parent=5 // pred_check_branch
      %252 = sbr.rel (%p249) target = $region48
    $region47: #{srresnet_forward.13} parent=5 // pred_region
      %s253 = ssub.s32 %s14, 1
      %p254 = scmp.lt.s32.totalorder %s19, 1
      %s255 = scalar_select %p254, %s19, 1
      %s256 = smul.addr %s255, 14
      %s257 = smul.addr %s256, 4
      %s258 = scalar_lea.vmem %s0, %s257
      %p259 = pneg %p40
      %p260 = pneg %p37
      %p261 = scmp.lt.s32.totalorder %s19, 1
      %s262 = scalar_select %p261, %s19, 1
      %s263 = smul.addr %s262, 14
      %s264 = smul.addr %s263, 4
      %s265 = scalar_lea.vmem %s1, %s264
      %p266 = pneg %p66
      %p267 = pneg %p63
      %p268 = pneg %p87
      %p269 = pneg %p84
      %p270 = pneg %p108
      %p271 = pneg %p105
      %p272 = pneg %p129
      %p273 = pneg %p126
      %p274 = pneg %p150
      %p275 = pneg %p147
      %p276 = pneg %p171
      %p277 = pneg %p168
      %p278 = pneg %p197
      %p279 = pneg %p194
      %p280 = scmp.lt.s32.totalorder %s19, 1
      %s281 = scalar_select %p280, %s19, 1
      %s282 = smul.addr %s281, 14
      %s283 = smul.addr %s282, 4
      %s284 = scalar_lea.vmem %s7, %s283
      %p285 = scmp.lt.s32.totalorder %s19, 1
      %s286 = scalar_select %p285, %s19, 1
      %s287 = smul.addr %s286, 14
      %s288 = smul.addr %s287, 4
      %s289 = scalar_lea.vmem %s0, %s288
      %p290 = scmp.lt.s32.totalorder %s19, 1
      %s291 = scalar_select %p290, %s19, 1
      %s292 = smul.addr %s291, 14
      %s293 = smul.addr %s292, 4
      %s294 = scalar_lea.vmem %s1, %s293
      %p295 = scmp.lt.s32.totalorder %s19, 1
      %s296 = scalar_select %p295, %s19, 1
      %s297 = smul.addr %s296, 14
      %s298 = smul.addr %s297, 4
      %s299 = scalar_lea.vmem %s7, %s298
      %v301 = vld [vmem:[%s289] sm:$0xff]
      %v302 = vld [vmem:[%s289 + $0x8] sm:$0xff]
      %v303 = vld [vmem:[%s289 + $0x10] sm:$0xff]
      %v304 = vld [vmem:[%s289 + $0x18] sm:$0xf]
      %v305 = vld [vmem:[%s289 + $0x1c] sm:$0xff]
      %v306 = vld [vmem:[%s289 + $0x24] sm:$0xff]
      %v307 = vld [vmem:[%s289 + $0x2c] sm:$0xff]
      %v308 = vld [vmem:[%s289 + $0x34] sm:$0xf]
      %v309 = vunpack.c.l.bf16 %v301
      %v310 = vunpack.c.h.bf16 %v301
      %v311 = vunpack.c.l.bf16 %v302
      %v312 = vunpack.c.h.bf16 %v302
      %v313 = vunpack.c.l.bf16 %v303
      %v314 = vunpack.c.h.bf16 %v303
      %v315 = vunpack.c.l.bf16 %v304
      %v316 = vunpack.c.l.bf16 %v305
      %v317 = vunpack.c.h.bf16 %v305
      %v318 = vunpack.c.l.bf16 %v306
      %v319 = vunpack.c.h.bf16 %v306
      %v320 = vunpack.c.l.bf16 %v307
      %v321 = vunpack.c.h.bf16 %v307
      %v322 = vunpack.c.l.bf16 %v308
      %v323 = vld [vmem:[%s2] sm:$0xff]
      %v324 = vld [vmem:[%s2 + $0x8] sm:$0xff]
      %326 = vset.pattern.permute.xlu0 0
      %327 = vperm.xlu0 %326, %v323
      %v328 = vpop.permute.xlu0 %327
      %331 = vset.pattern.permute.xlu0 0
      %332 = vperm.xlu0 %331, %v324
      %v333 = vpop.permute.xlu0 %332
      %v335 = vadd.f32 %v309, %v328
      %v336 = vadd.f32 %v310, %v328
      %v337 = vadd.f32 %v311, %v328
      %v338 = vadd.f32 %v312, %v328
      %v339 = vadd.f32 %v313, %v328
      %v340 = vadd.f32 %v314, %v328
      %v341 = vadd.f32 %v315, %v328
      %v342 = vadd.f32 %v316, %v333
      %v343 = vadd.f32 %v317, %v333
      %v344 = vadd.f32 %v318, %v333
      %v345 = vadd.f32 %v319, %v333
      %v346 = vadd.f32 %v320, %v333
      %v347 = vadd.f32 %v321, %v333
      %v348 = vadd.f32 %v322, %v333
      %v349 = vmax.f32 %v335, %v342
      %v350 = vrot.slane %v349, 4
      %v351 = vmax.f32 %v349, %v350
      %v352 = vrot.slane %v351, 2
      %v353 = vmax.f32 %v351, %v352
      %v354 = vrot.slane %v353, 1
      %v355 = vmax.f32 %v353, %v354
      %v356 = vmax.f32 %v336, %v343
      %v357 = vrot.slane %v356, 4
      %v358 = vmax.f32 %v356, %v357
      %v359 = vrot.slane %v358, 2
      %v360 = vmax.f32 %v358, %v359
      %v361 = vrot.slane %v360, 1
      %v362 = vmax.f32 %v360, %v361
      %v363 = vmax.f32 %v337, %v344
      %v364 = vrot.slane %v363, 4
      %v365 = vmax.f32 %v363, %v364
      %v366 = vrot.slane %v365, 2
      %v367 = vmax.f32 %v365, %v366
      %v368 = vrot.slane %v367, 1
      %v369 = vmax.f32 %v367, %v368
      %v370 = vmax.f32 %v338, %v345
      %v371 = vrot.slane %v370, 4
      %v372 = vmax.f32 %v370, %v371
      %v373 = vrot.slane %v372, 2
      %v374 = vmax.f32 %v372, %v373
      %v375 = vrot.slane %v374, 1
      %v376 = vmax.f32 %v374, %v375
      %v377 = vmax.f32 %v339, %v346
      %v378 = vrot.slane %v377, 4
      %v379 = vmax.f32 %v377, %v378
      %v380 = vrot.slane %v379, 2
      %v381 = vmax.f32 %v379, %v380
      %v382 = vrot.slane %v381, 1
      %v383 = vmax.f32 %v381, %v382
      %v384 = vmax.f32 %v340, %v347
      %v385 = vrot.slane %v384, 4
      %v386 = vmax.f32 %v384, %v385
      %v387 = vrot.slane %v386, 2
      %v388 = vmax.f32 %v386, %v387
      %v389 = vrot.slane %v388, 1
      %v390 = vmax.f32 %v388, %v389
      %vm391 = vcmask 556032
      %v392 = vsel %vm391, %v341, -inf
      %v393 = vsel %vm391, %v348, -inf
      %v394 = vmax.f32 %v392, %v393
      %v395 = vrot.slane %v394, 4
      %v396 = vmax.f32 %v394, %v395
      %v397 = vrot.slane %v396, 2
      %v398 = vmax.f32 %v396, %v397
      %v399 = vrot.slane %v398, 1
      %v400 = vmax.f32 %v398, %v399
      %v401 = vsub.f32 %v335, %v355
      %v402 = vsub.f32 %v336, %v362
      %v403 = vsub.f32 %v337, %v369
      %v404 = vsub.f32 %v338, %v376
      %v405 = vsub.f32 %v339, %v383
      %v406 = vsub.f32 %v340, %v390
      %v407 = vsub.f32 %v341, %v400
      %v408 = vsub.f32 %v342, %v355
      %v409 = vsub.f32 %v343, %v362
      %v410 = vsub.f32 %v344, %v369
      %v411 = vsub.f32 %v345, %v376
      %v412 = vsub.f32 %v346, %v383
      %v413 = vsub.f32 %v347, %v390
      %v414 = vsub.f32 %v348, %v400
      %v415 = vmul.f32 %v401, 1.442695
      %v416 = vpow.pop %v415
      %v417 = vmul.f32 %v402, 1.442695
      %v418 = vpow.pop %v417
      %v419 = vmul.f32 %v403, 1.442695
      %v420 = vpow.pop %v419
      %v421 = vmul.f32 %v404, 1.442695
      %v422 = vpow.pop %v421
      %v423 = vmul.f32 %v405, 1.442695
      %v424 = vpow.pop %v423
      %v425 = vmul.f32 %v406, 1.442695
      %v426 = vpow.pop %v425
      %v427 = vmul.f32 %v407, 1.442695
      %v428 = vpow.pop %v427
      %v429 = vmul.f32 %v408, 1.442695
      %v430 = vpow.pop %v429
      %v431 = vmul.f32 %v409, 1.442695
      %v432 = vpow.pop %v431
      %v433 = vmul.f32 %v410, 1.442695
      %v434 = vpow.pop %v433
      %v435 = vmul.f32 %v411, 1.442695
      %v436 = vpow.pop %v435
      %v437 = vmul.f32 %v412, 1.442695
      %v438 = vpow.pop %v437
      %v439 = vmul.f32 %v413, 1.442695
      %v440 = vpow.pop %v439
      %v441 = vmul.f32 %v414, 1.442695
      %v442 = vpow.pop %v441
      %v443 = vadd.f32 %v416, %v430
      %v444 = vrot.slane %v443, 4
      %v445 = vadd.f32 %v443, %v444
      %v446 = vrot.slane %v445, 2
      %v447 = vadd.f32 %v445, %v446
      %v448 = vrot.slane %v447, 1
      %v449 = vadd.f32 %v447, %v448
      %v450 = vadd.f32 %v418, %v432
      %v451 = vrot.slane %v450, 4
      %v452 = vadd.f32 %v450, %v451
      %v453 = vrot.slane %v452, 2
      %v454 = vadd.f32 %v452, %v453
      %v455 = vrot.slane %v454, 1
      %v456 = vadd.f32 %v454, %v455
      %v457 = vadd.f32 %v420, %v434
      %v458 = vrot.slane %v457, 4
      %v459 = vadd.f32 %v457, %v458
      %v460 = vrot.slane %v459, 2
      %v461 = vadd.f32 %v459, %v460
      %v462 = vrot.slane %v461, 1
      %v463 = vadd.f32 %v461, %v462
      %v464 = vadd.f32 %v422, %v436
      %v465 = vrot.slane %v464, 4
      %v466 = vadd.f32 %v464, %v465
      %v467 = vrot.slane %v466, 2
      %v468 = vadd.f32 %v466, %v467
      %v469 = vrot.slane %v468, 1
      %v470 = vadd.f32 %v468, %v469
      %v471 = vadd.f32 %v424, %v438
      %v472 = vrot.slane %v471, 4
      %v473 = vadd.f32 %v471, %v472
      %v474 = vrot.slane %v473, 2
      %v475 = vadd.f32 %v473, %v474
      %v476 = vrot.slane %v475, 1
      %v477 = vadd.f32 %v475, %v476
      %v478 = vadd.f32 %v426, %v440
      %v479 = vrot.slane %v478, 4
      %v480 = vadd.f32 %v478, %v479
      %v481 = vrot.slane %v480, 2
      %v482 = vadd.f32 %v480, %v481
      %v483 = vrot.slane %v482, 1
      %v484 = vadd.f32 %v482, %v483
      %v485 = vsel %vm391, %v428, 0.0
      %v486 = vsel %vm391, %v442, 0.0
      %v487 = vadd.f32 %v485, %v486
      %v488 = vrot.slane %v487, 4
      %v489 = vadd.f32 %v487, %v488
      %v490 = vrot.slane %v489, 2
      %v491 = vadd.f32 %v489, %v490
      %v492 = vrot.slane %v491, 1
      %v493 = vadd.f32 %v491, %v492
      %v494 = vrcp.pop %v449
      %v495 = vrcp.pop %v456
      %v496 = vrcp.pop %v463
      %v497 = vrcp.pop %v470
      %v498 = vrcp.pop %v477
      %v499 = vrcp.pop %v484
      %v500 = vrcp.pop %v493
      %v501 = vmul.f32 %v416, %v494
      %v502 = vmul.f32 %v418, %v495
      %v503 = vmul.f32 %v420, %v496
      %v504 = vmul.f32 %v422, %v497
      %v505 = vmul.f32 %v424, %v498
      %v506 = vmul.f32 %v426, %v499
      %v507 = vmul.f32 %v428, %v500
      %v508 = vmul.f32 %v430, %v494
      %v509 = vmul.f32 %v432, %v495
      %v510 = vmul.f32 %v434, %v496
      %v511 = vmul.f32 %v436, %v497
      %v512 = vmul.f32 %v438, %v498
      %v513 = vmul.f32 %v440, %v499
      %v514 = vmul.f32 %v442, %v500
      %v515 = vld [vmem:[%s294] sm:$0xff]
      %v516 = vld [vmem:[%s294 + $0x8] sm:$0xff]
      %v517 = vld [vmem:[%s294 + $0x10] sm:$0xff]
      %v518 = vld [vmem:[%s294 + $0x18] sm:$0xf]
      %v519 = vld [vmem:[%s294 + $0x1c] sm:$0xff]
      %v520 = vld [vmem:[%s294 + $0x24] sm:$0xff]
      %v521 = vld [vmem:[%s294 + $0x2c] sm:$0xff]
      %v522 = vld [vmem:[%s294 + $0x34] sm:$0xf]
      %v523 = vunpack.c.l.bf16 %v515
      %v524 = vunpack.c.h.bf16 %v515
      %v525 = vunpack.c.l.bf16 %v516
      %v526 = vunpack.c.h.bf16 %v516
      %v527 = vunpack.c.l.bf16 %v517
      %v528 = vunpack.c.h.bf16 %v517
      %v529 = vunpack.c.l.bf16 %v518
      %v530 = vunpack.c.l.bf16 %v519
      %v531 = vunpack.c.h.bf16 %v519
      %v532 = vunpack.c.l.bf16 %v520
      %v533 = vunpack.c.h.bf16 %v520
      %v534 = vunpack.c.l.bf16 %v521
      %v535 = vunpack.c.h.bf16 %v521
      %v536 = vunpack.c.l.bf16 %v522
      %v537 = vmul.f32 %v501, %v523
      %v538 = vmul.f32 %v502, %v524
      %v539 = vmul.f32 %v503, %v525
      %v540 = vmul.f32 %v504, %v526
      %v541 = vmul.f32 %v505, %v527
      %v542 = vmul.f32 %v506, %v528
      %v543 = vmul.f32 %v507, %v529
      %v544 = vmul.f32 %v508, %v530
      %v545 = vmul.f32 %v509, %v531
      %v546 = vmul.f32 %v510, %v532
      %v547 = vmul.f32 %v511, %v533
      %v548 = vmul.f32 %v512, %v534
      %v549 = vmul.f32 %v513, %v535
      %v550 = vmul.f32 %v514, %v536
      %v551 = vpack.c.bf16 %v544, %v537
      %v552 = vpack.c.bf16 %v545, %v538
      %v553 = vpack.c.bf16 %v546, %v539
      %v554 = vpack.c.bf16 %v547, %v540
      %v555 = vpack.c.bf16 %v548, %v541
      %v556 = vpack.c.bf16 %v549, %v542
      %v557 = vpack.c.bf16 %v550, %v543
      %558 = vst [vmem:[#allocation3] sm:$0xff] %v551
      %559 = vst [vmem:[#allocation3 + $0x8] sm:$0xff] %v552
      %560 = vst [vmem:[#allocation3 + $0x10] sm:$0xff] %v553
      %561 = vst [vmem:[#allocation3 + $0x18] sm:$0xff] %v554
      %562 = vst [vmem:[#allocation3 + $0x20] sm:$0xff] %v555
      %563 = vst [vmem:[#allocation3 + $0x28] sm:$0xff] %v556
      %564 = vst.msk [vmem:[#allocation3 + $0x30] sm:$0xff] %vm391, %v557
      %v565 = vld [vmem:[%s3] sm:$0xff]
      %v566 = vld [vmem:[%s3 + $0x8] sm:$0xff]
      %v567 = vld [vmem:[%s4] sm:$0xff]
      %v568 = vld [vmem:[%s4 + $0x8] sm:$0xff]
      %s569 = sld [smem:[#allocation4]]
      %v570 = vld [vmem:[#allocation3 + $0x8] sm:$0xff]
      %v571 = vld [vmem:[#allocation3 + $0x10] sm:$0xff]
      %v572 = vld [vmem:[#allocation3 + $0x18] sm:$0xff]
      %v573 = vld [vmem:[#allocation3 + $0x20] sm:$0xff]
      %578 = vrot.lane.b32.xlu0 %v570, 19
      %v579 = vpop.permute.xlu0 %578
      %580 = vrot.lane.b32.xlu0 %v571, 19
      %v581 = vpop.permute.xlu0 %580
      %582 = vrot.lane.b32.xlu0 %v572, 19
      %v583 = vpop.permute.xlu0 %582
      %584 = vrot.lane.b32.xlu0 %v573, 19
      %v585 = vpop.permute.xlu0 %584
      %vm586 = vcmask 154624
      %v587 = vsel %vm586, %v579, %v581
      %v588 = vsel %vm586, %v581, %v583
      %v589 = vsel %vm586, %v583, %v585
      %593 = vst [vmem:[#allocation2] sm:$0xff] %v587
      %594 = vst [vmem:[#allocation2 + $0x8] sm:$0xff] %v588
      %595 = vst [vmem:[#allocation2 + $0x10] sm:$0xff] %v589
      %v596 = vld [vmem:[#allocation3 + $0x8] sm:$0xff]
      %v597 = vld [vmem:[#allocation3 + $0x10] sm:$0xff]
      %v598 = vld [vmem:[#allocation3 + $0x18] sm:$0xff]
      %v599 = vld [vmem:[#allocation3 + $0x20] sm:$0xff]
      %604 = vrot.lane.b32.xlu0 %v596, 18
      %v605 = vpop.permute.xlu0 %604
      %606 = vrot.lane.b32.xlu0 %v597, 18
      %v607 = vpop.permute.xlu0 %606
      %608 = vrot.lane.b32.xlu0 %v598, 18
      %v609 = vpop.permute.xlu0 %608
      %610 = vrot.lane.b32.xlu0 %v599, 18
      %v611 = vpop.permute.xlu0 %610
      %vm612 = vcmask 146432
      %v613 = vsel %vm612, %v605, %v607
      %v614 = vsel %vm612, %v607, %v609
      %v615 = vsel %vm612, %v609, %v611
      %619 = vst [vmem:[#allocation2 + $0x18] sm:$0xff] %v613
      %620 = vst [vmem:[#allocation2 + $0x20] sm:$0xff] %v614
      %621 = vst [vmem:[#allocation2 + $0x28] sm:$0xff] %v615
      %v622 = vld [vmem:[#allocation3 + $0x8] sm:$0xff]
      %v623 = vld [vmem:[#allocation3 + $0x10] sm:$0xff]
      %v624 = vld [vmem:[#allocation3 + $0x18] sm:$0xff]
      %v625 = vld [vmem:[#allocation3 + $0x20] sm:$0xff]
      %630 = vrot.lane.b32.xlu0 %v622, 17
      %v631 = vpop.permute.xlu0 %630
      %632 = vrot.lane.b32.xlu0 %v623, 17
      %v633 = vpop.permute.xlu0 %632
      %634 = vrot.lane.b32.xlu0 %v624, 17
      %v635 = vpop.permute.xlu0 %634
      %636 = vrot.lane.b32.xlu0 %v625, 17
      %v637 = vpop.permute.xlu0 %636
      %vm638 = vcmask 138240
      %v639 = vsel %vm638, %v631, %v633
      %v640 = vsel %vm638, %v633, %v635
      %v641 = vsel %vm638, %v635, %v637
      %645 = vst [vmem:[#allocation2 + $0x30] sm:$0xff] %v639
      %646 = vst [vmem:[#allocation2 + $0x38] sm:$0xff] %v640
      %647 = vst [vmem:[#allocation2 + $0x40] sm:$0xff] %v641
      %v648 = vld [vmem:[#allocation3 + $0x8] sm:$0xff]
      %v649 = vld [vmem:[#allocation3 + $0x10] sm:$0xff]
      %v650 = vld [vmem:[#allocation3 + $0x18] sm:$0xff]
      %v651 = vld [vmem:[#allocation3 + $0x20] sm:$0xff]
      %656 = vrot.lane.b32.xlu0 %v648, 1
      %v657 = vpop.permute.xlu0 %656
      %658 = vrot.lane.b32.xlu0 %v649, 1
      %v659 = vpop.permute.xlu0 %658
      %660 = vrot.lane.b32.xlu0 %v650, 1
      %v661 = vpop.permute.xlu0 %660
      %662 = vrot.lane.b32.xlu0 %v651, 1
      %v663 = vpop.permute.xlu0 %662
      %vm664 = vcmask 7168
      %v665 = vsel %vm664, %v657, %v659
      %v666 = vsel %vm664, %v659, %v661
      %v667 = vsel %vm664, %v661, %v663
      %671 = vst [vmem:[#allocation2 + $0x48] sm:$0xff] %v665
      %672 = vst [vmem:[#allocation2 + $0x50] sm:$0xff] %v666
      %673 = vst [vmem:[#allocation2 + $0x58] sm:$0xff] %v667
      %v674 = vld [vmem:[#allocation3 + $0x10] sm:$0xff]
      %v675 = vld [vmem:[#allocation3 + $0x18] sm:$0xff]
      %v676 = vld [vmem:[#allocation3 + $0x20] sm:$0xff]
      %677 = vst [vmem:[#allocation2 + $0x60] sm:$0xff] %v674
      %678 = vst [vmem:[#allocation2 + $0x68] sm:$0xff] %v675
      %679 = vst [vmem:[#allocation2 + $0x70] sm:$0xff] %v676
      %v680 = vld [vmem:[#allocation3 + $0x10] sm:$0xff]
      %v681 = vld [vmem:[#allocation3 + $0x18] sm:$0xff]
      %v682 = vld [vmem:[#allocation3 + $0x20] sm:$0xff]
      %v683 = vld [vmem:[#allocation3 + $0x28] sm:$0xff]
      %688 = vrot.lane.b32.xlu0 %v680, 127
      %v689 = vpop.permute.xlu0 %688
      %690 = vrot.lane.b32.xlu0 %v681, 127
      %v691 = vpop.permute.xlu0 %690
      %692 = vrot.lane.b32.xlu0 %v682, 127
      %v693 = vpop.permute.xlu0 %692
      %694 = vrot.lane.b32.xlu0 %v683, 127
      %v695 = vpop.permute.xlu0 %694
      %vm696 = vcmask 1039360
      %v697 = vsel %vm696, %v689, %v691
      %v698 = vsel %vm696, %v691, %v693
      %v699 = vsel %vm696, %v693, %v695
      %703 = vst [vmem:[#allocation2 + $0x78] sm:$0xff] %v697
      %704 = vst [vmem:[#allocation2 + $0x80] sm:$0xff] %v698
      %705 = vst [vmem:[#allocation2 + $0x88] sm:$0xff] %v699
      %v706 = vld [vmem:[#allocation3 + $0x10] sm:$0xff]
      %v707 = vld [vmem:[#allocation3 + $0x18] sm:$0xff]
      %v708 = vld [vmem:[#allocation3 + $0x20] sm:$0xff]
      %v709 = vld [vmem:[#allocation3 + $0x28] sm:$0xff]
      %714 = vrot.lane.b32.xlu0 %v706, 111
      %v715 = vpop.permute.xlu0 %714
      %716 = vrot.lane.b32.xlu0 %v707, 111
      %v717 = vpop.permute.xlu0 %716
      %718 = vrot.lane.b32.xlu0 %v708, 111
      %v719 = vpop.permute.xlu0 %718
      %720 = vrot.lane.b32.xlu0 %v709, 111
      %v721 = vpop.permute.xlu0 %720
      %vm722 = vcmask 908288
      %v723 = vsel %vm722, %v715, %v717
      %v724 = vsel %vm722, %v717, %v719
      %v725 = vsel %vm722, %v719, %v721
      %729 = vst [vmem:[#allocation2 + $0x90] sm:$0xff] %v723
      %730 = vst [vmem:[#allocation2 + $0x98] sm:$0xff] %v724
      %731 = vst [vmem:[#allocation2 + $0xa0] sm:$0xff] %v725
      %v732 = vld [vmem:[#allocation3 + $0x10] sm:$0xff]
      %v733 = vld [vmem:[#allocation3 + $0x18] sm:$0xff]
      %v734 = vld [vmem:[#allocation3 + $0x20] sm:$0xff]
      %v735 = vld [vmem:[#allocation3 + $0x28] sm:$0xff]
      %740 = vrot.lane.b32.xlu0 %v732, 110
      %v741 = vpop.permute.xlu0 %740
      %742 = vrot.lane.b32.xlu0 %v733, 110
      %v743 = vpop.permute.xlu0 %742
      %744 = vrot.lane.b32.xlu0 %v734, 110
      %v745 = vpop.permute.xlu0 %744
      %746 = vrot.lane.b32.xlu0 %v735, 110
      %v747 = vpop.permute.xlu0 %746
      %vm748 = vcmask 900096
      %v749 = vsel %vm748, %v741, %v743
      %v750 = vsel %vm748, %v743, %v745
      %v751 = vsel %vm748, %v745, %v747
      %755 = vst [vmem:[#allocation2 + $0xa8] sm:$0xff] %v749
      %756 = vst [vmem:[#allocation2 + $0xb0] sm:$0xff] %v750
      %757 = vst [vmem:[#allocation2 + $0xb8] sm:$0xff] %v751
      %v758 = vld [vmem:[#allocation3 + $0x10] sm:$0xff]
      %v759 = vld [vmem:[#allocation3 + $0x18] sm:$0xff]
      %v760 = vld [vmem:[#allocation3 + $0x20] sm:$0xff]
      %v761 = vld [vmem:[#allocation3 + $0x28] sm:$0xff]
      %766 = vrot.lane.b32.xlu0 %v758, 109
      %v767 = vpop.permute.xlu0 %766
      %768 = vrot.lane.b32.xlu0 %v759, 109
      %v769 = vpop.permute.xlu0 %768
      %770 = vrot.lane.b32.xlu0 %v760, 109
      %v771 = vpop.permute.xlu0 %770
      %772 = vrot.lane.b32.xlu0 %v761, 109
      %v773 = vpop.permute.xlu0 %772
      %vm774 = vcmask 891904
      %v775 = vsel %vm774, %v767, %v769
      %v776 = vsel %vm774, %v769, %v771
      %v777 = vsel %vm774, %v771, %v773
      %781 = vst [vmem:[#allocation2 + $0xc0] sm:$0xff] %v775
      %782 = vst [vmem:[#allocation2 + $0xc8] sm:$0xff] %v776
      %783 = vst [vmem:[#allocation2 + $0xd0] sm:$0xff] %v777
      %v784 = vld [vmem:[#allocation2] sm:$0xff]
      %v785 = vld [vmem:[#allocation2 + $0x8] sm:$0xff]
      %v786 = vld [vmem:[#allocation2 + $0x10] sm:$0xff]
      %v787 = vld [vmem:[#allocation2 + $0x18] sm:$0xff]
      %v788 = vld [vmem:[#allocation2 + $0x20] sm:$0xff]
      %v789 = vld [vmem:[#allocation2 + $0x28] sm:$0xff]
      %v790 = vld [vmem:[#allocation2 + $0x30] sm:$0xff]
      %v791 = vld [vmem:[#allocation2 + $0x38] sm:$0xff]
      %v792 = vld [vmem:[#allocation2 + $0x40] sm:$0xff]
      %v793 = vld [vmem:[#allocation2 + $0x48] sm:$0xff]
      %v794 = vld [vmem:[#allocation2 + $0x50] sm:$0xff]
      %v795 = vld [vmem:[#allocation2 + $0x58] sm:$0xff]
      %v796 = vld [vmem:[#allocation2 + $0x60] sm:$0xff]
      %v797 = vld [vmem:[#allocation2 + $0x68] sm:$0xff]
      %v798 = vld [vmem:[#allocation2 + $0x70] sm:$0xff]
      %v799 = vld [vmem:[#allocation2 + $0x78] sm:$0xff]
      %v800 = vld [vmem:[#allocation2 + $0x80] sm:$0xff]
      %v801 = vld [vmem:[#allocation2 + $0x88] sm:$0xff]
      %v802 = vld [vmem:[#allocation2 + $0x90] sm:$0xff]
      %v803 = vld [vmem:[#allocation2 + $0x98] sm:$0xff]
      %v804 = vld [vmem:[#allocation2 + $0xa0] sm:$0xff]
      %v805 = vld [vmem:[#allocation2 + $0xa8] sm:$0xff]
      %v806 = vld [vmem:[#allocation2 + $0xb0] sm:$0xff]
      %v807 = vld [vmem:[#allocation2 + $0xb8] sm:$0xff]
      %v808 = vld [vmem:[#allocation2 + $0xc0] sm:$0xff]
      %v809 = vld [vmem:[#allocation2 + $0xc8] sm:$0xff]
      %v810 = vld [vmem:[#allocation2 + $0xd0] sm:$0xff]
      %812 = vset.pattern.permute.xlu0 0
      %813 = vperm.xlu0 %812, %v567
      %v814 = vpop.permute.xlu0 %813
      %817 = vset.pattern.permute.xlu0 0
      %818 = vperm.xlu0 %817, %v568
      %v819 = vpop.permute.xlu0 %818
      %v823 = vunpack.c.l.b16 %v565
      %v824 = vunpack.c.h.b16 %v565
      %v825 = vunpack.c.l.b16 %v566
      %v826 = vunpack.c.h.b16 %v566
      %v827 = vpack.c.b16 %v825, %v823
      %v828 = vpack.c.b16 %v826, %v824
      %vm830 = vcmask 130048
      %v832 = vsel %vm830, %v828, 0
      %834 = vmatprep.subr.bf16.mxu0 %v785
      %835 = vmatpush1.bf16.msra.mxu0 %v784
      %836 = vmatprep.subr.bf16.mxu0 %v788
      %837 = vmatpush1.bf16.msra.mxu0 %v787
      %838 = vmatprep.subr.bf16.mxu0 %v791
      %839 = vmatpush1.bf16.msra.mxu0 %v790
      %840 = vmatprep.subr.bf16.mxu0 %v794
      %841 = vmatpush1.bf16.msra.mxu0 %v793
      %842 = vmatprep.subr.bf16.mxu0 %v797
      %843 = vmatpush1.bf16.msra.mxu0 %v796
      %844 = vmatprep.subr.bf16.mxu0 %v800
      %845 = vmatpush1.bf16.msra.mxu0 %v799
      %846 = vmatprep.subr.bf16.mxu0 %v803
      %847 = vmatpush1.bf16.msra.mxu0 %v802
      %848 = vmatprep.subr.bf16.mxu0 %v806
      %849 = vmatpush1.bf16.msra.mxu0 %v805
      %850 = vmatprep.subr.bf16.mxu0 %v809
      %851 = vmatpush1.bf16.msra.mxu0 %v808
      %852 = vmatprep.subr.bf16.mxu0 0
      %853 = vmatpush1.bf16.msra.mxu0 0
      %854 = vmatprep.subr.bf16.mxu0 0
      %855 = vmatpush1.bf16.msra.mxu0 0
      %856 = vmatprep.subr.bf16.mxu0 0
      %857 = vmatpush1.bf16.msra.mxu0 0
      %858 = vmatprep.subr.bf16.mxu0 0
      %859 = vmatpush1.bf16.msra.mxu0 0
      %860 = vmatprep.subr.bf16.mxu0 0
      %861 = vmatpush1.bf16.msra.mxu0 0
      %862 = vmatprep.subr.bf16.mxu0 0
      %863 = vmatpush1.bf16.msra.mxu0 0
      %864 = vmatprep.subr.bf16.mxu0 0
      %865 = vmatpush1.bf16.msra.mxu0 0
      %866 = vmatprep.mubr.bf16.mxu0 %v832
      %867 = vmatmul.mubr.bf16.gmra.mrb[0].mxu0 %v827
      %v868 = vpop.f32.mrb[0].mxu0
      %v869 = vadd.f32 %v814, %v868
      %v870 = vpop.f32.mrb[0].mxu0
      %v871 = vadd.f32 %v814, %v870
      %v872 = vpop.f32.mrb[0].mxu0
      %v873 = vadd.f32 %v819, %v872
      %v874 = vpop.f32.mrb[0].mxu0
      %v875 = vadd.f32 %v819, %v874
      %876 = vdwg.mxu0
      %877 = vmatprep.subr.bf16.mxu0 0
      %878 = vmatpush1.bf16.msra.mxu0 %v786
      %879 = vmatprep.subr.bf16.mxu0 0
      %880 = vmatpush1.bf16.msra.mxu0 %v789
      %881 = vmatprep.subr.bf16.mxu0 0
      %882 = vmatpush1.bf16.msra.mxu0 %v792
      %883 = vmatprep.subr.bf16.mxu0 0
      %884 = vmatpush1.bf16.msra.mxu0 %v795
      %885 = vmatprep.subr.bf16.mxu0 0
      %886 = vmatpush1.bf16.msra.mxu0 %v798
      %887 = vmatprep.subr.bf16.mxu0 0
      %888 = vmatpush1.bf16.msra.mxu0 %v801
      %889 = vmatprep.subr.bf16.mxu0 0
      %890 = vmatpush1.bf16.msra.mxu0 %v804
      %891 = vmatprep.subr.bf16.mxu0 0
      %892 = vmatpush1.bf16.msra.mxu0 %v807
      %893 = vmatprep.subr.bf16.mxu0 0
      %894 = vmatpush1.bf16.msra.mxu0 %v810
      %895 = vmatprep.subr.bf16.mxu0 0
      %896 = vmatpush1.bf16.msra.mxu0 0
      %897 = vmatprep.subr.bf16.mxu0 0
      %898 = vmatpush1.bf16.msra.mxu0 0
      %899 = vmatprep.subr.bf16.mxu0 0
      %900 = vmatpush1.bf16.msra.mxu0 0
      %901 = vmatprep.subr.bf16.mxu0 0
      %902 = vmatpush1.bf16.msra.mxu0 0
      %903 = vmatprep.subr.bf16.mxu0 0
      %904 = vmatpush1.bf16.msra.mxu0 0
      %905 = vmatprep.subr.bf16.mxu0 0
      %906 = vmatpush1.bf16.msra.mxu0 0
      %907 = vmatprep.subr.bf16.mxu0 0
      %908 = vmatpush1.bf16.msra.mxu0 0
      %909 = vmatprep.mubr.bf16.mxu0 %v832
      %910 = vmatmul.mubr.bf16.gmra.mrb[0].mxu0 %v827
      %v911 = vpop.f32.mrb[0].mxu0
      %v912 = vadd.f32 %v814, %v911
      %v913 = vpop.f32.mrb[0].mxu0
      %v914 = vpop.f32.mrb[0].mxu0
      %v915 = vadd.f32 %v819, %v914
      %v916 = vpop.f32.mrb[0].mxu0
      %917 = vdwg.mxu0
      %vm918 = vcmp.ge.f32.partialorder %v869, 0.0
      %vm919 = vcmp.ge.f32.partialorder %v871, 0.0
      %vm920 = vcmp.ge.f32.partialorder %v912, 0.0
      %vm921 = vcmp.ge.f32.partialorder %v873, 0.0
      %vm922 = vcmp.ge.f32.partialorder %v875, 0.0
      %vm923 = vcmp.ge.f32.partialorder %v915, 0.0
      %v924 = vstv %s569
      %v925 = vmul.f32 %v924, %v869
      %v926 = vmul.f32 %v924, %v871
      %v927 = vmul.f32 %v924, %v912
      %v928 = vmul.f32 %v924, %v873
      %v929 = vmul.f32 %v924, %v875
      %v930 = vmul.f32 %v924, %v915
      %v931 = vsel %vm918, %v869, %v925
      %v932 = vsel %vm919, %v871, %v926
      %v933 = vsel %vm920, %v912, %v927
      %v934 = vsel %vm921, %v873, %v928
      %v935 = vsel %vm922, %v875, %v929
      %v936 = vsel %vm923, %v915, %v930
      %v937 = vld [vmem:[%s294 + $0x8] sm:$0xff]
      %v938 = vld [vmem:[%s294 + $0x10] sm:$0xf]
      %v939 = vld [vmem:[%s294 + $0x24] sm:$0xff]
      %v940 = vld [vmem:[%s294 + $0x2c] sm:$0xf]
      %v941 = vunpack.c.l.bf16 %v937
      %v942 = vunpack.c.h.bf16 %v937
      %v943 = vunpack.c.l.bf16 %v938
      %v944 = vunpack.c.l.bf16 %v939
      %v945 = vunpack.c.h.bf16 %v939
      %v946 = vunpack.c.l.bf16 %v940
      %v947 = vadd.f32 %v931, %v941
      %v948 = vadd.f32 %v932, %v942
      %v949 = vadd.f32 %v933, %v943
      %v950 = vadd.f32 %v934, %v944
      %v951 = vadd.f32 %v935, %v945
      %v952 = vadd.f32 %v936, %v946
      %v953 = vld [vmem:[%s5 + $0x2] sm:$0x7]
      %v954 = vunpack.c.l.bf16 %v953
      %v956 = vlaneseq
      %v957 = vshrl.u32 %v956, 7
      %v958 = vsub.s32 0, %v957
      %v959 = vrot.slane %v954, %v958
      %v960 = vlaneseq
      %v961 = vshrl.u32 %v960, 7
      %v962 = vsub.s32 2, %v961
      %v963 = vrot.slane %v954, %v962
      %v964 = vlaneseq
      %v965 = vshrl.u32 %v964, 7
      %v966 = vsub.s32 4, %v965
      %v967 = vrot.slane %v954, %v966
      %v971 = vlaneseq
      %v972 = vshrl.u32 %v971, 7
      %v973 = vsub.s32 0, %v972
      %v974 = vrot.slane %v959, %v973
      %v975 = vlaneseq
      %v976 = vshrl.u32 %v975, 7
      %v977 = vsub.s32 0, %v976
      %v978 = vrot.slane %v963, %v977
      %v979 = vlaneseq
      %v980 = vshrl.u32 %v979, 7
      %v981 = vsub.s32 0, %v980
      %v982 = vrot.slane %v967, %v981
      %v983 = vmul.f32 %v947, %v974
      %v984 = vmul.f32 %v948, %v978
      %v985 = vmul.f32 %v949, %v982
      %v986 = vmul.f32 %v950, %v974
      %v987 = vmul.f32 %v951, %v978
      %v988 = vmul.f32 %v952, %v982
      %v989 = vpack.c.bf16 %v986, %v983
      %v990 = vpack.c.bf16 %v987, %v984
      %v991 = vpack.c.bf16 %v988, %v985
      %v995 = vunpack.c.l.b16 %v989
      %v996 = vunpack.c.l.b16 %v990
      %v997 = vunpack.c.l.b16 %v991
      %v998 = vunpack.c.h.b16 %v989
      %v999 = vunpack.c.h.b16 %v990
      %v1000 = vunpack.c.h.b16 %v991
      %v1001 = vpack.c.b16 %v996, %v995
      %v1002 = vpack.c.b16 %v997, %v997
      %v1003 = vpack.c.b16 %v999, %v998
      %v1004 = vpack.c.b16 %v1000, %v1000
      %1009 = vst [vmem:[%s299 + $0x8] sm:$0xff] %v1001
      %1010 = vst [vmem:[%s299 + $0x10] sm:$0xf] %v1002
      %1011 = vst [vmem:[%s299 + $0x24] sm:$0xff] %v1003
      %1012 = vst [vmem:[%s299 + $0x2c] sm:$0xf] %v1004
      %1013 = vst [vmem:[%s299] sm:$0xff] 0
      %1014 = vst [vmem:[%s299 + $0x1c] sm:$0xff] 0
      %vm1015 = vcmask 1043456
      %vm1016 = vcmask 556036
      %vm1017 = vmor %vm1016, %vm1015
      %1018 = vst.msk [vmem:[%s299 + $0x14] sm:$0xff] %vm1017, 0
      %1019 = vst.msk [vmem:[%s299 + $0x30] sm:$0xff] %vm1017, 0
      %p1020 = scmp.lt.s32.totalorder %s19, 1
      %s1021 = scalar_select %p1020, %s19, 1
      %s1022 = smul.addr %s1021, 14
      %s1023 = smul.addr %s1022, 4
      %s1024 = scalar_lea.vmem %s7, %s1023
      // Predicated region
      $region49: #{srresnet_forward.13} parent=47 // pred_check
        %p1025 = pneg %p194
      $region50: #{srresnet_forward.13} parent=47 // pred_check_branch
        %1027 = sbr.rel (%p1025) target = $region52
      $region51: #{srresnet_forward.13} parent=47 // pred_region
        _
      $region52: #{srresnet_forward.13} parent=47 // pred_fallthru
        _
    $region48: #{srresnet_forward.13} parent=5 // pred_fallthru
      _
    %p1028 = scmp.le.s32.totalorder 2, %s14
    // Predicated region
    $region53: #{srresnet_forward.13} parent=5 // pred_check
      %p1029 = pneg %p1028
    $region54: #{srresnet_forward.13} parent=5 // pred_check_branch
      %1031 = sbr.rel (%p1029) target = $region56
    $region55: #{srresnet_forward.13} parent=5 // pred_region
      %s1032 = ssub.s32 %s14, 2
      // Predicated region
      $region57: #{srresnet_forward.13} parent=55 // pred_check
        %p1033 = pneg %p200
      $region58: #{srresnet_forward.13} parent=55 // pred_check_branch
        %1035 = sbr.rel (%p1033) target = $region60
      $region59: #{srresnet_forward.13} parent=55 // pred_region
        %p1036 = scmp.lt.s32.totalorder %s20, 1
        %s1037 = scalar_select %p1036, %s20, 1
        %s1038 = smul.addr %s1037, 14
        %s1039 = smul.addr %s1038, 4
        %s1040 = scalar_lea.vmem %s7, %s1039
      $region60: #{srresnet_forward.13} parent=55 // pred_fallthru
        _
    $region56: #{srresnet_forward.13} parent=5 // pred_fallthru
      _
  $region6: #{srresnet_forward.13} parent=0 // loop_footer
    %s18 = sadd.s32 1, %s14
  $region7: #{srresnet_forward.13} parent=0 // loop_footer_branch
    %13 = sbr.rel target = $region3
  $region8: #{srresnet_forward.13} parent=0 // loop_exit
    _

// kernel: srresnet_forward.17
$region0: #{srresnet_forward.17}
  #allocation0 [shape = 'u32[]', space=smem, size = 0x4, offset = 0x4, fixed_abs, tag = 'smem constant byte address 0x4 - core index']
  #allocation1 [shape = 'u32[144,128]{1,0:T(1,128)}', space=vmem, size = 0x12000, scoped, tag = 'internal scratch']
  #allocation2 [shape = 'bf16[144,384]{1,0:T(16,128)(2,1)}', space=vmem, size = 0x1b000, scoped, tag = 'scratch operand']
  %s0 = inlined_call_operand.vmem [shape: bf16[2,16,836], index: 0, kind: input, shape index: {}]
  %s1 = inlined_call_operand.vmem [shape: bf16[16,144], index: 1, kind: input, shape index: {}]
  %s2 = inlined_call_operand.vmem [shape: f32[16,1], index: 2, kind: input, shape index: {}]
  %s3 = inlined_call_operand.vmem [shape: bf16[1,836], index: 3, kind: input, shape index: {}]
  %s4 = inlined_call_operand.vmem [shape: bf16[2,16,836], index: 4, kind: input, shape index: {}]
  %s5 = inlined_call_operand.vmem [shape: bf16[2,16,836], index: 5, kind: output, shape index: {}]
  %s6 = sld [smem:[#allocation0]]
  $region53: #{srresnet_forward.17} parent=0
    _
  %s8 = ssub.s32 1, %s6
  %s9 = scalar_select 0, %s8, %s6
  loop: start=0, step=1, limit=4
  $region2: #{srresnet_forward.17} parent=0 // loop_pre_header
    _
  $region3: #{srresnet_forward.17} parent=0 // loop_header
    %s11 = sphi 0, %s15
    %p12 = scmp.ge.s32.totalorder %s11, 4
    %s21 = sphi 0, %s23
    %s24 = sphi 0, %s21
    %s25 = sphi 0, %s24
    %s41 = sphi 0, %s25
    %s45 = sphi 0, %s45
    %s47 = sphi 0, %s45
    %s48 = sphi 0, %s47
    %s62 = sphi 0, %s48
    %s66 = sphi 0, %s66
    %s68 = sphi 0, %s66
    %s69 = sphi 0, %s68
    %s83 = sphi 0, %s69
    %s87 = sphi 0, %s87
    %s89 = sphi 0, %s87
    %s90 = sphi 0, %s89
    %s104 = sphi 0, %s90
    %s110 = sphi 0, %s112
    %s113 = sphi 0, %s110
    %s114 = sphi 0, %s113
    %s130 = sphi 0, %s114
    %s136 = sphi 0, %s138
    %s139 = sphi 0, %s136
    %s140 = sphi 0, %s139
    %s156 = sphi 0, %s140
  $region4: #{srresnet_forward.17} parent=0 // loop_header_branch
    %14 = sbr.rel (%p12) target = $region8
  $region5: #{srresnet_forward.17} parent=0 // loop_body
    %s16 = ssub.s32 %s11, 1
    %s17 = ssub.s32 %s11, 2
    %s18 = sadd.s32 %s11, 1
    %s19 = ssub.s32 %s11, %s18
    %p20 = scmp.eq.s32.totalorder %s19, 0
    %s22 = sadd.s32 %s21, 1
    %s23 = scalar_select %p20, %s21, %s22
    %p26 = pneg %p20
    %p27 = scmp.eq.s32.totalorder %s11, 1
    %p28 = por %p26, %p27
    %p29 = scmp.ne.s32.totalorder %s21, %s24
    %p30 = scmp.eq.s32.totalorder %s11, 0
    %p31 = por %p29, %p30
    %p32 = scmp.ne.s32.totalorder %s21, %s24
    %p33 = scmp.eq.s32.totalorder %s16, 1
    %p34 = por %p32, %p33
    %p35 = scmp.ne.s32.totalorder %s24, %s25
    %p36 = scmp.eq.s32.totalorder %s16, 0
    %p37 = por %p35, %p36
    %p38 = scmp.ne.s32.totalorder %s24, %s25
    %p39 = scmp.eq.s32.totalorder %s17, 1
    %p40 = por %p38, %p39
    %p42 = scmp.ne.s32.totalorder %s25, %s41
    %p43 = scmp.eq.s32.totalorder %s17, 0
    %p44 = por %p42, %p43
    %s46 = sadd.s32 %s45, 1
    %p49 = scmp.eq.s32.totalorder %s11, 1
    %p50 = scmp.ne.s32.totalorder %s45, %s47
    %p51 = scmp.eq.s32.totalorder %s11, 0
    %p52 = por %p50, %p51
    %p53 = scmp.ne.s32.totalorder %s45, %s47
    %p54 = scmp.eq.s32.totalorder %s16, 1
    %p55 = por %p53, %p54
    %p56 = scmp.ne.s32.totalorder %s47, %s48
    %p57 = scmp.eq.s32.totalorder %s16, 0
    %p58 = por %p56, %p57
    %p59 = scmp.ne.s32.totalorder %s47, %s48
    %p60 = scmp.eq.s32.totalorder %s17, 1
    %p61 = por %p59, %p60
    %p63 = scmp.ne.s32.totalorder %s48, %s62
    %p64 = scmp.eq.s32.totalorder %s17, 0
    %p65 = por %p63, %p64
    %s67 = sadd.s32 %s66, 1
    %p70 = scmp.eq.s32.totalorder %s11, 1
    %p71 = scmp.ne.s32.totalorder %s66, %s68
    %p72 = scmp.eq.s32.totalorder %s11, 0
    %p73 = por %p71, %p72
    %p74 = scmp.ne.s32.totalorder %s66, %s68
    %p75 = scmp.eq.s32.totalorder %s16, 1
    %p76 = por %p74, %p75
    %p77 = scmp.ne.s32.totalorder %s68, %s69
    %p78 = scmp.eq.s32.totalorder %s16, 0
    %p79 = por %p77, %p78
    %p80 = scmp.ne.s32.totalorder %s68, %s69
    %p81 = scmp.eq.s32.totalorder %s17, 1
    %p82 = por %p80, %p81
    %p84 = scmp.ne.s32.totalorder %s69, %s83
    %p85 = scmp.eq.s32.totalorder %s17, 0
    %p86 = por %p84, %p85
    %s88 = sadd.s32 %s87, 1
    %p91 = scmp.eq.s32.totalorder %s11, 1
    %p92 = scmp.ne.s32.totalorder %s87, %s89
    %p93 = scmp.eq.s32.totalorder %s11, 0
    %p94 = por %p92, %p93
    %p95 = scmp.ne.s32.totalorder %s87, %s89
    %p96 = scmp.eq.s32.totalorder %s16, 1
    %p97 = por %p95, %p96
    %p98 = scmp.ne.s32.totalorder %s89, %s90
    %p99 = scmp.eq.s32.totalorder %s16, 0
    %p100 = por %p98, %p99
    %p101 = scmp.ne.s32.totalorder %s89, %s90
    %p102 = scmp.eq.s32.totalorder %s17, 1
    %p103 = por %p101, %p102
    %p105 = scmp.ne.s32.totalorder %s90, %s104
    %p106 = scmp.eq.s32.totalorder %s17, 0
    %p107 = por %p105, %p106
    %s108 = ssub.s32 %s11, %s18
    %p109 = scmp.eq.s32.totalorder %s108, 0
    %s111 = sadd.s32 %s110, 1
    %s112 = scalar_select %p109, %s110, %s111
    %p115 = pneg %p109
    %p116 = scmp.eq.s32.totalorder %s11, 1
    %p117 = por %p115, %p116
    %p118 = scmp.ne.s32.totalorder %s110, %s113
    %p119 = scmp.eq.s32.totalorder %s11, 0
    %p120 = por %p118, %p119
    %p121 = scmp.ne.s32.totalorder %s110, %s113
    %p122 = scmp.eq.s32.totalorder %s16, 1
    %p123 = por %p121, %p122
    %p124 = scmp.ne.s32.totalorder %s113, %s114
    %p125 = scmp.eq.s32.totalorder %s16, 0
    %p126 = por %p124, %p125
    %p127 = scmp.ne.s32.totalorder %s113, %s114
    %p128 = scmp.eq.s32.totalorder %s17, 1
    %p129 = por %p127, %p128
    %p131 = scmp.ne.s32.totalorder %s114, %s130
    %p132 = scmp.eq.s32.totalorder %s17, 0
    %p133 = por %p131, %p132
    %s134 = ssub.s32 %s11, %s18
    %p135 = scmp.eq.s32.totalorder %s134, 0
    %s137 = sadd.s32 %s136, 1
    %s138 = scalar_select %p135, %s136, %s137
    %p141 = pneg %p135
    %p142 = scmp.eq.s32.totalorder %s11, 1
    %p143 = por %p141, %p142
    %p144 = scmp.ne.s32.totalorder %s136, %s139
    %p145 = scmp.eq.s32.totalorder %s11, 0
    %p146 = por %p144, %p145
    %p147 = scmp.ne.s32.totalorder %s136, %s139
    %p148 = scmp.eq.s32.totalorder %s16, 1
    %p149 = por %p147, %p148
    %p150 = scmp.ne.s32.totalorder %s139, %s140
    %p151 = scmp.eq.s32.totalorder %s16, 0
    %p152 = por %p150, %p151
    %p153 = scmp.ne.s32.totalorder %s139, %s140
    %p154 = scmp.eq.s32.totalorder %s17, 1
    %p155 = por %p153, %p154
    %p157 = scmp.ne.s32.totalorder %s140, %s156
    %p158 = scmp.eq.s32.totalorder %s17, 0
    %p159 = por %p157, %p158
    %p160 = scmp.le.s32.totalorder 1, %s11
    %p161 = scmp.lt.s32.totalorder %s11, 3
    %p162 = pnand %p160, %p161
    %p163 = pneg %p162
    // Predicated region
    $region9: #{srresnet_forward.17} parent=5 // pred_check
      _
    $region10: #{srresnet_forward.17} parent=5 // pred_check_branch
      %165 = sbr.rel (%p162) target = $region12
    $region11: #{srresnet_forward.17} parent=5 // pred_region
      %s166 = ssub.s32 %s11, 1
      // Predicated region
      $region13: #{srresnet_forward.17} parent=11 // pred_check
        %p167 = pneg %p58
      $region14: #{srresnet_forward.17} parent=11 // pred_check_branch
        %169 = sbr.rel (%p167) target = $region16
      $region15: #{srresnet_forward.17} parent=11 // pred_region
        _
      $region16: #{srresnet_forward.17} parent=11 // pred_fallthru
        _
      // Predicated region
      $region17: #{srresnet_forward.17} parent=11 // pred_check
        %p170 = pneg %p79
      $region18: #{srresnet_forward.17} parent=11 // pred_check_branch
        %172 = sbr.rel (%p170) target = $region20
      $region19: #{srresnet_forward.17} parent=11 // pred_region
        _
      $region20: #{srresnet_forward.17} parent=11 // pred_fallthru
        _
      // Predicated region
      $region21: #{srresnet_forward.17} parent=11 // pred_check
        %p173 = pneg %p100
      $region22: #{srresnet_forward.17} parent=11 // pred_check_branch
        %175 = sbr.rel (%p173) target = $region24
      $region23: #{srresnet_forward.17} parent=11 // pred_region
        _
      $region24: #{srresnet_forward.17} parent=11 // pred_fallthru
        _
    $region12: #{srresnet_forward.17} parent=5 // pred_fallthru
      _
    %p176 = scmp.lt.s32.totalorder %s11, 2
    // Predicated region
    $region25: #{srresnet_forward.17} parent=5 // pred_check
      %p177 = pneg %p176
    $region26: #{srresnet_forward.17} parent=5 // pred_check_branch
      %179 = sbr.rel (%p177) target = $region28
    $region27: #{srresnet_forward.17} parent=5 // pred_region
      // Predicated region
      $region29: #{srresnet_forward.17} parent=27 // pred_check
        %p180 = pneg %p31
      $region30: #{srresnet_forward.17} parent=27 // pred_check_branch
        %182 = sbr.rel (%p180) target = $region32
      $region31: #{srresnet_forward.17} parent=27 // pred_region
        %p183 = scmp.lt.s32.totalorder %s11, 1
        %s184 = scalar_select %p183, %s11, 1
        %s185 = smul.addr %s184, 14
        %s186 = smul.addr %s185, 4
        %s187 = scalar_lea.vmem %s0, %s186
      $region32: #{srresnet_forward.17} parent=27 // pred_fallthru
        _
      // Predicated region
      $region33: #{srresnet_forward.17} parent=27 // pred_check
        %p188 = pneg %p120
      $region34: #{srresnet_forward.17} parent=27 // pred_check_branch
        %190 = sbr.rel (%p188) target = $region36
      $region35: #{srresnet_forward.17} parent=27 // pred_region
        %p191 = scmp.lt.s32.totalorder %s11, 1
        %s192 = scalar_select %p191, %s11, 1
        %s193 = smul.addr %s192, 14
        %s194 = smul.addr %s193, 4
        %s195 = scalar_lea.vmem %s4, %s194
      $region36: #{srresnet_forward.17} parent=27 // pred_fallthru
        _
    $region28: #{srresnet_forward.17} parent=5 // pred_fallthru
      _
    %p196 = scmp.le.s32.totalorder 1, %s11
    %p197 = scmp.lt.s32.totalorder %s11, 3
    %p198 = pnand %p196, %p197
    %p199 = pneg %p198
    // Predicated region
    $region37: #{srresnet_forward.17} parent=5 // pred_check
      _
    $region38: #{srresnet_forward.17} parent=5 // pred_check_branch
      %201 = sbr.rel (%p198) target = $region40
    $region39: #{srresnet_forward.17} parent=5 // pred_region
      %s202 = ssub.s32 %s11, 1
      %p203 = scmp.lt.s32.totalorder %s16, 1
      %s204 = scalar_select %p203, %s16, 1
      %s205 = smul.addr %s204, 14
      %s206 = smul.addr %s205, 4
      %s207 = scalar_lea.vmem %s0, %s206
      %p208 = pneg %p37
      %p209 = pneg %p34
      %p210 = pneg %p58
      %p211 = pneg %p55
      %p212 = pneg %p79
      %p213 = pneg %p76
      %p214 = pneg %p100
      %p215 = pneg %p97
      %p216 = scmp.lt.s32.totalorder %s16, 1
      %s217 = scalar_select %p216, %s16, 1
      %s218 = smul.addr %s217, 14
      %s219 = smul.addr %s218, 4
      %s220 = scalar_lea.vmem %s4, %s219
      %p221 = pneg %p126
      %p222 = pneg %p123
      %p223 = pneg %p152
      %p224 = pneg %p149
      %p225 = scmp.lt.s32.totalorder %s16, 1
      %s226 = scalar_select %p225, %s16, 1
      %s227 = smul.addr %s226, 14
      %s228 = smul.addr %s227, 4
      %s229 = scalar_lea.vmem %s5, %s228
      %p230 = scmp.lt.s32.totalorder %s16, 1
      %s231 = scalar_select %p230, %s16, 1
      %s232 = smul.addr %s231, 14
      %s233 = smul.addr %s232, 4
      %s234 = scalar_lea.vmem %s0, %s233
      %p235 = scmp.lt.s32.totalorder %s16, 1
      %s236 = scalar_select %p235, %s16, 1
      %s237 = smul.addr %s236, 14
      %s238 = smul.addr %s237, 4
      %s239 = scalar_lea.vmem %s4, %s238
      %p240 = scmp.lt.s32.totalorder %s16, 1
      %s241 = scalar_select %p240, %s16, 1
      %s242 = smul.addr %s241, 14
      %s243 = smul.addr %s242, 4
      %s244 = scalar_lea.vmem %s5, %s243
      %v246 = vld [vmem:[%s1] sm:$0xff]
      %v247 = vld [vmem:[%s1 + $0x8] sm:$0xff]
      %v248 = vld [vmem:[%s2] sm:$0xff]
      %v249 = vld [vmem:[%s2 + $0x8] sm:$0xff]
      %v250 = vld [vmem:[%s234 + $0x4] sm:$0xff]
      %v251 = vld [vmem:[%s234 + $0xc] sm:$0xff]
      %v252 = vld [vmem:[%s234 + $0x20] sm:$0xff]
      %v253 = vld [vmem:[%s234 + $0x28] sm:$0xff]
      %v258 = vunpack.c.l.b16 %v250
      %v259 = vunpack.c.h.b16 %v250
      %v260 = vunpack.c.l.b16 %v251
      %v261 = vunpack.c.h.b16 %v251
      %v262 = vunpack.c.l.b16 %v252
      %v263 = vunpack.c.h.b16 %v252
      %v264 = vunpack.c.l.b16 %v253
      %v265 = vunpack.c.h.b16 %v253
      %v266 = vpack.c.b16 %v262, %v258
      %v267 = vpack.c.b16 %v263, %v259
      %v268 = vpack.c.b16 %v264, %v260
      %v269 = vpack.c.b16 %v265, %v261
      %270 = vrot.lane.b32.xlu0 %v266, 19
      %v271 = vpop.permute.xlu0 %270
      %272 = vrot.lane.b32.xlu0 %v267, 19
      %v273 = vpop.permute.xlu0 %272
      %274 = vrot.lane.b32.xlu0 %v268, 19
      %v275 = vpop.permute.xlu0 %274
      %276 = vrot.lane.b32.xlu0 %v269, 19
      %v277 = vpop.permute.xlu0 %276
      %vm278 = vcmask 154624
      %v279 = vsel %vm278, %v271, %v273
      %v280 = vsel %vm278, %v273, %v275
      %v281 = vsel %vm278, %v275, %v277
      %285 = vst [vmem:[#allocation2] sm:$0xff] %v279
      %286 = vst [vmem:[#allocation2 + $0x8] sm:$0xff] %v280
      %287 = vst [vmem:[#allocation2 + $0x10] sm:$0xff] %v281
      %v288 = vld [vmem:[%s234 + $0x4] sm:$0xff]
      %v289 = vld [vmem:[%s234 + $0xc] sm:$0xff]
      %v290 = vld [vmem:[%s234 + $0x20] sm:$0xff]
      %v291 = vld [vmem:[%s234 + $0x28] sm:$0xff]
      %v296 = vunpack.c.l.b16 %v288
      %v297 = vunpack.c.h.b16 %v288
      %v298 = vunpack.c.l.b16 %v289
      %v299 = vunpack.c.h.b16 %v289
      %v300 = vunpack.c.l.b16 %v290
      %v301 = vunpack.c.h.b16 %v290
      %v302 = vunpack.c.l.b16 %v291
      %v303 = vunpack.c.h.b16 %v291
      %v304 = vpack.c.b16 %v300, %v296
      %v305 = vpack.c.b16 %v301, %v297
      %v306 = vpack.c.b16 %v302, %v298
      %v307 = vpack.c.b16 %v303, %v299
      %308 = vrot.lane.b32.xlu0 %v304, 18
      %v309 = vpop.permute.xlu0 %308
      %310 = vrot.lane.b32.xlu0 %v305, 18
      %v311 = vpop.permute.xlu0 %310
      %312 = vrot.lane.b32.xlu0 %v306, 18
      %v313 = vpop.permute.xlu0 %312
      %314 = vrot.lane.b32.xlu0 %v307, 18
      %v315 = vpop.permute.xlu0 %314
      %vm316 = vcmask 146432
      %v317 = vsel %vm316, %v309, %v311
      %v318 = vsel %vm316, %v311, %v313
      %v319 = vsel %vm316, %v313, %v315
      %323 = vst [vmem:[#allocation2 + $0x18] sm:$0xff] %v317
      %324 = vst [vmem:[#allocation2 + $0x20] sm:$0xff] %v318
      %325 = vst [vmem:[#allocation2 + $0x28] sm:$0xff] %v319
      %v326 = vld [vmem:[%s234 + $0x4] sm:$0xff]
      %v327 = vld [vmem:[%s234 + $0xc] sm:$0xff]
      %v328 = vld [vmem:[%s234 + $0x20] sm:$0xff]
      %v329 = vld [vmem:[%s234 + $0x28] sm:$0xff]
      %v334 = vunpack.c.l.b16 %v326
      %v335 = vunpack.c.h.b16 %v326
      %v336 = vunpack.c.l.b16 %v327
      %v337 = vunpack.c.h.b16 %v327
      %v338 = vunpack.c.l.b16 %v328
      %v339 = vunpack.c.h.b16 %v328
      %v340 = vunpack.c.l.b16 %v329
      %v341 = vunpack.c.h.b16 %v329
      %v342 = vpack.c.b16 %v338, %v334
      %v343 = vpack.c.b16 %v339, %v335
      %v344 = vpack.c.b16 %v340, %v336
      %v345 = vpack.c.b16 %v341, %v337
      %346 = vrot.lane.b32.xlu0 %v342, 17
      %v347 = vpop.permute.xlu0 %346
      %348 = vrot.lane.b32.xlu0 %v343, 17
      %v349 = vpop.permute.xlu0 %348
      %350 = vrot.lane.b32.xlu0 %v344, 17
      %v351 = vpop.permute.xlu0 %350
      %352 = vrot.lane.b32.xlu0 %v345, 17
      %v353 = vpop.permute.xlu0 %352
      %vm354 = vcmask 138240
      %v355 = vsel %vm354, %v347, %v349
      %v356 = vsel %vm354, %v349, %v351
      %v357 = vsel %vm354, %v351, %v353
      %361 = vst [vmem:[#allocation2 + $0x30] sm:$0xff] %v355
      %362 = vst [vmem:[#allocation2 + $0x38] sm:$0xff] %v356
      %363 = vst [vmem:[#allocation2 + $0x40] sm:$0xff] %v357
      %v364 = vld [vmem:[%s234 + $0x4] sm:$0xff]
      %v365 = vld [vmem:[%s234 + $0xc] sm:$0xff]
      %v366 = vld [vmem:[%s234 + $0x20] sm:$0xff]
      %v367 = vld [vmem:[%s234 + $0x28] sm:$0xff]
      %v372 = vunpack.c.l.b16 %v364
      %v373 = vunpack.c.h.b16 %v364
      %v374 = vunpack.c.l.b16 %v365
      %v375 = vunpack.c.h.b16 %v365
      %v376 = vunpack.c.l.b16 %v366
      %v377 = vunpack.c.h.b16 %v366
      %v378 = vunpack.c.l.b16 %v367
      %v379 = vunpack.c.h.b16 %v367
      %v380 = vpack.c.b16 %v376, %v372
      %v381 = vpack.c.b16 %v377, %v373
      %v382 = vpack.c.b16 %v378, %v374
      %v383 = vpack.c.b16 %v379, %v375
      %384 = vrot.lane.b32.xlu0 %v380, 1
      %v385 = vpop.permute.xlu0 %384
      %386 = vrot.lane.b32.xlu0 %v381, 1
      %v387 = vpop.permute.xlu0 %386
      %388 = vrot.lane.b32.xlu0 %v382, 1
      %v389 = vpop.permute.xlu0 %388
      %390 = vrot.lane.b32.xlu0 %v383, 1
      %v391 = vpop.permute.xlu0 %390
      %vm392 = vcmask 7168
      %v393 = vsel %vm392, %v385, %v387
      %v394 = vsel %vm392, %v387, %v389
      %v395 = vsel %vm392, %v389, %v391
      %399 = vst [vmem:[#allocation2 + $0x48] sm:$0xff] %v393
      %400 = vst [vmem:[#allocation2 + $0x50] sm:$0xff] %v394
      %401 = vst [vmem:[#allocation2 + $0x58] sm:$0xff] %v395
      %v402 = vld [vmem:[%s234 + $0x8] sm:$0xff]
      %v403 = vld [vmem:[%s234 + $0x10] sm:$0xf]
      %v404 = vld [vmem:[%s234 + $0x24] sm:$0xff]
      %v405 = vld [vmem:[%s234 + $0x2c] sm:$0xf]
      %v410 = vunpack.c.l.b16 %v402
      %v411 = vunpack.c.h.b16 %v402
      %v412 = vunpack.c.l.b16 %v403
      %v413 = vunpack.c.l.b16 %v404
      %v414 = vunpack.c.h.b16 %v404
      %v415 = vunpack.c.l.b16 %v405
      %v416 = vpack.c.b16 %v413, %v410
      %v417 = vpack.c.b16 %v414, %v411
      %v418 = vpack.c.b16 %v415, %v412
      %422 = vst [vmem:[#allocation2 + $0x60] sm:$0xff] %v416
      %423 = vst [vmem:[#allocation2 + $0x68] sm:$0xff] %v417
      %424 = vst [vmem:[#allocation2 + $0x70] sm:$0xff] %v418
      %v425 = vld [vmem:[%s234 + $0x8] sm:$0xff]
      %v426 = vld [vmem:[%s234 + $0x10] sm:$0xff]
      %v427 = vld [vmem:[%s234 + $0x24] sm:$0xff]
      %v428 = vld [vmem:[%s234 + $0x2c] sm:$0xff]
      %v433 = vunpack.c.l.b16 %v425
      %v434 = vunpack.c.h.b16 %v425
      %v435 = vunpack.c.l.b16 %v426
      %v436 = vunpack.c.h.b16 %v426
      %v437 = vunpack.c.l.b16 %v427
      %v438 = vunpack.c.h.b16 %v427
      %v439 = vunpack.c.l.b16 %v428
      %v440 = vunpack.c.h.b16 %v428
      %v441 = vpack.c.b16 %v437, %v433
      %v442 = vpack.c.b16 %v438, %v434
      %v443 = vpack.c.b16 %v439, %v435
      %v444 = vpack.c.b16 %v440, %v436
      %445 = vrot.lane.b32.xlu0 %v441, 127
      %v446 = vpop.permute.xlu0 %445
      %447 = vrot.lane.b32.xlu0 %v442, 127
      %v448 = vpop.permute.xlu0 %447
      %449 = vrot.lane.b32.xlu0 %v443, 127
      %v450 = vpop.permute.xlu0 %449
      %451 = vrot.lane.b32.xlu0 %v444, 127
      %v452 = vpop.permute.xlu0 %451
      %vm453 = vcmask 1039360
      %v454 = vsel %vm453, %v446, %v448
      %v455 = vsel %vm453, %v448, %v450
      %v456 = vsel %vm453, %v450, %v452
      %460 = vst [vmem:[#allocation2 + $0x78] sm:$0xff] %v454
      %461 = vst [vmem:[#allocation2 + $0x80] sm:$0xff] %v455
      %462 = vst [vmem:[#allocation2 + $0x88] sm:$0xff] %v456
      %v463 = vld [vmem:[%s234 + $0x8] sm:$0xff]
      %v464 = vld [vmem:[%s234 + $0x10] sm:$0xff]
      %v465 = vld [vmem:[%s234 + $0x24] sm:$0xff]
      %v466 = vld [vmem:[%s234 + $0x2c] sm:$0xff]
      %v471 = vunpack.c.l.b16 %v463
      %v472 = vunpack.c.h.b16 %v463
      %v473 = vunpack.c.l.b16 %v464
      %v474 = vunpack.c.h.b16 %v464
      %v475 = vunpack.c.l.b16 %v465
      %v476 = vunpack.c.h.b16 %v465
      %v477 = vunpack.c.l.b16 %v466
      %v478 = vunpack.c.h.b16 %v466
      %v479 = vpack.c.b16 %v475, %v471
      %v480 = vpack.c.b16 %v476, %v472
      %v481 = vpack.c.b16 %v477, %v473
      %v482 = vpack.c.b16 %v478, %v474
      %483 = vrot.lane.b32.xlu0 %v479, 111
      %v484 = vpop.permute.xlu0 %483
      %485 = vrot.lane.b32.xlu0 %v480, 111
      %v486 = vpop.permute.xlu0 %485
      %487 = vrot.lane.b32.xlu0 %v481, 111
      %v488 = vpop.permute.xlu0 %487
      %489 = vrot.lane.b32.xlu0 %v482, 111
      %v490 = vpop.permute.xlu0 %489
      %vm491 = vcmask 908288
      %v492 = vsel %vm491, %v484, %v486
      %v493 = vsel %vm491, %v486, %v488
      %v494 = vsel %vm491, %v488, %v490
      %498 = vst [vmem:[#allocation2 + $0x90] sm:$0xff] %v492
      %499 = vst [vmem:[#allocation2 + $0x98] sm:$0xff] %v493
      %500 = vst [vmem:[#allocation2 + $0xa0] sm:$0xff] %v494
      %v501 = vld [vmem:[%s234 + $0x8] sm:$0xff]
      %v502 = vld [vmem:[%s234 + $0x10] sm:$0xff]
      %v503 = vld [vmem:[%s234 + $0x24] sm:$0xff]
      %v504 = vld [vmem:[%s234 + $0x2c] sm:$0xff]
      %v509 = vunpack.c.l.b16 %v501
      %v510 = vunpack.c.h.b16 %v501
      %v511 = vunpack.c.l.b16 %v502
      %v512 = vunpack.c.h.b16 %v502
      %v513 = vunpack.c.l.b16 %v503
      %v514 = vunpack.c.h.b16 %v503
      %v515 = vunpack.c.l.b16 %v504
      %v516 = vunpack.c.h.b16 %v504
      %v517 = vpack.c.b16 %v513, %v509
      %v518 = vpack.c.b16 %v514, %v510
      %v519 = vpack.c.b16 %v515, %v511
      %v520 = vpack.c.b16 %v516, %v512
      %521 = vrot.lane.b32.xlu0 %v517, 110
      %v522 = vpop.permute.xlu0 %521
      %523 = vrot.lane.b32.xlu0 %v518, 110
      %v524 = vpop.permute.xlu0 %523
      %525 = vrot.lane.b32.xlu0 %v519, 110
      %v526 = vpop.permute.xlu0 %525
      %527 = vrot.lane.b32.xlu0 %v520, 110
      %v528 = vpop.permute.xlu0 %527
      %vm529 = vcmask 900096
      %v530 = vsel %vm529, %v522, %v524
      %v531 = vsel %vm529, %v524, %v526
      %v532 = vsel %vm529, %v526, %v528
      %536 = vst [vmem:[#allocation2 + $0xa8] sm:$0xff] %v530
      %537 = vst [vmem:[#allocation2 + $0xb0] sm:$0xff] %v531
      %538 = vst [vmem:[#allocation2 + $0xb8] sm:$0xff] %v532
      %v539 = vld [vmem:[%s234 + $0x8] sm:$0xff]
      %v540 = vld [vmem:[%s234 + $0x10] sm:$0xff]
      %v541 = vld [vmem:[%s234 + $0x24] sm:$0xff]
      %v542 = vld [vmem:[%s234 + $0x2c] sm:$0xff]
      %v547 = vunpack.c.l.b16 %v539
      %v548 = vunpack.c.h.b16 %v539
      %v549 = vunpack.c.l.b16 %v540
      %v550 = vunpack.c.h.b16 %v540
      %v551 = vunpack.c.l.b16 %v541
      %v552 = vunpack.c.h.b16 %v541
      %v553 = vunpack.c.l.b16 %v542
      %v554 = vunpack.c.h.b16 %v542
      %v555 = vpack.c.b16 %v551, %v547
      %v556 = vpack.c.b16 %v552, %v548
      %v557 = vpack.c.b16 %v553, %v549
      %v558 = vpack.c.b16 %v554, %v550
      %559 = vrot.lane.b32.xlu0 %v555, 109
      %v560 = vpop.permute.xlu0 %559
      %561 = vrot.lane.b32.xlu0 %v556, 109
      %v562 = vpop.permute.xlu0 %561
      %563 = vrot.lane.b32.xlu0 %v557, 109
      %v564 = vpop.permute.xlu0 %563
      %565 = vrot.lane.b32.xlu0 %v558, 109
      %v566 = vpop.permute.xlu0 %565
      %vm567 = vcmask 891904
      %v568 = vsel %vm567, %v560, %v562
      %v569 = vsel %vm567, %v562, %v564
      %v570 = vsel %vm567, %v564, %v566
      %574 = vst [vmem:[#allocation2 + $0xc0] sm:$0xff] %v568
      %575 = vst [vmem:[#allocation2 + $0xc8] sm:$0xff] %v569
      %576 = vst [vmem:[#allocation2 + $0xd0] sm:$0xff] %v570
      %v577 = vld [vmem:[#allocation2] sm:$0xff]
      %v578 = vld [vmem:[#allocation2 + $0x8] sm:$0xff]
      %v579 = vld [vmem:[#allocation2 + $0x10] sm:$0xff]
      %v580 = vld [vmem:[#allocation2 + $0x18] sm:$0xff]
      %v581 = vld [vmem:[#allocation2 + $0x20] sm:$0xff]
      %v582 = vld [vmem:[#allocation2 + $0x28] sm:$0xff]
      %v583 = vld [vmem:[#allocation2 + $0x30] sm:$0xff]
      %v584 = vld [vmem:[#allocation2 + $0x38] sm:$0xff]
      %v585 = vld [vmem:[#allocation2 + $0x40] sm:$0xff]
      %v586 = vld [vmem:[#allocation2 + $0x48] sm:$0xff]
      %v587 = vld [vmem:[#allocation2 + $0x50] sm:$0xff]
      %v588 = vld [vmem:[#allocation2 + $0x58] sm:$0xff]
      %v589 = vld [vmem:[#allocation2 + $0x60] sm:$0xff]
      %v590 = vld [vmem:[#allocation2 + $0x68] sm:$0xff]
      %v591 = vld [vmem:[#allocation2 + $0x70] sm:$0xff]
      %v592 = vld [vmem:[#allocation2 + $0x78] sm:$0xff]
      %v593 = vld [vmem:[#allocation2 + $0x80] sm:$0xff]
      %v594 = vld [vmem:[#allocation2 + $0x88] sm:$0xff]
      %v595 = vld [vmem:[#allocation2 + $0x90] sm:$0xff]
      %v596 = vld [vmem:[#allocation2 + $0x98] sm:$0xff]
      %v597 = vld [vmem:[#allocation2 + $0xa0] sm:$0xff]
      %v598 = vld [vmem:[#allocation2 + $0xa8] sm:$0xff]
      %v599 = vld [vmem:[#allocation2 + $0xb0] sm:$0xff]
      %v600 = vld [vmem:[#allocation2 + $0xb8] sm:$0xff]
      %v601 = vld [vmem:[#allocation2 + $0xc0] sm:$0xff]
      %v602 = vld [vmem:[#allocation2 + $0xc8] sm:$0xff]
      %v603 = vld [vmem:[#allocation2 + $0xd0] sm:$0xff]
      %605 = vset.pattern.permute.xlu0 0
      %606 = vperm.xlu0 %605, %v248
      %v607 = vpop.permute.xlu0 %606
      %610 = vset.pattern.permute.xlu0 0
      %611 = vperm.xlu0 %610, %v249
      %v612 = vpop.permute.xlu0 %611
      %v616 = vunpack.c.l.b16 %v246
      %v617 = vunpack.c.h.b16 %v246
      %v618 = vunpack.c.l.b16 %v247
      %v619 = vunpack.c.h.b16 %v247
      %v620 = vpack.c.b16 %v618, %v616
      %v621 = vpack.c.b16 %v619, %v617
      %vm623 = vcmask 130048
      %v625 = vsel %vm623, %v621, 0
      %627 = vmatprep.subr.bf16.mxu0 %v578
      %628 = vmatpush1.bf16.msra.mxu0 %v577
      %629 = vmatprep.subr.bf16.mxu0 %v581
      %630 = vmatpush1.bf16.msra.mxu0 %v580
      %631 = vmatprep.subr.bf16.mxu0 %v584
      %632 = vmatpush1.bf16.msra.mxu0 %v583
      %633 = vmatprep.subr.bf16.mxu0 %v587
      %634 = vmatpush1.bf16.msra.mxu0 %v586
      %635 = vmatprep.subr.bf16.mxu0 %v590
      %636 = vmatpush1.bf16.msra.mxu0 %v589
      %637 = vmatprep.subr.bf16.mxu0 %v593
      %638 = vmatpush1.bf16.msra.mxu0 %v592
      %639 = vmatprep.subr.bf16.mxu0 %v596
      %640 = vmatpush1.bf16.msra.mxu0 %v595
      %641 = vmatprep.subr.bf16.mxu0 %v599
      %642 = vmatpush1.bf16.msra.mxu0 %v598
      %643 = vmatprep.subr.bf16.mxu0 %v602
      %644 = vmatpush1.bf16.msra.mxu0 %v601
      %645 = vmatprep.subr.bf16.mxu0 0
      %646 = vmatpush1.bf16.msra.mxu0 0
      %647 = vmatprep.subr.bf16.mxu0 0
      %648 = vmatpush1.bf16.msra.mxu0 0
      %649 = vmatprep.subr.bf16.mxu0 0
      %650 = vmatpush1.bf16.msra.mxu0 0
      %651 = vmatprep.subr.bf16.mxu0 0
      %652 = vmatpush1.bf16.msra.mxu0 0
      %653 = vmatprep.subr.bf16.mxu0 0
      %654 = vmatpush1.bf16.msra.mxu0 0
      %655 = vmatprep.subr.bf16.mxu0 0
      %656 = vmatpush1.bf16.msra.mxu0 0
      %657 = vmatprep.subr.bf16.mxu0 0
      %658 = vmatpush1.bf16.msra.mxu0 0
      %659 = vmatprep.mubr.bf16.mxu0 %v625
      %660 = vmatmul.mubr.bf16.gmra.mrb[0].mxu0 %v620
      %v661 = vpop.f32.mrb[0].mxu0
      %v662 = vadd.f32 %v607, %v661
      %v663 = vpop.f32.mrb[0].mxu0
      %v664 = vadd.f32 %v607, %v663
      %v665 = vpop.f32.mrb[0].mxu0
      %v666 = vadd.f32 %v612, %v665
      %v667 = vpop.f32.mrb[0].mxu0
      %v668 = vadd.f32 %v612, %v667
      %669 = vdwg.mxu0
      %670 = vmatprep.subr.bf16.mxu0 0
      %671 = vmatpush1.bf16.msra.mxu0 %v579
      %672 = vmatprep.subr.bf16.mxu0 0
      %673 = vmatpush1.bf16.msra.mxu0 %v582
      %674 = vmatprep.subr.bf16.mxu0 0
      %675 = vmatpush1.bf16.msra.mxu0 %v585
      %676 = vmatprep.subr.bf16.mxu0 0
      %677 = vmatpush1.bf16.msra.mxu0 %v588
      %678 = vmatprep.subr.bf16.mxu0 0
      %679 = vmatpush1.bf16.msra.mxu0 %v591
      %680 = vmatprep.subr.bf16.mxu0 0
      %681 = vmatpush1.bf16.msra.mxu0 %v594
      %682 = vmatprep.subr.bf16.mxu0 0
      %683 = vmatpush1.bf16.msra.mxu0 %v597
      %684 = vmatprep.subr.bf16.mxu0 0
      %685 = vmatpush1.bf16.msra.mxu0 %v600
      %686 = vmatprep.subr.bf16.mxu0 0
      %687 = vmatpush1.bf16.msra.mxu0 %v603
      %688 = vmatprep.subr.bf16.mxu0 0
      %689 = vmatpush1.bf16.msra.mxu0 0
      %690 = vmatprep.subr.bf16.mxu0 0
      %691 = vmatpush1.bf16.msra.mxu0 0
      %692 = vmatprep.subr.bf16.mxu0 0
      %693 = vmatpush1.bf16.msra.mxu0 0
      %694 = vmatprep.subr.bf16.mxu0 0
      %695 = vmatpush1.bf16.msra.mxu0 0
      %696 = vmatprep.subr.bf16.mxu0 0
      %697 = vmatpush1.bf16.msra.mxu0 0
      %698 = vmatprep.subr.bf16.mxu0 0
      %699 = vmatpush1.bf16.msra.mxu0 0
      %700 = vmatprep.subr.bf16.mxu0 0
      %701 = vmatpush1.bf16.msra.mxu0 0
      %702 = vmatprep.mubr.bf16.mxu0 %v625
      %703 = vmatmul.mubr.bf16.gmra.mrb[0].mxu0 %v620
      %v704 = vpop.f32.mrb[0].mxu0
      %v705 = vadd.f32 %v607, %v704
      %v706 = vpop.f32.mrb[0].mxu0
      %v707 = vpop.f32.mrb[0].mxu0
      %v708 = vadd.f32 %v612, %v707
      %v709 = vpop.f32.mrb[0].mxu0
      %710 = vdwg.mxu0
      %v711 = vld [vmem:[%s239 + $0x8] sm:$0xff]
      %v712 = vld [vmem:[%s239 + $0x10] sm:$0xf]
      %v713 = vld [vmem:[%s239 + $0x24] sm:$0xff]
      %v714 = vld [vmem:[%s239 + $0x2c] sm:$0xf]
      %v715 = vunpack.c.l.bf16 %v711
      %v716 = vunpack.c.h.bf16 %v711
      %v717 = vunpack.c.l.bf16 %v712
      %v718 = vunpack.c.l.bf16 %v713
      %v719 = vunpack.c.h.bf16 %v713
      %v720 = vunpack.c.l.bf16 %v714
      %v721 = vadd.f32 %v662, %v715
      %v722 = vadd.f32 %v664, %v716
      %v723 = vadd.f32 %v705, %v717
      %v724 = vadd.f32 %v666, %v718
      %v725 = vadd.f32 %v668, %v719
      %v726 = vadd.f32 %v708, %v720
      %v727 = vld [vmem:[%s3 + $0x2] sm:$0x7]
      %v728 = vunpack.c.l.bf16 %v727
      %v730 = vlaneseq
      %v731 = vshrl.u32 %v730, 7
      %v732 = vsub.s32 0, %v731
      %v733 = vrot.slane %v728, %v732
      %v734 = vlaneseq
      %v735 = vshrl.u32 %v734, 7
      %v736 = vsub.s32 2, %v735
      %v737 = vrot.slane %v728, %v736
      %v738 = vlaneseq
      %v739 = vshrl.u32 %v738, 7
      %v740 = vsub.s32 4, %v739
      %v741 = vrot.slane %v728, %v740
      %v745 = vlaneseq
      %v746 = vshrl.u32 %v745, 7
      %v747 = vsub.s32 0, %v746
      %v748 = vrot.slane %v733, %v747
      %v749 = vlaneseq
      %v750 = vshrl.u32 %v749, 7
      %v751 = vsub.s32 0, %v750
      %v752 = vrot.slane %v737, %v751
      %v753 = vlaneseq
      %v754 = vshrl.u32 %v753, 7
      %v755 = vsub.s32 0, %v754
      %v756 = vrot.slane %v741, %v755
      %v757 = vmul.f32 %v721, %v748
      %v758 = vmul.f32 %v722, %v752
      %v759 = vmul.f32 %v723, %v756
      %v760 = vmul.f32 %v724, %v748
      %v761 = vmul.f32 %v725, %v752
      %v762 = vmul.f32 %v726, %v756
      %v763 = vpack.c.bf16 %v760, %v757
      %v764 = vpack.c.bf16 %v761, %v758
      %v765 = vpack.c.bf16 %v762, %v759
      %v769 = vunpack.c.l.b16 %v763
      %v770 = vunpack.c.l.b16 %v764
      %v771 = vunpack.c.l.b16 %v765
      %v772 = vunpack.c.h.b16 %v763
      %v773 = vunpack.c.h.b16 %v764
      %v774 = vunpack.c.h.b16 %v765
      %v775 = vpack.c.b16 %v770, %v769
      %v776 = vpack.c.b16 %v771, %v771
      %v777 = vpack.c.b16 %v773, %v772
      %v778 = vpack.c.b16 %v774, %v774
      %783 = vst [vmem:[%s244 + $0x8] sm:$0xff] %v775
      %784 = vst [vmem:[%s244 + $0x10] sm:$0xf] %v776
      %785 = vst [vmem:[%s244 + $0x24] sm:$0xff] %v777
      %786 = vst [vmem:[%s244 + $0x2c] sm:$0xf] %v778
      %787 = vst [vmem:[%s244] sm:$0xff] 0
      %788 = vst [vmem:[%s244 + $0x1c] sm:$0xff] 0
      %vm789 = vcmask 1043456
      %vm790 = vcmask 556036
      %vm791 = vmor %vm790, %vm789
      %792 = vst.msk [vmem:[%s244 + $0x14] sm:$0xff] %vm791, 0
      %793 = vst.msk [vmem:[%s244 + $0x30] sm:$0xff] %vm791, 0
      %p794 = scmp.lt.s32.totalorder %s16, 1
      %s795 = scalar_select %p794, %s16, 1
      %s796 = smul.addr %s795, 14
      %s797 = smul.addr %s796, 4
      %s798 = scalar_lea.vmem %s5, %s797
      // Predicated region
      $region41: #{srresnet_forward.17} parent=39 // pred_check
        %p799 = pneg %p149
      $region42: #{srresnet_forward.17} parent=39 // pred_check_branch
        %801 = sbr.rel (%p799) target = $region44
      $region43: #{srresnet_forward.17} parent=39 // pred_region
        _
      $region44: #{srresnet_forward.17} parent=39 // pred_fallthru
        _
    $region40: #{srresnet_forward.17} parent=5 // pred_fallthru
      _
    %p802 = scmp.le.s32.totalorder 2, %s11
    // Predicated region
    $region45: #{srresnet_forward.17} parent=5 // pred_check
      %p803 = pneg %p802
    $region46: #{srresnet_forward.17} parent=5 // pred_check_branch
      %805 = sbr.rel (%p803) target = $region48
    $region47: #{srresnet_forward.17} parent=5 // pred_region
      %s806 = ssub.s32 %s11, 2
      // Predicated region
      $region49: #{srresnet_forward.17} parent=47 // pred_check
        %p807 = pneg %p155
      $region50: #{srresnet_forward.17} parent=47 // pred_check_branch
        %809 = sbr.rel (%p807) target = $region52
      $region51: #{srresnet_forward.17} parent=47 // pred_region
        %p810 = scmp.lt.s32.totalorder %s17, 1
        %s811 = scalar_select %p810, %s17, 1
        %s812 = smul.addr %s811, 14
        %s813 = smul.addr %s812, 4
        %s814 = scalar_lea.vmem %s5, %s813
      $region52: #{srresnet_forward.17} parent=47 // pred_fallthru
        _
    $region48: #{srresnet_forward.17} parent=5 // pred_fallthru
      _
  $region6: #{srresnet_forward.17} parent=0 // loop_footer
    %s15 = sadd.s32 1, %s11
  $region7: #{srresnet_forward.17} parent=0 // loop_footer_branch
    %10 = sbr.rel target = $region3
  $region8: #{srresnet_forward.17} parent=0 // loop_exit
    _

// kernel: srresnet_forward.18
$region0: #{srresnet_forward.18}
  #allocation0 [shape = 'u32[]', space=smem, size = 0x4, offset = 0x4, fixed_abs, tag = 'smem constant byte address 0x4 - core index']
  #allocation1 [shape = 'u32[144,128]{1,0:T(1,128)}', space=vmem, size = 0x12000, scoped, tag = 'internal scratch']
  #allocation2 [shape = 'bf16[144,384]{1,0:T(16,128)(2,1)}', space=vmem, size = 0x1b000, scoped, tag = 'scratch operand']
  #allocation3 [shape = 'f32[1]{0:T(128)S(6)}', space=smem, size = 0x200, scoped, tag = 'scoped memory for srresnet_forward.18']
  %s0 = inlined_call_operand.vmem [shape: bf16[2,16,836], index: 0, kind: input, shape index: {}]
  %s1 = inlined_call_operand.vmem [shape: bf16[64,144], index: 1, kind: input, shape index: {}]
  %s2 = inlined_call_operand.vmem [shape: f32[64,1], index: 2, kind: input, shape index: {}]
  %s3 = inlined_call_operand.vmem [shape: bf16[1,836], index: 3, kind: input, shape index: {}]
  %s4 = inlined_call_operand.<no memory space> [shape: f32[1], index: 4, kind: input, shape index: {}]
  %s5 = inlined_call_operand.vmem [shape: bf16[2,64,836], index: 5, kind: output, shape index: {}]
  %s6 = sld [smem:[#allocation0]]
  $region53: #{srresnet_forward.18} parent=0
    _
  %s8 = ssub.s32 1, %s6
  %s9 = scalar_select 0, %s8, %s6
  %10 = sst [smem:[#allocation3]] %s4
  loop: start=0, step=1, limit=4
  $region2: #{srresnet_forward.18} parent=0 // loop_pre_header
    _
  $region3: #{srresnet_forward.18} parent=0 // loop_header
    %s12 = sphi 0, %s16
    %p13 = scmp.ge.s32.totalorder %s12, 4
    %s22 = sphi 0, %s24
    %s25 = sphi 0, %s22
    %s26 = sphi 0, %s25
    %s42 = sphi 0, %s26
    %s46 = sphi 0, %s46
    %s48 = sphi 0, %s46
    %s49 = sphi 0, %s48
    %s63 = sphi 0, %s49
    %s67 = sphi 0, %s67
    %s69 = sphi 0, %s67
    %s70 = sphi 0, %s69
    %s84 = sphi 0, %s70
    %s88 = sphi 0, %s88
    %s90 = sphi 0, %s88
    %s91 = sphi 0, %s90
    %s105 = sphi 0, %s91
    %s109 = sphi 0, %s109
    %s111 = sphi 0, %s109
    %s112 = sphi 0, %s111
    %s126 = sphi 0, %s112
    %s132 = sphi 0, %s134
    %s135 = sphi 0, %s132
    %s136 = sphi 0, %s135
    %s152 = sphi 0, %s136
  $region4: #{srresnet_forward.18} parent=0 // loop_header_branch
    %15 = sbr.rel (%p13) target = $region8
  $region5: #{srresnet_forward.18} parent=0 // loop_body
    %s17 = ssub.s32 %s12, 1
    %s18 = ssub.s32 %s12, 2
    %s19 = sadd.s32 %s12, 1
    %s20 = ssub.s32 %s12, %s19
    %p21 = scmp.eq.s32.totalorder %s20, 0
    %s23 = sadd.s32 %s22, 1
    %s24 = scalar_select %p21, %s22, %s23
    %p27 = pneg %p21
    %p28 = scmp.eq.s32.totalorder %s12, 1
    %p29 = por %p27, %p28
    %p30 = scmp.ne.s32.totalorder %s22, %s25
    %p31 = scmp.eq.s32.totalorder %s12, 0
    %p32 = por %p30, %p31
    %p33 = scmp.ne.s32.totalorder %s22, %s25
    %p34 = scmp.eq.s32.totalorder %s17, 1
    %p35 = por %p33, %p34
    %p36 = scmp.ne.s32.totalorder %s25, %s26
    %p37 = scmp.eq.s32.totalorder %s17, 0
    %p38 = por %p36, %p37
    %p39 = scmp.ne.s32.totalorder %s25, %s26
    %p40 = scmp.eq.s32.totalorder %s18, 1
    %p41 = por %p39, %p40
    %p43 = scmp.ne.s32.totalorder %s26, %s42
    %p44 = scmp.eq.s32.totalorder %s18, 0
    %p45 = por %p43, %p44
    %s47 = sadd.s32 %s46, 1
    %p50 = scmp.eq.s32.totalorder %s12, 1
    %p51 = scmp.ne.s32.totalorder %s46, %s48
    %p52 = scmp.eq.s32.totalorder %s12, 0
    %p53 = por %p51, %p52
    %p54 = scmp.ne.s32.totalorder %s46, %s48
    %p55 = scmp.eq.s32.totalorder %s17, 1
    %p56 = por %p54, %p55
    %p57 = scmp.ne.s32.totalorder %s48, %s49
    %p58 = scmp.eq.s32.totalorder %s17, 0
    %p59 = por %p57, %p58
    %p60 = scmp.ne.s32.totalorder %s48, %s49
    %p61 = scmp.eq.s32.totalorder %s18, 1
    %p62 = por %p60, %p61
    %p64 = scmp.ne.s32.totalorder %s49, %s63
    %p65 = scmp.eq.s32.totalorder %s18, 0
    %p66 = por %p64, %p65
    %s68 = sadd.s32 %s67, 1
    %p71 = scmp.eq.s32.totalorder %s12, 1
    %p72 = scmp.ne.s32.totalorder %s67, %s69
    %p73 = scmp.eq.s32.totalorder %s12, 0
    %p74 = por %p72, %p73
    %p75 = scmp.ne.s32.totalorder %s67, %s69
    %p76 = scmp.eq.s32.totalorder %s17, 1
    %p77 = por %p75, %p76
    %p78 = scmp.ne.s32.totalorder %s69, %s70
    %p79 = scmp.eq.s32.totalorder %s17, 0
    %p80 = por %p78, %p79
    %p81 = scmp.ne.s32.totalorder %s69, %s70
    %p82 = scmp.eq.s32.totalorder %s18, 1
    %p83 = por %p81, %p82
    %p85 = scmp.ne.s32.totalorder %s70, %s84
    %p86 = scmp.eq.s32.totalorder %s18, 0
    %p87 = por %p85, %p86
    %s89 = sadd.s32 %s88, 1
    %p92 = scmp.eq.s32.totalorder %s12, 1
    %p93 = scmp.ne.s32.totalorder %s88, %s90
    %p94 = scmp.eq.s32.totalorder %s12, 0
    %p95 = por %p93, %p94
    %p96 = scmp.ne.s32.totalorder %s88, %s90
    %p97 = scmp.eq.s32.totalorder %s17, 1
    %p98 = por %p96, %p97
    %p99 = scmp.ne.s32.totalorder %s90, %s91
    %p100 = scmp.eq.s32.totalorder %s17, 0
    %p101 = por %p99, %p100
    %p102 = scmp.ne.s32.totalorder %s90, %s91
    %p103 = scmp.eq.s32.totalorder %s18, 1
    %p104 = por %p102, %p103
    %p106 = scmp.ne.s32.totalorder %s91, %s105
    %p107 = scmp.eq.s32.totalorder %s18, 0
    %p108 = por %p106, %p107
    %s110 = sadd.s32 %s109, 1
    %p113 = scmp.eq.s32.totalorder %s12, 1
    %p114 = scmp.ne.s32.totalorder %s109, %s111
    %p115 = scmp.eq.s32.totalorder %s12, 0
    %p116 = por %p114, %p115
    %p117 = scmp.ne.s32.totalorder %s109, %s111
    %p118 = scmp.eq.s32.totalorder %s17, 1
    %p119 = por %p117, %p118
    %p120 = scmp.ne.s32.totalorder %s111, %s112
    %p121 = scmp.eq.s32.totalorder %s17, 0
    %p122 = por %p120, %p121
    %p123 = scmp.ne.s32.totalorder %s111, %s112
    %p124 = scmp.eq.s32.totalorder %s18, 1
    %p125 = por %p123, %p124
    %p127 = scmp.ne.s32.totalorder %s112, %s126
    %p128 = scmp.eq.s32.totalorder %s18, 0
    %p129 = por %p127, %p128
    %s130 = ssub.s32 %s12, %s19
    %p131 = scmp.eq.s32.totalorder %s130, 0
    %s133 = sadd.s32 %s132, 1
    %s134 = scalar_select %p131, %s132, %s133
    %p137 = pneg %p131
    %p138 = scmp.eq.s32.totalorder %s12, 1
    %p139 = por %p137, %p138
    %p140 = scmp.ne.s32.totalorder %s132, %s135
    %p141 = scmp.eq.s32.totalorder %s12, 0
    %p142 = por %p140, %p141
    %p143 = scmp.ne.s32.totalorder %s132, %s135
    %p144 = scmp.eq.s32.totalorder %s17, 1
    %p145 = por %p143, %p144
    %p146 = scmp.ne.s32.totalorder %s135, %s136
    %p147 = scmp.eq.s32.totalorder %s17, 0
    %p148 = por %p146, %p147
    %p149 = scmp.ne.s32.totalorder %s135, %s136
    %p150 = scmp.eq.s32.totalorder %s18, 1
    %p151 = por %p149, %p150
    %p153 = scmp.ne.s32.totalorder %s136, %s152
    %p154 = scmp.eq.s32.totalorder %s18, 0
    %p155 = por %p153, %p154
    %p156 = scmp.le.s32.totalorder 1, %s12
    %p157 = scmp.lt.s32.totalorder %s12, 3
    %p158 = pnand %p156, %p157
    %p159 = pneg %p158
    // Predicated region
    $region9: #{srresnet_forward.18} parent=5 // pred_check
      _
    $region10: #{srresnet_forward.18} parent=5 // pred_check_branch
      %161 = sbr.rel (%p158) target = $region12
    $region11: #{srresnet_forward.18} parent=5 // pred_region
      %s162 = ssub.s32 %s12, 1
      // Predicated region
      $region13: #{srresnet_forward.18} parent=11 // pred_check
        %p163 = pneg %p59
      $region14: #{srresnet_forward.18} parent=11 // pred_check_branch
        %165 = sbr.rel (%p163) target = $region16
      $region15: #{srresnet_forward.18} parent=11 // pred_region
        _
      $region16: #{srresnet_forward.18} parent=11 // pred_fallthru
        _
      // Predicated region
      $region17: #{srresnet_forward.18} parent=11 // pred_check
        %p166 = pneg %p80
      $region18: #{srresnet_forward.18} parent=11 // pred_check_branch
        %168 = sbr.rel (%p166) target = $region20
      $region19: #{srresnet_forward.18} parent=11 // pred_region
        _
      $region20: #{srresnet_forward.18} parent=11 // pred_fallthru
        _
      // Predicated region
      $region21: #{srresnet_forward.18} parent=11 // pred_check
        %p169 = pneg %p101
      $region22: #{srresnet_forward.18} parent=11 // pred_check_branch
        %171 = sbr.rel (%p169) target = $region24
      $region23: #{srresnet_forward.18} parent=11 // pred_region
        _
      $region24: #{srresnet_forward.18} parent=11 // pred_fallthru
        _
      // Predicated region
      $region25: #{srresnet_forward.18} parent=11 // pred_check
        %p172 = pneg %p122
      $region26: #{srresnet_forward.18} parent=11 // pred_check_branch
        %174 = sbr.rel (%p172) target = $region28
      $region27: #{srresnet_forward.18} parent=11 // pred_region
        _
      $region28: #{srresnet_forward.18} parent=11 // pred_fallthru
        _
    $region12: #{srresnet_forward.18} parent=5 // pred_fallthru
      _
    %p175 = scmp.lt.s32.totalorder %s12, 2
    // Predicated region
    $region29: #{srresnet_forward.18} parent=5 // pred_check
      %p176 = pneg %p175
    $region30: #{srresnet_forward.18} parent=5 // pred_check_branch
      %178 = sbr.rel (%p176) target = $region32
    $region31: #{srresnet_forward.18} parent=5 // pred_region
      // Predicated region
      $region33: #{srresnet_forward.18} parent=31 // pred_check
        %p179 = pneg %p32
      $region34: #{srresnet_forward.18} parent=31 // pred_check_branch
        %181 = sbr.rel (%p179) target = $region36
      $region35: #{srresnet_forward.18} parent=31 // pred_region
        %p182 = scmp.lt.s32.totalorder %s12, 1
        %s183 = scalar_select %p182, %s12, 1
        %s184 = smul.addr %s183, 14
        %s185 = smul.addr %s184, 4
        %s186 = scalar_lea.vmem %s0, %s185
      $region36: #{srresnet_forward.18} parent=31 // pred_fallthru
        _
    $region32: #{srresnet_forward.18} parent=5 // pred_fallthru
      _
    %p187 = scmp.le.s32.totalorder 1, %s12
    %p188 = scmp.lt.s32.totalorder %s12, 3
    %p189 = pnand %p187, %p188
    %p190 = pneg %p189
    // Predicated region
    $region37: #{srresnet_forward.18} parent=5 // pred_check
      _
    $region38: #{srresnet_forward.18} parent=5 // pred_check_branch
      %192 = sbr.rel (%p189) target = $region40
    $region39: #{srresnet_forward.18} parent=5 // pred_region
      %s193 = ssub.s32 %s12, 1
      %p194 = scmp.lt.s32.totalorder %s17, 1
      %s195 = scalar_select %p194, %s17, 1
      %s196 = smul.addr %s195, 14
      %s197 = smul.addr %s196, 4
      %s198 = scalar_lea.vmem %s0, %s197
      %p199 = pneg %p38
      %p200 = pneg %p35
      %p201 = pneg %p59
      %p202 = pneg %p56
      %p203 = pneg %p80
      %p204 = pneg %p77
      %p205 = pneg %p101
      %p206 = pneg %p98
      %p207 = pneg %p122
      %p208 = pneg %p119
      %p209 = pneg %p148
      %p210 = pneg %p145
      %p211 = scmp.lt.s32.totalorder %s17, 1
      %s212 = scalar_select %p211, %s17, 1
      %s213 = smul.addr %s212, 56
      %s214 = smul.addr %s213, 4
      %s215 = scalar_lea.vmem %s5, %s214
      %p216 = scmp.lt.s32.totalorder %s17, 1
      %s217 = scalar_select %p216, %s17, 1
      %s218 = smul.addr %s217, 14
      %s219 = smul.addr %s218, 4
      %s220 = scalar_lea.vmem %s0, %s219
      %p221 = scmp.lt.s32.totalorder %s17, 1
      %s222 = scalar_select %p221, %s17, 1
      %s223 = smul.addr %s222, 56
      %s224 = smul.addr %s223, 4
      %s225 = scalar_lea.vmem %s5, %s224
      %v227 = vld [vmem:[%s1] sm:$0xff]
      %v228 = vld [vmem:[%s1 + $0x8] sm:$0xff]
      %v229 = vld [vmem:[%s1 + $0x10] sm:$0xff]
      %v230 = vld [vmem:[%s1 + $0x18] sm:$0xff]
      %v231 = vld [vmem:[%s1 + $0x20] sm:$0xff]
      %v232 = vld [vmem:[%s1 + $0x28] sm:$0xff]
      %v233 = vld [vmem:[%s1 + $0x30] sm:$0xff]
      %v234 = vld [vmem:[%s1 + $0x38] sm:$0xff]
      %v235 = vld [vmem:[%s2] sm:$0xff]
      %v236 = vld [vmem:[%s2 + $0x8] sm:$0xff]
      %v237 = vld [vmem:[%s2 + $0x10] sm:$0xff]
      %v238 = vld [vmem:[%s2 + $0x18] sm:$0xff]
      %v239 = vld [vmem:[%s2 + $0x20] sm:$0xff]
      %v240 = vld [vmem:[%s2 + $0x28] sm:$0xff]
      %v241 = vld [vmem:[%s2 + $0x30] sm:$0xff]
      %v242 = vld [vmem:[%s2 + $0x38] sm:$0xff]
      %s243 = sld [smem:[#allocation3]]
      %v244 = vld [vmem:[%s220 + $0x4] sm:$0xff]
      %v245 = vld [vmem:[%s220 + $0xc] sm:$0xff]
      %v246 = vld [vmem:[%s220 + $0x20] sm:$0xff]
      %v247 = vld [vmem:[%s220 + $0x28] sm:$0xff]
      %v252 = vunpack.c.l.b16 %v244
      %v253 = vunpack.c.h.b16 %v244
      %v254 = vunpack.c.l.b16 %v245
      %v255 = vunpack.c.h.b16 %v245
      %v256 = vunpack.c.l.b16 %v246
      %v257 = vunpack.c.h.b16 %v246
      %v258 = vunpack.c.l.b16 %v247
      %v259 = vunpack.c.h.b16 %v247
      %v260 = vpack.c.b16 %v256, %v252
      %v261 = vpack.c.b16 %v257, %v253
      %v262 = vpack.c.b16 %v258, %v254
      %v263 = vpack.c.b16 %v259, %v255
      %264 = vrot.lane.b32.xlu0 %v260, 19
      %v265 = vpop.permute.xlu0 %264
      %266 = vrot.lane.b32.xlu0 %v261, 19
      %v267 = vpop.permute.xlu0 %266
      %268 = vrot.lane.b32.xlu0 %v262, 19
      %v269 = vpop.permute.xlu0 %268
      %270 = vrot.lane.b32.xlu0 %v263, 19
      %v271 = vpop.permute.xlu0 %270
      %vm272 = vcmask 154624
      %v273 = vsel %vm272, %v265, %v267
      %v274 = vsel %vm272, %v267, %v269
      %v275 = vsel %vm272, %v269, %v271
      %279 = vst [vmem:[#allocation2] sm:$0xff] %v273
      %280 = vst [vmem:[#allocation2 + $0x8] sm:$0xff] %v274
      %281 = vst [vmem:[#allocation2 + $0x10] sm:$0xff] %v275
      %v282 = vld [vmem:[%s220 + $0x4] sm:$0xff]
      %v283 = vld [vmem:[%s220 + $0xc] sm:$0xff]
      %v284 = vld [vmem:[%s220 + $0x20] sm:$0xff]
      %v285 = vld [vmem:[%s220 + $0x28] sm:$0xff]
      %v290 = vunpack.c.l.b16 %v282
      %v291 = vunpack.c.h.b16 %v282
      %v292 = vunpack.c.l.b16 %v283
      %v293 = vunpack.c.h.b16 %v283
      %v294 = vunpack.c.l.b16 %v284
      %v295 = vunpack.c.h.b16 %v284
      %v296 = vunpack.c.l.b16 %v285
      %v297 = vunpack.c.h.b16 %v285
      %v298 = vpack.c.b16 %v294, %v290
      %v299 = vpack.c.b16 %v295, %v291
      %v300 = vpack.c.b16 %v296, %v292
      %v301 = vpack.c.b16 %v297, %v293
      %302 = vrot.lane.b32.xlu0 %v298, 18
      %v303 = vpop.permute.xlu0 %302
      %304 = vrot.lane.b32.xlu0 %v299, 18
      %v305 = vpop.permute.xlu0 %304
      %306 = vrot.lane.b32.xlu0 %v300, 18
      %v307 = vpop.permute.xlu0 %306
      %308 = vrot.lane.b32.xlu0 %v301, 18
      %v309 = vpop.permute.xlu0 %308
      %vm310 = vcmask 146432
      %v311 = vsel %vm310, %v303, %v305
      %v312 = vsel %vm310, %v305, %v307
      %v313 = vsel %vm310, %v307, %v309
      %317 = vst [vmem:[#allocation2 + $0x18] sm:$0xff] %v311
      %318 = vst [vmem:[#allocation2 + $0x20] sm:$0xff] %v312
      %319 = vst [vmem:[#allocation2 + $0x28] sm:$0xff] %v313
      %v320 = vld [vmem:[%s220 + $0x4] sm:$0xff]
      %v321 = vld [vmem:[%s220 + $0xc] sm:$0xff]
      %v322 = vld [vmem:[%s220 + $0x20] sm:$0xff]
      %v323 = vld [vmem:[%s220 + $0x28] sm:$0xff]
      %v328 = vunpack.c.l.b16 %v320
      %v329 = vunpack.c.h.b16 %v320
      %v330 = vunpack.c.l.b16 %v321
      %v331 = vunpack.c.h.b16 %v321
      %v332 = vunpack.c.l.b16 %v322
      %v333 = vunpack.c.h.b16 %v322
      %v334 = vunpack.c.l.b16 %v323
      %v335 = vunpack.c.h.b16 %v323
      %v336 = vpack.c.b16 %v332, %v328
      %v337 = vpack.c.b16 %v333, %v329
      %v338 = vpack.c.b16 %v334, %v330
      %v339 = vpack.c.b16 %v335, %v331
      %340 = vrot.lane.b32.xlu0 %v336, 17
      %v341 = vpop.permute.xlu0 %340
      %342 = vrot.lane.b32.xlu0 %v337, 17
      %v343 = vpop.permute.xlu0 %342
      %344 = vrot.lane.b32.xlu0 %v338, 17
      %v345 = vpop.permute.xlu0 %344
      %346 = vrot.lane.b32.xlu0 %v339, 17
      %v347 = vpop.permute.xlu0 %346
      %vm348 = vcmask 138240
      %v349 = vsel %vm348, %v341, %v343
      %v350 = vsel %vm348, %v343, %v345
      %v351 = vsel %vm348, %v345, %v347
      %355 = vst [vmem:[#allocation2 + $0x30] sm:$0xff] %v349
      %356 = vst [vmem:[#allocation2 + $0x38] sm:$0xff] %v350
      %357 = vst [vmem:[#allocation2 + $0x40] sm:$0xff] %v351
      %v358 = vld [vmem:[%s220 + $0x4] sm:$0xff]
      %v359 = vld [vmem:[%s220 + $0xc] sm:$0xff]
      %v360 = vld [vmem:[%s220 + $0x20] sm:$0xff]
      %v361 = vld [vmem:[%s220 + $0x28] sm:$0xff]
      %v366 = vunpack.c.l.b16 %v358
      %v367 = vunpack.c.h.b16 %v358
      %v368 = vunpack.c.l.b16 %v359
      %v369 = vunpack.c.h.b16 %v359
      %v370 = vunpack.c.l.b16 %v360
      %v371 = vunpack.c.h.b16 %v360
      %v372 = vunpack.c.l.b16 %v361
      %v373 = vunpack.c.h.b16 %v361
      %v374 = vpack.c.b16 %v370, %v366
      %v375 = vpack.c.b16 %v371, %v367
      %v376 = vpack.c.b16 %v372, %v368
      %v377 = vpack.c.b16 %v373, %v369
      %378 = vrot.lane.b32.xlu0 %v374, 1
      %v379 = vpop.permute.xlu0 %378
      %380 = vrot.lane.b32.xlu0 %v375, 1
      %v381 = vpop.permute.xlu0 %380
      %382 = vrot.lane.b32.xlu0 %v376, 1
      %v383 = vpop.permute.xlu0 %382
      %384 = vrot.lane.b32.xlu0 %v377, 1
      %v385 = vpop.permute.xlu0 %384
      %vm386 = vcmask 7168
      %v387 = vsel %vm386, %v379, %v381
      %v388 = vsel %vm386, %v381, %v383
      %v389 = vsel %vm386, %v383, %v385
      %393 = vst [vmem:[#allocation2 + $0x48] sm:$0xff] %v387
      %394 = vst [vmem:[#allocation2 + $0x50] sm:$0xff] %v388
      %395 = vst [vmem:[#allocation2 + $0x58] sm:$0xff] %v389
      %v396 = vld [vmem:[%s220 + $0x8] sm:$0xff]
      %v397 = vld [vmem:[%s220 + $0x10] sm:$0xf]
      %v398 = vld [vmem:[%s220 + $0x24] sm:$0xff]
      %v399 = vld [vmem:[%s220 + $0x2c] sm:$0xf]
      %v404 = vunpack.c.l.b16 %v396
      %v405 = vunpack.c.h.b16 %v396
      %v406 = vunpack.c.l.b16 %v397
      %v407 = vunpack.c.l.b16 %v398
      %v408 = vunpack.c.h.b16 %v398
      %v409 = vunpack.c.l.b16 %v399
      %v410 = vpack.c.b16 %v407, %v404
      %v411 = vpack.c.b16 %v408, %v405
      %v412 = vpack.c.b16 %v409, %v406
      %416 = vst [vmem:[#allocation2 + $0x60] sm:$0xff] %v410
      %417 = vst [vmem:[#allocation2 + $0x68] sm:$0xff] %v411
      %418 = vst [vmem:[#allocation2 + $0x70] sm:$0xff] %v412
      %v419 = vld [vmem:[%s220 + $0x8] sm:$0xff]
      %v420 = vld [vmem:[%s220 + $0x10] sm:$0xff]
      %v421 = vld [vmem:[%s220 + $0x24] sm:$0xff]
      %v422 = vld [vmem:[%s220 + $0x2c] sm:$0xff]
      %v427 = vunpack.c.l.b16 %v419
      %v428 = vunpack.c.h.b16 %v419
      %v429 = vunpack.c.l.b16 %v420
      %v430 = vunpack.c.h.b16 %v420
      %v431 = vunpack.c.l.b16 %v421
      %v432 = vunpack.c.h.b16 %v421
      %v433 = vunpack.c.l.b16 %v422
      %v434 = vunpack.c.h.b16 %v422
      %v435 = vpack.c.b16 %v431, %v427
      %v436 = vpack.c.b16 %v432, %v428
      %v437 = vpack.c.b16 %v433, %v429
      %v438 = vpack.c.b16 %v434, %v430
      %439 = vrot.lane.b32.xlu0 %v435, 127
      %v440 = vpop.permute.xlu0 %439
      %441 = vrot.lane.b32.xlu0 %v436, 127
      %v442 = vpop.permute.xlu0 %441
      %443 = vrot.lane.b32.xlu0 %v437, 127
      %v444 = vpop.permute.xlu0 %443
      %445 = vrot.lane.b32.xlu0 %v438, 127
      %v446 = vpop.permute.xlu0 %445
      %vm447 = vcmask 1039360
      %v448 = vsel %vm447, %v440, %v442
      %v449 = vsel %vm447, %v442, %v444
      %v450 = vsel %vm447, %v444, %v446
      %454 = vst [vmem:[#allocation2 + $0x78] sm:$0xff] %v448
      %455 = vst [vmem:[#allocation2 + $0x80] sm:$0xff] %v449
      %456 = vst [vmem:[#allocation2 + $0x88] sm:$0xff] %v450
      %v457 = vld [vmem:[%s220 + $0x8] sm:$0xff]
      %v458 = vld [vmem:[%s220 + $0x10] sm:$0xff]
      %v459 = vld [vmem:[%s220 + $0x24] sm:$0xff]
      %v460 = vld [vmem:[%s220 + $0x2c] sm:$0xff]
      %v465 = vunpack.c.l.b16 %v457
      %v466 = vunpack.c.h.b16 %v457
      %v467 = vunpack.c.l.b16 %v458
      %v468 = vunpack.c.h.b16 %v458
      %v469 = vunpack.c.l.b16 %v459
      %v470 = vunpack.c.h.b16 %v459
      %v471 = vunpack.c.l.b16 %v460
      %v472 = vunpack.c.h.b16 %v460
      %v473 = vpack.c.b16 %v469, %v465
      %v474 = vpack.c.b16 %v470, %v466
      %v475 = vpack.c.b16 %v471, %v467
      %v476 = vpack.c.b16 %v472, %v468
      %477 = vrot.lane.b32.xlu0 %v473, 111
      %v478 = vpop.permute.xlu0 %477
      %479 = vrot.lane.b32.xlu0 %v474, 111
      %v480 = vpop.permute.xlu0 %479
      %481 = vrot.lane.b32.xlu0 %v475, 111
      %v482 = vpop.permute.xlu0 %481
      %483 = vrot.lane.b32.xlu0 %v476, 111
      %v484 = vpop.permute.xlu0 %483
      %vm485 = vcmask 908288
      %v486 = vsel %vm485, %v478, %v480
      %v487 = vsel %vm485, %v480, %v482
      %v488 = vsel %vm485, %v482, %v484
      %492 = vst [vmem:[#allocation2 + $0x90] sm:$0xff] %v486
      %493 = vst [vmem:[#allocation2 + $0x98] sm:$0xff] %v487
      %494 = vst [vmem:[#allocation2 + $0xa0] sm:$0xff] %v488
      %v495 = vld [vmem:[%s220 + $0x8] sm:$0xff]
      %v496 = vld [vmem:[%s220 + $0x10] sm:$0xff]
      %v497 = vld [vmem:[%s220 + $0x24] sm:$0xff]
      %v498 = vld [vmem:[%s220 + $0x2c] sm:$0xff]
      %v503 = vunpack.c.l.b16 %v495
      %v504 = vunpack.c.h.b16 %v495
      %v505 = vunpack.c.l.b16 %v496
      %v506 = vunpack.c.h.b16 %v496
      %v507 = vunpack.c.l.b16 %v497
      %v508 = vunpack.c.h.b16 %v497
      %v509 = vunpack.c.l.b16 %v498
      %v510 = vunpack.c.h.b16 %v498
      %v511 = vpack.c.b16 %v507, %v503
      %v512 = vpack.c.b16 %v508, %v504
      %v513 = vpack.c.b16 %v509, %v505
      %v514 = vpack.c.b16 %v510, %v506
      %515 = vrot.lane.b32.xlu0 %v511, 110
      %v516 = vpop.permute.xlu0 %515
      %517 = vrot.lane.b32.xlu0 %v512, 110
      %v518 = vpop.permute.xlu0 %517
      %519 = vrot.lane.b32.xlu0 %v513, 110
      %v520 = vpop.permute.xlu0 %519
      %521 = vrot.lane.b32.xlu0 %v514, 110
      %v522 = vpop.permute.xlu0 %521
      %vm523 = vcmask 900096
      %v524 = vsel %vm523, %v516, %v518
      %v525 = vsel %vm523, %v518, %v520
      %v526 = vsel %vm523, %v520, %v522
      %530 = vst [vmem:[#allocation2 + $0xa8] sm:$0xff] %v524
      %531 = vst [vmem:[#allocation2 + $0xb0] sm:$0xff] %v525
      %532 = vst [vmem:[#allocation2 + $0xb8] sm:$0xff] %v526
      %v533 = vld [vmem:[%s220 + $0x8] sm:$0xff]
      %v534 = vld [vmem:[%s220 + $0x10] sm:$0xff]
      %v535 = vld [vmem:[%s220 + $0x24] sm:$0xff]
      %v536 = vld [vmem:[%s220 + $0x2c] sm:$0xff]
      %v541 = vunpack.c.l.b16 %v533
      %v542 = vunpack.c.h.b16 %v533
      %v543 = vunpack.c.l.b16 %v534
      %v544 = vunpack.c.h.b16 %v534
      %v545 = vunpack.c.l.b16 %v535
      %v546 = vunpack.c.h.b16 %v535
      %v547 = vunpack.c.l.b16 %v536
      %v548 = vunpack.c.h.b16 %v536
      %v549 = vpack.c.b16 %v545, %v541
      %v550 = vpack.c.b16 %v546, %v542
      %v551 = vpack.c.b16 %v547, %v543
      %v552 = vpack.c.b16 %v548, %v544
      %553 = vrot.lane.b32.xlu0 %v549, 109
      %v554 = vpop.permute.xlu0 %553
      %555 = vrot.lane.b32.xlu0 %v550, 109
      %v556 = vpop.permute.xlu0 %555
      %557 = vrot.lane.b32.xlu0 %v551, 109
      %v558 = vpop.permute.xlu0 %557
      %559 = vrot.lane.b32.xlu0 %v552, 109
      %v560 = vpop.permute.xlu0 %559
      %vm561 = vcmask 891904
      %v562 = vsel %vm561, %v554, %v556
      %v563 = vsel %vm561, %v556, %v558
      %v564 = vsel %vm561, %v558, %v560
      %568 = vst [vmem:[#allocation2 + $0xc0] sm:$0xff] %v562
      %569 = vst [vmem:[#allocation2 + $0xc8] sm:$0xff] %v563
      %570 = vst [vmem:[#allocation2 + $0xd0] sm:$0xff] %v564
      %v571 = vld [vmem:[#allocation2] sm:$0xff]
      %v572 = vld [vmem:[#allocation2 + $0x8] sm:$0xff]
      %v573 = vld [vmem:[#allocation2 + $0x10] sm:$0xff]
      %v574 = vld [vmem:[#allocation2 + $0x18] sm:$0xff]
      %v575 = vld [vmem:[#allocation2 + $0x20] sm:$0xff]
      %v576 = vld [vmem:[#allocation2 + $0x28] sm:$0xff]
      %v577 = vld [vmem:[#allocation2 + $0x30] sm:$0xff]
      %v578 = vld [vmem:[#allocation2 + $0x38] sm:$0xff]
      %v579 = vld [vmem:[#allocation2 + $0x40] sm:$0xff]
      %v580 = vld [vmem:[#allocation2 + $0x48] sm:$0xff]
      %v581 = vld [vmem:[#allocation2 + $0x50] sm:$0xff]
      %v582 = vld [vmem:[#allocation2 + $0x58] sm:$0xff]
      %v583 = vld [vmem:[#allocation2 + $0x60] sm:$0xff]
      %v584 = vld [vmem:[#allocation2 + $0x68] sm:$0xff]
      %v585 = vld [vmem:[#allocation2 + $0x70] sm:$0xff]
      %v586 = vld [vmem:[#allocation2 + $0x78] sm:$0xff]
      %v587 = vld [vmem:[#allocation2 + $0x80] sm:$0xff]
      %v588 = vld [vmem:[#allocation2 + $0x88] sm:$0xff]
      %v589 = vld [vmem:[#allocation2 + $0x90] sm:$0xff]
      %v590 = vld [vmem:[#allocation2 + $0x98] sm:$0xff]
      %v591 = vld [vmem:[#allocation2 + $0xa0] sm:$0xff]
      %v592 = vld [vmem:[#allocation2 + $0xa8] sm:$0xff]
      %v593 = vld [vmem:[#allocation2 + $0xb0] sm:$0xff]
      %v594 = vld [vmem:[#allocation2 + $0xb8] sm:$0xff]
      %v595 = vld [vmem:[#allocation2 + $0xc0] sm:$0xff]
      %v596 = vld [vmem:[#allocation2 + $0xc8] sm:$0xff]
      %v597 = vld [vmem:[#allocation2 + $0xd0] sm:$0xff]
      %599 = vset.pattern.permute.xlu0 0
      %600 = vperm.xlu0 %599, %v235
      %v601 = vpop.permute.xlu0 %600
      %604 = vset.pattern.permute.xlu0 0
      %605 = vperm.xlu0 %604, %v236
      %v606 = vpop.permute.xlu0 %605
      %609 = vset.pattern.permute.xlu0 0
      %610 = vperm.xlu0 %609, %v237
      %v611 = vpop.permute.xlu0 %610
      %614 = vset.pattern.permute.xlu0 0
      %615 = vperm.xlu0 %614, %v238
      %v616 = vpop.permute.xlu0 %615
      %619 = vset.pattern.permute.xlu0 0
      %620 = vperm.xlu0 %619, %v239
      %v621 = vpop.permute.xlu0 %620
      %624 = vset.pattern.permute.xlu0 0
      %625 = vperm.xlu0 %624, %v240
      %v626 = vpop.permute.xlu0 %625
      %629 = vset.pattern.permute.xlu0 0
      %630 = vperm.xlu0 %629, %v241
      %v631 = vpop.permute.xlu0 %630
      %634 = vset.pattern.permute.xlu0 0
      %635 = vperm.xlu0 %634, %v242
      %v636 = vpop.permute.xlu0 %635
      %v646 = vunpack.c.l.b16 %v227
      %v647 = vunpack.c.h.b16 %v227
      %v648 = vunpack.c.l.b16 %v228
      %v649 = vunpack.c.h.b16 %v228
      %v650 = vunpack.c.l.b16 %v229
      %v651 = vunpack.c.h.b16 %v229
      %v652 = vunpack.c.l.b16 %v230
      %v653 = vunpack.c.h.b16 %v230
      %v654 = vunpack.c.l.b16 %v231
      %v655 = vunpack.c.h.b16 %v231
      %v656 = vunpack.c.l.b16 %v232
      %v657 = vunpack.c.h.b16 %v232
      %v658 = vunpack.c.l.b16 %v233
      %v659 = vunpack.c.h.b16 %v233
      %v660 = vunpack.c.l.b16 %v234
      %v661 = vunpack.c.h.b16 %v234
      %v662 = vpack.c.b16 %v648, %v646
      %v663 = vpack.c.b16 %v649, %v647
      %v664 = vpack.c.b16 %v652, %v650
      %v665 = vpack.c.b16 %v653, %v651
      %v666 = vpack.c.b16 %v656, %v654
      %v667 = vpack.c.b16 %v657, %v655
      %v668 = vpack.c.b16 %v660, %v658
      %v669 = vpack.c.b16 %v661, %v659
      %vm674 = vcmask 130048
      %v676 = vsel %vm674, %v663, 0
      %v679 = vsel %vm674, %v665, 0
      %v682 = vsel %vm674, %v667, 0
      %v685 = vsel %vm674, %v669, 0
      %687 = vmatprep.subr.bf16.mxu0 %v572
      %688 = vmatpush1.bf16.msra.mxu0 %v571
      %689 = vmatprep.subr.bf16.mxu0 %v575
      %690 = vmatpush1.bf16.msra.mxu0 %v574
      %691 = vmatprep.subr.bf16.mxu0 %v578
      %692 = vmatpush1.bf16.msra.mxu0 %v577
      %693 = vmatprep.subr.bf16.mxu0 %v581
      %694 = vmatpush1.bf16.msra.mxu0 %v580
      %695 = vmatprep.subr.bf16.mxu0 %v584
      %696 = vmatpush1.bf16.msra.mxu0 %v583
      %697 = vmatprep.subr.bf16.mxu0 %v587
      %698 = vmatpush1.bf16.msra.mxu0 %v586
      %699 = vmatprep.subr.bf16.mxu0 %v590
      %700 = vmatpush1.bf16.msra.mxu0 %v589
      %701 = vmatprep.subr.bf16.mxu0 %v593
      %702 = vmatpush1.bf16.msra.mxu0 %v592
      %703 = vmatprep.subr.bf16.mxu0 %v596
      %704 = vmatpush1.bf16.msra.mxu0 %v595
      %705 = vmatprep.subr.bf16.mxu0 0
      %706 = vmatpush1.bf16.msra.mxu0 0
      %707 = vmatprep.subr.bf16.mxu0 0
      %708 = vmatpush1.bf16.msra.mxu0 0
      %709 = vmatprep.subr.bf16.mxu0 0
      %710 = vmatpush1.bf16.msra.mxu0 0
      %711 = vmatprep.subr.bf16.mxu0 0
      %712 = vmatpush1.bf16.msra.mxu0 0
      %713 = vmatprep.subr.bf16.mxu0 0
      %714 = vmatpush1.bf16.msra.mxu0 0
      %715 = vmatprep.subr.bf16.mxu0 0
      %716 = vmatpush1.bf16.msra.mxu0 0
      %717 = vmatprep.subr.bf16.mxu0 0
      %718 = vmatpush1.bf16.msra.mxu0 0
      %719 = vmatprep.mubr.bf16.mxu0 %v676
      %720 = vmatmul.mubr.bf16.gmra.mrb[0].mxu0 %v662
      %v721 = vpop.f32.mrb[0].mxu0
      %v722 = vadd.f32 %v601, %v721
      %v723 = vpop.f32.mrb[0].mxu0
      %v724 = vadd.f32 %v601, %v723
      %v725 = vpop.f32.mrb[0].mxu0
      %v726 = vadd.f32 %v606, %v725
      %v727 = vpop.f32.mrb[0].mxu0
      %v728 = vadd.f32 %v606, %v727
      %729 = vmatprep.mubr.bf16.mxu0 %v679
      %730 = vmatmul.mubr.bf16.gmra.mrb[0].mxu0 %v664
      %v731 = vpop.f32.mrb[0].mxu0
      %v732 = vadd.f32 %v611, %v731
      %v733 = vpop.f32.mrb[0].mxu0
      %v734 = vadd.f32 %v611, %v733
      %v735 = vpop.f32.mrb[0].mxu0
      %v736 = vadd.f32 %v616, %v735
      %v737 = vpop.f32.mrb[0].mxu0
      %v738 = vadd.f32 %v616, %v737
      %739 = vmatprep.mubr.bf16.mxu0 %v682
      %740 = vmatmul.mubr.bf16.gmra.mrb[0].mxu0 %v666
      %v741 = vpop.f32.mrb[0].mxu0
      %v742 = vadd.f32 %v621, %v741
      %v743 = vpop.f32.mrb[0].mxu0
      %v744 = vadd.f32 %v621, %v743
      %v745 = vpop.f32.mrb[0].mxu0
      %v746 = vadd.f32 %v626, %v745
      %v747 = vpop.f32.mrb[0].mxu0
      %v748 = vadd.f32 %v626, %v747
      %749 = vmatprep.mubr.bf16.mxu0 %v685
      %750 = vmatmul.mubr.bf16.gmra.mrb[0].mxu0 %v668
      %v751 = vpop.f32.mrb[0].mxu0
      %v752 = vadd.f32 %v631, %v751
      %v753 = vpop.f32.mrb[0].mxu0
      %v754 = vadd.f32 %v631, %v753
      %v755 = vpop.f32.mrb[0].mxu0
      %v756 = vadd.f32 %v636, %v755
      %v757 = vpop.f32.mrb[0].mxu0
      %v758 = vadd.f32 %v636, %v757
      %759 = vdwg.mxu0
      %760 = vmatprep.subr.bf16.mxu0 0
      %761 = vmatpush1.bf16.msra.mxu0 %v573
      %762 = vmatprep.subr.bf16.mxu0 0
      %763 = vmatpush1.bf16.msra.mxu0 %v576
      %764 = vmatprep.subr.bf16.mxu0 0
      %765 = vmatpush1.bf16.msra.mxu0 %v579
      %766 = vmatprep.subr.bf16.mxu0 0
      %767 = vmatpush1.bf16.msra.mxu0 %v582
      %768 = vmatprep.subr.bf16.mxu0 0
      %769 = vmatpush1.bf16.msra.mxu0 %v585
      %770 = vmatprep.subr.bf16.mxu0 0
      %771 = vmatpush1.bf16.msra.mxu0 %v588
      %772 = vmatprep.subr.bf16.mxu0 0
      %773 = vmatpush1.bf16.msra.mxu0 %v591
      %774 = vmatprep.subr.bf16.mxu0 0
      %775 = vmatpush1.bf16.msra.mxu0 %v594
      %776 = vmatprep.subr.bf16.mxu0 0
      %777 = vmatpush1.bf16.msra.mxu0 %v597
      %778 = vmatprep.subr.bf16.mxu0 0
      %779 = vmatpush1.bf16.msra.mxu0 0
      %780 = vmatprep.subr.bf16.mxu0 0
      %781 = vmatpush1.bf16.msra.mxu0 0
      %782 = vmatprep.subr.bf16.mxu0 0
      %783 = vmatpush1.bf16.msra.mxu0 0
      %784 = vmatprep.subr.bf16.mxu0 0
      %785 = vmatpush1.bf16.msra.mxu0 0
      %786 = vmatprep.subr.bf16.mxu0 0
      %787 = vmatpush1.bf16.msra.mxu0 0
      %788 = vmatprep.subr.bf16.mxu0 0
      %789 = vmatpush1.bf16.msra.mxu0 0
      %790 = vmatprep.subr.bf16.mxu0 0
      %791 = vmatpush1.bf16.msra.mxu0 0
      %792 = vmatprep.mubr.bf16.mxu0 %v676
      %793 = vmatmul.mubr.bf16.gmra.mrb[0].mxu0 %v662
      %v794 = vpop.f32.mrb[0].mxu0
      %v795 = vadd.f32 %v601, %v794
      %v796 = vpop.f32.mrb[0].mxu0
      %v797 = vpop.f32.mrb[0].mxu0
      %v798 = vadd.f32 %v606, %v797
      %v799 = vpop.f32.mrb[0].mxu0
      %800 = vmatprep.mubr.bf16.mxu0 %v679
      %801 = vmatmul.mubr.bf16.gmra.mrb[0].mxu0 %v664
      %v802 = vpop.f32.mrb[0].mxu0
      %v803 = vadd.f32 %v611, %v802
      %v804 = vpop.f32.mrb[0].mxu0
      %v805 = vpop.f32.mrb[0].mxu0
      %v806 = vadd.f32 %v616, %v805
      %v807 = vpop.f32.mrb[0].mxu0
      %808 = vmatprep.mubr.bf16.mxu0 %v682
      %809 = vmatmul.mubr.bf16.gmra.mrb[0].mxu0 %v666
      %v810 = vpop.f32.mrb[0].mxu0
      %v811 = vadd.f32 %v621, %v810
      %v812 = vpop.f32.mrb[0].mxu0
      %v813 = vpop.f32.mrb[0].mxu0
      %v814 = vadd.f32 %v626, %v813
      %v815 = vpop.f32.mrb[0].mxu0
      %816 = vmatprep.mubr.bf16.mxu0 %v685
      %817 = vmatmul.mubr.bf16.gmra.mrb[0].mxu0 %v668
      %v818 = vpop.f32.mrb[0].mxu0
      %v819 = vadd.f32 %v631, %v818
      %v820 = vpop.f32.mrb[0].mxu0
      %v821 = vpop.f32.mrb[0].mxu0
      %v822 = vadd.f32 %v636, %v821
      %v823 = vpop.f32.mrb[0].mxu0
      %824 = vdwg.mxu0
      %vm825 = vcmp.ge.f32.partialorder %v722, 0.0
      %vm826 = vcmp.ge.f32.partialorder %v724, 0.0
      %vm827 = vcmp.ge.f32.partialorder %v795, 0.0
      %vm828 = vcmp.ge.f32.partialorder %v726, 0.0
      %vm829 = vcmp.ge.f32.partialorder %v728, 0.0
      %vm830 = vcmp.ge.f32.partialorder %v798, 0.0
      %vm831 = vcmp.ge.f32.partialorder %v732, 0.0
      %vm832 = vcmp.ge.f32.partialorder %v734, 0.0
      %vm833 = vcmp.ge.f32.partialorder %v803, 0.0
      %vm834 = vcmp.ge.f32.partialorder %v736, 0.0
      %vm835 = vcmp.ge.f32.partialorder %v738, 0.0
      %vm836 = vcmp.ge.f32.partialorder %v806, 0.0
      %vm837 = vcmp.ge.f32.partialorder %v742, 0.0
      %vm838 = vcmp.ge.f32.partialorder %v744, 0.0
      %vm839 = vcmp.ge.f32.partialorder %v811, 0.0
      %vm840 = vcmp.ge.f32.partialorder %v746, 0.0
      %vm841 = vcmp.ge.f32.partialorder %v748, 0.0
      %vm842 = vcmp.ge.f32.partialorder %v814, 0.0
      %vm843 = vcmp.ge.f32.partialorder %v752, 0.0
      %vm844 = vcmp.ge.f32.partialorder %v754, 0.0
      %vm845 = vcmp.ge.f32.partialorder %v819, 0.0
      %vm846 = vcmp.ge.f32.partialorder %v756, 0.0
      %vm847 = vcmp.ge.f32.partialorder %v758, 0.0
      %vm848 = vcmp.ge.f32.partialorder %v822, 0.0
      %v849 = vstv %s243
      %v850 = vmul.f32 %v849, %v722
      %v851 = vmul.f32 %v849, %v724
      %v852 = vmul.f32 %v849, %v795
      %v853 = vmul.f32 %v849, %v726
      %v854 = vmul.f32 %v849, %v728
      %v855 = vmul.f32 %v849, %v798
      %v856 = vmul.f32 %v849, %v732
      %v857 = vmul.f32 %v849, %v734
      %v858 = vmul.f32 %v849, %v803
      %v859 = vmul.f32 %v849, %v736
      %v860 = vmul.f32 %v849, %v738
      %v861 = vmul.f32 %v849, %v806
      %v862 = vmul.f32 %v849, %v742
      %v863 = vmul.f32 %v849, %v744
      %v864 = vmul.f32 %v849, %v811
      %v865 = vmul.f32 %v849, %v746
      %v866 = vmul.f32 %v849, %v748
      %v867 = vmul.f32 %v849, %v814
      %v868 = vmul.f32 %v849, %v752
      %v869 = vmul.f32 %v849, %v754
      %v870 = vmul.f32 %v849, %v819
      %v871 = vmul.f32 %v849, %v756
      %v872 = vmul.f32 %v849, %v758
      %v873 = vmul.f32 %v849, %v822
      %v874 = vsel %vm825, %v722, %v850
      %v875 = vsel %vm826, %v724, %v851
      %v876 = vsel %vm827, %v795, %v852
      %v877 = vsel %vm828, %v726, %v853
      %v878 = vsel %vm829, %v728, %v854
      %v879 = vsel %vm830, %v798, %v855
      %v880 = vsel %vm831, %v732, %v856
      %v881 = vsel %vm832, %v734, %v857
      %v882 = vsel %vm833, %v803, %v858
      %v883 = vsel %vm834, %v736, %v859
      %v884 = vsel %vm835, %v738, %v860
      %v885 = vsel %vm836, %v806, %v861
      %v886 = vsel %vm837, %v742, %v862
      %v887 = vsel %vm838, %v744, %v863
      %v888 = vsel %vm839, %v811, %v864
      %v889 = vsel %vm840, %v746, %v865
      %v890 = vsel %vm841, %v748, %v866
      %v891 = vsel %vm842, %v814, %v867
      %v892 = vsel %vm843, %v752, %v868
      %v893 = vsel %vm844, %v754, %v869
      %v894 = vsel %vm845, %v819, %v870
      %v895 = vsel %vm846, %v756, %v871
      %v896 = vsel %vm847, %v758, %v872
      %v897 = vsel %vm848, %v822, %v873
      %v898 = vld [vmem:[%s3 + $0x2] sm:$0x7]
      %v899 = vunpack.c.l.bf16 %v898
      %v901 = vlaneseq
      %v902 = vshrl.u32 %v901, 7
      %v903 = vsub.s32 0, %v902
      %v904 = vrot.slane %v899, %v903
      %v905 = vlaneseq
      %v906 = vshrl.u32 %v905, 7
      %v907 = vsub.s32 2, %v906
      %v908 = vrot.slane %v899, %v907
      %v909 = vlaneseq
      %v910 = vshrl.u32 %v909, 7
      %v911 = vsub.s32 4, %v910
      %v912 = vrot.slane %v899, %v911
      %v916 = vlaneseq
      %v917 = vshrl.u32 %v916, 7
      %v918 = vsub.s32 0, %v917
      %v919 = vrot.slane %v904, %v918
      %v920 = vlaneseq
      %v921 = vshrl.u32 %v920, 7
      %v922 = vsub.s32 0, %v921
      %v923 = vrot.slane %v908, %v922
      %v924 = vlaneseq
      %v925 = vshrl.u32 %v924, 7
      %v926 = vsub.s32 0, %v925
      %v927 = vrot.slane %v912, %v926
      %v928 = vmul.f32 %v874, %v919
      %v929 = vmul.f32 %v875, %v923
      %v930 = vmul.f32 %v876, %v927
      %v931 = vmul.f32 %v877, %v919
      %v932 = vmul.f32 %v878, %v923
      %v933 = vmul.f32 %v879, %v927
      %v934 = vmul.f32 %v880, %v919
      %v935 = vmul.f32 %v881, %v923
      %v936 = vmul.f32 %v882, %v927
      %v937 = vmul.f32 %v883, %v919
      %v938 = vmul.f32 %v884, %v923
      %v939 = vmul.f32 %v885, %v927
      %v940 = vmul.f32 %v886, %v919
      %v941 = vmul.f32 %v887, %v923
      %v942 = vmul.f32 %v888, %v927
      %v943 = vmul.f32 %v889, %v919
      %v944 = vmul.f32 %v890, %v923
      %v945 = vmul.f32 %v891, %v927
      %v946 = vmul.f32 %v892, %v919
      %v947 = vmul.f32 %v893, %v923
      %v948 = vmul.f32 %v894, %v927
      %v949 = vmul.f32 %v895, %v919
      %v950 = vmul.f32 %v896, %v923
      %v951 = vmul.f32 %v897, %v927
      %v952 = vpack.c.bf16 %v931, %v928
      %v953 = vpack.c.bf16 %v932, %v929
      %v954 = vpack.c.bf16 %v933, %v930
      %v955 = vpack.c.bf16 %v937, %v934
      %v956 = vpack.c.bf16 %v938, %v935
      %v957 = vpack.c.bf16 %v939, %v936
      %v958 = vpack.c.bf16 %v943, %v940
      %v959 = vpack.c.bf16 %v944, %v941
      %v960 = vpack.c.bf16 %v945, %v942
      %v961 = vpack.c.bf16 %v949, %v946
      %v962 = vpack.c.bf16 %v950, %v947
      %v963 = vpack.c.bf16 %v951, %v948
      %v976 = vunpack.c.l.b16 %v952
      %v977 = vunpack.c.l.b16 %v953
      %v978 = vunpack.c.l.b16 %v954
      %v979 = vunpack.c.h.b16 %v952
      %v980 = vunpack.c.h.b16 %v953
      %v981 = vunpack.c.h.b16 %v954
      %v982 = vunpack.c.l.b16 %v955
      %v983 = vunpack.c.l.b16 %v956
      %v984 = vunpack.c.l.b16 %v957
      %v985 = vunpack.c.h.b16 %v955
      %v986 = vunpack.c.h.b16 %v956
      %v987 = vunpack.c.h.b16 %v957
      %v988 = vunpack.c.l.b16 %v958
      %v989 = vunpack.c.l.b16 %v959
      %v990 = vunpack.c.l.b16 %v960
      %v991 = vunpack.c.h.b16 %v958
      %v992 = vunpack.c.h.b16 %v959
      %v993 = vunpack.c.h.b16 %v960
      %v994 = vunpack.c.l.b16 %v961
      %v995 = vunpack.c.l.b16 %v962
      %v996 = vunpack.c.l.b16 %v963
      %v997 = vunpack.c.h.b16 %v961
      %v998 = vunpack.c.h.b16 %v962
      %v999 = vunpack.c.h.b16 %v963
      %v1000 = vpack.c.b16 %v977, %v976
      %v1001 = vpack.c.b16 %v978, %v978
      %v1002 = vpack.c.b16 %v980, %v979
      %v1003 = vpack.c.b16 %v981, %v981
      %v1004 = vpack.c.b16 %v983, %v982
      %v1005 = vpack.c.b16 %v984, %v984
      %v1006 = vpack.c.b16 %v986, %v985
      %v1007 = vpack.c.b16 %v987, %v987
      %v1008 = vpack.c.b16 %v989, %v988
      %v1009 = vpack.c.b16 %v990, %v990
      %v1010 = vpack.c.b16 %v992, %v991
      %v1011 = vpack.c.b16 %v993, %v993
      %v1012 = vpack.c.b16 %v995, %v994
      %v1013 = vpack.c.b16 %v996, %v996
      %v1014 = vpack.c.b16 %v998, %v997
      %v1015 = vpack.c.b16 %v999, %v999
      %1032 = vst [vmem:[%s225 + $0x8] sm:$0xff] %v1000
      %1033 = vst [vmem:[%s225 + $0x10] sm:$0xf] %v1001
      %1034 = vst [vmem:[%s225 + $0x24] sm:$0xff] %v1002
      %1035 = vst [vmem:[%s225 + $0x2c] sm:$0xf] %v1003
      %1036 = vst [vmem:[%s225 + $0x40] sm:$0xff] %v1004
      %1037 = vst [vmem:[%s225 + $0x48] sm:$0xf] %v1005
      %1038 = vst [vmem:[%s225 + $0x5c] sm:$0xff] %v1006
      %1039 = vst [vmem:[%s225 + $0x64] sm:$0xf] %v1007
      %1040 = vst [vmem:[%s225 + $0x78] sm:$0xff] %v1008
      %1041 = vst [vmem:[%s225 + $0x80] sm:$0xf] %v1009
      %1042 = vst [vmem:[%s225 + $0x94] sm:$0xff] %v1010
      %1043 = vst [vmem:[%s225 + $0x9c] sm:$0xf] %v1011
      %1044 = vst [vmem:[%s225 + $0xb0] sm:$0xff] %v1012
      %1045 = vst [vmem:[%s225 + $0xb8] sm:$0xf] %v1013
      %1046 = vst [vmem:[%s225 + $0xcc] sm:$0xff] %v1014
      %1047 = vst [vmem:[%s225 + $0xd4] sm:$0xf] %v1015
      %1048 = vst [vmem:[%s225] sm:$0xff] 0
      %1049 = vst [vmem:[%s225 + $0x1c] sm:$0xff] 0
      %1050 = vst [vmem:[%s225 + $0x38] sm:$0xff] 0
      %1051 = vst [vmem:[%s225 + $0x54] sm:$0xff] 0
      %1052 = vst [vmem:[%s225 + $0x70] sm:$0xff] 0
      %1053 = vst [vmem:[%s225 + $0x8c] sm:$0xff] 0
      %1054 = vst [vmem:[%s225 + $0xa8] sm:$0xff] 0
      %1055 = vst [vmem:[%s225 + $0xc4] sm:$0xff] 0
      %vm1056 = vcmask 1043456
      %vm1057 = vcmask 556036
      %vm1058 = vmor %vm1057, %vm1056
      %1059 = vst.msk [vmem:[%s225 + $0x14] sm:$0xff] %vm1058, 0
      %1060 = vst.msk [vmem:[%s225 + $0x30] sm:$0xff] %vm1058, 0
      %1061 = vst.msk [vmem:[%s225 + $0x4c] sm:$0xff] %vm1058, 0
      %1062 = vst.msk [vmem:[%s225 + $0x68] sm:$0xff] %vm1058, 0
      %1063 = vst.msk [vmem:[%s225 + $0x84] sm:$0xff] %vm1058, 0
      %1064 = vst.msk [vmem:[%s225 + $0xa0] sm:$0xff] %vm1058, 0
      %1065 = vst.msk [vmem:[%s225 + $0xbc] sm:$0xff] %vm1058, 0
      %1066 = vst.msk [vmem:[%s225 + $0xd8] sm:$0xff] %vm1058, 0
      %p1067 = scmp.lt.s32.totalorder %s17, 1
      %s1068 = scalar_select %p1067, %s17, 1
      %s1069 = smul.addr %s1068, 56
      %s1070 = smul.addr %s1069, 4
      %s1071 = scalar_lea.vmem %s5, %s1070
      // Predicated region
      $region41: #{srresnet_forward.18} parent=39 // pred_check
        %p1072 = pneg %p145
      $region42: #{srresnet_forward.18} parent=39 // pred_check_branch
        %1074 = sbr.rel (%p1072) target = $region44
      $region43: #{srresnet_forward.18} parent=39 // pred_region
        _
      $region44: #{srresnet_forward.18} parent=39 // pred_fallthru
        _
    $region40: #{srresnet_forward.18} parent=5 // pred_fallthru
      _
    %p1075 = scmp.le.s32.totalorder 2, %s12
    // Predicated region
    $region45: #{srresnet_forward.18} parent=5 // pred_check
      %p1076 = pneg %p1075
    $region46: #{srresnet_forward.18} parent=5 // pred_check_branch
      %1078 = sbr.rel (%p1076) target = $region48
    $region47: #{srresnet_forward.18} parent=5 // pred_region
      %s1079 = ssub.s32 %s12, 2
      // Predicated region
      $region49: #{srresnet_forward.18} parent=47 // pred_check
        %p1080 = pneg %p151
      $region50: #{srresnet_forward.18} parent=47 // pred_check_branch
        %1082 = sbr.rel (%p1080) target = $region52
      $region51: #{srresnet_forward.18} parent=47 // pred_region
        %p1083 = scmp.lt.s32.totalorder %s18, 1
        %s1084 = scalar_select %p1083, %s18, 1
        %s1085 = smul.addr %s1084, 56
        %s1086 = smul.addr %s1085, 4
        %s1087 = scalar_lea.vmem %s5, %s1086
      $region52: #{srresnet_forward.18} parent=47 // pred_fallthru
        _
    $region48: #{srresnet_forward.18} parent=5 // pred_fallthru
      _
  $region6: #{srresnet_forward.18} parent=0 // loop_footer
    %s16 = sadd.s32 1, %s12
  $region7: #{srresnet_forward.18} parent=0 // loop_footer_branch
    %11 = sbr.rel target = $region3
  $region8: #{srresnet_forward.18} parent=0 // loop_exit
    _

// kernel: srresnet_forward.19
$region0: #{srresnet_forward.19}
  #allocation0 [shape = 'u32[]', space=smem, size = 0x4, offset = 0x4, fixed_abs, tag = 'smem constant byte address 0x4 - core index']
  #allocation1 [shape = 'u32[144,128]{1,0:T(1,128)}', space=vmem, size = 0x12000, scoped, tag = 'internal scratch']
  #allocation2 [shape = 'bf16[144,1280]{1,0:T(16,128)(2,1)}', space=vmem, size = 0x5a000, scoped, tag = 'scratch operand']
  %s0 = inlined_call_operand.vmem [shape: bf16[2,16,1668], index: 0, kind: input, shape index: {}]
  %s1 = inlined_call_operand.vmem [shape: bf16[8,144], index: 1, kind: input, shape index: {}]
  %s2 = inlined_call_operand.vmem [shape: f32[8,1], index: 2, kind: input, shape index: {}]
  %s3 = inlined_call_operand.vmem [shape: bf16[1,1668], index: 3, kind: input, shape index: {}]
  %s4 = inlined_call_operand.vmem [shape: bf16[2,8,1668], index: 4, kind: output, shape index: {}]
  %s5 = sld [smem:[#allocation0]]
  $region49: #{srresnet_forward.19} parent=0
    _
  %s7 = ssub.s32 1, %s5
  %s8 = scalar_select 0, %s7, %s5
  loop: start=0, step=1, limit=4
  $region2: #{srresnet_forward.19} parent=0 // loop_pre_header
    _
  $region3: #{srresnet_forward.19} parent=0 // loop_header
    %s10 = sphi 0, %s14
    %p11 = scmp.ge.s32.totalorder %s10, 4
    %s20 = sphi 0, %s22
    %s23 = sphi 0, %s20
    %s24 = sphi 0, %s23
    %s40 = sphi 0, %s24
    %s44 = sphi 0, %s44
    %s46 = sphi 0, %s44
    %s47 = sphi 0, %s46
    %s61 = sphi 0, %s47
    %s65 = sphi 0, %s65
    %s67 = sphi 0, %s65
    %s68 = sphi 0, %s67
    %s82 = sphi 0, %s68
    %s86 = sphi 0, %s86
    %s88 = sphi 0, %s86
    %s89 = sphi 0, %s88
    %s103 = sphi 0, %s89
    %s109 = sphi 0, %s111
    %s112 = sphi 0, %s109
    %s113 = sphi 0, %s112
    %s129 = sphi 0, %s113
  $region4: #{srresnet_forward.19} parent=0 // loop_header_branch
    %13 = sbr.rel (%p11) target = $region8
  $region5: #{srresnet_forward.19} parent=0 // loop_body
    %s15 = ssub.s32 %s10, 1
    %s16 = ssub.s32 %s10, 2
    %s17 = sadd.s32 %s10, 1
    %s18 = ssub.s32 %s10, %s17
    %p19 = scmp.eq.s32.totalorder %s18, 0
    %s21 = sadd.s32 %s20, 1
    %s22 = scalar_select %p19, %s20, %s21
    %p25 = pneg %p19
    %p26 = scmp.eq.s32.totalorder %s10, 1
    %p27 = por %p25, %p26
    %p28 = scmp.ne.s32.totalorder %s20, %s23
    %p29 = scmp.eq.s32.totalorder %s10, 0
    %p30 = por %p28, %p29
    %p31 = scmp.ne.s32.totalorder %s20, %s23
    %p32 = scmp.eq.s32.totalorder %s15, 1
    %p33 = por %p31, %p32
    %p34 = scmp.ne.s32.totalorder %s23, %s24
    %p35 = scmp.eq.s32.totalorder %s15, 0
    %p36 = por %p34, %p35
    %p37 = scmp.ne.s32.totalorder %s23, %s24
    %p38 = scmp.eq.s32.totalorder %s16, 1
    %p39 = por %p37, %p38
    %p41 = scmp.ne.s32.totalorder %s24, %s40
    %p42 = scmp.eq.s32.totalorder %s16, 0
    %p43 = por %p41, %p42
    %s45 = sadd.s32 %s44, 1
    %p48 = scmp.eq.s32.totalorder %s10, 1
    %p49 = scmp.ne.s32.totalorder %s44, %s46
    %p50 = scmp.eq.s32.totalorder %s10, 0
    %p51 = por %p49, %p50
    %p52 = scmp.ne.s32.totalorder %s44, %s46
    %p53 = scmp.eq.s32.totalorder %s15, 1
    %p54 = por %p52, %p53
    %p55 = scmp.ne.s32.totalorder %s46, %s47
    %p56 = scmp.eq.s32.totalorder %s15, 0
    %p57 = por %p55, %p56
    %p58 = scmp.ne.s32.totalorder %s46, %s47
    %p59 = scmp.eq.s32.totalorder %s16, 1
    %p60 = por %p58, %p59
    %p62 = scmp.ne.s32.totalorder %s47, %s61
    %p63 = scmp.eq.s32.totalorder %s16, 0
    %p64 = por %p62, %p63
    %s66 = sadd.s32 %s65, 1
    %p69 = scmp.eq.s32.totalorder %s10, 1
    %p70 = scmp.ne.s32.totalorder %s65, %s67
    %p71 = scmp.eq.s32.totalorder %s10, 0
    %p72 = por %p70, %p71
    %p73 = scmp.ne.s32.totalorder %s65, %s67
    %p74 = scmp.eq.s32.totalorder %s15, 1
    %p75 = por %p73, %p74
    %p76 = scmp.ne.s32.totalorder %s67, %s68
    %p77 = scmp.eq.s32.totalorder %s15, 0
    %p78 = por %p76, %p77
    %p79 = scmp.ne.s32.totalorder %s67, %s68
    %p80 = scmp.eq.s32.totalorder %s16, 1
    %p81 = por %p79, %p80
    %p83 = scmp.ne.s32.totalorder %s68, %s82
    %p84 = scmp.eq.s32.totalorder %s16, 0
    %p85 = por %p83, %p84
    %s87 = sadd.s32 %s86, 1
    %p90 = scmp.eq.s32.totalorder %s10, 1
    %p91 = scmp.ne.s32.totalorder %s86, %s88
    %p92 = scmp.eq.s32.totalorder %s10, 0
    %p93 = por %p91, %p92
    %p94 = scmp.ne.s32.totalorder %s86, %s88
    %p95 = scmp.eq.s32.totalorder %s15, 1
    %p96 = por %p94, %p95
    %p97 = scmp.ne.s32.totalorder %s88, %s89
    %p98 = scmp.eq.s32.totalorder %s15, 0
    %p99 = por %p97, %p98
    %p100 = scmp.ne.s32.totalorder %s88, %s89
    %p101 = scmp.eq.s32.totalorder %s16, 1
    %p102 = por %p100, %p101
    %p104 = scmp.ne.s32.totalorder %s89, %s103
    %p105 = scmp.eq.s32.totalorder %s16, 0
    %p106 = por %p104, %p105
    %s107 = ssub.s32 %s10, %s17
    %p108 = scmp.eq.s32.totalorder %s107, 0
    %s110 = sadd.s32 %s109, 1
    %s111 = scalar_select %p108, %s109, %s110
    %p114 = pneg %p108
    %p115 = scmp.eq.s32.totalorder %s10, 1
    %p116 = por %p114, %p115
    %p117 = scmp.ne.s32.totalorder %s109, %s112
    %p118 = scmp.eq.s32.totalorder %s10, 0
    %p119 = por %p117, %p118
    %p120 = scmp.ne.s32.totalorder %s109, %s112
    %p121 = scmp.eq.s32.totalorder %s15, 1
    %p122 = por %p120, %p121
    %p123 = scmp.ne.s32.totalorder %s112, %s113
    %p124 = scmp.eq.s32.totalorder %s15, 0
    %p125 = por %p123, %p124
    %p126 = scmp.ne.s32.totalorder %s112, %s113
    %p127 = scmp.eq.s32.totalorder %s16, 1
    %p128 = por %p126, %p127
    %p130 = scmp.ne.s32.totalorder %s113, %s129
    %p131 = scmp.eq.s32.totalorder %s16, 0
    %p132 = por %p130, %p131
    %p133 = scmp.le.s32.totalorder 1, %s10
    %p134 = scmp.lt.s32.totalorder %s10, 3
    %p135 = pnand %p133, %p134
    %p136 = pneg %p135
    // Predicated region
    $region9: #{srresnet_forward.19} parent=5 // pred_check
      _
    $region10: #{srresnet_forward.19} parent=5 // pred_check_branch
      %138 = sbr.rel (%p135) target = $region12
    $region11: #{srresnet_forward.19} parent=5 // pred_region
      %s139 = ssub.s32 %s10, 1
      // Predicated region
      $region13: #{srresnet_forward.19} parent=11 // pred_check
        %p140 = pneg %p57
      $region14: #{srresnet_forward.19} parent=11 // pred_check_branch
        %142 = sbr.rel (%p140) target = $region16
      $region15: #{srresnet_forward.19} parent=11 // pred_region
        _
      $region16: #{srresnet_forward.19} parent=11 // pred_fallthru
        _
      // Predicated region
      $region17: #{srresnet_forward.19} parent=11 // pred_check
        %p143 = pneg %p78
      $region18: #{srresnet_forward.19} parent=11 // pred_check_branch
        %145 = sbr.rel (%p143) target = $region20
      $region19: #{srresnet_forward.19} parent=11 // pred_region
        _
      $region20: #{srresnet_forward.19} parent=11 // pred_fallthru
        _
      // Predicated region
      $region21: #{srresnet_forward.19} parent=11 // pred_check
        %p146 = pneg %p99
      $region22: #{srresnet_forward.19} parent=11 // pred_check_branch
        %148 = sbr.rel (%p146) target = $region24
      $region23: #{srresnet_forward.19} parent=11 // pred_region
        _
      $region24: #{srresnet_forward.19} parent=11 // pred_fallthru
        _
    $region12: #{srresnet_forward.19} parent=5 // pred_fallthru
      _
    %p149 = scmp.lt.s32.totalorder %s10, 2
    // Predicated region
    $region25: #{srresnet_forward.19} parent=5 // pred_check
      %p150 = pneg %p149
    $region26: #{srresnet_forward.19} parent=5 // pred_check_branch
      %152 = sbr.rel (%p150) target = $region28
    $region27: #{srresnet_forward.19} parent=5 // pred_region
      // Predicated region
      $region29: #{srresnet_forward.19} parent=27 // pred_check
        %p153 = pneg %p30
      $region30: #{srresnet_forward.19} parent=27 // pred_check_branch
        %155 = sbr.rel (%p153) target = $region32
      $region31: #{srresnet_forward.19} parent=27 // pred_region
        %p156 = scmp.lt.s32.totalorder %s10, 1
        %s157 = scalar_select %p156, %s10, 1
        %s158 = smul.addr %s157, 28
        %s159 = smul.addr %s158, 4
        %s160 = scalar_lea.vmem %s0, %s159
      $region32: #{srresnet_forward.19} parent=27 // pred_fallthru
        _
    $region28: #{srresnet_forward.19} parent=5 // pred_fallthru
      _
    %p161 = scmp.le.s32.totalorder 1, %s10
    %p162 = scmp.lt.s32.totalorder %s10, 3
    %p163 = pnand %p161, %p162
    %p164 = pneg %p163
    // Predicated region
    $region33: #{srresnet_forward.19} parent=5 // pred_check
      _
    $region34: #{srresnet_forward.19} parent=5 // pred_check_branch
      %166 = sbr.rel (%p163) target = $region36
    $region35: #{srresnet_forward.19} parent=5 // pred_region
      %s167 = ssub.s32 %s10, 1
      %p168 = scmp.lt.s32.totalorder %s15, 1
      %s169 = scalar_select %p168, %s15, 1
      %s170 = smul.addr %s169, 28
      %s171 = smul.addr %s170, 4
      %s172 = scalar_lea.vmem %s0, %s171
      %p173 = pneg %p36
      %p174 = pneg %p33
      %p175 = pneg %p57
      %p176 = pneg %p54
      %p177 = pneg %p78
      %p178 = pneg %p75
      %p179 = pneg %p99
      %p180 = pneg %p96
      %p181 = pneg %p125
      %p182 = pneg %p122
      %p183 = scmp.lt.s32.totalorder %s15, 1
      %s184 = scalar_select %p183, %s15, 1
      %s185 = smul.addr %s184, 14
      %s186 = smul.addr %s185, 4
      %s187 = scalar_lea.vmem %s4, %s186
      %p188 = scmp.lt.s32.totalorder %s15, 1
      %s189 = scalar_select %p188, %s15, 1
      %s190 = smul.addr %s189, 28
      %s191 = smul.addr %s190, 4
      %s192 = scalar_lea.vmem %s0, %s191
      %p193 = scmp.lt.s32.totalorder %s15, 1
      %s194 = scalar_select %p193, %s15, 1
      %s195 = smul.addr %s194, 14
      %s196 = smul.addr %s195, 4
      %s197 = scalar_lea.vmem %s4, %s196
      %v199 = vld [vmem:[%s1] sm:$0xff]
      %v200 = vld [vmem:[%s2] sm:$0xff]
      %v201 = vld [vmem:[%s192 + $0x4] sm:$0xff]
      %v202 = vld [vmem:[%s192 + $0xc] sm:$0xff]
      %v203 = vld [vmem:[%s192 + $0x14] sm:$0xff]
      %v204 = vld [vmem:[%s192 + $0x1c] sm:$0xff]
      %v205 = vld [vmem:[%s192 + $0x24] sm:$0xff]
      %v206 = vld [vmem:[%s192 + $0x2c] sm:$0xf]
      %v207 = vld [vmem:[%s192 + $0x3c] sm:$0xff]
      %v208 = vld [vmem:[%s192 + $0x44] sm:$0xff]
      %v209 = vld [vmem:[%s192 + $0x4c] sm:$0xff]
      %v210 = vld [vmem:[%s192 + $0x54] sm:$0xff]
      %v211 = vld [vmem:[%s192 + $0x5c] sm:$0xff]
      %v212 = vld [vmem:[%s192 + $0x64] sm:$0xf]
      %v225 = vunpack.c.l.b16 %v201
      %v226 = vunpack.c.h.b16 %v201
      %v227 = vunpack.c.l.b16 %v202
      %v228 = vunpack.c.h.b16 %v202
      %v229 = vunpack.c.l.b16 %v203
      %v230 = vunpack.c.h.b16 %v203
      %v231 = vunpack.c.l.b16 %v204
      %v232 = vunpack.c.h.b16 %v204
      %v233 = vunpack.c.l.b16 %v205
      %v234 = vunpack.c.h.b16 %v205
      %v235 = vunpack.c.l.b16 %v206
      %v236 = vunpack.c.l.b16 %v207
      %v237 = vunpack.c.h.b16 %v207
      %v238 = vunpack.c.l.b16 %v208
      %v239 = vunpack.c.h.b16 %v208
      %v240 = vunpack.c.l.b16 %v209
      %v241 = vunpack.c.h.b16 %v209
      %v242 = vunpack.c.l.b16 %v210
      %v243 = vunpack.c.h.b16 %v210
      %v244 = vunpack.c.l.b16 %v211
      %v245 = vunpack.c.h.b16 %v211
      %v246 = vunpack.c.l.b16 %v212
      %v247 = vpack.c.b16 %v236, %v225
      %v248 = vpack.c.b16 %v237, %v226
      %v249 = vpack.c.b16 %v238, %v227
      %v250 = vpack.c.b16 %v239, %v228
      %v251 = vpack.c.b16 %v240, %v229
      %v252 = vpack.c.b16 %v241, %v230
      %v253 = vpack.c.b16 %v242, %v231
      %v254 = vpack.c.b16 %v243, %v232
      %v255 = vpack.c.b16 %v244, %v233
      %v256 = vpack.c.b16 %v245, %v234
      %v257 = vpack.c.b16 %v246, %v235
      %258 = vrot.lane.b32.xlu0 %v247, 35
      %v259 = vpop.permute.xlu0 %258
      %260 = vrot.lane.b32.xlu0 %v248, 35
      %v261 = vpop.permute.xlu0 %260
      %262 = vrot.lane.b32.xlu0 %v249, 35
      %v263 = vpop.permute.xlu0 %262
      %264 = vrot.lane.b32.xlu0 %v250, 35
      %v265 = vpop.permute.xlu0 %264
      %266 = vrot.lane.b32.xlu0 %v251, 35
      %v267 = vpop.permute.xlu0 %266
      %268 = vrot.lane.b32.xlu0 %v252, 35
      %v269 = vpop.permute.xlu0 %268
      %270 = vrot.lane.b32.xlu0 %v253, 35
      %v271 = vpop.permute.xlu0 %270
      %272 = vrot.lane.b32.xlu0 %v254, 35
      %v273 = vpop.permute.xlu0 %272
      %274 = vrot.lane.b32.xlu0 %v255, 35
      %v275 = vpop.permute.xlu0 %274
      %276 = vrot.lane.b32.xlu0 %v256, 35
      %v277 = vpop.permute.xlu0 %276
      %278 = vrot.lane.b32.xlu0 %v257, 35
      %v279 = vpop.permute.xlu0 %278
      %vm280 = vcmask 285696
      %v281 = vsel %vm280, %v259, %v261
      %v282 = vsel %vm280, %v261, %v263
      %v283 = vsel %vm280, %v263, %v265
      %v284 = vsel %vm280, %v265, %v267
      %v285 = vsel %vm280, %v267, %v269
      %v286 = vsel %vm280, %v269, %v271
      %v287 = vsel %vm280, %v271, %v273
      %v288 = vsel %vm280, %v273, %v275
      %v289 = vsel %vm280, %v275, %v277
      %v290 = vsel %vm280, %v277, %v279
      %301 = vst [vmem:[#allocation2] sm:$0xff] %v281
      %302 = vst [vmem:[#allocation2 + $0x8] sm:$0xff] %v282
      %303 = vst [vmem:[#allocation2 + $0x10] sm:$0xff] %v283
      %304 = vst [vmem:[#allocation2 + $0x18] sm:$0xff] %v284
      %305 = vst [vmem:[#allocation2 + $0x20] sm:$0xff] %v285
      %306 = vst [vmem:[#allocation2 + $0x28] sm:$0xff] %v286
      %307 = vst [vmem:[#allocation2 + $0x30] sm:$0xff] %v287
      %308 = vst [vmem:[#allocation2 + $0x38] sm:$0xff] %v288
      %309 = vst [vmem:[#allocation2 + $0x40] sm:$0xff] %v289
      %310 = vst [vmem:[#allocation2 + $0x48] sm:$0xff] %v290
      %v311 = vld [vmem:[%s192 + $0x4] sm:$0xff]
      %v312 = vld [vmem:[%s192 + $0xc] sm:$0xff]
      %v313 = vld [vmem:[%s192 + $0x14] sm:$0xff]
      %v314 = vld [vmem:[%s192 + $0x1c] sm:$0xff]
      %v315 = vld [vmem:[%s192 + $0x24] sm:$0xff]
      %v316 = vld [vmem:[%s192 + $0x2c] sm:$0xf]
      %v317 = vld [vmem:[%s192 + $0x3c] sm:$0xff]
      %v318 = vld [vmem:[%s192 + $0x44] sm:$0xff]
      %v319 = vld [vmem:[%s192 + $0x4c] sm:$0xff]
      %v320 = vld [vmem:[%s192 + $0x54] sm:$0xff]
      %v321 = vld [vmem:[%s192 + $0x5c] sm:$0xff]
      %v322 = vld [vmem:[%s192 + $0x64] sm:$0xf]
      %v335 = vunpack.c.l.b16 %v311
      %v336 = vunpack.c.h.b16 %v311
      %v337 = vunpack.c.l.b16 %v312
      %v338 = vunpack.c.h.b16 %v312
      %v339 = vunpack.c.l.b16 %v313
      %v340 = vunpack.c.h.b16 %v313
      %v341 = vunpack.c.l.b16 %v314
      %v342 = vunpack.c.h.b16 %v314
      %v343 = vunpack.c.l.b16 %v315
      %v344 = vunpack.c.h.b16 %v315
      %v345 = vunpack.c.l.b16 %v316
      %v346 = vunpack.c.l.b16 %v317
      %v347 = vunpack.c.h.b16 %v317
      %v348 = vunpack.c.l.b16 %v318
      %v349 = vunpack.c.h.b16 %v318
      %v350 = vunpack.c.l.b16 %v319
      %v351 = vunpack.c.h.b16 %v319
      %v352 = vunpack.c.l.b16 %v320
      %v353 = vunpack.c.h.b16 %v320
      %v354 = vunpack.c.l.b16 %v321
      %v355 = vunpack.c.h.b16 %v321
      %v356 = vunpack.c.l.b16 %v322
      %v357 = vpack.c.b16 %v346, %v335
      %v358 = vpack.c.b16 %v347, %v336
      %v359 = vpack.c.b16 %v348, %v337
      %v360 = vpack.c.b16 %v349, %v338
      %v361 = vpack.c.b16 %v350, %v339
      %v362 = vpack.c.b16 %v351, %v340
      %v363 = vpack.c.b16 %v352, %v341
      %v364 = vpack.c.b16 %v353, %v342
      %v365 = vpack.c.b16 %v354, %v343
      %v366 = vpack.c.b16 %v355, %v344
      %v367 = vpack.c.b16 %v356, %v345
      %368 = vrot.lane.b32.xlu0 %v357, 34
      %v369 = vpop.permute.xlu0 %368
      %370 = vrot.lane.b32.xlu0 %v358, 34
      %v371 = vpop.permute.xlu0 %370
      %372 = vrot.lane.b32.xlu0 %v359, 34
      %v373 = vpop.permute.xlu0 %372
      %374 = vrot.lane.b32.xlu0 %v360, 34
      %v375 = vpop.permute.xlu0 %374
      %376 = vrot.lane.b32.xlu0 %v361, 34
      %v377 = vpop.permute.xlu0 %376
      %378 = vrot.lane.b32.xlu0 %v362, 34
      %v379 = vpop.permute.xlu0 %378
      %380 = vrot.lane.b32.xlu0 %v363, 34
      %v381 = vpop.permute.xlu0 %380
      %382 = vrot.lane.b32.xlu0 %v364, 34
      %v383 = vpop.permute.xlu0 %382
      %384 = vrot.lane.b32.xlu0 %v365, 34
      %v385 = vpop.permute.xlu0 %384
      %386 = vrot.lane.b32.xlu0 %v366, 34
      %v387 = vpop.permute.xlu0 %386
      %388 = vrot.lane.b32.xlu0 %v367, 34
      %v389 = vpop.permute.xlu0 %388
      %vm390 = vcmask 277504
      %v391 = vsel %vm390, %v369, %v371
      %v392 = vsel %vm390, %v371, %v373
      %v393 = vsel %vm390, %v373, %v375
      %v394 = vsel %vm390, %v375, %v377
      %v395 = vsel %vm390, %v377, %v379
      %v396 = vsel %vm390, %v379, %v381
      %v397 = vsel %vm390, %v381, %v383
      %v398 = vsel %vm390, %v383, %v385
      %v399 = vsel %vm390, %v385, %v387
      %v400 = vsel %vm390, %v387, %v389
      %411 = vst [vmem:[#allocation2 + $0x50] sm:$0xff] %v391
      %412 = vst [vmem:[#allocation2 + $0x58] sm:$0xff] %v392
      %413 = vst [vmem:[#allocation2 + $0x60] sm:$0xff] %v393
      %414 = vst [vmem:[#allocation2 + $0x68] sm:$0xff] %v394
      %415 = vst [vmem:[#allocation2 + $0x70] sm:$0xff] %v395
      %416 = vst [vmem:[#allocation2 + $0x78] sm:$0xff] %v396
      %417 = vst [vmem:[#allocation2 + $0x80] sm:$0xff] %v397
      %418 = vst [vmem:[#allocation2 + $0x88] sm:$0xff] %v398
      %419 = vst [vmem:[#allocation2 + $0x90] sm:$0xff] %v399
      %420 = vst [vmem:[#allocation2 + $0x98] sm:$0xff] %v400
      %v421 = vld [vmem:[%s192 + $0x4] sm:$0xff]
      %v422 = vld [vmem:[%s192 + $0xc] sm:$0xff]
      %v423 = vld [vmem:[%s192 + $0x14] sm:$0xff]
      %v424 = vld [vmem:[%s192 + $0x1c] sm:$0xff]
      %v425 = vld [vmem:[%s192 + $0x24] sm:$0xff]
      %v426 = vld [vmem:[%s192 + $0x2c] sm:$0xf]
      %v427 = vld [vmem:[%s192 + $0x3c] sm:$0xff]
      %v428 = vld [vmem:[%s192 + $0x44] sm:$0xff]
      %v429 = vld [vmem:[%s192 + $0x4c] sm:$0xff]
      %v430 = vld [vmem:[%s192 + $0x54] sm:$0xff]
      %v431 = vld [vmem:[%s192 + $0x5c] sm:$0xff]
      %v432 = vld [vmem:[%s192 + $0x64] sm:$0xf]
      %v445 = vunpack.c.l.b16 %v421
      %v446 = vunpack.c.h.b16 %v421
      %v447 = vunpack.c.l.b16 %v422
      %v448 = vunpack.c.h.b16 %v422
      %v449 = vunpack.c.l.b16 %v423
      %v450 = vunpack.c.h.b16 %v423
      %v451 = vunpack.c.l.b16 %v424
      %v452 = vunpack.c.h.b16 %v424
      %v453 = vunpack.c.l.b16 %v425
      %v454 = vunpack.c.h.b16 %v425
      %v455 = vunpack.c.l.b16 %v426
      %v456 = vunpack.c.l.b16 %v427
      %v457 = vunpack.c.h.b16 %v427
      %v458 = vunpack.c.l.b16 %v428
      %v459 = vunpack.c.h.b16 %v428
      %v460 = vunpack.c.l.b16 %v429
      %v461 = vunpack.c.h.b16 %v429
      %v462 = vunpack.c.l.b16 %v430
      %v463 = vunpack.c.h.b16 %v430
      %v464 = vunpack.c.l.b16 %v431
      %v465 = vunpack.c.h.b16 %v431
      %v466 = vunpack.c.l.b16 %v432
      %v467 = vpack.c.b16 %v456, %v445
      %v468 = vpack.c.b16 %v457, %v446
      %v469 = vpack.c.b16 %v458, %v447
      %v470 = vpack.c.b16 %v459, %v448
      %v471 = vpack.c.b16 %v460, %v449
      %v472 = vpack.c.b16 %v461, %v450
      %v473 = vpack.c.b16 %v462, %v451
      %v474 = vpack.c.b16 %v463, %v452
      %v475 = vpack.c.b16 %v464, %v453
      %v476 = vpack.c.b16 %v465, %v454
      %v477 = vpack.c.b16 %v466, %v455
      %478 = vrot.lane.b32.xlu0 %v467, 33
      %v479 = vpop.permute.xlu0 %478
      %480 = vrot.lane.b32.xlu0 %v468, 33
      %v481 = vpop.permute.xlu0 %480
      %482 = vrot.lane.b32.xlu0 %v469, 33
      %v483 = vpop.permute.xlu0 %482
      %484 = vrot.lane.b32.xlu0 %v470, 33
      %v485 = vpop.permute.xlu0 %484
      %486 = vrot.lane.b32.xlu0 %v471, 33
      %v487 = vpop.permute.xlu0 %486
      %488 = vrot.lane.b32.xlu0 %v472, 33
      %v489 = vpop.permute.xlu0 %488
      %490 = vrot.lane.b32.xlu0 %v473, 33
      %v491 = vpop.permute.xlu0 %490
      %492 = vrot.lane.b32.xlu0 %v474, 33
      %v493 = vpop.permute.xlu0 %492
      %494 = vrot.lane.b32.xlu0 %v475, 33
      %v495 = vpop.permute.xlu0 %494
      %496 = vrot.lane.b32.xlu0 %v476, 33
      %v497 = vpop.permute.xlu0 %496
      %498 = vrot.lane.b32.xlu0 %v477, 33
      %v499 = vpop.permute.xlu0 %498
      %vm500 = vcmask 269312
      %v501 = vsel %vm500, %v479, %v481
      %v502 = vsel %vm500, %v481, %v483
      %v503 = vsel %vm500, %v483, %v485
      %v504 = vsel %vm500, %v485, %v487
      %v505 = vsel %vm500, %v487, %v489
      %v506 = vsel %vm500, %v489, %v491
      %v507 = vsel %vm500, %v491, %v493
      %v508 = vsel %vm500, %v493, %v495
      %v509 = vsel %vm500, %v495, %v497
      %v510 = vsel %vm500, %v497, %v499
      %521 = vst [vmem:[#allocation2 + $0xa0] sm:$0xff] %v501
      %522 = vst [vmem:[#allocation2 + $0xa8] sm:$0xff] %v502
      %523 = vst [vmem:[#allocation2 + $0xb0] sm:$0xff] %v503
      %524 = vst [vmem:[#allocation2 + $0xb8] sm:$0xff] %v504
      %525 = vst [vmem:[#allocation2 + $0xc0] sm:$0xff] %v505
      %526 = vst [vmem:[#allocation2 + $0xc8] sm:$0xff] %v506
      %527 = vst [vmem:[#allocation2 + $0xd0] sm:$0xff] %v507
      %528 = vst [vmem:[#allocation2 + $0xd8] sm:$0xff] %v508
      %529 = vst [vmem:[#allocation2 + $0xe0] sm:$0xff] %v509
      %530 = vst [vmem:[#allocation2 + $0xe8] sm:$0xff] %v510
      %v531 = vld [vmem:[%s192 + $0x4] sm:$0xff]
      %v532 = vld [vmem:[%s192 + $0xc] sm:$0xff]
      %v533 = vld [vmem:[%s192 + $0x14] sm:$0xff]
      %v534 = vld [vmem:[%s192 + $0x1c] sm:$0xff]
      %v535 = vld [vmem:[%s192 + $0x24] sm:$0xff]
      %v536 = vld [vmem:[%s192 + $0x2c] sm:$0xf]
      %v537 = vld [vmem:[%s192 + $0x3c] sm:$0xff]
      %v538 = vld [vmem:[%s192 + $0x44] sm:$0xff]
      %v539 = vld [vmem:[%s192 + $0x4c] sm:$0xff]
      %v540 = vld [vmem:[%s192 + $0x54] sm:$0xff]
      %v541 = vld [vmem:[%s192 + $0x5c] sm:$0xff]
      %v542 = vld [vmem:[%s192 + $0x64] sm:$0xf]
      %v555 = vunpack.c.l.b16 %v531
      %v556 = vunpack.c.h.b16 %v531
      %v557 = vunpack.c.l.b16 %v532
      %v558 = vunpack.c.h.b16 %v532
      %v559 = vunpack.c.l.b16 %v533
      %v560 = vunpack.c.h.b16 %v533
      %v561 = vunpack.c.l.b16 %v534
      %v562 = vunpack.c.h.b16 %v534
      %v563 = vunpack.c.l.b16 %v535
      %v564 = vunpack.c.h.b16 %v535
      %v565 = vunpack.c.l.b16 %v536
      %v566 = vunpack.c.l.b16 %v537
      %v567 = vunpack.c.h.b16 %v537
      %v568 = vunpack.c.l.b16 %v538
      %v569 = vunpack.c.h.b16 %v538
      %v570 = vunpack.c.l.b16 %v539
      %v571 = vunpack.c.h.b16 %v539
      %v572 = vunpack.c.l.b16 %v540
      %v573 = vunpack.c.h.b16 %v540
      %v574 = vunpack.c.l.b16 %v541
      %v575 = vunpack.c.h.b16 %v541
      %v576 = vunpack.c.l.b16 %v542
      %v577 = vpack.c.b16 %v566, %v555
      %v578 = vpack.c.b16 %v567, %v556
      %v579 = vpack.c.b16 %v568, %v557
      %v580 = vpack.c.b16 %v569, %v558
      %v581 = vpack.c.b16 %v570, %v559
      %v582 = vpack.c.b16 %v571, %v560
      %v583 = vpack.c.b16 %v572, %v561
      %v584 = vpack.c.b16 %v573, %v562
      %v585 = vpack.c.b16 %v574, %v563
      %v586 = vpack.c.b16 %v575, %v564
      %v587 = vpack.c.b16 %v576, %v565
      %588 = vrot.lane.b32.xlu0 %v577, 1
      %v589 = vpop.permute.xlu0 %588
      %590 = vrot.lane.b32.xlu0 %v578, 1
      %v591 = vpop.permute.xlu0 %590
      %592 = vrot.lane.b32.xlu0 %v579, 1
      %v593 = vpop.permute.xlu0 %592
      %594 = vrot.lane.b32.xlu0 %v580, 1
      %v595 = vpop.permute.xlu0 %594
      %596 = vrot.lane.b32.xlu0 %v581, 1
      %v597 = vpop.permute.xlu0 %596
      %598 = vrot.lane.b32.xlu0 %v582, 1
      %v599 = vpop.permute.xlu0 %598
      %600 = vrot.lane.b32.xlu0 %v583, 1
      %v601 = vpop.permute.xlu0 %600
      %602 = vrot.lane.b32.xlu0 %v584, 1
      %v603 = vpop.permute.xlu0 %602
      %604 = vrot.lane.b32.xlu0 %v585, 1
      %v605 = vpop.permute.xlu0 %604
      %606 = vrot.lane.b32.xlu0 %v586, 1
      %v607 = vpop.permute.xlu0 %606
      %608 = vrot.lane.b32.xlu0 %v587, 1
      %v609 = vpop.permute.xlu0 %608
      %vm610 = vcmask 7168
      %v611 = vsel %vm610, %v589, %v591
      %v612 = vsel %vm610, %v591, %v593
      %v613 = vsel %vm610, %v593, %v595
      %v614 = vsel %vm610, %v595, %v597
      %v615 = vsel %vm610, %v597, %v599
      %v616 = vsel %vm610, %v599, %v601
      %v617 = vsel %vm610, %v601, %v603
      %v618 = vsel %vm610, %v603, %v605
      %v619 = vsel %vm610, %v605, %v607
      %v620 = vsel %vm610, %v607, %v609
      %631 = vst [vmem:[#allocation2 + $0xf0] sm:$0xff] %v611
      %632 = vst [vmem:[#allocation2 + $0xf8] sm:$0xff] %v612
      %633 = vst [vmem:[#allocation2 + $0x100] sm:$0xff] %v613
      %634 = vst [vmem:[#allocation2 + $0x108] sm:$0xff] %v614
      %635 = vst [vmem:[#allocation2 + $0x110] sm:$0xff] %v615
      %636 = vst [vmem:[#allocation2 + $0x118] sm:$0xff] %v616
      %637 = vst [vmem:[#allocation2 + $0x120] sm:$0xff] %v617
      %638 = vst [vmem:[#allocation2 + $0x128] sm:$0xff] %v618
      %639 = vst [vmem:[#allocation2 + $0x130] sm:$0xff] %v619
      %640 = vst [vmem:[#allocation2 + $0x138] sm:$0xff] %v620
      %v641 = vld [vmem:[%s192 + $0x8] sm:$0xff]
      %v642 = vld [vmem:[%s192 + $0x10] sm:$0xff]
      %v643 = vld [vmem:[%s192 + $0x18] sm:$0xff]
      %v644 = vld [vmem:[%s192 + $0x20] sm:$0xff]
      %v645 = vld [vmem:[%s192 + $0x28] sm:$0xff]
      %v646 = vld [vmem:[%s192 + $0x40] sm:$0xff]
      %v647 = vld [vmem:[%s192 + $0x48] sm:$0xff]
      %v648 = vld [vmem:[%s192 + $0x50] sm:$0xff]
      %v649 = vld [vmem:[%s192 + $0x58] sm:$0xff]
      %v650 = vld [vmem:[%s192 + $0x60] sm:$0xff]
      %v661 = vunpack.c.l.b16 %v641
      %v662 = vunpack.c.h.b16 %v641
      %v663 = vunpack.c.l.b16 %v642
      %v664 = vunpack.c.h.b16 %v642
      %v665 = vunpack.c.l.b16 %v643
      %v666 = vunpack.c.h.b16 %v643
      %v667 = vunpack.c.l.b16 %v644
      %v668 = vunpack.c.h.b16 %v644
      %v669 = vunpack.c.l.b16 %v645
      %v670 = vunpack.c.h.b16 %v645
      %v671 = vunpack.c.l.b16 %v646
      %v672 = vunpack.c.h.b16 %v646
      %v673 = vunpack.c.l.b16 %v647
      %v674 = vunpack.c.h.b16 %v647
      %v675 = vunpack.c.l.b16 %v648
      %v676 = vunpack.c.h.b16 %v648
      %v677 = vunpack.c.l.b16 %v649
      %v678 = vunpack.c.h.b16 %v649
      %v679 = vunpack.c.l.b16 %v650
      %v680 = vunpack.c.h.b16 %v650
      %v681 = vpack.c.b16 %v671, %v661
      %v682 = vpack.c.b16 %v672, %v662
      %v683 = vpack.c.b16 %v673, %v663
      %v684 = vpack.c.b16 %v674, %v664
      %v685 = vpack.c.b16 %v675, %v665
      %v686 = vpack.c.b16 %v676, %v666
      %v687 = vpack.c.b16 %v677, %v667
      %v688 = vpack.c.b16 %v678, %v668
      %v689 = vpack.c.b16 %v679, %v669
      %v690 = vpack.c.b16 %v680, %v670
      %701 = vst [vmem:[#allocation2 + $0x140] sm:$0xff] %v681
      %702 = vst [vmem:[#allocation2 + $0x148] sm:$0xff] %v682
      %703 = vst [vmem:[#allocation2 + $0x150] sm:$0xff] %v683
      %704 = vst [vmem:[#allocation2 + $0x158] sm:$0xff] %v684
      %705 = vst [vmem:[#allocation2 + $0x160] sm:$0xff] %v685
      %706 = vst [vmem:[#allocation2 + $0x168] sm:$0xff] %v686
      %707 = vst [vmem:[#allocation2 + $0x170] sm:$0xff] %v687
      %708 = vst [vmem:[#allocation2 + $0x178] sm:$0xff] %v688
      %709 = vst [vmem:[#allocation2 + $0x180] sm:$0xff] %v689
      %710 = vst [vmem:[#allocation2 + $0x188] sm:$0xff] %v690
      %v711 = vld [vmem:[%s192 + $0x8] sm:$0xff]
      %v712 = vld [vmem:[%s192 + $0x10] sm:$0xff]
      %v713 = vld [vmem:[%s192 + $0x18] sm:$0xff]
      %v714 = vld [vmem:[%s192 + $0x20] sm:$0xff]
      %v715 = vld [vmem:[%s192 + $0x28] sm:$0xff]
      %v716 = vld [vmem:[%s192 + $0x30] sm:$0xf]
      %v717 = vld [vmem:[%s192 + $0x40] sm:$0xff]
      %v718 = vld [vmem:[%s192 + $0x48] sm:$0xff]
      %v719 = vld [vmem:[%s192 + $0x50] sm:$0xff]
      %v720 = vld [vmem:[%s192 + $0x58] sm:$0xff]
      %v721 = vld [vmem:[%s192 + $0x60] sm:$0xff]
      %v722 = vld [vmem:[%s192 + $0x68] sm:$0xf]
      %v735 = vunpack.c.l.b16 %v711
      %v736 = vunpack.c.h.b16 %v711
      %v737 = vunpack.c.l.b16 %v712
      %v738 = vunpack.c.h.b16 %v712
      %v739 = vunpack.c.l.b16 %v713
      %v740 = vunpack.c.h.b16 %v713
      %v741 = vunpack.c.l.b16 %v714
      %v742 = vunpack.c.h.b16 %v714
      %v743 = vunpack.c.l.b16 %v715
      %v744 = vunpack.c.h.b16 %v715
      %v745 = vunpack.c.l.b16 %v716
      %v746 = vunpack.c.l.b16 %v717
      %v747 = vunpack.c.h.b16 %v717
      %v748 = vunpack.c.l.b16 %v718
      %v749 = vunpack.c.h.b16 %v718
      %v750 = vunpack.c.l.b16 %v719
      %v751 = vunpack.c.h.b16 %v719
      %v752 = vunpack.c.l.b16 %v720
      %v753 = vunpack.c.h.b16 %v720
      %v754 = vunpack.c.l.b16 %v721
      %v755 = vunpack.c.h.b16 %v721
      %v756 = vunpack.c.l.b16 %v722
      %v757 = vpack.c.b16 %v746, %v735
      %v758 = vpack.c.b16 %v747, %v736
      %v759 = vpack.c.b16 %v748, %v737
      %v760 = vpack.c.b16 %v749, %v738
      %v761 = vpack.c.b16 %v750, %v739
      %v762 = vpack.c.b16 %v751, %v740
      %v763 = vpack.c.b16 %v752, %v741
      %v764 = vpack.c.b16 %v753, %v742
      %v765 = vpack.c.b16 %v754, %v743
      %v766 = vpack.c.b16 %v755, %v744
      %v767 = vpack.c.b16 %v756, %v745
      %768 = vrot.lane.b32.xlu0 %v757, 127
      %v769 = vpop.permute.xlu0 %768
      %770 = vrot.lane.b32.xlu0 %v758, 127
      %v771 = vpop.permute.xlu0 %770
      %772 = vrot.lane.b32.xlu0 %v759, 127
      %v773 = vpop.permute.xlu0 %772
      %774 = vrot.lane.b32.xlu0 %v760, 127
      %v775 = vpop.permute.xlu0 %774
      %776 = vrot.lane.b32.xlu0 %v761, 127
      %v777 = vpop.permute.xlu0 %776
      %778 = vrot.lane.b32.xlu0 %v762, 127
      %v779 = vpop.permute.xlu0 %778
      %780 = vrot.lane.b32.xlu0 %v763, 127
      %v781 = vpop.permute.xlu0 %780
      %782 = vrot.lane.b32.xlu0 %v764, 127
      %v783 = vpop.permute.xlu0 %782
      %784 = vrot.lane.b32.xlu0 %v765, 127
      %v785 = vpop.permute.xlu0 %784
      %786 = vrot.lane.b32.xlu0 %v766, 127
      %v787 = vpop.permute.xlu0 %786
      %788 = vrot.lane.b32.xlu0 %v767, 127
      %v789 = vpop.permute.xlu0 %788
      %vm790 = vcmask 1039360
      %v791 = vsel %vm790, %v769, %v771
      %v792 = vsel %vm790, %v771, %v773
      %v793 = vsel %vm790, %v773, %v775
      %v794 = vsel %vm790, %v775, %v777
      %v795 = vsel %vm790, %v777, %v779
      %v796 = vsel %vm790, %v779, %v781
      %v797 = vsel %vm790, %v781, %v783
      %v798 = vsel %vm790, %v783, %v785
      %v799 = vsel %vm790, %v785, %v787
      %v800 = vsel %vm790, %v787, %v789
      %811 = vst [vmem:[#allocation2 + $0x190] sm:$0xff] %v791
      %812 = vst [vmem:[#allocation2 + $0x198] sm:$0xff] %v792
      %813 = vst [vmem:[#allocation2 + $0x1a0] sm:$0xff] %v793
      %814 = vst [vmem:[#allocation2 + $0x1a8] sm:$0xff] %v794
      %815 = vst [vmem:[#allocation2 + $0x1b0] sm:$0xff] %v795
      %816 = vst [vmem:[#allocation2 + $0x1b8] sm:$0xff] %v796
      %817 = vst [vmem:[#allocation2 + $0x1c0] sm:$0xff] %v797
      %818 = vst [vmem:[#allocation2 + $0x1c8] sm:$0xff] %v798
      %819 = vst [vmem:[#allocation2 + $0x1d0] sm:$0xff] %v799
      %820 = vst [vmem:[#allocation2 + $0x1d8] sm:$0xff] %v800
      %v821 = vld [vmem:[%s192 + $0x8] sm:$0xff]
      %v822 = vld [vmem:[%s192 + $0x10] sm:$0xff]
      %v823 = vld [vmem:[%s192 + $0x18] sm:$0xff]
      %v824 = vld [vmem:[%s192 + $0x20] sm:$0xff]
      %v825 = vld [vmem:[%s192 + $0x28] sm:$0xff]
      %v826 = vld [vmem:[%s192 + $0x30] sm:$0xf]
      %v827 = vld [vmem:[%s192 + $0x40] sm:$0xff]
      %v828 = vld [vmem:[%s192 + $0x48] sm:$0xff]
      %v829 = vld [vmem:[%s192 + $0x50] sm:$0xff]
      %v830 = vld [vmem:[%s192 + $0x58] sm:$0xff]
      %v831 = vld [vmem:[%s192 + $0x60] sm:$0xff]
      %v832 = vld [vmem:[%s192 + $0x68] sm:$0xf]
      %v845 = vunpack.c.l.b16 %v821
      %v846 = vunpack.c.h.b16 %v821
      %v847 = vunpack.c.l.b16 %v822
      %v848 = vunpack.c.h.b16 %v822
      %v849 = vunpack.c.l.b16 %v823
      %v850 = vunpack.c.h.b16 %v823
      %v851 = vunpack.c.l.b16 %v824
      %v852 = vunpack.c.h.b16 %v824
      %v853 = vunpack.c.l.b16 %v825
      %v854 = vunpack.c.h.b16 %v825
      %v855 = vunpack.c.l.b16 %v826
      %v856 = vunpack.c.l.b16 %v827
      %v857 = vunpack.c.h.b16 %v827
      %v858 = vunpack.c.l.b16 %v828
      %v859 = vunpack.c.h.b16 %v828
      %v860 = vunpack.c.l.b16 %v829
      %v861 = vunpack.c.h.b16 %v829
      %v862 = vunpack.c.l.b16 %v830
      %v863 = vunpack.c.h.b16 %v830
      %v864 = vunpack.c.l.b16 %v831
      %v865 = vunpack.c.h.b16 %v831
      %v866 = vunpack.c.l.b16 %v832
      %v867 = vpack.c.b16 %v856, %v845
      %v868 = vpack.c.b16 %v857, %v846
      %v869 = vpack.c.b16 %v858, %v847
      %v870 = vpack.c.b16 %v859, %v848
      %v871 = vpack.c.b16 %v860, %v849
      %v872 = vpack.c.b16 %v861, %v850
      %v873 = vpack.c.b16 %v862, %v851
      %v874 = vpack.c.b16 %v863, %v852
      %v875 = vpack.c.b16 %v864, %v853
      %v876 = vpack.c.b16 %v865, %v854
      %v877 = vpack.c.b16 %v866, %v855
      %878 = vrot.lane.b32.xlu0 %v867, 95
      %v879 = vpop.permute.xlu0 %878
      %880 = vrot.lane.b32.xlu0 %v868, 95
      %v881 = vpop.permute.xlu0 %880
      %882 = vrot.lane.b32.xlu0 %v869, 95
      %v883 = vpop.permute.xlu0 %882
      %884 = vrot.lane.b32.xlu0 %v870, 95
      %v885 = vpop.permute.xlu0 %884
      %886 = vrot.lane.b32.xlu0 %v871, 95
      %v887 = vpop.permute.xlu0 %886
      %888 = vrot.lane.b32.xlu0 %v872, 95
      %v889 = vpop.permute.xlu0 %888
      %890 = vrot.lane.b32.xlu0 %v873, 95
      %v891 = vpop.permute.xlu0 %890
      %892 = vrot.lane.b32.xlu0 %v874, 95
      %v893 = vpop.permute.xlu0 %892
      %894 = vrot.lane.b32.xlu0 %v875, 95
      %v895 = vpop.permute.xlu0 %894
      %896 = vrot.lane.b32.xlu0 %v876, 95
      %v897 = vpop.permute.xlu0 %896
      %898 = vrot.lane.b32.xlu0 %v877, 95
      %v899 = vpop.permute.xlu0 %898
      %vm900 = vcmask 777216
      %v901 = vsel %vm900, %v879, %v881
      %v902 = vsel %vm900, %v881, %v883
      %v903 = vsel %vm900, %v883, %v885
      %v904 = vsel %vm900, %v885, %v887
      %v905 = vsel %vm900, %v887, %v889
      %v906 = vsel %vm900, %v889, %v891
      %v907 = vsel %vm900, %v891, %v893
      %v908 = vsel %vm900, %v893, %v895
      %v909 = vsel %vm900, %v895, %v897
      %v910 = vsel %vm900, %v897, %v899
      %921 = vst [vmem:[#allocation2 + $0x1e0] sm:$0xff] %v901
      %922 = vst [vmem:[#allocation2 + $0x1e8] sm:$0xff] %v902
      %923 = vst [vmem:[#allocation2 + $0x1f0] sm:$0xff] %v903
      %924 = vst [vmem:[#allocation2 + $0x1f8] sm:$0xff] %v904
      %925 = vst [vmem:[#allocation2 + $0x200] sm:$0xff] %v905
      %926 = vst [vmem:[#allocation2 + $0x208] sm:$0xff] %v906
      %927 = vst [vmem:[#allocation2 + $0x210] sm:$0xff] %v907
      %928 = vst [vmem:[#allocation2 + $0x218] sm:$0xff] %v908
      %929 = vst [vmem:[#allocation2 + $0x220] sm:$0xff] %v909
      %930 = vst [vmem:[#allocation2 + $0x228] sm:$0xff] %v910
      %v931 = vld [vmem:[%s192 + $0x8] sm:$0xff]
      %v932 = vld [vmem:[%s192 + $0x10] sm:$0xff]
      %v933 = vld [vmem:[%s192 + $0x18] sm:$0xff]
      %v934 = vld [vmem:[%s192 + $0x20] sm:$0xff]
      %v935 = vld [vmem:[%s192 + $0x28] sm:$0xff]
      %v936 = vld [vmem:[%s192 + $0x30] sm:$0xf]
      %v937 = vld [vmem:[%s192 + $0x40] sm:$0xff]
      %v938 = vld [vmem:[%s192 + $0x48] sm:$0xff]
      %v939 = vld [vmem:[%s192 + $0x50] sm:$0xff]
      %v940 = vld [vmem:[%s192 + $0x58] sm:$0xff]
      %v941 = vld [vmem:[%s192 + $0x60] sm:$0xff]
      %v942 = vld [vmem:[%s192 + $0x68] sm:$0xf]
      %v955 = vunpack.c.l.b16 %v931
      %v956 = vunpack.c.h.b16 %v931
      %v957 = vunpack.c.l.b16 %v932
      %v958 = vunpack.c.h.b16 %v932
      %v959 = vunpack.c.l.b16 %v933
      %v960 = vunpack.c.h.b16 %v933
      %v961 = vunpack.c.l.b16 %v934
      %v962 = vunpack.c.h.b16 %v934
      %v963 = vunpack.c.l.b16 %v935
      %v964 = vunpack.c.h.b16 %v935
      %v965 = vunpack.c.l.b16 %v936
      %v966 = vunpack.c.l.b16 %v937
      %v967 = vunpack.c.h.b16 %v937
      %v968 = vunpack.c.l.b16 %v938
      %v969 = vunpack.c.h.b16 %v938
      %v970 = vunpack.c.l.b16 %v939
      %v971 = vunpack.c.h.b16 %v939
      %v972 = vunpack.c.l.b16 %v940
      %v973 = vunpack.c.h.b16 %v940
      %v974 = vunpack.c.l.b16 %v941
      %v975 = vunpack.c.h.b16 %v941
      %v976 = vunpack.c.l.b16 %v942
      %v977 = vpack.c.b16 %v966, %v955
      %v978 = vpack.c.b16 %v967, %v956
      %v979 = vpack.c.b16 %v968, %v957
      %v980 = vpack.c.b16 %v969, %v958
      %v981 = vpack.c.b16 %v970, %v959
      %v982 = vpack.c.b16 %v971, %v960
      %v983 = vpack.c.b16 %v972, %v961
      %v984 = vpack.c.b16 %v973, %v962
      %v985 = vpack.c.b16 %v974, %v963
      %v986 = vpack.c.b16 %v975, %v964
      %v987 = vpack.c.b16 %v976, %v965
      %988 = vrot.lane.b32.xlu0 %v977, 94
      %v989 = vpop.permute.xlu0 %988
      %990 = vrot.lane.b32.xlu0 %v978, 94
      %v991 = vpop.permute.xlu0 %990
      %992 = vrot.lane.b32.xlu0 %v979, 94
      %v993 = vpop.permute.xlu0 %992
      %994 = vrot.lane.b32.xlu0 %v980, 94
      %v995 = vpop.permute.xlu0 %994
      %996 = vrot.lane.b32.xlu0 %v981, 94
      %v997 = vpop.permute.xlu0 %996
      %998 = vrot.lane.b32.xlu0 %v982, 94
      %v999 = vpop.permute.xlu0 %998
      %1000 = vrot.lane.b32.xlu0 %v983, 94
      %v1001 = vpop.permute.xlu0 %1000
      %1002 = vrot.lane.b32.xlu0 %v984, 94
      %v1003 = vpop.permute.xlu0 %1002
      %1004 = vrot.lane.b32.xlu0 %v985, 94
      %v1005 = vpop.permute.xlu0 %1004
      %1006 = vrot.lane.b32.xlu0 %v986, 94
      %v1007 = vpop.permute.xlu0 %1006
      %1008 = vrot.lane.b32.xlu0 %v987, 94
      %v1009 = vpop.permute.xlu0 %1008
      %vm1010 = vcmask 769024
      %v1011 = vsel %vm1010, %v989, %v991
      %v1012 = vsel %vm1010, %v991, %v993
      %v1013 = vsel %vm1010, %v993, %v995
      %v1014 = vsel %vm1010, %v995, %v997
      %v1015 = vsel %vm1010, %v997, %v999
      %v1016 = vsel %vm1010, %v999, %v1001
      %v1017 = vsel %vm1010, %v1001, %v1003
      %v1018 = vsel %vm1010, %v1003, %v1005
      %v1019 = vsel %vm1010, %v1005, %v1007
      %v1020 = vsel %vm1010, %v1007, %v1009
      %1031 = vst [vmem:[#allocation2 + $0x230] sm:$0xff] %v1011
      %1032 = vst [vmem:[#allocation2 + $0x238] sm:$0xff] %v1012
      %1033 = vst [vmem:[#allocation2 + $0x240] sm:$0xff] %v1013
      %1034 = vst [vmem:[#allocation2 + $0x248] sm:$0xff] %v1014
      %1035 = vst [vmem:[#allocation2 + $0x250] sm:$0xff] %v1015
      %1036 = vst [vmem:[#allocation2 + $0x258] sm:$0xff] %v1016
      %1037 = vst [vmem:[#allocation2 + $0x260] sm:$0xff] %v1017
      %1038 = vst [vmem:[#allocation2 + $0x268] sm:$0xff] %v1018
      %1039 = vst [vmem:[#allocation2 + $0x270] sm:$0xff] %v1019
      %1040 = vst [vmem:[#allocation2 + $0x278] sm:$0xff] %v1020
      %v1041 = vld [vmem:[%s192 + $0x8] sm:$0xff]
      %v1042 = vld [vmem:[%s192 + $0x10] sm:$0xff]
      %v1043 = vld [vmem:[%s192 + $0x18] sm:$0xff]
      %v1044 = vld [vmem:[%s192 + $0x20] sm:$0xff]
      %v1045 = vld [vmem:[%s192 + $0x28] sm:$0xff]
      %v1046 = vld [vmem:[%s192 + $0x30] sm:$0xf]
      %v1047 = vld [vmem:[%s192 + $0x40] sm:$0xff]
      %v1048 = vld [vmem:[%s192 + $0x48] sm:$0xff]
      %v1049 = vld [vmem:[%s192 + $0x50] sm:$0xff]
      %v1050 = vld [vmem:[%s192 + $0x58] sm:$0xff]
      %v1051 = vld [vmem:[%s192 + $0x60] sm:$0xff]
      %v1052 = vld [vmem:[%s192 + $0x68] sm:$0xf]
      %v1065 = vunpack.c.l.b16 %v1041
      %v1066 = vunpack.c.h.b16 %v1041
      %v1067 = vunpack.c.l.b16 %v1042
      %v1068 = vunpack.c.h.b16 %v1042
      %v1069 = vunpack.c.l.b16 %v1043
      %v1070 = vunpack.c.h.b16 %v1043
      %v1071 = vunpack.c.l.b16 %v1044
      %v1072 = vunpack.c.h.b16 %v1044
      %v1073 = vunpack.c.l.b16 %v1045
      %v1074 = vunpack.c.h.b16 %v1045
      %v1075 = vunpack.c.l.b16 %v1046
      %v1076 = vunpack.c.l.b16 %v1047
      %v1077 = vunpack.c.h.b16 %v1047
      %v1078 = vunpack.c.l.b16 %v1048
      %v1079 = vunpack.c.h.b16 %v1048
      %v1080 = vunpack.c.l.b16 %v1049
      %v1081 = vunpack.c.h.b16 %v1049
      %v1082 = vunpack.c.l.b16 %v1050
      %v1083 = vunpack.c.h.b16 %v1050
      %v1084 = vunpack.c.l.b16 %v1051
      %v1085 = vunpack.c.h.b16 %v1051
      %v1086 = vunpack.c.l.b16 %v1052
      %v1087 = vpack.c.b16 %v1076, %v1065
      %v1088 = vpack.c.b16 %v1077, %v1066
      %v1089 = vpack.c.b16 %v1078, %v1067
      %v1090 = vpack.c.b16 %v1079, %v1068
      %v1091 = vpack.c.b16 %v1080, %v1069
      %v1092 = vpack.c.b16 %v1081, %v1070
      %v1093 = vpack.c.b16 %v1082, %v1071
      %v1094 = vpack.c.b16 %v1083, %v1072
      %v1095 = vpack.c.b16 %v1084, %v1073
      %v1096 = vpack.c.b16 %v1085, %v1074
      %v1097 = vpack.c.b16 %v1086, %v1075
      %1098 = vrot.lane.b32.xlu0 %v1087, 93
      %v1099 = vpop.permute.xlu0 %1098
      %1100 = vrot.lane.b32.xlu0 %v1088, 93
      %v1101 = vpop.permute.xlu0 %1100
      %1102 = vrot.lane.b32.xlu0 %v1089, 93
      %v1103 = vpop.permute.xlu0 %1102
      %1104 = vrot.lane.b32.xlu0 %v1090, 93
      %v1105 = vpop.permute.xlu0 %1104
      %1106 = vrot.lane.b32.xlu0 %v1091, 93
      %v1107 = vpop.permute.xlu0 %1106
      %1108 = vrot.lane.b32.xlu0 %v1092, 93
      %v1109 = vpop.permute.xlu0 %1108
      %1110 = vrot.lane.b32.xlu0 %v1093, 93
      %v1111 = vpop.permute.xlu0 %1110
      %1112 = vrot.lane.b32.xlu0 %v1094, 93
      %v1113 = vpop.permute.xlu0 %1112
      %1114 = vrot.lane.b32.xlu0 %v1095, 93
      %v1115 = vpop.permute.xlu0 %1114
      %1116 = vrot.lane.b32.xlu0 %v1096, 93
      %v1117 = vpop.permute.xlu0 %1116
      %1118 = vrot.lane.b32.xlu0 %v1097, 93
      %v1119 = vpop.permute.xlu0 %1118
      %vm1120 = vcmask 760832
      %v1121 = vsel %vm1120, %v1099, %v1101
      %v1122 = vsel %vm1120, %v1101, %v1103
      %v1123 = vsel %vm1120, %v1103, %v1105
      %v1124 = vsel %vm1120, %v1105, %v1107
      %v1125 = vsel %vm1120, %v1107, %v1109
      %v1126 = vsel %vm1120, %v1109, %v1111
      %v1127 = vsel %vm1120, %v1111, %v1113
      %v1128 = vsel %vm1120, %v1113, %v1115
      %v1129 = vsel %vm1120, %v1115, %v1117
      %v1130 = vsel %vm1120, %v1117, %v1119
      %1141 = vst [vmem:[#allocation2 + $0x280] sm:$0xff] %v1121
      %1142 = vst [vmem:[#allocation2 + $0x288] sm:$0xff] %v1122
      %1143 = vst [vmem:[#allocation2 + $0x290] sm:$0xff] %v1123
      %1144 = vst [vmem:[#allocation2 + $0x298] sm:$0xff] %v1124
      %1145 = vst [vmem:[#allocation2 + $0x2a0] sm:$0xff] %v1125
      %1146 = vst [vmem:[#allocation2 + $0x2a8] sm:$0xff] %v1126
      %1147 = vst [vmem:[#allocation2 + $0x2b0] sm:$0xff] %v1127
      %1148 = vst [vmem:[#allocation2 + $0x2b8] sm:$0xff] %v1128
      %1149 = vst [vmem:[#allocation2 + $0x2c0] sm:$0xff] %v1129
      %1150 = vst [vmem:[#allocation2 + $0x2c8] sm:$0xff] %v1130
      %v1151 = vld [vmem:[#allocation2] sm:$0xff]
      %v1152 = vld [vmem:[#allocation2 + $0x8] sm:$0xff]
      %v1153 = vld [vmem:[#allocation2 + $0x10] sm:$0xff]
      %v1154 = vld [vmem:[#allocation2 + $0x18] sm:$0xff]
      %v1155 = vld [vmem:[#allocation2 + $0x20] sm:$0xff]
      %v1156 = vld [vmem:[#allocation2 + $0x28] sm:$0xff]
      %v1157 = vld [vmem:[#allocation2 + $0x30] sm:$0xff]
      %v1158 = vld [vmem:[#allocation2 + $0x38] sm:$0xff]
      %v1159 = vld [vmem:[#allocation2 + $0x40] sm:$0xff]
      %v1160 = vld [vmem:[#allocation2 + $0x48] sm:$0xff]
      %v1161 = vld [vmem:[#allocation2 + $0x50] sm:$0xff]
      %v1162 = vld [vmem:[#allocation2 + $0x58] sm:$0xff]
      %v1163 = vld [vmem:[#allocation2 + $0x60] sm:$0xff]
      %v1164 = vld [vmem:[#allocation2 + $0x68] sm:$0xff]
      %v1165 = vld [vmem:[#allocation2 + $0x70] sm:$0xff]
      %v1166 = vld [vmem:[#allocation2 + $0x78] sm:$0xff]
      %v1167 = vld [vmem:[#allocation2 + $0x80] sm:$0xff]
      %v1168 = vld [vmem:[#allocation2 + $0x88] sm:$0xff]
      %v1169 = vld [vmem:[#allocation2 + $0x90] sm:$0xff]
      %v1170 = vld [vmem:[#allocation2 + $0x98] sm:$0xff]
      %v1171 = vld [vmem:[#allocation2 + $0xa0] sm:$0xff]
      %v1172 = vld [vmem:[#allocation2 + $0xa8] sm:$0xff]
      %v1173 = vld [vmem:[#allocation2 + $0xb0] sm:$0xff]
      %v1174 = vld [vmem:[#allocation2 + $0xb8] sm:$0xff]
      %v1175 = vld [vmem:[#allocation2 + $0xc0] sm:$0xff]
      %v1176 = vld [vmem:[#allocation2 + $0xc8] sm:$0xff]
      %v1177 = vld [vmem:[#allocation2 + $0xd0] sm:$0xff]
      %v1178 = vld [vmem:[#allocation2 + $0xd8] sm:$0xff]
      %v1179 = vld [vmem:[#allocation2 + $0xe0] sm:$0xff]
      %v1180 = vld [vmem:[#allocation2 + $0xe8] sm:$0xff]
      %v1181 = vld [vmem:[#allocation2 + $0xf0] sm:$0xff]
      %v1182 = vld [vmem:[#allocation2 + $0xf8] sm:$0xff]
      %v1183 = vld [vmem:[#allocation2 + $0x100] sm:$0xff]
      %v1184 = vld [vmem:[#allocation2 + $0x108] sm:$0xff]
      %v1185 = vld [vmem:[#allocation2 + $0x110] sm:$0xff]
      %v1186 = vld [vmem:[#allocation2 + $0x118] sm:$0xff]
      %v1187 = vld [vmem:[#allocation2 + $0x120] sm:$0xff]
      %v1188 = vld [vmem:[#allocation2 + $0x128] sm:$0xff]
      %v1189 = vld [vmem:[#allocation2 + $0x130] sm:$0xff]
      %v1190 = vld [vmem:[#allocation2 + $0x138] sm:$0xff]
      %v1191 = vld [vmem:[#allocation2 + $0x140] sm:$0xff]
      %v1192 = vld [vmem:[#allocation2 + $0x148] sm:$0xff]
      %v1193 = vld [vmem:[#allocation2 + $0x150] sm:$0xff]
      %v1194 = vld [vmem:[#allocation2 + $0x158] sm:$0xff]
      %v1195 = vld [vmem:[#allocation2 + $0x160] sm:$0xff]
      %v1196 = vld [vmem:[#allocation2 + $0x168] sm:$0xff]
      %v1197 = vld [vmem:[#allocation2 + $0x170] sm:$0xff]
      %v1198 = vld [vmem:[#allocation2 + $0x178] sm:$0xff]
      %v1199 = vld [vmem:[#allocation2 + $0x180] sm:$0xff]
      %v1200 = vld [vmem:[#allocation2 + $0x188] sm:$0xff]
      %v1201 = vld [vmem:[#allocation2 + $0x190] sm:$0xff]
      %v1202 = vld [vmem:[#allocation2 + $0x198] sm:$0xff]
      %v1203 = vld [vmem:[#allocation2 + $0x1a0] sm:$0xff]
      %v1204 = vld [vmem:[#allocation2 + $0x1a8] sm:$0xff]
      %v1205 = vld [vmem:[#allocation2 + $0x1b0] sm:$0xff]
      %v1206 = vld [vmem:[#allocation2 + $0x1b8] sm:$0xff]
      %v1207 = vld [vmem:[#allocation2 + $0x1c0] sm:$0xff]
      %v1208 = vld [vmem:[#allocation2 + $0x1c8] sm:$0xff]
      %v1209 = vld [vmem:[#allocation2 + $0x1d0] sm:$0xff]
      %v1210 = vld [vmem:[#allocation2 + $0x1d8] sm:$0xff]
      %v1211 = vld [vmem:[#allocation2 + $0x1e0] sm:$0xff]
      %v1212 = vld [vmem:[#allocation2 + $0x1e8] sm:$0xff]
      %v1213 = vld [vmem:[#allocation2 + $0x1f0] sm:$0xff]
      %v1214 = vld [vmem:[#allocation2 + $0x1f8] sm:$0xff]
      %v1215 = vld [vmem:[#allocation2 + $0x200] sm:$0xff]
      %v1216 = vld [vmem:[#allocation2 + $0x208] sm:$0xff]
      %v1217 = vld [vmem:[#allocation2 + $0x210] sm:$0xff]
      %v1218 = vld [vmem:[#allocation2 + $0x218] sm:$0xff]
      %v1219 = vld [vmem:[#allocation2 + $0x220] sm:$0xff]
      %v1220 = vld [vmem:[#allocation2 + $0x228] sm:$0xff]
      %v1221 = vld [vmem:[#allocation2 + $0x230] sm:$0xff]
      %v1222 = vld [vmem:[#allocation2 + $0x238] sm:$0xff]
      %v1223 = vld [vmem:[#allocation2 + $0x240] sm:$0xff]
      %v1224 = vld [vmem:[#allocation2 + $0x248] sm:$0xff]
      %v1225 = vld [vmem:[#allocation2 + $0x250] sm:$0xff]
      %v1226 = vld [vmem:[#allocation2 + $0x258] sm:$0xff]
      %v1227 = vld [vmem:[#allocation2 + $0x260] sm:$0xff]
      %v1228 = vld [vmem:[#allocation2 + $0x268] sm:$0xff]
      %v1229 = vld [vmem:[#allocation2 + $0x270] sm:$0xff]
      %v1230 = vld [vmem:[#allocation2 + $0x278] sm:$0xff]
      %v1231 = vld [vmem:[#allocation2 + $0x280] sm:$0xff]
      %v1232 = vld [vmem:[#allocation2 + $0x288] sm:$0xff]
      %v1233 = vld [vmem:[#allocation2 + $0x290] sm:$0xff]
      %v1234 = vld [vmem:[#allocation2 + $0x298] sm:$0xff]
      %v1235 = vld [vmem:[#allocation2 + $0x2a0] sm:$0xff]
      %v1236 = vld [vmem:[#allocation2 + $0x2a8] sm:$0xff]
      %v1237 = vld [vmem:[#allocation2 + $0x2b0] sm:$0xff]
      %v1238 = vld [vmem:[#allocation2 + $0x2b8] sm:$0xff]
      %v1239 = vld [vmem:[#allocation2 + $0x2c0] sm:$0xff]
      %v1240 = vld [vmem:[#allocation2 + $0x2c8] sm:$0xff]
      %1242 = vset.pattern.permute.xlu0 0
      %1243 = vperm.xlu0 %1242, %v200
      %v1244 = vpop.permute.xlu0 %1243
      %v1247 = vunpack.c.l.b16 %v199
      %v1248 = vunpack.c.h.b16 %v199
      %v1249 = vpack.c.b16 %v1247, %v1247
      %v1250 = vpack.c.b16 %v1248, %v1248
      %vm1252 = vcmask 130048
      %v1254 = vsel %vm1252, %v1250, 0
      %1256 = vmatprep.subr.bf16.mxu0 %v1152
      %1257 = vmatpush1.bf16.msra.mxu0 %v1151
      %1258 = vmatprep.subr.bf16.mxu0 %v1162
      %1259 = vmatpush1.bf16.msra.mxu0 %v1161
      %1260 = vmatprep.subr.bf16.mxu0 %v1172
      %1261 = vmatpush1.bf16.msra.mxu0 %v1171
      %1262 = vmatprep.subr.bf16.mxu0 %v1182
      %1263 = vmatpush1.bf16.msra.mxu0 %v1181
      %1264 = vmatprep.subr.bf16.mxu0 %v1192
      %1265 = vmatpush1.bf16.msra.mxu0 %v1191
      %1266 = vmatprep.subr.bf16.mxu0 %v1202
      %1267 = vmatpush1.bf16.msra.mxu0 %v1201
      %1268 = vmatprep.subr.bf16.mxu0 %v1212
      %1269 = vmatpush1.bf16.msra.mxu0 %v1211
      %1270 = vmatprep.subr.bf16.mxu0 %v1222
      %1271 = vmatpush1.bf16.msra.mxu0 %v1221
      %1272 = vmatprep.subr.bf16.mxu0 %v1232
      %1273 = vmatpush1.bf16.msra.mxu0 %v1231
      %1274 = vmatprep.subr.bf16.mxu0 0
      %1275 = vmatpush1.bf16.msra.mxu0 0
      %1276 = vmatprep.subr.bf16.mxu0 0
      %1277 = vmatpush1.bf16.msra.mxu0 0
      %1278 = vmatprep.subr.bf16.mxu0 0
      %1279 = vmatpush1.bf16.msra.mxu0 0
      %1280 = vmatprep.subr.bf16.mxu0 0
      %1281 = vmatpush1.bf16.msra.mxu0 0
      %1282 = vmatprep.subr.bf16.mxu0 0
      %1283 = vmatpush1.bf16.msra.mxu0 0
      %1284 = vmatprep.subr.bf16.mxu0 0
      %1285 = vmatpush1.bf16.msra.mxu0 0
      %1286 = vmatprep.subr.bf16.mxu0 0
      %1287 = vmatpush1.bf16.msra.mxu0 0
      %1288 = vmatprep.mubr.bf16.mxu0 %v1254
      %1289 = vmatmul.mubr.bf16.gmra.mrb[0].mxu0 %v1249
      %v1290 = vpop.f32.mrb[0].mxu0
      %v1291 = vadd.f32 %v1244, %v1290
      %v1292 = vpop.f32.mrb[0].mxu0
      %v1293 = vadd.f32 %v1244, %v1292
      %v1294 = vpop.f32.mrb[0].mxu0
      %v1295 = vpop.f32.mrb[0].mxu0
      %1296 = vdwg.mxu0
      %1297 = vmatprep.subr.bf16.mxu0 %v1154
      %1298 = vmatpush1.bf16.msra.mxu0 %v1153
      %1299 = vmatprep.subr.bf16.mxu0 %v1164
      %1300 = vmatpush1.bf16.msra.mxu0 %v1163
      %1301 = vmatprep.subr.bf16.mxu0 %v1174
      %1302 = vmatpush1.bf16.msra.mxu0 %v1173
      %1303 = vmatprep.subr.bf16.mxu0 %v1184
      %1304 = vmatpush1.bf16.msra.mxu0 %v1183
      %1305 = vmatprep.subr.bf16.mxu0 %v1194
      %1306 = vmatpush1.bf16.msra.mxu0 %v1193
      %1307 = vmatprep.subr.bf16.mxu0 %v1204
      %1308 = vmatpush1.bf16.msra.mxu0 %v1203
      %1309 = vmatprep.subr.bf16.mxu0 %v1214
      %1310 = vmatpush1.bf16.msra.mxu0 %v1213
      %1311 = vmatprep.subr.bf16.mxu0 %v1224
      %1312 = vmatpush1.bf16.msra.mxu0 %v1223
      %1313 = vmatprep.subr.bf16.mxu0 %v1234
      %1314 = vmatpush1.bf16.msra.mxu0 %v1233
      %1315 = vmatprep.subr.bf16.mxu0 0
      %1316 = vmatpush1.bf16.msra.mxu0 0
      %1317 = vmatprep.subr.bf16.mxu0 0
      %1318 = vmatpush1.bf16.msra.mxu0 0
      %1319 = vmatprep.subr.bf16.mxu0 0
      %1320 = vmatpush1.bf16.msra.mxu0 0
      %1321 = vmatprep.subr.bf16.mxu0 0
      %1322 = vmatpush1.bf16.msra.mxu0 0
      %1323 = vmatprep.subr.bf16.mxu0 0
      %1324 = vmatpush1.bf16.msra.mxu0 0
      %1325 = vmatprep.subr.bf16.mxu0 0
      %1326 = vmatpush1.bf16.msra.mxu0 0
      %1327 = vmatprep.subr.bf16.mxu0 0
      %1328 = vmatpush1.bf16.msra.mxu0 0
      %1329 = vmatprep.mubr.bf16.mxu0 %v1254
      %1330 = vmatmul.mubr.bf16.gmra.mrb[0].mxu0 %v1249
      %v1331 = vpop.f32.mrb[0].mxu0
      %v1332 = vadd.f32 %v1244, %v1331
      %v1333 = vpop.f32.mrb[0].mxu0
      %v1334 = vadd.f32 %v1244, %v1333
      %v1335 = vpop.f32.mrb[0].mxu0
      %v1336 = vpop.f32.mrb[0].mxu0
      %1337 = vdwg.mxu0
      %1338 = vmatprep.subr.bf16.mxu0 %v1156
      %1339 = vmatpush1.bf16.msra.mxu0 %v1155
      %1340 = vmatprep.subr.bf16.mxu0 %v1166
      %1341 = vmatpush1.bf16.msra.mxu0 %v1165
      %1342 = vmatprep.subr.bf16.mxu0 %v1176
      %1343 = vmatpush1.bf16.msra.mxu0 %v1175
      %1344 = vmatprep.subr.bf16.mxu0 %v1186
      %1345 = vmatpush1.bf16.msra.mxu0 %v1185
      %1346 = vmatprep.subr.bf16.mxu0 %v1196
      %1347 = vmatpush1.bf16.msra.mxu0 %v1195
      %1348 = vmatprep.subr.bf16.mxu0 %v1206
      %1349 = vmatpush1.bf16.msra.mxu0 %v1205
      %1350 = vmatprep.subr.bf16.mxu0 %v1216
      %1351 = vmatpush1.bf16.msra.mxu0 %v1215
      %1352 = vmatprep.subr.bf16.mxu0 %v1226
      %1353 = vmatpush1.bf16.msra.mxu0 %v1225
      %1354 = vmatprep.subr.bf16.mxu0 %v1236
      %1355 = vmatpush1.bf16.msra.mxu0 %v1235
      %1356 = vmatprep.subr.bf16.mxu0 0
      %1357 = vmatpush1.bf16.msra.mxu0 0
      %1358 = vmatprep.subr.bf16.mxu0 0
      %1359 = vmatpush1.bf16.msra.mxu0 0
      %1360 = vmatprep.subr.bf16.mxu0 0
      %1361 = vmatpush1.bf16.msra.mxu0 0
      %1362 = vmatprep.subr.bf16.mxu0 0
      %1363 = vmatpush1.bf16.msra.mxu0 0
      %1364 = vmatprep.subr.bf16.mxu0 0
      %1365 = vmatpush1.bf16.msra.mxu0 0
      %1366 = vmatprep.subr.bf16.mxu0 0
      %1367 = vmatpush1.bf16.msra.mxu0 0
      %1368 = vmatprep.subr.bf16.mxu0 0
      %1369 = vmatpush1.bf16.msra.mxu0 0
      %1370 = vmatprep.mubr.bf16.mxu0 %v1254
      %1371 = vmatmul.mubr.bf16.gmra.mrb[0].mxu0 %v1249
      %v1372 = vpop.f32.mrb[0].mxu0
      %v1373 = vadd.f32 %v1244, %v1372
      %v1374 = vpop.f32.mrb[0].mxu0
      %v1375 = vadd.f32 %v1244, %v1374
      %v1376 = vpop.f32.mrb[0].mxu0
      %v1377 = vpop.f32.mrb[0].mxu0
      %1378 = vdwg.mxu0
      %1379 = vmatprep.subr.bf16.mxu0 %v1158
      %1380 = vmatpush1.bf16.msra.mxu0 %v1157
      %1381 = vmatprep.subr.bf16.mxu0 %v1168
      %1382 = vmatpush1.bf16.msra.mxu0 %v1167
      %1383 = vmatprep.subr.bf16.mxu0 %v1178
      %1384 = vmatpush1.bf16.msra.mxu0 %v1177
      %1385 = vmatprep.subr.bf16.mxu0 %v1188
      %1386 = vmatpush1.bf16.msra.mxu0 %v1187
      %1387 = vmatprep.subr.bf16.mxu0 %v1198
      %1388 = vmatpush1.bf16.msra.mxu0 %v1197
      %1389 = vmatprep.subr.bf16.mxu0 %v1208
      %1390 = vmatpush1.bf16.msra.mxu0 %v1207
      %1391 = vmatprep.subr.bf16.mxu0 %v1218
      %1392 = vmatpush1.bf16.msra.mxu0 %v1217
      %1393 = vmatprep.subr.bf16.mxu0 %v1228
      %1394 = vmatpush1.bf16.msra.mxu0 %v1227
      %1395 = vmatprep.subr.bf16.mxu0 %v1238
      %1396 = vmatpush1.bf16.msra.mxu0 %v1237
      %1397 = vmatprep.subr.bf16.mxu0 0
      %1398 = vmatpush1.bf16.msra.mxu0 0
      %1399 = vmatprep.subr.bf16.mxu0 0
      %1400 = vmatpush1.bf16.msra.mxu0 0
      %1401 = vmatprep.subr.bf16.mxu0 0
      %1402 = vmatpush1.bf16.msra.mxu0 0
      %1403 = vmatprep.subr.bf16.mxu0 0
      %1404 = vmatpush1.bf16.msra.mxu0 0
      %1405 = vmatprep.subr.bf16.mxu0 0
      %1406 = vmatpush1.bf16.msra.mxu0 0
      %1407 = vmatprep.subr.bf16.mxu0 0
      %1408 = vmatpush1.bf16.msra.mxu0 0
      %1409 = vmatprep.subr.bf16.mxu0 0
      %1410 = vmatpush1.bf16.msra.mxu0 0
      %1411 = vmatprep.mubr.bf16.mxu0 %v1254
      %1412 = vmatmul.mubr.bf16.gmra.mrb[0].mxu0 %v1249
      %v1413 = vpop.f32.mrb[0].mxu0
      %v1414 = vadd.f32 %v1244, %v1413
      %v1415 = vpop.f32.mrb[0].mxu0
      %v1416 = vadd.f32 %v1244, %v1415
      %v1417 = vpop.f32.mrb[0].mxu0
      %v1418 = vpop.f32.mrb[0].mxu0
      %1419 = vdwg.mxu0
      %1420 = vmatprep.subr.bf16.mxu0 %v1160
      %1421 = vmatpush1.bf16.msra.mxu0 %v1159
      %1422 = vmatprep.subr.bf16.mxu0 %v1170
      %1423 = vmatpush1.bf16.msra.mxu0 %v1169
      %1424 = vmatprep.subr.bf16.mxu0 %v1180
      %1425 = vmatpush1.bf16.msra.mxu0 %v1179
      %1426 = vmatprep.subr.bf16.mxu0 %v1190
      %1427 = vmatpush1.bf16.msra.mxu0 %v1189
      %1428 = vmatprep.subr.bf16.mxu0 %v1200
      %1429 = vmatpush1.bf16.msra.mxu0 %v1199
      %1430 = vmatprep.subr.bf16.mxu0 %v1210
      %1431 = vmatpush1.bf16.msra.mxu0 %v1209
      %1432 = vmatprep.subr.bf16.mxu0 %v1220
      %1433 = vmatpush1.bf16.msra.mxu0 %v1219
      %1434 = vmatprep.subr.bf16.mxu0 %v1230
      %1435 = vmatpush1.bf16.msra.mxu0 %v1229
      %1436 = vmatprep.subr.bf16.mxu0 %v1240
      %1437 = vmatpush1.bf16.msra.mxu0 %v1239
      %1438 = vmatprep.subr.bf16.mxu0 0
      %1439 = vmatpush1.bf16.msra.mxu0 0
      %1440 = vmatprep.subr.bf16.mxu0 0
      %1441 = vmatpush1.bf16.msra.mxu0 0
      %1442 = vmatprep.subr.bf16.mxu0 0
      %1443 = vmatpush1.bf16.msra.mxu0 0
      %1444 = vmatprep.subr.bf16.mxu0 0
      %1445 = vmatpush1.bf16.msra.mxu0 0
      %1446 = vmatprep.subr.bf16.mxu0 0
      %1447 = vmatpush1.bf16.msra.mxu0 0
      %1448 = vmatprep.subr.bf16.mxu0 0
      %1449 = vmatpush1.bf16.msra.mxu0 0
      %1450 = vmatprep.subr.bf16.mxu0 0
      %1451 = vmatpush1.bf16.msra.mxu0 0
      %1452 = vmatprep.mubr.bf16.mxu0 %v1254
      %1453 = vmatmul.mubr.bf16.gmra.mrb[0].mxu0 %v1249
      %v1454 = vpop.f32.mrb[0].mxu0
      %v1455 = vadd.f32 %v1244, %v1454
      %v1456 = vpop.f32.mrb[0].mxu0
      %v1457 = vadd.f32 %v1244, %v1456
      %v1458 = vpop.f32.mrb[0].mxu0
      %v1459 = vpop.f32.mrb[0].mxu0
      %1460 = vdwg.mxu0
      %v1461 = vld [vmem:[%s3 + $0x2] sm:$0xff]
      %v1462 = vld [vmem:[%s3 + $0xa] sm:$0x3]
      %v1463 = vunpack.c.l.bf16 %v1461
      %v1464 = vunpack.c.h.bf16 %v1461
      %v1465 = vunpack.c.l.bf16 %v1462
      %v1469 = vlaneseq
      %v1470 = vshrl.u32 %v1469, 7
      %v1471 = vsub.s32 0, %v1470
      %v1472 = vrot.slane %v1463, %v1471
      %v1473 = vlaneseq
      %v1474 = vshrl.u32 %v1473, 7
      %v1475 = vsub.s32 2, %v1474
      %v1476 = vrot.slane %v1463, %v1475
      %v1477 = vlaneseq
      %v1478 = vshrl.u32 %v1477, 7
      %v1479 = vsub.s32 4, %v1478
      %v1480 = vrot.slane %v1463, %v1479
      %v1481 = vlaneseq
      %v1482 = vshrl.u32 %v1481, 7
      %v1483 = vsub.s32 6, %v1482
      %v1484 = vrot.slane %v1463, %v1483
      %v1485 = vlaneseq
      %v1486 = vshrl.u32 %v1485, 7
      %v1487 = vsub.s32 0, %v1486
      %v1488 = vrot.slane %v1464, %v1487
      %v1489 = vlaneseq
      %v1490 = vshrl.u32 %v1489, 7
      %v1491 = vsub.s32 2, %v1490
      %v1492 = vrot.slane %v1464, %v1491
      %v1493 = vlaneseq
      %v1494 = vshrl.u32 %v1493, 7
      %v1495 = vsub.s32 4, %v1494
      %v1496 = vrot.slane %v1464, %v1495
      %v1497 = vlaneseq
      %v1498 = vshrl.u32 %v1497, 7
      %v1499 = vsub.s32 6, %v1498
      %v1500 = vrot.slane %v1464, %v1499
      %v1501 = vlaneseq
      %v1502 = vshrl.u32 %v1501, 7
      %v1503 = vsub.s32 0, %v1502
      %v1504 = vrot.slane %v1465, %v1503
      %v1505 = vlaneseq
      %v1506 = vshrl.u32 %v1505, 7
      %v1507 = vsub.s32 2, %v1506
      %v1508 = vrot.slane %v1465, %v1507
      %v1519 = vlaneseq
      %v1520 = vshrl.u32 %v1519, 7
      %v1521 = vsub.s32 0, %v1520
      %v1522 = vrot.slane %v1472, %v1521
      %v1523 = vlaneseq
      %v1524 = vshrl.u32 %v1523, 7
      %v1525 = vsub.s32 0, %v1524
      %v1526 = vrot.slane %v1476, %v1525
      %v1527 = vlaneseq
      %v1528 = vshrl.u32 %v1527, 7
      %v1529 = vsub.s32 0, %v1528
      %v1530 = vrot.slane %v1480, %v1529
      %v1531 = vlaneseq
      %v1532 = vshrl.u32 %v1531, 7
      %v1533 = vsub.s32 0, %v1532
      %v1534 = vrot.slane %v1484, %v1533
      %v1535 = vlaneseq
      %v1536 = vshrl.u32 %v1535, 7
      %v1537 = vsub.s32 0, %v1536
      %v1538 = vrot.slane %v1488, %v1537
      %v1539 = vlaneseq
      %v1540 = vshrl.u32 %v1539, 7
      %v1541 = vsub.s32 0, %v1540
      %v1542 = vrot.slane %v1492, %v1541
      %v1543 = vlaneseq
      %v1544 = vshrl.u32 %v1543, 7
      %v1545 = vsub.s32 0, %v1544
      %v1546 = vrot.slane %v1496, %v1545
      %v1547 = vlaneseq
      %v1548 = vshrl.u32 %v1547, 7
      %v1549 = vsub.s32 0, %v1548
      %v1550 = vrot.slane %v1500, %v1549
      %v1551 = vlaneseq
      %v1552 = vshrl.u32 %v1551, 7
      %v1553 = vsub.s32 0, %v1552
      %v1554 = vrot.slane %v1504, %v1553
      %v1555 = vlaneseq
      %v1556 = vshrl.u32 %v1555, 7
      %v1557 = vsub.s32 0, %v1556
      %v1558 = vrot.slane %v1508, %v1557
      %v1559 = vmul.f32 %v1291, %v1522
      %v1560 = vmul.f32 %v1293, %v1526
      %v1561 = vmul.f32 %v1332, %v1530
      %v1562 = vmul.f32 %v1334, %v1534
      %v1563 = vmul.f32 %v1373, %v1538
      %v1564 = vmul.f32 %v1375, %v1542
      %v1565 = vmul.f32 %v1414, %v1546
      %v1566 = vmul.f32 %v1416, %v1550
      %v1567 = vmul.f32 %v1455, %v1554
      %v1568 = vmul.f32 %v1457, %v1558
      %v1569 = vpack.c.bf16 %v1559, %v1559
      %v1570 = vpack.c.bf16 %v1560, %v1560
      %v1571 = vpack.c.bf16 %v1561, %v1561
      %v1572 = vpack.c.bf16 %v1562, %v1562
      %v1573 = vpack.c.bf16 %v1563, %v1563
      %v1574 = vpack.c.bf16 %v1564, %v1564
      %v1575 = vpack.c.bf16 %v1565, %v1565
      %v1576 = vpack.c.bf16 %v1566, %v1566
      %v1577 = vpack.c.bf16 %v1567, %v1567
      %v1578 = vpack.c.bf16 %v1568, %v1568
      %v1589 = vunpack.c.l.b16 %v1569
      %v1590 = vunpack.c.l.b16 %v1570
      %v1591 = vunpack.c.l.b16 %v1571
      %v1592 = vunpack.c.l.b16 %v1572
      %v1593 = vunpack.c.l.b16 %v1573
      %v1594 = vunpack.c.l.b16 %v1574
      %v1595 = vunpack.c.l.b16 %v1575
      %v1596 = vunpack.c.l.b16 %v1576
      %v1597 = vunpack.c.l.b16 %v1577
      %v1598 = vunpack.c.l.b16 %v1578
      %v1599 = vpack.c.b16 %v1590, %v1589
      %v1600 = vpack.c.b16 %v1592, %v1591
      %v1601 = vpack.c.b16 %v1594, %v1593
      %v1602 = vpack.c.b16 %v1596, %v1595
      %v1603 = vpack.c.b16 %v1598, %v1597
      %1609 = vst [vmem:[%s197 + $0x8] sm:$0xff] %v1599
      %1610 = vst [vmem:[%s197 + $0x10] sm:$0xff] %v1600
      %1611 = vst [vmem:[%s197 + $0x18] sm:$0xff] %v1601
      %1612 = vst [vmem:[%s197 + $0x20] sm:$0xff] %v1602
      %1613 = vst [vmem:[%s197 + $0x28] sm:$0xff] %v1603
      %1614 = vst [vmem:[%s197] sm:$0xff] 0
      %vm1615 = vcmask 1043456
      %vm1616 = vcmask 31748
      %vm1617 = vmor %vm1616, %vm1615
      %1618 = vst.msk [vmem:[%s197 + $0x30] sm:$0xff] %vm1617, 0
      %p1619 = scmp.lt.s32.totalorder %s15, 1
      %s1620 = scalar_select %p1619, %s15, 1
      %s1621 = smul.addr %s1620, 14
      %s1622 = smul.addr %s1621, 4
      %s1623 = scalar_lea.vmem %s4, %s1622
      // Predicated region
      $region37: #{srresnet_forward.19} parent=35 // pred_check
        %p1624 = pneg %p122
      $region38: #{srresnet_forward.19} parent=35 // pred_check_branch
        %1626 = sbr.rel (%p1624) target = $region40
      $region39: #{srresnet_forward.19} parent=35 // pred_region
        _
      $region40: #{srresnet_forward.19} parent=35 // pred_fallthru
        _
    $region36: #{srresnet_forward.19} parent=5 // pred_fallthru
      _
    %p1627 = scmp.le.s32.totalorder 2, %s10
    // Predicated region
    $region41: #{srresnet_forward.19} parent=5 // pred_check
      %p1628 = pneg %p1627
    $region42: #{srresnet_forward.19} parent=5 // pred_check_branch
      %1630 = sbr.rel (%p1628) target = $region44
    $region43: #{srresnet_forward.19} parent=5 // pred_region
      %s1631 = ssub.s32 %s10, 2
      // Predicated region
      $region45: #{srresnet_forward.19} parent=43 // pred_check
        %p1632 = pneg %p128
      $region46: #{srresnet_forward.19} parent=43 // pred_check_branch
        %1634 = sbr.rel (%p1632) target = $region48
      $region47: #{srresnet_forward.19} parent=43 // pred_region
        %p1635 = scmp.lt.s32.totalorder %s16, 1
        %s1636 = scalar_select %p1635, %s16, 1
        %s1637 = smul.addr %s1636, 14
        %s1638 = smul.addr %s1637, 4
        %s1639 = scalar_lea.vmem %s4, %s1638
      $region48: #{srresnet_forward.19} parent=43 // pred_fallthru
        _
    $region44: #{srresnet_forward.19} parent=5 // pred_fallthru
      _
  $region6: #{srresnet_forward.19} parent=0 // loop_footer
    %s14 = sadd.s32 1, %s10
  $region7: #{srresnet_forward.19} parent=0 // loop_footer_branch
    %9 = sbr.rel target = $region3
  $region8: #{srresnet_forward.19} parent=0 // loop_exit
    _

</llo_original>
